<compile_context>
chip_gen: v7x
topology: tpu7x:2x2x1
jax: 0.10.0
libtpu: 0.0.40
codegen_flags: <defaults>
</compile_context>

<pallas_src>
import jax
import jax.numpy as jnp
import numpy as np
from jax.experimental import pallas as pl
from jax.experimental.pallas import tpu as pltpu

BT = 8  # batch tile (sublane-aligned); grid grows with batch -> megacore shards


# ---------------------------------------------------------------------------
# Fused kernel: whole network for one batch tile
# ---------------------------------------------------------------------------
def _fused_kernel(xd_ref, m1_ref, b1_ref, m2_ref, b2_ref, g_ref,
                  fb1_ref, wfc2_ref, fb2_ref, o_ref):
    bt = xd_ref.shape[2]

    # ---------------- conv1 + 2x2 max-pool + bias + ReLU -------------------
    # conv1 output row  oh = 4*m + 2*t + p   (m: 0..5; t: oh2 parity; p: pool row)
    #              col  ow = 2*ow2 + pw      (ow2: 0..11; pw: pool col)
    # xd_ref[s4, h4, b, w] = x[b, 4*h4 + s4, w]  (row-deinterleaved input),
    # so every row slice below lands on a major dim (free).
    p1 = []                    # p1[t]: (6*bt, 120)  rows (m, b), cols (ow2, c1)
    for t in range(2):
        accs = [[None, None], [None, None]]            # [p][pw]
        for p in range(2):
            for i in range(5):
                q, s4 = divmod(2 * t + p + i, 4)
                a = xd_ref[s4, q:q + 6]                 # (6, bt, 28)
                a = a.reshape(6 * bt, 28)               # bt == 8 -> layout no-op
                for pw in range(2):
                    d = jnp.dot(a, m1_ref[i, pw],
                                preferred_element_type=jnp.float32)
                    accs[p][pw] = d if accs[p][pw] is None else accs[p][pw] + d
        pooled = jnp.maximum(jnp.maximum(accs[0][0], accs[0][1]),
                             jnp.maximum(accs[1][0], accs[1][1]))
        p1.append(jnp.maximum(pooled + b1_ref[...], 0.0))

    # ---------------- conv2 + 2x2 max-pool + bias + ReLU -------------------
    # TODO(synk): nn.Dropout2d(0.5) on conv2 output -> identity in eval mode.
    # conv2 output row oh = 2*oh2 + p (oh2: 0..3), col ow = 2*ow2 + pw (ow2: 0..3)
    accs2 = [[None, None], [None, None]]                # [p][pw]
    for p in range(2):
        for i in range(5):
            q, s = divmod(p + i, 2)
            b_in = p1[s][q * bt:(q + 4) * bt, :]        # (4*bt, 120), 8-aligned
            for pw in range(2):
                d = jnp.dot(b_in, m2_ref[i, pw],
                            preferred_element_type=jnp.float32)
                accs2[p][pw] = d if accs2[p][pw] is None else accs2[p][pw] + d
    pooled2 = jnp.maximum(jnp.maximum(accs2[0][0], accs2[0][1]),
                          jnp.maximum(accs2[1][0], accs2[1][1]))
    p2 = jnp.maximum(pooled2 + b2_ref[...], 0.0)        # (4*bt, 80)

    # ---------------- fc1 (+ flatten folded into g) + ReLU -----------------
    h = fb1_ref[...]                                    # (1, 50) broadcast
    for r in range(4):
        h = h + jnp.dot(p2[r * bt:(r + 1) * bt, :], g_ref[r],
                        preferred_element_type=jnp.float32)
    h = jnp.maximum(h, 0.0)                             # (bt, 50)
    # TODO(synk): F.dropout(training=self.training) -> identity in eval mode.

    # ---------------- fc2 + log_softmax ------------------------------------
    logits = jnp.dot(h, wfc2_ref[...],
                     preferred_element_type=jnp.float32) + fb2_ref[...]
    mx = jnp.max(logits, axis=-1, keepdims=True)
    s = logits - mx
    o_ref[...] = s - jnp.log(jnp.sum(jnp.exp(s), axis=-1, keepdims=True))


# ---------------------------------------------------------------------------
# Wrapper-side weight repacking (tiny, one-time per call, runs under jit)
# ---------------------------------------------------------------------------
def _prepare_params(params):
    w1 = params["conv1_w"]        # (10, 1, 5, 5)   PyTorch layout (O, I, kh, kw)
    b1 = params["conv1_b"]        # (10,)
    w2 = params["conv2_w"]        # (20, 10, 5, 5)
    b2 = params["conv2_b"]        # (20,)
    fc1_w = params["fc1_w"]       # (320, 50) == Linear.weight.T
    fc2_w = params["fc2_w"]       # (50, 10)  == Linear.weight.T

    jj = np.arange(5)
    pw = np.arange(2)

    # conv1 banded weights: m1[i, pw, w', ow2*10+co] = w1[co, 0, i, w'-(2*ow2+pw)]
    wp = np.arange(28)
    ow2 = np.arange(12)
    t1 = (wp[None, :, None, None] ==
          2 * ow2[None, None, :, None] + pw[:, None, None, None]
          + jj[None, None, None, :]).astype(np.float32)       # (2, 28, 12, 5)
    m1 = jnp.einsum("pxoj,cij->ipxoc", jnp.asarray(t1), w1[:, 0])
    m1 = m1.reshape(5, 2, 28, 120)

    # conv2 banded weights: m2[i, pw, iw*10+ci, ow2*20+co] = w2[co, ci, i, iw-(2*ow2+pw)]
    iw = np.arange(12)
    ow2b = np.arange(4)
    t2 = (iw[None, :, None, None] ==
          2 * ow2b[None, None, :, None] + pw[:, None, None, None]
          + jj[None, None, None, :]).astype(np.float32)       # (2, 12, 4, 5)
    m2 = jnp.einsum("pxoj,kcij->ipxcok", jnp.asarray(t2), w2)
    m2 = m2.reshape(5, 2, 120, 80)

    # fc1 weight regrouped so the NCHW view(-1, 320) flatten is folded in:
    #   g[r, ow*20 + co, n] = fc1_w[co*16 + r*4 + ow, n]
    g = fc1_w.reshape(20, 4, 4, 50).transpose(1, 2, 0, 3).reshape(4, 80, 50)

    return (m1, jnp.tile(b1, 12).reshape(1, 120),
            m2, jnp.tile(b2, 4).reshape(1, 80),
            g, params["fc1_b"].reshape(1, 50),
            fc2_w, params["fc2_b"].reshape(1, 10))


# ---------------------------------------------------------------------------
# Full forward pass (inference semantics)
# ---------------------------------------------------------------------------
def my_network_forward(x, params, *, bt=BT):
    """x: NCHW (B, 1, 28, 28) float32 -> (B, 10) log-probs."""
    m1, b1t, m2, b2t, g, fb1, wfc2, fb2 = _prepare_params(params)

    B = x.shape[0]
    bp = ((B + bt - 1) // bt) * bt
    xs = x.reshape(B, 28, 28)
    if bp != B:
        xs = jnp.pad(xs, ((0, bp - B), (0, 0), (0, 0)))      # pad raw input only
    # Row-deinterleave (mod 4) so all in-kernel row slices are on major dims:
    #   xd[s4, h4, b, w] = x[b, 4*h4 + s4, w]
    xd = xs.reshape(bp, 7, 4, 28).transpose(2, 1, 0, 3)      # (4, 7, bp, 28)

    out = pl.pallas_call(
        _fused_kernel,
        out_shape=jax.ShapeDtypeStruct((bp, 10), jnp.float32),
        grid=(bp // bt,),
        in_specs=[
            pl.BlockSpec((4, 7, bt, 28), lambda ib: (0, 0, ib, 0)),   # input tile
            pl.BlockSpec((5, 2, 28, 120), lambda ib: (0, 0, 0, 0)),   # conv1 banded
            pl.BlockSpec((1, 120), lambda ib: (0, 0)),                # conv1 bias
            pl.BlockSpec((5, 2, 120, 80), lambda ib: (0, 0, 0, 0)),   # conv2 banded
            pl.BlockSpec((1, 80), lambda ib: (0, 0)),                 # conv2 bias
            pl.BlockSpec((4, 80, 50), lambda ib: (0, 0, 0)),          # fc1 regrouped
            pl.BlockSpec((1, 50), lambda ib: (0, 0)),                 # fc1 bias
            pl.BlockSpec((50, 10), lambda ib: (0, 0)),                # fc2 weight.T
            pl.BlockSpec((1, 10), lambda ib: (0, 0)),                 # fc2 bias
        ],
        out_specs=pl.BlockSpec((bt, 10), lambda ib: (ib, 0)),
        compiler_params=pltpu.CompilerParams(
            dimension_semantics=("parallel",)),
    )(xd, m1, b1t, m2, b2t, g, fb1, wfc2, fb2)
    return out[:B]


# ---------------------------------------------------------------------------
# Params + pure-JAX reference (for correctness check)
# ---------------------------------------------------------------------------
def init_params(key):
    ks = jax.random.split(key, 8)

    def u(k, shape, fan_in):
        bound = 1.0 / np.sqrt(fan_in)
        return jax.random.uniform(k, shape, jnp.float32, -bound, bound)

    return {
        "conv1_w": u(ks[0], (10, 1, 5, 5), 1 * 25),
        "conv1_b": u(ks[1], (10,), 1 * 25),
        "conv2_w": u(ks[2], (20, 10, 5, 5), 10 * 25),
        "conv2_b": u(ks[3], (20,), 10 * 25),
        "fc1_w": u(ks[4], (320, 50), 320),   # stored as (in, out) = Linear.weight.T
        "fc1_b": u(ks[5], (50,), 320),
        "fc2_w": u(ks[6], (50, 10), 50),
        "fc2_b": u(ks[7], (10,), 50),
    }


def _reference_forward(x, params):
    with jax.default_matmul_precision("highest"):
        y = jax.lax.conv_general_dilated(
            x, params["conv1_w"], (1, 1), "VALID",
            dimension_numbers=("NCHW", "OIHW", "NCHW"))
        y = y + params["conv1_b"][None, :, None, None]
        b, c, hh, ww = y.shape
        y = jnp.maximum(y.reshape(b, c, hh // 2, 2, ww // 2, 2).max(axis=(3, 5)), 0.0)
        y = jax.lax.conv_general_dilated(
            y, params["conv2_w"], (1, 1), "VALID",
            dimension_numbers=("NCHW", "OIHW", "NCHW"))
        y = y + params["conv2_b"][None, :, None, None]
        b, c, hh, ww = y.shape
        y = jnp.maximum(y.reshape(b, c, hh // 2, 2, ww // 2, 2).max(axis=(3, 5)), 0.0)
        y = y.reshape(b, 320)
        h = jnp.maximum(y @ params["fc1_w"] + params["fc1_b"], 0.0)
        logits = h @ params["fc2_w"] + params["fc2_b"]
        return jax.nn.log_softmax(logits, axis=1)


if __name__ == "__main__":
    key = jax.random.PRNGKey(0)
    pkey, xkey = jax.random.split(key)
    params = init_params(pkey)
    # 28x28 single-channel input (implied by the view(-1, 320) flatten), batch=2.
    x = jax.random.normal(xkey, (2, 1, 28, 28), jnp.float32)

    out = jax.jit(my_network_forward)(x, params)
    out = jax.block_until_ready(out)

    assert out.shape == (2, 10)
    assert bool(jnp.all(jnp.isfinite(out)))
    # log_softmax rows must exponentiate-sum to 1.
    assert bool(jnp.allclose(jnp.exp(out).sum(axis=1), 1.0, atol=1e-4))
    # Numerical check against a pure-JAX/XLA reference of the PyTorch module.
    ref = jax.jit(_reference_forward)(x, params)
    assert bool(jnp.max(jnp.abs(out - ref)) < 5e-3)
    print("KERNEL_OK")
</pallas_src>

<mosaic_0001>
module attributes {stable_mosaic.version = 11 : i64} {
  func.func @_fused_kernel(%arg0: i32, %arg1: memref<4x7x8x28xf32, #tpu.memory_space<vmem>>, %arg2: memref<5x2x28x120xf32, #tpu.memory_space<vmem>>, %arg3: memref<1x120xf32, #tpu.memory_space<vmem>>, %arg4: memref<5x2x120x80xf32, #tpu.memory_space<vmem>>, %arg5: memref<1x80xf32, #tpu.memory_space<vmem>>, %arg6: memref<4x80x50xf32, #tpu.memory_space<vmem>>, %arg7: memref<1x50xf32, #tpu.memory_space<vmem>>, %arg8: memref<50x10xf32, #tpu.memory_space<vmem>>, %arg9: memref<1x10xf32, #tpu.memory_space<vmem>>, %arg10: memref<8x10xf32, #tpu.memory_space<vmem>>) attributes {dimension_semantics = [#tpu.dimension_semantics<parallel>], iteration_bounds = array<i64: 1>, scalar_prefetch = 0 : i64, scratch_operands = 0 : i64, tpu.core_type = #tpu.core_type<tc>, window_params = [{transform_indices = @transform_0, window_bounds = array<i64: 4, 7, 8, 28>}, {pipeline_mode = #tpu.pipeline_mode<synchronous>, transform_indices = @transform_1, window_bounds = array<i64: 5, 2, 28, 120>}, {pipeline_mode = #tpu.pipeline_mode<synchronous>, transform_indices = @transform_2, window_bounds = array<i64: 1, 120>}, {pipeline_mode = #tpu.pipeline_mode<synchronous>, transform_indices = @transform_3, window_bounds = array<i64: 5, 2, 120, 80>}, {pipeline_mode = #tpu.pipeline_mode<synchronous>, transform_indices = @transform_4, window_bounds = array<i64: 1, 80>}, {pipeline_mode = #tpu.pipeline_mode<synchronous>, transform_indices = @transform_5, window_bounds = array<i64: 4, 80, 50>}, {pipeline_mode = #tpu.pipeline_mode<synchronous>, transform_indices = @transform_6, window_bounds = array<i64: 1, 50>}, {pipeline_mode = #tpu.pipeline_mode<synchronous>, transform_indices = @transform_7, window_bounds = array<i64: 50, 10>}, {pipeline_mode = #tpu.pipeline_mode<synchronous>, transform_indices = @transform_8, window_bounds = array<i64: 1, 10>}, {transform_indices = @transform_9, window_bounds = array<i64: 8, 10>}]} {
    %c0 = arith.constant 0 : index
    %c0_0 = arith.constant 0 : index
    %c0_1 = arith.constant 0 : index
    %c0_2 = arith.constant 0 : index
    %0 = vector.load %arg1[%c0, %c0_0, %c0_1, %c0_2] : memref<4x7x8x28xf32, #tpu.memory_space<vmem>>, vector<1x6x8x28xf32>
    %1 = vector.shape_cast %0 : vector<1x6x8x28xf32> to vector<6x8x28xf32>
    %2 = vector.shape_cast %1 : vector<6x8x28xf32> to vector<48x28xf32>
    %c0_3 = arith.constant 0 : index
    %c0_4 = arith.constant 0 : index
    %c0_5 = arith.constant 0 : index
    %c0_6 = arith.constant 0 : index
    %3 = vector.load %arg2[%c0_3, %c0_4, %c0_5, %c0_6] : memref<5x2x28x120xf32, #tpu.memory_space<vmem>>, vector<1x1x28x120xf32>
    %4 = vector.shape_cast %3 : vector<1x1x28x120xf32> to vector<28x120xf32>
    %cst = arith.constant dense<0.000000e+00> : vector<48x120xf32>
    %5 = tpu.matmul %2, %4, %cst {dimension_numbers = #tpu.dot_dimension_numbers<[1], [0], [0], [1], [0, 0, 1, 1], [], []>} : vector<48x28xf32>, vector<28x120xf32>, vector<48x120xf32> -> vector<48x120xf32>
    %c0_7 = arith.constant 0 : index
    %c1 = arith.constant 1 : index
    %c0_8 = arith.constant 0 : index
    %c0_9 = arith.constant 0 : index
    %6 = vector.load %arg2[%c0_7, %c1, %c0_8, %c0_9] : memref<5x2x28x120xf32, #tpu.memory_space<vmem>>, vector<1x1x28x120xf32>
    %7 = vector.shape_cast %6 : vector<1x1x28x120xf32> to vector<28x120xf32>
    %cst_10 = arith.constant dense<0.000000e+00> : vector<48x120xf32>
    %8 = tpu.matmul %2, %7, %cst_10 {dimension_numbers = #tpu.dot_dimension_numbers<[1], [0], [0], [1], [0, 0, 1, 1], [], []>} : vector<48x28xf32>, vector<28x120xf32>, vector<48x120xf32> -> vector<48x120xf32>
    %c1_11 = arith.constant 1 : index
    %c0_12 = arith.constant 0 : index
    %c0_13 = arith.constant 0 : index
    %c0_14 = arith.constant 0 : index
    %9 = vector.load %arg1[%c1_11, %c0_12, %c0_13, %c0_14] : memref<4x7x8x28xf32, #tpu.memory_space<vmem>>, vector<1x6x8x28xf32>
    %10 = vector.shape_cast %9 : vector<1x6x8x28xf32> to vector<6x8x28xf32>
    %11 = vector.shape_cast %10 : vector<6x8x28xf32> to vector<48x28xf32>
    %c1_15 = arith.constant 1 : index
    %c0_16 = arith.constant 0 : index
    %c0_17 = arith.constant 0 : index
    %c0_18 = arith.constant 0 : index
    %12 = vector.load %arg2[%c1_15, %c0_16, %c0_17, %c0_18] : memref<5x2x28x120xf32, #tpu.memory_space<vmem>>, vector<1x1x28x120xf32>
    %13 = vector.shape_cast %12 : vector<1x1x28x120xf32> to vector<28x120xf32>
    %cst_19 = arith.constant dense<0.000000e+00> : vector<48x120xf32>
    %14 = tpu.matmul %11, %13, %cst_19 {dimension_numbers = #tpu.dot_dimension_numbers<[1], [0], [0], [1], [0, 0, 1, 1], [], []>} : vector<48x28xf32>, vector<28x120xf32>, vector<48x120xf32> -> vector<48x120xf32>
    %15 = arith.addf %5, %14 : vector<48x120xf32>
    %c1_20 = arith.constant 1 : index
    %c1_21 = arith.constant 1 : index
    %c0_22 = arith.constant 0 : index
    %c0_23 = arith.constant 0 : index
    %16 = vector.load %arg2[%c1_20, %c1_21, %c0_22, %c0_23] : memref<5x2x28x120xf32, #tpu.memory_space<vmem>>, vector<1x1x28x120xf32>
    %17 = vector.shape_cast %16 : vector<1x1x28x120xf32> to vector<28x120xf32>
    %cst_24 = arith.constant dense<0.000000e+00> : vector<48x120xf32>
    %18 = tpu.matmul %11, %17, %cst_24 {dimension_numbers = #tpu.dot_dimension_numbers<[1], [0], [0], [1], [0, 0, 1, 1], [], []>} : vector<48x28xf32>, vector<28x120xf32>, vector<48x120xf32> -> vector<48x120xf32>
    %19 = arith.addf %8, %18 : vector<48x120xf32>
    %c2 = arith.constant 2 : index
    %c0_25 = arith.constant 0 : index
    %c0_26 = arith.constant 0 : index
    %c0_27 = arith.constant 0 : index
    %20 = vector.load %arg1[%c2, %c0_25, %c0_26, %c0_27] : memref<4x7x8x28xf32, #tpu.memory_space<vmem>>, vector<1x6x8x28xf32>
    %21 = vector.shape_cast %20 : vector<1x6x8x28xf32> to vector<6x8x28xf32>
    %22 = vector.shape_cast %21 : vector<6x8x28xf32> to vector<48x28xf32>
    %c2_28 = arith.constant 2 : index
    %c0_29 = arith.constant 0 : index
    %c0_30 = arith.constant 0 : index
    %c0_31 = arith.constant 0 : index
    %23 = vector.load %arg2[%c2_28, %c0_29, %c0_30, %c0_31] : memref<5x2x28x120xf32, #tpu.memory_space<vmem>>, vector<1x1x28x120xf32>
    %24 = vector.shape_cast %23 : vector<1x1x28x120xf32> to vector<28x120xf32>
    %cst_32 = arith.constant dense<0.000000e+00> : vector<48x120xf32>
    %25 = tpu.matmul %22, %24, %cst_32 {dimension_numbers = #tpu.dot_dimension_numbers<[1], [0], [0], [1], [0, 0, 1, 1], [], []>} : vector<48x28xf32>, vector<28x120xf32>, vector<48x120xf32> -> vector<48x120xf32>
    %26 = arith.addf %15, %25 : vector<48x120xf32>
    %c2_33 = arith.constant 2 : index
    %c1_34 = arith.constant 1 : index
    %c0_35 = arith.constant 0 : index
    %c0_36 = arith.constant 0 : index
    %27 = vector.load %arg2[%c2_33, %c1_34, %c0_35, %c0_36] : memref<5x2x28x120xf32, #tpu.memory_space<vmem>>, vector<1x1x28x120xf32>
    %28 = vector.shape_cast %27 : vector<1x1x28x120xf32> to vector<28x120xf32>
    %cst_37 = arith.constant dense<0.000000e+00> : vector<48x120xf32>
    %29 = tpu.matmul %22, %28, %cst_37 {dimension_numbers = #tpu.dot_dimension_numbers<[1], [0], [0], [1], [0, 0, 1, 1], [], []>} : vector<48x28xf32>, vector<28x120xf32>, vector<48x120xf32> -> vector<48x120xf32>
    %30 = arith.addf %19, %29 : vector<48x120xf32>
    %c3 = arith.constant 3 : index
    %c0_38 = arith.constant 0 : index
    %c0_39 = arith.constant 0 : index
    %c0_40 = arith.constant 0 : index
    %31 = vector.load %arg1[%c3, %c0_38, %c0_39, %c0_40] : memref<4x7x8x28xf32, #tpu.memory_space<vmem>>, vector<1x6x8x28xf32>
    %32 = vector.shape_cast %31 : vector<1x6x8x28xf32> to vector<6x8x28xf32>
    %33 = vector.shape_cast %32 : vector<6x8x28xf32> to vector<48x28xf32>
    %c3_41 = arith.constant 3 : index
    %c0_42 = arith.constant 0 : index
    %c0_43 = arith.constant 0 : index
    %c0_44 = arith.constant 0 : index
    %34 = vector.load %arg2[%c3_41, %c0_42, %c0_43, %c0_44] : memref<5x2x28x120xf32, #tpu.memory_space<vmem>>, vector<1x1x28x120xf32>
    %35 = vector.shape_cast %34 : vector<1x1x28x120xf32> to vector<28x120xf32>
    %cst_45 = arith.constant dense<0.000000e+00> : vector<48x120xf32>
    %36 = tpu.matmul %33, %35, %cst_45 {dimension_numbers = #tpu.dot_dimension_numbers<[1], [0], [0], [1], [0, 0, 1, 1], [], []>} : vector<48x28xf32>, vector<28x120xf32>, vector<48x120xf32> -> vector<48x120xf32>
    %37 = arith.addf %26, %36 : vector<48x120xf32>
    %c3_46 = arith.constant 3 : index
    %c1_47 = arith.constant 1 : index
    %c0_48 = arith.constant 0 : index
    %c0_49 = arith.constant 0 : index
    %38 = vector.load %arg2[%c3_46, %c1_47, %c0_48, %c0_49] : memref<5x2x28x120xf32, #tpu.memory_space<vmem>>, vector<1x1x28x120xf32>
    %39 = vector.shape_cast %38 : vector<1x1x28x120xf32> to vector<28x120xf32>
    %cst_50 = arith.constant dense<0.000000e+00> : vector<48x120xf32>
    %40 = tpu.matmul %33, %39, %cst_50 {dimension_numbers = #tpu.dot_dimension_numbers<[1], [0], [0], [1], [0, 0, 1, 1], [], []>} : vector<48x28xf32>, vector<28x120xf32>, vector<48x120xf32> -> vector<48x120xf32>
    %41 = arith.addf %30, %40 : vector<48x120xf32>
    %c0_51 = arith.constant 0 : index
    %c1_52 = arith.constant 1 : index
    %c0_53 = arith.constant 0 : index
    %c0_54 = arith.constant 0 : index
    %42 = vector.load %arg1[%c0_51, %c1_52, %c0_53, %c0_54] : memref<4x7x8x28xf32, #tpu.memory_space<vmem>>, vector<1x6x8x28xf32>
    %43 = vector.shape_cast %42 : vector<1x6x8x28xf32> to vector<6x8x28xf32>
    %44 = vector.shape_cast %43 : vector<6x8x28xf32> to vector<48x28xf32>
    %c4 = arith.constant 4 : index
    %c0_55 = arith.constant 0 : index
    %c0_56 = arith.constant 0 : index
    %c0_57 = arith.constant 0 : index
    %45 = vector.load %arg2[%c4, %c0_55, %c0_56, %c0_57] : memref<5x2x28x120xf32, #tpu.memory_space<vmem>>, vector<1x1x28x120xf32>
    %46 = vector.shape_cast %45 : vector<1x1x28x120xf32> to vector<28x120xf32>
    %cst_58 = arith.constant dense<0.000000e+00> : vector<48x120xf32>
    %47 = tpu.matmul %44, %46, %cst_58 {dimension_numbers = #tpu.dot_dimension_numbers<[1], [0], [0], [1], [0, 0, 1, 1], [], []>} : vector<48x28xf32>, vector<28x120xf32>, vector<48x120xf32> -> vector<48x120xf32>
    %48 = arith.addf %37, %47 : vector<48x120xf32>
    %c4_59 = arith.constant 4 : index
    %c1_60 = arith.constant 1 : index
    %c0_61 = arith.constant 0 : index
    %c0_62 = arith.constant 0 : index
    %49 = vector.load %arg2[%c4_59, %c1_60, %c0_61, %c0_62] : memref<5x2x28x120xf32, #tpu.memory_space<vmem>>, vector<1x1x28x120xf32>
    %50 = vector.shape_cast %49 : vector<1x1x28x120xf32> to vector<28x120xf32>
    %cst_63 = arith.constant dense<0.000000e+00> : vector<48x120xf32>
    %51 = tpu.matmul %44, %50, %cst_63 {dimension_numbers = #tpu.dot_dimension_numbers<[1], [0], [0], [1], [0, 0, 1, 1], [], []>} : vector<48x28xf32>, vector<28x120xf32>, vector<48x120xf32> -> vector<48x120xf32>
    %52 = arith.addf %41, %51 : vector<48x120xf32>
    %c1_64 = arith.constant 1 : index
    %c0_65 = arith.constant 0 : index
    %c0_66 = arith.constant 0 : index
    %c0_67 = arith.constant 0 : index
    %53 = vector.load %arg1[%c1_64, %c0_65, %c0_66, %c0_67] : memref<4x7x8x28xf32, #tpu.memory_space<vmem>>, vector<1x6x8x28xf32>
    %54 = vector.shape_cast %53 : vector<1x6x8x28xf32> to vector<6x8x28xf32>
    %55 = vector.shape_cast %54 : vector<6x8x28xf32> to vector<48x28xf32>
    %c0_68 = arith.constant 0 : index
    %c0_69 = arith.constant 0 : index
    %c0_70 = arith.constant 0 : index
    %c0_71 = arith.constant 0 : index
    %56 = vector.load %arg2[%c0_68, %c0_69, %c0_70, %c0_71] : memref<5x2x28x120xf32, #tpu.memory_space<vmem>>, vector<1x1x28x120xf32>
    %57 = vector.shape_cast %56 : vector<1x1x28x120xf32> to vector<28x120xf32>
    %cst_72 = arith.constant dense<0.000000e+00> : vector<48x120xf32>
    %58 = tpu.matmul %55, %57, %cst_72 {dimension_numbers = #tpu.dot_dimension_numbers<[1], [0], [0], [1], [0, 0, 1, 1], [], []>} : vector<48x28xf32>, vector<28x120xf32>, vector<48x120xf32> -> vector<48x120xf32>
    %c0_73 = arith.constant 0 : index
    %c1_74 = arith.constant 1 : index
    %c0_75 = arith.constant 0 : index
    %c0_76 = arith.constant 0 : index
    %59 = vector.load %arg2[%c0_73, %c1_74, %c0_75, %c0_76] : memref<5x2x28x120xf32, #tpu.memory_space<vmem>>, vector<1x1x28x120xf32>
    %60 = vector.shape_cast %59 : vector<1x1x28x120xf32> to vector<28x120xf32>
    %cst_77 = arith.constant dense<0.000000e+00> : vector<48x120xf32>
    %61 = tpu.matmul %55, %60, %cst_77 {dimension_numbers = #tpu.dot_dimension_numbers<[1], [0], [0], [1], [0, 0, 1, 1], [], []>} : vector<48x28xf32>, vector<28x120xf32>, vector<48x120xf32> -> vector<48x120xf32>
    %c2_78 = arith.constant 2 : index
    %c0_79 = arith.constant 0 : index
    %c0_80 = arith.constant 0 : index
    %c0_81 = arith.constant 0 : index
    %62 = vector.load %arg1[%c2_78, %c0_79, %c0_80, %c0_81] : memref<4x7x8x28xf32, #tpu.memory_space<vmem>>, vector<1x6x8x28xf32>
    %63 = vector.shape_cast %62 : vector<1x6x8x28xf32> to vector<6x8x28xf32>
    %64 = vector.shape_cast %63 : vector<6x8x28xf32> to vector<48x28xf32>
    %c1_82 = arith.constant 1 : index
    %c0_83 = arith.constant 0 : index
    %c0_84 = arith.constant 0 : index
    %c0_85 = arith.constant 0 : index
    %65 = vector.load %arg2[%c1_82, %c0_83, %c0_84, %c0_85] : memref<5x2x28x120xf32, #tpu.memory_space<vmem>>, vector<1x1x28x120xf32>
    %66 = vector.shape_cast %65 : vector<1x1x28x120xf32> to vector<28x120xf32>
    %cst_86 = arith.constant dense<0.000000e+00> : vector<48x120xf32>
    %67 = tpu.matmul %64, %66, %cst_86 {dimension_numbers = #tpu.dot_dimension_numbers<[1], [0], [0], [1], [0, 0, 1, 1], [], []>} : vector<48x28xf32>, vector<28x120xf32>, vector<48x120xf32> -> vector<48x120xf32>
    %68 = arith.addf %58, %67 : vector<48x120xf32>
    %c1_87 = arith.constant 1 : index
    %c1_88 = arith.constant 1 : index
    %c0_89 = arith.constant 0 : index
    %c0_90 = arith.constant 0 : index
    %69 = vector.load %arg2[%c1_87, %c1_88, %c0_89, %c0_90] : memref<5x2x28x120xf32, #tpu.memory_space<vmem>>, vector<1x1x28x120xf32>
    %70 = vector.shape_cast %69 : vector<1x1x28x120xf32> to vector<28x120xf32>
    %cst_91 = arith.constant dense<0.000000e+00> : vector<48x120xf32>
    %71 = tpu.matmul %64, %70, %cst_91 {dimension_numbers = #tpu.dot_dimension_numbers<[1], [0], [0], [1], [0, 0, 1, 1], [], []>} : vector<48x28xf32>, vector<28x120xf32>, vector<48x120xf32> -> vector<48x120xf32>
    %72 = arith.addf %61, %71 : vector<48x120xf32>
    %c3_92 = arith.constant 3 : index
    %c0_93 = arith.constant 0 : index
    %c0_94 = arith.constant 0 : index
    %c0_95 = arith.constant 0 : index
    %73 = vector.load %arg1[%c3_92, %c0_93, %c0_94, %c0_95] : memref<4x7x8x28xf32, #tpu.memory_space<vmem>>, vector<1x6x8x28xf32>
    %74 = vector.shape_cast %73 : vector<1x6x8x28xf32> to vector<6x8x28xf32>
    %75 = vector.shape_cast %74 : vector<6x8x28xf32> to vector<48x28xf32>
    %c2_96 = arith.constant 2 : index
    %c0_97 = arith.constant 0 : index
    %c0_98 = arith.constant 0 : index
    %c0_99 = arith.constant 0 : index
    %76 = vector.load %arg2[%c2_96, %c0_97, %c0_98, %c0_99] : memref<5x2x28x120xf32, #tpu.memory_space<vmem>>, vector<1x1x28x120xf32>
    %77 = vector.shape_cast %76 : vector<1x1x28x120xf32> to vector<28x120xf32>
    %cst_100 = arith.constant dense<0.000000e+00> : vector<48x120xf32>
    %78 = tpu.matmul %75, %77, %cst_100 {dimension_numbers = #tpu.dot_dimension_numbers<[1], [0], [0], [1], [0, 0, 1, 1], [], []>} : vector<48x28xf32>, vector<28x120xf32>, vector<48x120xf32> -> vector<48x120xf32>
    %79 = arith.addf %68, %78 : vector<48x120xf32>
    %c2_101 = arith.constant 2 : index
    %c1_102 = arith.constant 1 : index
    %c0_103 = arith.constant 0 : index
    %c0_104 = arith.constant 0 : index
    %80 = vector.load %arg2[%c2_101, %c1_102, %c0_103, %c0_104] : memref<5x2x28x120xf32, #tpu.memory_space<vmem>>, vector<1x1x28x120xf32>
    %81 = vector.shape_cast %80 : vector<1x1x28x120xf32> to vector<28x120xf32>
    %cst_105 = arith.constant dense<0.000000e+00> : vector<48x120xf32>
    %82 = tpu.matmul %75, %81, %cst_105 {dimension_numbers = #tpu.dot_dimension_numbers<[1], [0], [0], [1], [0, 0, 1, 1], [], []>} : vector<48x28xf32>, vector<28x120xf32>, vector<48x120xf32> -> vector<48x120xf32>
    %83 = arith.addf %72, %82 : vector<48x120xf32>
    %c0_106 = arith.constant 0 : index
    %c1_107 = arith.constant 1 : index
    %c0_108 = arith.constant 0 : index
    %c0_109 = arith.constant 0 : index
    %84 = vector.load %arg1[%c0_106, %c1_107, %c0_108, %c0_109] : memref<4x7x8x28xf32, #tpu.memory_space<vmem>>, vector<1x6x8x28xf32>
    %85 = vector.shape_cast %84 : vector<1x6x8x28xf32> to vector<6x8x28xf32>
    %86 = vector.shape_cast %85 : vector<6x8x28xf32> to vector<48x28xf32>
    %c3_110 = arith.constant 3 : index
    %c0_111 = arith.constant 0 : index
    %c0_112 = arith.constant 0 : index
    %c0_113 = arith.constant 0 : index
    %87 = vector.load %arg2[%c3_110, %c0_111, %c0_112, %c0_113] : memref<5x2x28x120xf32, #tpu.memory_space<vmem>>, vector<1x1x28x120xf32>
    %88 = vector.shape_cast %87 : vector<1x1x28x120xf32> to vector<28x120xf32>
    %cst_114 = arith.constant dense<0.000000e+00> : vector<48x120xf32>
    %89 = tpu.matmul %86, %88, %cst_114 {dimension_numbers = #tpu.dot_dimension_numbers<[1], [0], [0], [1], [0, 0, 1, 1], [], []>} : vector<48x28xf32>, vector<28x120xf32>, vector<48x120xf32> -> vector<48x120xf32>
    %90 = arith.addf %79, %89 : vector<48x120xf32>
    %c3_115 = arith.constant 3 : index
    %c1_116 = arith.constant 1 : index
    %c0_117 = arith.constant 0 : index
    %c0_118 = arith.constant 0 : index
    %91 = vector.load %arg2[%c3_115, %c1_116, %c0_117, %c0_118] : memref<5x2x28x120xf32, #tpu.memory_space<vmem>>, vector<1x1x28x120xf32>
    %92 = vector.shape_cast %91 : vector<1x1x28x120xf32> to vector<28x120xf32>
    %cst_119 = arith.constant dense<0.000000e+00> : vector<48x120xf32>
    %93 = tpu.matmul %86, %92, %cst_119 {dimension_numbers = #tpu.dot_dimension_numbers<[1], [0], [0], [1], [0, 0, 1, 1], [], []>} : vector<48x28xf32>, vector<28x120xf32>, vector<48x120xf32> -> vector<48x120xf32>
    %94 = arith.addf %83, %93 : vector<48x120xf32>
    %c1_120 = arith.constant 1 : index
    %c1_121 = arith.constant 1 : index
    %c0_122 = arith.constant 0 : index
    %c0_123 = arith.constant 0 : index
    %95 = vector.load %arg1[%c1_120, %c1_121, %c0_122, %c0_123] : memref<4x7x8x28xf32, #tpu.memory_space<vmem>>, vector<1x6x8x28xf32>
    %96 = vector.shape_cast %95 : vector<1x6x8x28xf32> to vector<6x8x28xf32>
    %97 = vector.shape_cast %96 : vector<6x8x28xf32> to vector<48x28xf32>
    %c4_124 = arith.constant 4 : index
    %c0_125 = arith.constant 0 : index
    %c0_126 = arith.constant 0 : index
    %c0_127 = arith.constant 0 : index
    %98 = vector.load %arg2[%c4_124, %c0_125, %c0_126, %c0_127] : memref<5x2x28x120xf32, #tpu.memory_space<vmem>>, vector<1x1x28x120xf32>
    %99 = vector.shape_cast %98 : vector<1x1x28x120xf32> to vector<28x120xf32>
    %cst_128 = arith.constant dense<0.000000e+00> : vector<48x120xf32>
    %100 = tpu.matmul %97, %99, %cst_128 {dimension_numbers = #tpu.dot_dimension_numbers<[1], [0], [0], [1], [0, 0, 1, 1], [], []>} : vector<48x28xf32>, vector<28x120xf32>, vector<48x120xf32> -> vector<48x120xf32>
    %101 = arith.addf %90, %100 : vector<48x120xf32>
    %c4_129 = arith.constant 4 : index
    %c1_130 = arith.constant 1 : index
    %c0_131 = arith.constant 0 : index
    %c0_132 = arith.constant 0 : index
    %102 = vector.load %arg2[%c4_129, %c1_130, %c0_131, %c0_132] : memref<5x2x28x120xf32, #tpu.memory_space<vmem>>, vector<1x1x28x120xf32>
    %103 = vector.shape_cast %102 : vector<1x1x28x120xf32> to vector<28x120xf32>
    %cst_133 = arith.constant dense<0.000000e+00> : vector<48x120xf32>
    %104 = tpu.matmul %97, %103, %cst_133 {dimension_numbers = #tpu.dot_dimension_numbers<[1], [0], [0], [1], [0, 0, 1, 1], [], []>} : vector<48x28xf32>, vector<28x120xf32>, vector<48x120xf32> -> vector<48x120xf32>
    %105 = arith.addf %94, %104 : vector<48x120xf32>
    %106 = arith.maximumf %48, %52 : vector<48x120xf32>
    %107 = arith.maximumf %101, %105 : vector<48x120xf32>
    %108 = arith.maximumf %106, %107 : vector<48x120xf32>
    %c0_134 = arith.constant 0 : index
    %c0_135 = arith.constant 0 : index
    %109 = vector.load %arg3[%c0_134, %c0_135] : memref<1x120xf32, #tpu.memory_space<vmem>>, vector<1x120xf32>
    %110 = vector.broadcast %109 : vector<1x120xf32> to vector<48x120xf32>
    %111 = arith.addf %108, %110 : vector<48x120xf32>
    %cst_136 = arith.constant 0.000000e+00 : f32
    %112 = vector.broadcast %cst_136 : f32 to vector<48x120xf32>
    %113 = arith.maximumf %111, %112 : vector<48x120xf32>
    %c2_137 = arith.constant 2 : index
    %c0_138 = arith.constant 0 : index
    %c0_139 = arith.constant 0 : index
    %c0_140 = arith.constant 0 : index
    %114 = vector.load %arg1[%c2_137, %c0_138, %c0_139, %c0_140] : memref<4x7x8x28xf32, #tpu.memory_space<vmem>>, vector<1x6x8x28xf32>
    %115 = vector.shape_cast %114 : vector<1x6x8x28xf32> to vector<6x8x28xf32>
    %116 = vector.shape_cast %115 : vector<6x8x28xf32> to vector<48x28xf32>
    %c0_141 = arith.constant 0 : index
    %c0_142 = arith.constant 0 : index
    %c0_143 = arith.constant 0 : index
    %c0_144 = arith.constant 0 : index
    %117 = vector.load %arg2[%c0_141, %c0_142, %c0_143, %c0_144] : memref<5x2x28x120xf32, #tpu.memory_space<vmem>>, vector<1x1x28x120xf32>
    %118 = vector.shape_cast %117 : vector<1x1x28x120xf32> to vector<28x120xf32>
    %cst_145 = arith.constant dense<0.000000e+00> : vector<48x120xf32>
    %119 = tpu.matmul %116, %118, %cst_145 {dimension_numbers = #tpu.dot_dimension_numbers<[1], [0], [0], [1], [0, 0, 1, 1], [], []>} : vector<48x28xf32>, vector<28x120xf32>, vector<48x120xf32> -> vector<48x120xf32>
    %c0_146 = arith.constant 0 : index
    %c1_147 = arith.constant 1 : index
    %c0_148 = arith.constant 0 : index
    %c0_149 = arith.constant 0 : index
    %120 = vector.load %arg2[%c0_146, %c1_147, %c0_148, %c0_149] : memref<5x2x28x120xf32, #tpu.memory_space<vmem>>, vector<1x1x28x120xf32>
    %121 = vector.shape_cast %120 : vector<1x1x28x120xf32> to vector<28x120xf32>
    %cst_150 = arith.constant dense<0.000000e+00> : vector<48x120xf32>
    %122 = tpu.matmul %116, %121, %cst_150 {dimension_numbers = #tpu.dot_dimension_numbers<[1], [0], [0], [1], [0, 0, 1, 1], [], []>} : vector<48x28xf32>, vector<28x120xf32>, vector<48x120xf32> -> vector<48x120xf32>
    %c3_151 = arith.constant 3 : index
    %c0_152 = arith.constant 0 : index
    %c0_153 = arith.constant 0 : index
    %c0_154 = arith.constant 0 : index
    %123 = vector.load %arg1[%c3_151, %c0_152, %c0_153, %c0_154] : memref<4x7x8x28xf32, #tpu.memory_space<vmem>>, vector<1x6x8x28xf32>
    %124 = vector.shape_cast %123 : vector<1x6x8x28xf32> to vector<6x8x28xf32>
    %125 = vector.shape_cast %124 : vector<6x8x28xf32> to vector<48x28xf32>
    %c1_155 = arith.constant 1 : index
    %c0_156 = arith.constant 0 : index
    %c0_157 = arith.constant 0 : index
    %c0_158 = arith.constant 0 : index
    %126 = vector.load %arg2[%c1_155, %c0_156, %c0_157, %c0_158] : memref<5x2x28x120xf32, #tpu.memory_space<vmem>>, vector<1x1x28x120xf32>
    %127 = vector.shape_cast %126 : vector<1x1x28x120xf32> to vector<28x120xf32>
    %cst_159 = arith.constant dense<0.000000e+00> : vector<48x120xf32>
    %128 = tpu.matmul %125, %127, %cst_159 {dimension_numbers = #tpu.dot_dimension_numbers<[1], [0], [0], [1], [0, 0, 1, 1], [], []>} : vector<48x28xf32>, vector<28x120xf32>, vector<48x120xf32> -> vector<48x120xf32>
    %129 = arith.addf %119, %128 : vector<48x120xf32>
    %c1_160 = arith.constant 1 : index
    %c1_161 = arith.constant 1 : index
    %c0_162 = arith.constant 0 : index
    %c0_163 = arith.constant 0 : index
    %130 = vector.load %arg2[%c1_160, %c1_161, %c0_162, %c0_163] : memref<5x2x28x120xf32, #tpu.memory_space<vmem>>, vector<1x1x28x120xf32>
    %131 = vector.shape_cast %130 : vector<1x1x28x120xf32> to vector<28x120xf32>
    %cst_164 = arith.constant dense<0.000000e+00> : vector<48x120xf32>
    %132 = tpu.matmul %125, %131, %cst_164 {dimension_numbers = #tpu.dot_dimension_numbers<[1], [0], [0], [1], [0, 0, 1, 1], [], []>} : vector<48x28xf32>, vector<28x120xf32>, vector<48x120xf32> -> vector<48x120xf32>
    %133 = arith.addf %122, %132 : vector<48x120xf32>
    %c0_165 = arith.constant 0 : index
    %c1_166 = arith.constant 1 : index
    %c0_167 = arith.constant 0 : index
    %c0_168 = arith.constant 0 : index
    %134 = vector.load %arg1[%c0_165, %c1_166, %c0_167, %c0_168] : memref<4x7x8x28xf32, #tpu.memory_space<vmem>>, vector<1x6x8x28xf32>
    %135 = vector.shape_cast %134 : vector<1x6x8x28xf32> to vector<6x8x28xf32>
    %136 = vector.shape_cast %135 : vector<6x8x28xf32> to vector<48x28xf32>
    %c2_169 = arith.constant 2 : index
    %c0_170 = arith.constant 0 : index
    %c0_171 = arith.constant 0 : index
    %c0_172 = arith.constant 0 : index
    %137 = vector.load %arg2[%c2_169, %c0_170, %c0_171, %c0_172] : memref<5x2x28x120xf32, #tpu.memory_space<vmem>>, vector<1x1x28x120xf32>
    %138 = vector.shape_cast %137 : vector<1x1x28x120xf32> to vector<28x120xf32>
    %cst_173 = arith.constant dense<0.000000e+00> : vector<48x120xf32>
    %139 = tpu.matmul %136, %138, %cst_173 {dimension_numbers = #tpu.dot_dimension_numbers<[1], [0], [0], [1], [0, 0, 1, 1], [], []>} : vector<48x28xf32>, vector<28x120xf32>, vector<48x120xf32> -> vector<48x120xf32>
    %140 = arith.addf %129, %139 : vector<48x120xf32>
    %c2_174 = arith.constant 2 : index
    %c1_175 = arith.constant 1 : index
    %c0_176 = arith.constant 0 : index
    %c0_177 = arith.constant 0 : index
    %141 = vector.load %arg2[%c2_174, %c1_175, %c0_176, %c0_177] : memref<5x2x28x120xf32, #tpu.memory_space<vmem>>, vector<1x1x28x120xf32>
    %142 = vector.shape_cast %141 : vector<1x1x28x120xf32> to vector<28x120xf32>
    %cst_178 = arith.constant dense<0.000000e+00> : vector<48x120xf32>
    %143 = tpu.matmul %136, %142, %cst_178 {dimension_numbers = #tpu.dot_dimension_numbers<[1], [0], [0], [1], [0, 0, 1, 1], [], []>} : vector<48x28xf32>, vector<28x120xf32>, vector<48x120xf32> -> vector<48x120xf32>
    %144 = arith.addf %133, %143 : vector<48x120xf32>
    %c1_179 = arith.constant 1 : index
    %c1_180 = arith.constant 1 : index
    %c0_181 = arith.constant 0 : index
    %c0_182 = arith.constant 0 : index
    %145 = vector.load %arg1[%c1_179, %c1_180, %c0_181, %c0_182] : memref<4x7x8x28xf32, #tpu.memory_space<vmem>>, vector<1x6x8x28xf32>
    %146 = vector.shape_cast %145 : vector<1x6x8x28xf32> to vector<6x8x28xf32>
    %147 = vector.shape_cast %146 : vector<6x8x28xf32> to vector<48x28xf32>
    %c3_183 = arith.constant 3 : index
    %c0_184 = arith.constant 0 : index
    %c0_185 = arith.constant 0 : index
    %c0_186 = arith.constant 0 : index
    %148 = vector.load %arg2[%c3_183, %c0_184, %c0_185, %c0_186] : memref<5x2x28x120xf32, #tpu.memory_space<vmem>>, vector<1x1x28x120xf32>
    %149 = vector.shape_cast %148 : vector<1x1x28x120xf32> to vector<28x120xf32>
    %cst_187 = arith.constant dense<0.000000e+00> : vector<48x120xf32>
    %150 = tpu.matmul %147, %149, %cst_187 {dimension_numbers = #tpu.dot_dimension_numbers<[1], [0], [0], [1], [0, 0, 1, 1], [], []>} : vector<48x28xf32>, vector<28x120xf32>, vector<48x120xf32> -> vector<48x120xf32>
    %151 = arith.addf %140, %150 : vector<48x120xf32>
    %c3_188 = arith.constant 3 : index
    %c1_189 = arith.constant 1 : index
    %c0_190 = arith.constant 0 : index
    %c0_191 = arith.constant 0 : index
    %152 = vector.load %arg2[%c3_188, %c1_189, %c0_190, %c0_191] : memref<5x2x28x120xf32, #tpu.memory_space<vmem>>, vector<1x1x28x120xf32>
    %153 = vector.shape_cast %152 : vector<1x1x28x120xf32> to vector<28x120xf32>
    %cst_192 = arith.constant dense<0.000000e+00> : vector<48x120xf32>
    %154 = tpu.matmul %147, %153, %cst_192 {dimension_numbers = #tpu.dot_dimension_numbers<[1], [0], [0], [1], [0, 0, 1, 1], [], []>} : vector<48x28xf32>, vector<28x120xf32>, vector<48x120xf32> -> vector<48x120xf32>
    %155 = arith.addf %144, %154 : vector<48x120xf32>
    %c2_193 = arith.constant 2 : index
    %c1_194 = arith.constant 1 : index
    %c0_195 = arith.constant 0 : index
    %c0_196 = arith.constant 0 : index
    %156 = vector.load %arg1[%c2_193, %c1_194, %c0_195, %c0_196] : memref<4x7x8x28xf32, #tpu.memory_space<vmem>>, vector<1x6x8x28xf32>
    %157 = vector.shape_cast %156 : vector<1x6x8x28xf32> to vector<6x8x28xf32>
    %158 = vector.shape_cast %157 : vector<6x8x28xf32> to vector<48x28xf32>
    %c4_197 = arith.constant 4 : index
    %c0_198 = arith.constant 0 : index
    %c0_199 = arith.constant 0 : index
    %c0_200 = arith.constant 0 : index
    %159 = vector.load %arg2[%c4_197, %c0_198, %c0_199, %c0_200] : memref<5x2x28x120xf32, #tpu.memory_space<vmem>>, vector<1x1x28x120xf32>
    %160 = vector.shape_cast %159 : vector<1x1x28x120xf32> to vector<28x120xf32>
    %cst_201 = arith.constant dense<0.000000e+00> : vector<48x120xf32>
    %161 = tpu.matmul %158, %160, %cst_201 {dimension_numbers = #tpu.dot_dimension_numbers<[1], [0], [0], [1], [0, 0, 1, 1], [], []>} : vector<48x28xf32>, vector<28x120xf32>, vector<48x120xf32> -> vector<48x120xf32>
    %162 = arith.addf %151, %161 : vector<48x120xf32>
    %c4_202 = arith.constant 4 : index
    %c1_203 = arith.constant 1 : index
    %c0_204 = arith.constant 0 : index
    %c0_205 = arith.constant 0 : index
    %163 = vector.load %arg2[%c4_202, %c1_203, %c0_204, %c0_205] : memref<5x2x28x120xf32, #tpu.memory_space<vmem>>, vector<1x1x28x120xf32>
    %164 = vector.shape_cast %163 : vector<1x1x28x120xf32> to vector<28x120xf32>
    %cst_206 = arith.constant dense<0.000000e+00> : vector<48x120xf32>
    %165 = tpu.matmul %158, %164, %cst_206 {dimension_numbers = #tpu.dot_dimension_numbers<[1], [0], [0], [1], [0, 0, 1, 1], [], []>} : vector<48x28xf32>, vector<28x120xf32>, vector<48x120xf32> -> vector<48x120xf32>
    %166 = arith.addf %155, %165 : vector<48x120xf32>
    %c3_207 = arith.constant 3 : index
    %c0_208 = arith.constant 0 : index
    %c0_209 = arith.constant 0 : index
    %c0_210 = arith.constant 0 : index
    %167 = vector.load %arg1[%c3_207, %c0_208, %c0_209, %c0_210] : memref<4x7x8x28xf32, #tpu.memory_space<vmem>>, vector<1x6x8x28xf32>
    %168 = vector.shape_cast %167 : vector<1x6x8x28xf32> to vector<6x8x28xf32>
    %169 = vector.shape_cast %168 : vector<6x8x28xf32> to vector<48x28xf32>
    %c0_211 = arith.constant 0 : index
    %c0_212 = arith.constant 0 : index
    %c0_213 = arith.constant 0 : index
    %c0_214 = arith.constant 0 : index
    %170 = vector.load %arg2[%c0_211, %c0_212, %c0_213, %c0_214] : memref<5x2x28x120xf32, #tpu.memory_space<vmem>>, vector<1x1x28x120xf32>
    %171 = vector.shape_cast %170 : vector<1x1x28x120xf32> to vector<28x120xf32>
    %cst_215 = arith.constant dense<0.000000e+00> : vector<48x120xf32>
    %172 = tpu.matmul %169, %171, %cst_215 {dimension_numbers = #tpu.dot_dimension_numbers<[1], [0], [0], [1], [0, 0, 1, 1], [], []>} : vector<48x28xf32>, vector<28x120xf32>, vector<48x120xf32> -> vector<48x120xf32>
    %c0_216 = arith.constant 0 : index
    %c1_217 = arith.constant 1 : index
    %c0_218 = arith.constant 0 : index
    %c0_219 = arith.constant 0 : index
    %173 = vector.load %arg2[%c0_216, %c1_217, %c0_218, %c0_219] : memref<5x2x28x120xf32, #tpu.memory_space<vmem>>, vector<1x1x28x120xf32>
    %174 = vector.shape_cast %173 : vector<1x1x28x120xf32> to vector<28x120xf32>
    %cst_220 = arith.constant dense<0.000000e+00> : vector<48x120xf32>
    %175 = tpu.matmul %169, %174, %cst_220 {dimension_numbers = #tpu.dot_dimension_numbers<[1], [0], [0], [1], [0, 0, 1, 1], [], []>} : vector<48x28xf32>, vector<28x120xf32>, vector<48x120xf32> -> vector<48x120xf32>
    %c0_221 = arith.constant 0 : index
    %c1_222 = arith.constant 1 : index
    %c0_223 = arith.constant 0 : index
    %c0_224 = arith.constant 0 : index
    %176 = vector.load %arg1[%c0_221, %c1_222, %c0_223, %c0_224] : memref<4x7x8x28xf32, #tpu.memory_space<vmem>>, vector<1x6x8x28xf32>
    %177 = vector.shape_cast %176 : vector<1x6x8x28xf32> to vector<6x8x28xf32>
    %178 = vector.shape_cast %177 : vector<6x8x28xf32> to vector<48x28xf32>
    %c1_225 = arith.constant 1 : index
    %c0_226 = arith.constant 0 : index
    %c0_227 = arith.constant 0 : index
    %c0_228 = arith.constant 0 : index
    %179 = vector.load %arg2[%c1_225, %c0_226, %c0_227, %c0_228] : memref<5x2x28x120xf32, #tpu.memory_space<vmem>>, vector<1x1x28x120xf32>
    %180 = vector.shape_cast %179 : vector<1x1x28x120xf32> to vector<28x120xf32>
    %cst_229 = arith.constant dense<0.000000e+00> : vector<48x120xf32>
    %181 = tpu.matmul %178, %180, %cst_229 {dimension_numbers = #tpu.dot_dimension_numbers<[1], [0], [0], [1], [0, 0, 1, 1], [], []>} : vector<48x28xf32>, vector<28x120xf32>, vector<48x120xf32> -> vector<48x120xf32>
    %182 = arith.addf %172, %181 : vector<48x120xf32>
    %c1_230 = arith.constant 1 : index
    %c1_231 = arith.constant 1 : index
    %c0_232 = arith.constant 0 : index
    %c0_233 = arith.constant 0 : index
    %183 = vector.load %arg2[%c1_230, %c1_231, %c0_232, %c0_233] : memref<5x2x28x120xf32, #tpu.memory_space<vmem>>, vector<1x1x28x120xf32>
    %184 = vector.shape_cast %183 : vector<1x1x28x120xf32> to vector<28x120xf32>
    %cst_234 = arith.constant dense<0.000000e+00> : vector<48x120xf32>
    %185 = tpu.matmul %178, %184, %cst_234 {dimension_numbers = #tpu.dot_dimension_numbers<[1], [0], [0], [1], [0, 0, 1, 1], [], []>} : vector<48x28xf32>, vector<28x120xf32>, vector<48x120xf32> -> vector<48x120xf32>
    %186 = arith.addf %175, %185 : vector<48x120xf32>
    %c1_235 = arith.constant 1 : index
    %c1_236 = arith.constant 1 : index
    %c0_237 = arith.constant 0 : index
    %c0_238 = arith.constant 0 : index
    %187 = vector.load %arg1[%c1_235, %c1_236, %c0_237, %c0_238] : memref<4x7x8x28xf32, #tpu.memory_space<vmem>>, vector<1x6x8x28xf32>
    %188 = vector.shape_cast %187 : vector<1x6x8x28xf32> to vector<6x8x28xf32>
    %189 = vector.shape_cast %188 : vector<6x8x28xf32> to vector<48x28xf32>
    %c2_239 = arith.constant 2 : index
    %c0_240 = arith.constant 0 : index
    %c0_241 = arith.constant 0 : index
    %c0_242 = arith.constant 0 : index
    %190 = vector.load %arg2[%c2_239, %c0_240, %c0_241, %c0_242] : memref<5x2x28x120xf32, #tpu.memory_space<vmem>>, vector<1x1x28x120xf32>
    %191 = vector.shape_cast %190 : vector<1x1x28x120xf32> to vector<28x120xf32>
    %cst_243 = arith.constant dense<0.000000e+00> : vector<48x120xf32>
    %192 = tpu.matmul %189, %191, %cst_243 {dimension_numbers = #tpu.dot_dimension_numbers<[1], [0], [0], [1], [0, 0, 1, 1], [], []>} : vector<48x28xf32>, vector<28x120xf32>, vector<48x120xf32> -> vector<48x120xf32>
    %193 = arith.addf %182, %192 : vector<48x120xf32>
    %c2_244 = arith.constant 2 : index
    %c1_245 = arith.constant 1 : index
    %c0_246 = arith.constant 0 : index
    %c0_247 = arith.constant 0 : index
    %194 = vector.load %arg2[%c2_244, %c1_245, %c0_246, %c0_247] : memref<5x2x28x120xf32, #tpu.memory_space<vmem>>, vector<1x1x28x120xf32>
    %195 = vector.shape_cast %194 : vector<1x1x28x120xf32> to vector<28x120xf32>
    %cst_248 = arith.constant dense<0.000000e+00> : vector<48x120xf32>
    %196 = tpu.matmul %189, %195, %cst_248 {dimension_numbers = #tpu.dot_dimension_numbers<[1], [0], [0], [1], [0, 0, 1, 1], [], []>} : vector<48x28xf32>, vector<28x120xf32>, vector<48x120xf32> -> vector<48x120xf32>
    %197 = arith.addf %186, %196 : vector<48x120xf32>
    %c2_249 = arith.constant 2 : index
    %c1_250 = arith.constant 1 : index
    %c0_251 = arith.constant 0 : index
    %c0_252 = arith.constant 0 : index
    %198 = vector.load %arg1[%c2_249, %c1_250, %c0_251, %c0_252] : memref<4x7x8x28xf32, #tpu.memory_space<vmem>>, vector<1x6x8x28xf32>
    %199 = vector.shape_cast %198 : vector<1x6x8x28xf32> to vector<6x8x28xf32>
    %200 = vector.shape_cast %199 : vector<6x8x28xf32> to vector<48x28xf32>
    %c3_253 = arith.constant 3 : index
    %c0_254 = arith.constant 0 : index
    %c0_255 = arith.constant 0 : index
    %c0_256 = arith.constant 0 : index
    %201 = vector.load %arg2[%c3_253, %c0_254, %c0_255, %c0_256] : memref<5x2x28x120xf32, #tpu.memory_space<vmem>>, vector<1x1x28x120xf32>
    %202 = vector.shape_cast %201 : vector<1x1x28x120xf32> to vector<28x120xf32>
    %cst_257 = arith.constant dense<0.000000e+00> : vector<48x120xf32>
    %203 = tpu.matmul %200, %202, %cst_257 {dimension_numbers = #tpu.dot_dimension_numbers<[1], [0], [0], [1], [0, 0, 1, 1], [], []>} : vector<48x28xf32>, vector<28x120xf32>, vector<48x120xf32> -> vector<48x120xf32>
    %204 = arith.addf %193, %203 : vector<48x120xf32>
    %c3_258 = arith.constant 3 : index
    %c1_259 = arith.constant 1 : index
    %c0_260 = arith.constant 0 : index
    %c0_261 = arith.constant 0 : index
    %205 = vector.load %arg2[%c3_258, %c1_259, %c0_260, %c0_261] : memref<5x2x28x120xf32, #tpu.memory_space<vmem>>, vector<1x1x28x120xf32>
    %206 = vector.shape_cast %205 : vector<1x1x28x120xf32> to vector<28x120xf32>
    %cst_262 = arith.constant dense<0.000000e+00> : vector<48x120xf32>
    %207 = tpu.matmul %200, %206, %cst_262 {dimension_numbers = #tpu.dot_dimension_numbers<[1], [0], [0], [1], [0, 0, 1, 1], [], []>} : vector<48x28xf32>, vector<28x120xf32>, vector<48x120xf32> -> vector<48x120xf32>
    %208 = arith.addf %197, %207 : vector<48x120xf32>
    %c3_263 = arith.constant 3 : index
    %c1_264 = arith.constant 1 : index
    %c0_265 = arith.constant 0 : index
    %c0_266 = arith.constant 0 : index
    %209 = vector.load %arg1[%c3_263, %c1_264, %c0_265, %c0_266] : memref<4x7x8x28xf32, #tpu.memory_space<vmem>>, vector<1x6x8x28xf32>
    %210 = vector.shape_cast %209 : vector<1x6x8x28xf32> to vector<6x8x28xf32>
    %211 = vector.shape_cast %210 : vector<6x8x28xf32> to vector<48x28xf32>
    %c4_267 = arith.constant 4 : index
    %c0_268 = arith.constant 0 : index
    %c0_269 = arith.constant 0 : index
    %c0_270 = arith.constant 0 : index
    %212 = vector.load %arg2[%c4_267, %c0_268, %c0_269, %c0_270] : memref<5x2x28x120xf32, #tpu.memory_space<vmem>>, vector<1x1x28x120xf32>
    %213 = vector.shape_cast %212 : vector<1x1x28x120xf32> to vector<28x120xf32>
    %cst_271 = arith.constant dense<0.000000e+00> : vector<48x120xf32>
    %214 = tpu.matmul %211, %213, %cst_271 {dimension_numbers = #tpu.dot_dimension_numbers<[1], [0], [0], [1], [0, 0, 1, 1], [], []>} : vector<48x28xf32>, vector<28x120xf32>, vector<48x120xf32> -> vector<48x120xf32>
    %215 = arith.addf %204, %214 : vector<48x120xf32>
    %c4_272 = arith.constant 4 : index
    %c1_273 = arith.constant 1 : index
    %c0_274 = arith.constant 0 : index
    %c0_275 = arith.constant 0 : index
    %216 = vector.load %arg2[%c4_272, %c1_273, %c0_274, %c0_275] : memref<5x2x28x120xf32, #tpu.memory_space<vmem>>, vector<1x1x28x120xf32>
    %217 = vector.shape_cast %216 : vector<1x1x28x120xf32> to vector<28x120xf32>
    %cst_276 = arith.constant dense<0.000000e+00> : vector<48x120xf32>
    %218 = tpu.matmul %211, %217, %cst_276 {dimension_numbers = #tpu.dot_dimension_numbers<[1], [0], [0], [1], [0, 0, 1, 1], [], []>} : vector<48x28xf32>, vector<28x120xf32>, vector<48x120xf32> -> vector<48x120xf32>
    %219 = arith.addf %208, %218 : vector<48x120xf32>
    %220 = arith.maximumf %162, %166 : vector<48x120xf32>
    %221 = arith.maximumf %215, %219 : vector<48x120xf32>
    %222 = arith.maximumf %220, %221 : vector<48x120xf32>
    %c0_277 = arith.constant 0 : index
    %c0_278 = arith.constant 0 : index
    %223 = vector.load %arg3[%c0_277, %c0_278] : memref<1x120xf32, #tpu.memory_space<vmem>>, vector<1x120xf32>
    %224 = vector.broadcast %223 : vector<1x120xf32> to vector<48x120xf32>
    %225 = arith.addf %222, %224 : vector<48x120xf32>
    %cst_279 = arith.constant 0.000000e+00 : f32
    %226 = vector.broadcast %cst_279 : f32 to vector<48x120xf32>
    %227 = arith.maximumf %225, %226 : vector<48x120xf32>
    %228 = vector.extract_strided_slice %113 {offsets = [0, 0], sizes = [32, 120], strides = [1, 1]} : vector<48x120xf32> to vector<32x120xf32>
    %c0_280 = arith.constant 0 : index
    %c0_281 = arith.constant 0 : index
    %c0_282 = arith.constant 0 : index
    %c0_283 = arith.constant 0 : index
    %229 = vector.load %arg4[%c0_280, %c0_281, %c0_282, %c0_283] : memref<5x2x120x80xf32, #tpu.memory_space<vmem>>, vector<1x1x120x80xf32>
    %230 = vector.shape_cast %229 : vector<1x1x120x80xf32> to vector<120x80xf32>
    %cst_284 = arith.constant dense<0.000000e+00> : vector<32x80xf32>
    %231 = tpu.matmul %228, %230, %cst_284 {dimension_numbers = #tpu.dot_dimension_numbers<[1], [0], [0], [1], [0, 0, 1, 1], [], []>} : vector<32x120xf32>, vector<120x80xf32>, vector<32x80xf32> -> vector<32x80xf32>
    %c0_285 = arith.constant 0 : index
    %c1_286 = arith.constant 1 : index
    %c0_287 = arith.constant 0 : index
    %c0_288 = arith.constant 0 : index
    %232 = vector.load %arg4[%c0_285, %c1_286, %c0_287, %c0_288] : memref<5x2x120x80xf32, #tpu.memory_space<vmem>>, vector<1x1x120x80xf32>
    %233 = vector.shape_cast %232 : vector<1x1x120x80xf32> to vector<120x80xf32>
    %cst_289 = arith.constant dense<0.000000e+00> : vector<32x80xf32>
    %234 = tpu.matmul %228, %233, %cst_289 {dimension_numbers = #tpu.dot_dimension_numbers<[1], [0], [0], [1], [0, 0, 1, 1], [], []>} : vector<32x120xf32>, vector<120x80xf32>, vector<32x80xf32> -> vector<32x80xf32>
    %235 = vector.extract_strided_slice %227 {offsets = [0, 0], sizes = [32, 120], strides = [1, 1]} : vector<48x120xf32> to vector<32x120xf32>
    %c1_290 = arith.constant 1 : index
    %c0_291 = arith.constant 0 : index
    %c0_292 = arith.constant 0 : index
    %c0_293 = arith.constant 0 : index
    %236 = vector.load %arg4[%c1_290, %c0_291, %c0_292, %c0_293] : memref<5x2x120x80xf32, #tpu.memory_space<vmem>>, vector<1x1x120x80xf32>
    %237 = vector.shape_cast %236 : vector<1x1x120x80xf32> to vector<120x80xf32>
    %cst_294 = arith.constant dense<0.000000e+00> : vector<32x80xf32>
    %238 = tpu.matmul %235, %237, %cst_294 {dimension_numbers = #tpu.dot_dimension_numbers<[1], [0], [0], [1], [0, 0, 1, 1], [], []>} : vector<32x120xf32>, vector<120x80xf32>, vector<32x80xf32> -> vector<32x80xf32>
    %239 = arith.addf %231, %238 : vector<32x80xf32>
    %c1_295 = arith.constant 1 : index
    %c1_296 = arith.constant 1 : index
    %c0_297 = arith.constant 0 : index
    %c0_298 = arith.constant 0 : index
    %240 = vector.load %arg4[%c1_295, %c1_296, %c0_297, %c0_298] : memref<5x2x120x80xf32, #tpu.memory_space<vmem>>, vector<1x1x120x80xf32>
    %241 = vector.shape_cast %240 : vector<1x1x120x80xf32> to vector<120x80xf32>
    %cst_299 = arith.constant dense<0.000000e+00> : vector<32x80xf32>
    %242 = tpu.matmul %235, %241, %cst_299 {dimension_numbers = #tpu.dot_dimension_numbers<[1], [0], [0], [1], [0, 0, 1, 1], [], []>} : vector<32x120xf32>, vector<120x80xf32>, vector<32x80xf32> -> vector<32x80xf32>
    %243 = arith.addf %234, %242 : vector<32x80xf32>
    %244 = vector.extract_strided_slice %113 {offsets = [8, 0], sizes = [32, 120], strides = [1, 1]} : vector<48x120xf32> to vector<32x120xf32>
    %c2_300 = arith.constant 2 : index
    %c0_301 = arith.constant 0 : index
    %c0_302 = arith.constant 0 : index
    %c0_303 = arith.constant 0 : index
    %245 = vector.load %arg4[%c2_300, %c0_301, %c0_302, %c0_303] : memref<5x2x120x80xf32, #tpu.memory_space<vmem>>, vector<1x1x120x80xf32>
    %246 = vector.shape_cast %245 : vector<1x1x120x80xf32> to vector<120x80xf32>
    %cst_304 = arith.constant dense<0.000000e+00> : vector<32x80xf32>
    %247 = tpu.matmul %244, %246, %cst_304 {dimension_numbers = #tpu.dot_dimension_numbers<[1], [0], [0], [1], [0, 0, 1, 1], [], []>} : vector<32x120xf32>, vector<120x80xf32>, vector<32x80xf32> -> vector<32x80xf32>
    %248 = arith.addf %239, %247 : vector<32x80xf32>
    %c2_305 = arith.constant 2 : index
    %c1_306 = arith.constant 1 : index
    %c0_307 = arith.constant 0 : index
    %c0_308 = arith.constant 0 : index
    %249 = vector.load %arg4[%c2_305, %c1_306, %c0_307, %c0_308] : memref<5x2x120x80xf32, #tpu.memory_space<vmem>>, vector<1x1x120x80xf32>
    %250 = vector.shape_cast %249 : vector<1x1x120x80xf32> to vector<120x80xf32>
    %cst_309 = arith.constant dense<0.000000e+00> : vector<32x80xf32>
    %251 = tpu.matmul %244, %250, %cst_309 {dimension_numbers = #tpu.dot_dimension_numbers<[1], [0], [0], [1], [0, 0, 1, 1], [], []>} : vector<32x120xf32>, vector<120x80xf32>, vector<32x80xf32> -> vector<32x80xf32>
    %252 = arith.addf %243, %251 : vector<32x80xf32>
    %253 = vector.extract_strided_slice %227 {offsets = [8, 0], sizes = [32, 120], strides = [1, 1]} : vector<48x120xf32> to vector<32x120xf32>
    %c3_310 = arith.constant 3 : index
    %c0_311 = arith.constant 0 : index
    %c0_312 = arith.constant 0 : index
    %c0_313 = arith.constant 0 : index
    %254 = vector.load %arg4[%c3_310, %c0_311, %c0_312, %c0_313] : memref<5x2x120x80xf32, #tpu.memory_space<vmem>>, vector<1x1x120x80xf32>
    %255 = vector.shape_cast %254 : vector<1x1x120x80xf32> to vector<120x80xf32>
    %cst_314 = arith.constant dense<0.000000e+00> : vector<32x80xf32>
    %256 = tpu.matmul %253, %255, %cst_314 {dimension_numbers = #tpu.dot_dimension_numbers<[1], [0], [0], [1], [0, 0, 1, 1], [], []>} : vector<32x120xf32>, vector<120x80xf32>, vector<32x80xf32> -> vector<32x80xf32>
    %257 = arith.addf %248, %256 : vector<32x80xf32>
    %c3_315 = arith.constant 3 : index
    %c1_316 = arith.constant 1 : index
    %c0_317 = arith.constant 0 : index
    %c0_318 = arith.constant 0 : index
    %258 = vector.load %arg4[%c3_315, %c1_316, %c0_317, %c0_318] : memref<5x2x120x80xf32, #tpu.memory_space<vmem>>, vector<1x1x120x80xf32>
    %259 = vector.shape_cast %258 : vector<1x1x120x80xf32> to vector<120x80xf32>
    %cst_319 = arith.constant dense<0.000000e+00> : vector<32x80xf32>
    %260 = tpu.matmul %253, %259, %cst_319 {dimension_numbers = #tpu.dot_dimension_numbers<[1], [0], [0], [1], [0, 0, 1, 1], [], []>} : vector<32x120xf32>, vector<120x80xf32>, vector<32x80xf32> -> vector<32x80xf32>
    %261 = arith.addf %252, %260 : vector<32x80xf32>
    %262 = vector.extract_strided_slice %113 {offsets = [16, 0], sizes = [32, 120], strides = [1, 1]} : vector<48x120xf32> to vector<32x120xf32>
    %c4_320 = arith.constant 4 : index
    %c0_321 = arith.constant 0 : index
    %c0_322 = arith.constant 0 : index
    %c0_323 = arith.constant 0 : index
    %263 = vector.load %arg4[%c4_320, %c0_321, %c0_322, %c0_323] : memref<5x2x120x80xf32, #tpu.memory_space<vmem>>, vector<1x1x120x80xf32>
    %264 = vector.shape_cast %263 : vector<1x1x120x80xf32> to vector<120x80xf32>
    %cst_324 = arith.constant dense<0.000000e+00> : vector<32x80xf32>
    %265 = tpu.matmul %262, %264, %cst_324 {dimension_numbers = #tpu.dot_dimension_numbers<[1], [0], [0], [1], [0, 0, 1, 1], [], []>} : vector<32x120xf32>, vector<120x80xf32>, vector<32x80xf32> -> vector<32x80xf32>
    %266 = arith.addf %257, %265 : vector<32x80xf32>
    %c4_325 = arith.constant 4 : index
    %c1_326 = arith.constant 1 : index
    %c0_327 = arith.constant 0 : index
    %c0_328 = arith.constant 0 : index
    %267 = vector.load %arg4[%c4_325, %c1_326, %c0_327, %c0_328] : memref<5x2x120x80xf32, #tpu.memory_space<vmem>>, vector<1x1x120x80xf32>
    %268 = vector.shape_cast %267 : vector<1x1x120x80xf32> to vector<120x80xf32>
    %cst_329 = arith.constant dense<0.000000e+00> : vector<32x80xf32>
    %269 = tpu.matmul %262, %268, %cst_329 {dimension_numbers = #tpu.dot_dimension_numbers<[1], [0], [0], [1], [0, 0, 1, 1], [], []>} : vector<32x120xf32>, vector<120x80xf32>, vector<32x80xf32> -> vector<32x80xf32>
    %270 = arith.addf %261, %269 : vector<32x80xf32>
    %271 = vector.extract_strided_slice %227 {offsets = [0, 0], sizes = [32, 120], strides = [1, 1]} : vector<48x120xf32> to vector<32x120xf32>
    %c0_330 = arith.constant 0 : index
    %c0_331 = arith.constant 0 : index
    %c0_332 = arith.constant 0 : index
    %c0_333 = arith.constant 0 : index
    %272 = vector.load %arg4[%c0_330, %c0_331, %c0_332, %c0_333] : memref<5x2x120x80xf32, #tpu.memory_space<vmem>>, vector<1x1x120x80xf32>
    %273 = vector.shape_cast %272 : vector<1x1x120x80xf32> to vector<120x80xf32>
    %cst_334 = arith.constant dense<0.000000e+00> : vector<32x80xf32>
    %274 = tpu.matmul %271, %273, %cst_334 {dimension_numbers = #tpu.dot_dimension_numbers<[1], [0], [0], [1], [0, 0, 1, 1], [], []>} : vector<32x120xf32>, vector<120x80xf32>, vector<32x80xf32> -> vector<32x80xf32>
    %c0_335 = arith.constant 0 : index
    %c1_336 = arith.constant 1 : index
    %c0_337 = arith.constant 0 : index
    %c0_338 = arith.constant 0 : index
    %275 = vector.load %arg4[%c0_335, %c1_336, %c0_337, %c0_338] : memref<5x2x120x80xf32, #tpu.memory_space<vmem>>, vector<1x1x120x80xf32>
    %276 = vector.shape_cast %275 : vector<1x1x120x80xf32> to vector<120x80xf32>
    %cst_339 = arith.constant dense<0.000000e+00> : vector<32x80xf32>
    %277 = tpu.matmul %271, %276, %cst_339 {dimension_numbers = #tpu.dot_dimension_numbers<[1], [0], [0], [1], [0, 0, 1, 1], [], []>} : vector<32x120xf32>, vector<120x80xf32>, vector<32x80xf32> -> vector<32x80xf32>
    %278 = vector.extract_strided_slice %113 {offsets = [8, 0], sizes = [32, 120], strides = [1, 1]} : vector<48x120xf32> to vector<32x120xf32>
    %c1_340 = arith.constant 1 : index
    %c0_341 = arith.constant 0 : index
    %c0_342 = arith.constant 0 : index
    %c0_343 = arith.constant 0 : index
    %279 = vector.load %arg4[%c1_340, %c0_341, %c0_342, %c0_343] : memref<5x2x120x80xf32, #tpu.memory_space<vmem>>, vector<1x1x120x80xf32>
    %280 = vector.shape_cast %279 : vector<1x1x120x80xf32> to vector<120x80xf32>
    %cst_344 = arith.constant dense<0.000000e+00> : vector<32x80xf32>
    %281 = tpu.matmul %278, %280, %cst_344 {dimension_numbers = #tpu.dot_dimension_numbers<[1], [0], [0], [1], [0, 0, 1, 1], [], []>} : vector<32x120xf32>, vector<120x80xf32>, vector<32x80xf32> -> vector<32x80xf32>
    %282 = arith.addf %274, %281 : vector<32x80xf32>
    %c1_345 = arith.constant 1 : index
    %c1_346 = arith.constant 1 : index
    %c0_347 = arith.constant 0 : index
    %c0_348 = arith.constant 0 : index
    %283 = vector.load %arg4[%c1_345, %c1_346, %c0_347, %c0_348] : memref<5x2x120x80xf32, #tpu.memory_space<vmem>>, vector<1x1x120x80xf32>
    %284 = vector.shape_cast %283 : vector<1x1x120x80xf32> to vector<120x80xf32>
    %cst_349 = arith.constant dense<0.000000e+00> : vector<32x80xf32>
    %285 = tpu.matmul %278, %284, %cst_349 {dimension_numbers = #tpu.dot_dimension_numbers<[1], [0], [0], [1], [0, 0, 1, 1], [], []>} : vector<32x120xf32>, vector<120x80xf32>, vector<32x80xf32> -> vector<32x80xf32>
    %286 = arith.addf %277, %285 : vector<32x80xf32>
    %287 = vector.extract_strided_slice %227 {offsets = [8, 0], sizes = [32, 120], strides = [1, 1]} : vector<48x120xf32> to vector<32x120xf32>
    %c2_350 = arith.constant 2 : index
    %c0_351 = arith.constant 0 : index
    %c0_352 = arith.constant 0 : index
    %c0_353 = arith.constant 0 : index
    %288 = vector.load %arg4[%c2_350, %c0_351, %c0_352, %c0_353] : memref<5x2x120x80xf32, #tpu.memory_space<vmem>>, vector<1x1x120x80xf32>
    %289 = vector.shape_cast %288 : vector<1x1x120x80xf32> to vector<120x80xf32>
    %cst_354 = arith.constant dense<0.000000e+00> : vector<32x80xf32>
    %290 = tpu.matmul %287, %289, %cst_354 {dimension_numbers = #tpu.dot_dimension_numbers<[1], [0], [0], [1], [0, 0, 1, 1], [], []>} : vector<32x120xf32>, vector<120x80xf32>, vector<32x80xf32> -> vector<32x80xf32>
    %291 = arith.addf %282, %290 : vector<32x80xf32>
    %c2_355 = arith.constant 2 : index
    %c1_356 = arith.constant 1 : index
    %c0_357 = arith.constant 0 : index
    %c0_358 = arith.constant 0 : index
    %292 = vector.load %arg4[%c2_355, %c1_356, %c0_357, %c0_358] : memref<5x2x120x80xf32, #tpu.memory_space<vmem>>, vector<1x1x120x80xf32>
    %293 = vector.shape_cast %292 : vector<1x1x120x80xf32> to vector<120x80xf32>
    %cst_359 = arith.constant dense<0.000000e+00> : vector<32x80xf32>
    %294 = tpu.matmul %287, %293, %cst_359 {dimension_numbers = #tpu.dot_dimension_numbers<[1], [0], [0], [1], [0, 0, 1, 1], [], []>} : vector<32x120xf32>, vector<120x80xf32>, vector<32x80xf32> -> vector<32x80xf32>
    %295 = arith.addf %286, %294 : vector<32x80xf32>
    %296 = vector.extract_strided_slice %113 {offsets = [16, 0], sizes = [32, 120], strides = [1, 1]} : vector<48x120xf32> to vector<32x120xf32>
    %c3_360 = arith.constant 3 : index
    %c0_361 = arith.constant 0 : index
    %c0_362 = arith.constant 0 : index
    %c0_363 = arith.constant 0 : index
    %297 = vector.load %arg4[%c3_360, %c0_361, %c0_362, %c0_363] : memref<5x2x120x80xf32, #tpu.memory_space<vmem>>, vector<1x1x120x80xf32>
    %298 = vector.shape_cast %297 : vector<1x1x120x80xf32> to vector<120x80xf32>
    %cst_364 = arith.constant dense<0.000000e+00> : vector<32x80xf32>
    %299 = tpu.matmul %296, %298, %cst_364 {dimension_numbers = #tpu.dot_dimension_numbers<[1], [0], [0], [1], [0, 0, 1, 1], [], []>} : vector<32x120xf32>, vector<120x80xf32>, vector<32x80xf32> -> vector<32x80xf32>
    %300 = arith.addf %291, %299 : vector<32x80xf32>
    %c3_365 = arith.constant 3 : index
    %c1_366 = arith.constant 1 : index
    %c0_367 = arith.constant 0 : index
    %c0_368 = arith.constant 0 : index
    %301 = vector.load %arg4[%c3_365, %c1_366, %c0_367, %c0_368] : memref<5x2x120x80xf32, #tpu.memory_space<vmem>>, vector<1x1x120x80xf32>
    %302 = vector.shape_cast %301 : vector<1x1x120x80xf32> to vector<120x80xf32>
    %cst_369 = arith.constant dense<0.000000e+00> : vector<32x80xf32>
    %303 = tpu.matmul %296, %302, %cst_369 {dimension_numbers = #tpu.dot_dimension_numbers<[1], [0], [0], [1], [0, 0, 1, 1], [], []>} : vector<32x120xf32>, vector<120x80xf32>, vector<32x80xf32> -> vector<32x80xf32>
    %304 = arith.addf %295, %303 : vector<32x80xf32>
    %305 = vector.extract_strided_slice %227 {offsets = [16, 0], sizes = [32, 120], strides = [1, 1]} : vector<48x120xf32> to vector<32x120xf32>
    %c4_370 = arith.constant 4 : index
    %c0_371 = arith.constant 0 : index
    %c0_372 = arith.constant 0 : index
    %c0_373 = arith.constant 0 : index
    %306 = vector.load %arg4[%c4_370, %c0_371, %c0_372, %c0_373] : memref<5x2x120x80xf32, #tpu.memory_space<vmem>>, vector<1x1x120x80xf32>
    %307 = vector.shape_cast %306 : vector<1x1x120x80xf32> to vector<120x80xf32>
    %cst_374 = arith.constant dense<0.000000e+00> : vector<32x80xf32>
    %308 = tpu.matmul %305, %307, %cst_374 {dimension_numbers = #tpu.dot_dimension_numbers<[1], [0], [0], [1], [0, 0, 1, 1], [], []>} : vector<32x120xf32>, vector<120x80xf32>, vector<32x80xf32> -> vector<32x80xf32>
    %309 = arith.addf %300, %308 : vector<32x80xf32>
    %c4_375 = arith.constant 4 : index
    %c1_376 = arith.constant 1 : index
    %c0_377 = arith.constant 0 : index
    %c0_378 = arith.constant 0 : index
    %310 = vector.load %arg4[%c4_375, %c1_376, %c0_377, %c0_378] : memref<5x2x120x80xf32, #tpu.memory_space<vmem>>, vector<1x1x120x80xf32>
    %311 = vector.shape_cast %310 : vector<1x1x120x80xf32> to vector<120x80xf32>
    %cst_379 = arith.constant dense<0.000000e+00> : vector<32x80xf32>
    %312 = tpu.matmul %305, %311, %cst_379 {dimension_numbers = #tpu.dot_dimension_numbers<[1], [0], [0], [1], [0, 0, 1, 1], [], []>} : vector<32x120xf32>, vector<120x80xf32>, vector<32x80xf32> -> vector<32x80xf32>
    %313 = arith.addf %304, %312 : vector<32x80xf32>
    %314 = arith.maximumf %266, %270 : vector<32x80xf32>
    %315 = arith.maximumf %309, %313 : vector<32x80xf32>
    %316 = arith.maximumf %314, %315 : vector<32x80xf32>
    %c0_380 = arith.constant 0 : index
    %c0_381 = arith.constant 0 : index
    %317 = vector.load %arg5[%c0_380, %c0_381] : memref<1x80xf32, #tpu.memory_space<vmem>>, vector<1x80xf32>
    %318 = vector.broadcast %317 : vector<1x80xf32> to vector<32x80xf32>
    %319 = arith.addf %316, %318 : vector<32x80xf32>
    %cst_382 = arith.constant 0.000000e+00 : f32
    %320 = vector.broadcast %cst_382 : f32 to vector<32x80xf32>
    %321 = arith.maximumf %319, %320 : vector<32x80xf32>
    %c0_383 = arith.constant 0 : index
    %c0_384 = arith.constant 0 : index
    %322 = vector.load %arg7[%c0_383, %c0_384] : memref<1x50xf32, #tpu.memory_space<vmem>>, vector<1x50xf32>
    %323 = vector.extract_strided_slice %321 {offsets = [0, 0], sizes = [8, 80], strides = [1, 1]} : vector<32x80xf32> to vector<8x80xf32>
    %c0_385 = arith.constant 0 : index
    %c0_386 = arith.constant 0 : index
    %c0_387 = arith.constant 0 : index
    %324 = vector.load %arg6[%c0_385, %c0_386, %c0_387] : memref<4x80x50xf32, #tpu.memory_space<vmem>>, vector<1x80x50xf32>
    %325 = vector.shape_cast %324 : vector<1x80x50xf32> to vector<80x50xf32>
    %cst_388 = arith.constant dense<0.000000e+00> : vector<8x50xf32>
    %326 = tpu.matmul %323, %325, %cst_388 {dimension_numbers = #tpu.dot_dimension_numbers<[1], [0], [0], [1], [0, 0, 1, 1], [], []>} : vector<8x80xf32>, vector<80x50xf32>, vector<8x50xf32> -> vector<8x50xf32>
    %327 = vector.broadcast %322 : vector<1x50xf32> to vector<8x50xf32>
    %328 = arith.addf %327, %326 : vector<8x50xf32>
    %329 = vector.extract_strided_slice %321 {offsets = [8, 0], sizes = [8, 80], strides = [1, 1]} : vector<32x80xf32> to vector<8x80xf32>
    %c1_389 = arith.constant 1 : index
    %c0_390 = arith.constant 0 : index
    %c0_391 = arith.constant 0 : index
    %330 = vector.load %arg6[%c1_389, %c0_390, %c0_391] : memref<4x80x50xf32, #tpu.memory_space<vmem>>, vector<1x80x50xf32>
    %331 = vector.shape_cast %330 : vector<1x80x50xf32> to vector<80x50xf32>
    %cst_392 = arith.constant dense<0.000000e+00> : vector<8x50xf32>
    %332 = tpu.matmul %329, %331, %cst_392 {dimension_numbers = #tpu.dot_dimension_numbers<[1], [0], [0], [1], [0, 0, 1, 1], [], []>} : vector<8x80xf32>, vector<80x50xf32>, vector<8x50xf32> -> vector<8x50xf32>
    %333 = arith.addf %328, %332 : vector<8x50xf32>
    %334 = vector.extract_strided_slice %321 {offsets = [16, 0], sizes = [8, 80], strides = [1, 1]} : vector<32x80xf32> to vector<8x80xf32>
    %c2_393 = arith.constant 2 : index
    %c0_394 = arith.constant 0 : index
    %c0_395 = arith.constant 0 : index
    %335 = vector.load %arg6[%c2_393, %c0_394, %c0_395] : memref<4x80x50xf32, #tpu.memory_space<vmem>>, vector<1x80x50xf32>
    %336 = vector.shape_cast %335 : vector<1x80x50xf32> to vector<80x50xf32>
    %cst_396 = arith.constant dense<0.000000e+00> : vector<8x50xf32>
    %337 = tpu.matmul %334, %336, %cst_396 {dimension_numbers = #tpu.dot_dimension_numbers<[1], [0], [0], [1], [0, 0, 1, 1], [], []>} : vector<8x80xf32>, vector<80x50xf32>, vector<8x50xf32> -> vector<8x50xf32>
    %338 = arith.addf %333, %337 : vector<8x50xf32>
    %339 = vector.extract_strided_slice %321 {offsets = [24, 0], sizes = [8, 80], strides = [1, 1]} : vector<32x80xf32> to vector<8x80xf32>
    %c3_397 = arith.constant 3 : index
    %c0_398 = arith.constant 0 : index
    %c0_399 = arith.constant 0 : index
    %340 = vector.load %arg6[%c3_397, %c0_398, %c0_399] : memref<4x80x50xf32, #tpu.memory_space<vmem>>, vector<1x80x50xf32>
    %341 = vector.shape_cast %340 : vector<1x80x50xf32> to vector<80x50xf32>
    %cst_400 = arith.constant dense<0.000000e+00> : vector<8x50xf32>
    %342 = tpu.matmul %339, %341, %cst_400 {dimension_numbers = #tpu.dot_dimension_numbers<[1], [0], [0], [1], [0, 0, 1, 1], [], []>} : vector<8x80xf32>, vector<80x50xf32>, vector<8x50xf32> -> vector<8x50xf32>
    %343 = arith.addf %338, %342 : vector<8x50xf32>
    %cst_401 = arith.constant 0.000000e+00 : f32
    %344 = vector.broadcast %cst_401 : f32 to vector<8x50xf32>
    %345 = arith.maximumf %343, %344 : vector<8x50xf32>
    %c0_402 = arith.constant 0 : index
    %c0_403 = arith.constant 0 : index
    %346 = vector.load %arg8[%c0_402, %c0_403] : memref<50x10xf32, #tpu.memory_space<vmem>>, vector<50x10xf32>
    %cst_404 = arith.constant dense<0.000000e+00> : vector<8x10xf32>
    %347 = tpu.matmul %345, %346, %cst_404 {dimension_numbers = #tpu.dot_dimension_numbers<[1], [0], [0], [1], [0, 0, 1, 1], [], []>} : vector<8x50xf32>, vector<50x10xf32>, vector<8x10xf32> -> vector<8x10xf32>
    %c0_405 = arith.constant 0 : index
    %c0_406 = arith.constant 0 : index
    %348 = vector.load %arg9[%c0_405, %c0_406] : memref<1x10xf32, #tpu.memory_space<vmem>>, vector<1x10xf32>
    %349 = vector.broadcast %348 : vector<1x10xf32> to vector<8x10xf32>
    %350 = arith.addf %347, %349 : vector<8x10xf32>
    %cst_407 = arith.constant dense<0xFF800000> : vector<8xf32>
    %351 = vector.multi_reduction <maximumf>, %350, %cst_407 [1] : vector<8x10xf32> to vector<8xf32>
    %352 = vector.shape_cast %351 : vector<8xf32> to vector<8x1xf32>
    %353 = vector.broadcast %352 : vector<8x1xf32> to vector<8x10xf32>
    %354 = arith.subf %350, %353 : vector<8x10xf32>
    %355 = math.exp %354 : vector<8x10xf32>
    %cst_408 = arith.constant dense<0.000000e+00> : vector<8xf32>
    %356 = vector.multi_reduction <add>, %355, %cst_408 [1] : vector<8x10xf32> to vector<8xf32>
    %357 = vector.shape_cast %356 : vector<8xf32> to vector<8x1xf32>
    %358 = math.log %357 : vector<8x1xf32>
    %359 = vector.broadcast %358 : vector<8x1xf32> to vector<8x10xf32>
    %360 = arith.subf %354, %359 : vector<8x10xf32>
    %c0_409 = arith.constant 0 : index
    %c0_410 = arith.constant 0 : index
    %361 = vector.load %arg10[%c0_409, %c0_410] : memref<8x10xf32, #tpu.memory_space<vmem>>, vector<8x10xf32>
    tpu.vector_store %arg10[%c0_409, %c0_410], %360 {strides = array<i32>} : memref<8x10xf32, #tpu.memory_space<vmem>>, vector<8x10xf32>,
    return
  }
  func.func @transform_0(%arg0: i32) -> (i32, i32, i32, i32) {
    %c0_i32 = arith.constant 0 : i32
    %c0_i32_0 = arith.constant 0 : i32
    %c0_i32_1 = arith.constant 0 : i32
    %c0_i32_2 = arith.constant 0 : i32
    return %c0_i32, %c0_i32_0, %arg0, %c0_i32_1 : i32, i32, i32, i32
  }
  func.func @transform_1(%arg0: i32) -> (i32, i32, i32, i32) {
    %c0_i32 = arith.constant 0 : i32
    %c0_i32_0 = arith.constant 0 : i32
    %c0_i32_1 = arith.constant 0 : i32
    %c0_i32_2 = arith.constant 0 : i32
    %c0_i32_3 = arith.constant 0 : i32
    return %c0_i32, %c0_i32_0, %c0_i32_1, %c0_i32_2 : i32, i32, i32, i32
  }
  func.func @transform_2(%arg0: i32) -> (i32, i32) {
    %c0_i32 = arith.constant 0 : i32
    %c0_i32_0 = arith.constant 0 : i32
    %c0_i32_1 = arith.constant 0 : i32
    return %c0_i32, %c0_i32_0 : i32, i32
  }
  func.func @transform_3(%arg0: i32) -> (i32, i32, i32, i32) {
    %c0_i32 = arith.constant 0 : i32
    %c0_i32_0 = arith.constant 0 : i32
    %c0_i32_1 = arith.constant 0 : i32
    %c0_i32_2 = arith.constant 0 : i32
    %c0_i32_3 = arith.constant 0 : i32
    return %c0_i32, %c0_i32_0, %c0_i32_1, %c0_i32_2 : i32, i32, i32, i32
  }
  func.func @transform_4(%arg0: i32) -> (i32, i32) {
    %c0_i32 = arith.constant 0 : i32
    %c0_i32_0 = arith.constant 0 : i32
    %c0_i32_1 = arith.constant 0 : i32
    return %c0_i32, %c0_i32_0 : i32, i32
  }
  func.func @transform_5(%arg0: i32) -> (i32, i32, i32) {
    %c0_i32 = arith.constant 0 : i32
    %c0_i32_0 = arith.constant 0 : i32
    %c0_i32_1 = arith.constant 0 : i32
    %c0_i32_2 = arith.constant 0 : i32
    return %c0_i32, %c0_i32_0, %c0_i32_1 : i32, i32, i32
  }
  func.func @transform_6(%arg0: i32) -> (i32, i32) {
    %c0_i32 = arith.constant 0 : i32
    %c0_i32_0 = arith.constant 0 : i32
    %c0_i32_1 = arith.constant 0 : i32
    return %c0_i32, %c0_i32_0 : i32, i32
  }
  func.func @transform_7(%arg0: i32) -> (i32, i32) {
    %c0_i32 = arith.constant 0 : i32
    %c0_i32_0 = arith.constant 0 : i32
    %c0_i32_1 = arith.constant 0 : i32
    return %c0_i32, %c0_i32_0 : i32, i32
  }
  func.func @transform_8(%arg0: i32) -> (i32, i32) {
    %c0_i32 = arith.constant 0 : i32
    %c0_i32_0 = arith.constant 0 : i32
    %c0_i32_1 = arith.constant 0 : i32
    return %c0_i32, %c0_i32_0 : i32, i32
  }
  func.func @transform_9(%arg0: i32) -> (i32, i32) {
    %c0_i32 = arith.constant 0 : i32
    %c0_i32_0 = arith.constant 0 : i32
    return %arg0, %c0_i32 : i32, i32
  }
}

</mosaic_0001>

<llo_original>
// kernel: tile.13
$region0: #{tile.13}
  #allocation0 [shape = 's32[1]{0}', space=sflag, size = 0x4, scoped, tag = 'scoped memory for tile.13']
  %s0 = inlined_call_operand.vmem [shape: f32[10], index: 0, kind: input, shape index: {}]
  %s1 = inlined_call_operand.vmem [shape: f32[12,10], index: 1, kind: output, shape index: {}]
  // Predicated region
  $region2: #{tile.13} parent=0 // pred_check
    _
  $region3: #{tile.13} parent=0 // pred_check_branch
    %3 = sbr.rel (0) target = $region5
  $region4: #{tile.13} parent=0 // pred_region
    _
  $region5: #{tile.13} parent=0 // pred_fallthru
    _
  %v4 = vld [vmem:[%s0] ss:$0 sm:$0xff]
  %5 = vst [vmem:[%s1] sm:$0xff] %v4
  %s6 = scalar_lea.vmem %s1, 8
  %7 = vst [vmem:[%s6] sm:$0xff] %v4

// kernel: tile.18
$region0: #{tile.18}
  #allocation0 [shape = 's32[1]{0}', space=sflag, size = 0x4, scoped, tag = 'scoped memory for tile.18']
  %s0 = inlined_call_operand.vmem [shape: f32[20], index: 0, kind: input, shape index: {}]
  %s1 = inlined_call_operand.vmem [shape: f32[4,20], index: 1, kind: output, shape index: {}]
  // Predicated region
  $region2: #{tile.18} parent=0 // pred_check
    _
  $region3: #{tile.18} parent=0 // pred_check_branch
    %3 = sbr.rel (0) target = $region5
  $region4: #{tile.18} parent=0 // pred_region
    _
  $region5: #{tile.18} parent=0 // pred_fallthru
    _
  %v4 = vld [vmem:[%s0] ss:$0 sm:$0xff]
  %5 = vst [vmem:[%s1] sm:$0xf] %v4

// kernel: tile.14
$region0: #{tile.14}
  %s0 = inlined_call_operand.vmem [shape: f32[12,10], index: 0, kind: input, shape index: {}]
  %s1 = inlined_call_operand.vmem [shape: f32[1,120], index: 1, kind: output, shape index: {}]
  $region1: #{tile.14} parent=0
    #allocation0 [shape = 'u8[4096]{0}', space=vmem, size = 0x1000, scoped, tag = 'scoped mem for output reshape']
    %v2 = vld [vmem:[%s0] sm:$0x1]
    %vm3 = vcmask 80896
    %4 = vst.msk [vmem:[#allocation0] sm:$0x1] %vm3, %v2
    %s5 = scalar_lea.vmem %s0, 11
    %v6 = vld [vmem:[%s5] sm:$0x1]
    %7 = vrot.lane.b32.xlu0 %v6, 110
    %v8 = vpop.permute.xlu0 %7
    %vm9 = vcmask 982896
    %10 = vst.msk [vmem:[#allocation0] sm:$0x1] %vm9, %v8
    %s11 = scalar_lea.vmem %s0, 10
    %v12 = vld [vmem:[%s11] sm:$0x1]
    %13 = vrot.lane.b32.xlu0 %v12, 100
    %v14 = vpop.permute.xlu0 %13
    %vm15 = vcmask 900896
    %16 = vst.msk [vmem:[#allocation0] sm:$0x1] %vm15, %v14
    %s17 = scalar_lea.vmem %s0, 9
    %v18 = vld [vmem:[%s17] sm:$0x1]
    %19 = vrot.lane.b32.xlu0 %v18, 90
    %v20 = vpop.permute.xlu0 %19
    %vm21 = vcmask 818896
    %22 = vst.msk [vmem:[#allocation0] sm:$0x1] %vm21, %v20
    %s23 = scalar_lea.vmem %s0, 8
    %v24 = vld [vmem:[%s23] sm:$0x1]
    %25 = vrot.lane.b32.xlu0 %v24, 80
    %v26 = vpop.permute.xlu0 %25
    %vm27 = vcmask 736896
    %28 = vst.msk [vmem:[#allocation0] sm:$0x1] %vm27, %v26
    %s29 = scalar_lea.vmem %s0, 7
    %v30 = vld [vmem:[%s29] sm:$0x1]
    %31 = vrot.lane.b32.xlu0 %v30, 70
    %v32 = vpop.permute.xlu0 %31
    %vm33 = vcmask 654896
    %34 = vst.msk [vmem:[#allocation0] sm:$0x1] %vm33, %v32
    %s35 = scalar_lea.vmem %s0, 6
    %v36 = vld [vmem:[%s35] sm:$0x1]
    %37 = vrot.lane.b32.xlu0 %v36, 60
    %v38 = vpop.permute.xlu0 %37
    %vm39 = vcmask 572896
    %40 = vst.msk [vmem:[#allocation0] sm:$0x1] %vm39, %v38
    %s41 = scalar_lea.vmem %s0, 5
    %v42 = vld [vmem:[%s41] sm:$0x1]
    %43 = vrot.lane.b32.xlu0 %v42, 50
    %v44 = vpop.permute.xlu0 %43
    %vm45 = vcmask 490896
    %46 = vst.msk [vmem:[#allocation0] sm:$0x1] %vm45, %v44
    %s47 = scalar_lea.vmem %s0, 4
    %v48 = vld [vmem:[%s47] sm:$0x1]
    %49 = vrot.lane.b32.xlu0 %v48, 40
    %v50 = vpop.permute.xlu0 %49
    %vm51 = vcmask 408896
    %52 = vst.msk [vmem:[#allocation0] sm:$0x1] %vm51, %v50
    %s53 = scalar_lea.vmem %s0, 3
    %v54 = vld [vmem:[%s53] sm:$0x1]
    %55 = vrot.lane.b32.xlu0 %v54, 30
    %v56 = vpop.permute.xlu0 %55
    %vm57 = vcmask 326896
    %58 = vst.msk [vmem:[#allocation0] sm:$0x1] %vm57, %v56
    %s59 = scalar_lea.vmem %s0, 2
    %v60 = vld [vmem:[%s59] sm:$0x1]
    %61 = vrot.lane.b32.xlu0 %v60, 20
    %v62 = vpop.permute.xlu0 %61
    %vm63 = vcmask 244896
    %64 = vst.msk [vmem:[#allocation0] sm:$0x1] %vm63, %v62
    %s65 = scalar_lea.vmem %s0, 1
    %v66 = vld [vmem:[%s65] sm:$0x1]
    %67 = vrot.lane.b32.xlu0 %v66, 10
    %v68 = vpop.permute.xlu0 %67
    %vm69 = vcmask 162896
    %70 = vst.msk [vmem:[#allocation0] sm:$0x1] %vm69, %v68
    %s72 = sshllo.u32 0, 1
    %v74 = vld [vmem:[#allocation0] sm:%s72]
    %s75 = sshllo.u32 0, 1
    %76 = vst [vmem:[%s1] sm:%s75] %v74

// kernel: tile.19
$region0: #{tile.19}
  %s0 = inlined_call_operand.vmem [shape: f32[4,20], index: 0, kind: input, shape index: {}]
  %s1 = inlined_call_operand.vmem [shape: f32[1,80], index: 1, kind: output, shape index: {}]
  $region1: #{tile.19} parent=0
    #allocation0 [shape = 'u8[4096]{0}', space=vmem, size = 0x1000, scoped, tag = 'scoped mem for output reshape']
    #allocation1 [shape = 'u8[4096]{0}', space=vmem, size = 0x1000, scoped, tag = 'scoped mem for input reshape']
    %s3 = sshllo.u32 0, 4
    %v4 = vld [vmem:[%s0] sm:%s3]
    %5 = vst [vmem:[#allocation1] sm:%s3] %v4
    %v6 = vld [vmem:[#allocation1] sm:$0x1]
    %vm7 = vcmask 162816
    %8 = vst.msk [vmem:[#allocation0] sm:$0x1] %vm7, %v6
    %s9 = scalar_lea.vmem [#allocation1], 3
    %v10 = vld [vmem:[%s9] sm:$0x1]
    %11 = vrot.lane.b32.xlu0 %v10, 60
    %v12 = vpop.permute.xlu0 %11
    %vm13 = vcmask 654816
    %14 = vst.msk [vmem:[#allocation0] sm:$0x1] %vm13, %v12
    %s15 = scalar_lea.vmem [#allocation1], 2
    %v16 = vld [vmem:[%s15] sm:$0x1]
    %17 = vrot.lane.b32.xlu0 %v16, 40
    %v18 = vpop.permute.xlu0 %17
    %vm19 = vcmask 490816
    %20 = vst.msk [vmem:[#allocation0] sm:$0x1] %vm19, %v18
    %s21 = scalar_lea.vmem [#allocation1], 1
    %v22 = vld [vmem:[%s21] sm:$0x1]
    %23 = vrot.lane.b32.xlu0 %v22, 20
    %v24 = vpop.permute.xlu0 %23
    %vm25 = vcmask 326816
    %26 = vst.msk [vmem:[#allocation0] sm:$0x1] %vm25, %v24
    %s28 = sshllo.u32 0, 1
    %v30 = vld [vmem:[#allocation0] sm:%s28]
    %s31 = sshllo.u32 0, 1
    %32 = vst [vmem:[%s1] sm:%s31] %v30

// kernel: my_network_forward.1
$region0: #{my_network_forward.1}
  #allocation0 [shape = 'u32[]', space=smem, size = 0x4, offset = 0x4, fixed_abs, tag = 'smem constant byte address 0x4 - core index']
  #allocation1 [shape = 'u32[144,128]{1,0:T(1,128)}', space=vmem, size = 0x12000, scoped, tag = 'internal scratch']
  %s0 = inlined_call_operand.vmem [shape: f32[4,7,8,28], index: 0, kind: input, shape index: {}]
  %s1 = inlined_call_operand.vmem [shape: f32[5,2,28,120], index: 1, kind: input, shape index: {}]
  %s2 = inlined_call_operand.vmem [shape: f32[1,120], index: 2, kind: input, shape index: {}]
  %s3 = inlined_call_operand.vmem [shape: f32[5,2,120,80], index: 3, kind: input, shape index: {}]
  %s4 = inlined_call_operand.vmem [shape: f32[1,80], index: 4, kind: input, shape index: {}]
  %s5 = inlined_call_operand.vmem [shape: f32[4,80,50], index: 5, kind: input, shape index: {}]
  %s6 = inlined_call_operand.vmem [shape: f32[1,50], index: 6, kind: input, shape index: {}]
  %s7 = inlined_call_operand.vmem [shape: f32[50,10], index: 7, kind: input, shape index: {}]
  %s8 = inlined_call_operand.vmem [shape: f32[1,10], index: 8, kind: input, shape index: {}]
  %s9 = inlined_call_operand.vmem [shape: f32[8,10], index: 9, kind: output, shape index: {}]
  %s10 = sld [smem:[#allocation0]]
  $region46: #{my_network_forward.1} parent=0
    _
  %s12 = ssub.s32 1, %s10
  %s13 = scalar_select 0, %s12, %s10
  // Predicated region
  $region2: #{my_network_forward.1} parent=0 // pred_check
    _
  $region3: #{my_network_forward.1} parent=0 // pred_check_branch
    %15 = sbr.rel (0) target = $region5
  $region4: #{my_network_forward.1} parent=0 // pred_region
    _
  $region5: #{my_network_forward.1} parent=0 // pred_fallthru
    _
  // Predicated region
  $region6: #{my_network_forward.1} parent=0 // pred_check
    _
  $region7: #{my_network_forward.1} parent=0 // pred_check_branch
    %17 = sbr.rel (0) target = $region9
  $region8: #{my_network_forward.1} parent=0 // pred_region
    _
  $region9: #{my_network_forward.1} parent=0 // pred_fallthru
    _
  // Predicated region
  $region10: #{my_network_forward.1} parent=0 // pred_check
    _
  $region11: #{my_network_forward.1} parent=0 // pred_check_branch
    %19 = sbr.rel (0) target = $region13
  $region12: #{my_network_forward.1} parent=0 // pred_region
    _
  $region13: #{my_network_forward.1} parent=0 // pred_fallthru
    _
  // Predicated region
  $region14: #{my_network_forward.1} parent=0 // pred_check
    _
  $region15: #{my_network_forward.1} parent=0 // pred_check_branch
    %21 = sbr.rel (0) target = $region17
  $region16: #{my_network_forward.1} parent=0 // pred_region
    _
  $region17: #{my_network_forward.1} parent=0 // pred_fallthru
    _
  // Predicated region
  $region18: #{my_network_forward.1} parent=0 // pred_check
    _
  $region19: #{my_network_forward.1} parent=0 // pred_check_branch
    %23 = sbr.rel (0) target = $region21
  $region20: #{my_network_forward.1} parent=0 // pred_region
    _
  $region21: #{my_network_forward.1} parent=0 // pred_fallthru
    _
  // Predicated region
  $region22: #{my_network_forward.1} parent=0 // pred_check
    _
  $region23: #{my_network_forward.1} parent=0 // pred_check_branch
    %25 = sbr.rel (0) target = $region25
  $region24: #{my_network_forward.1} parent=0 // pred_region
    _
  $region25: #{my_network_forward.1} parent=0 // pred_fallthru
    _
  // Predicated region
  $region26: #{my_network_forward.1} parent=0 // pred_check
    _
  $region27: #{my_network_forward.1} parent=0 // pred_check_branch
    %27 = sbr.rel (0) target = $region29
  $region28: #{my_network_forward.1} parent=0 // pred_region
    _
  $region29: #{my_network_forward.1} parent=0 // pred_fallthru
    _
  // Predicated region
  $region30: #{my_network_forward.1} parent=0 // pred_check
    _
  $region31: #{my_network_forward.1} parent=0 // pred_check_branch
    %29 = sbr.rel (0) target = $region33
  $region32: #{my_network_forward.1} parent=0 // pred_region
    _
  $region33: #{my_network_forward.1} parent=0 // pred_fallthru
    _
  // Predicated region
  $region34: #{my_network_forward.1} parent=0 // pred_check
    _
  $region35: #{my_network_forward.1} parent=0 // pred_check_branch
    %31 = sbr.rel (0) target = $region37
  $region36: #{my_network_forward.1} parent=0 // pred_region
    _
  $region37: #{my_network_forward.1} parent=0 // pred_fallthru
    _
  %v32 = vld [vmem:[%s0] sm:$0xff]
  %v33 = vld [vmem:[%s0 + $0x8] sm:$0xff]
  %v34 = vld [vmem:[%s0 + $0x10] sm:$0xff]
  %v35 = vld [vmem:[%s0 + $0x18] sm:$0xff]
  %v36 = vld [vmem:[%s0 + $0x20] sm:$0xff]
  %v37 = vld [vmem:[%s0 + $0x28] sm:$0xff]
  %v38 = vld [vmem:[%s1] sm:$0xff]
  %v39 = vld [vmem:[%s1 + $0x8] sm:$0xff]
  %v40 = vld [vmem:[%s1 + $0x10] sm:$0xff]
  %v41 = vld [vmem:[%s1 + $0x18] sm:$0xf]
  %s42 = scalar_lea.vmem %s1, 32
  %v43 = vld [vmem:[%s42] sm:$0xff]
  %v44 = vld [vmem:[%s42 + $0x8] sm:$0xff]
  %v45 = vld [vmem:[%s42 + $0x10] sm:$0xff]
  %v46 = vld [vmem:[%s42 + $0x18] sm:$0xf]
  %s47 = scalar_lea.vmem %s0, 56
  %v48 = vld [vmem:[%s47] sm:$0xff]
  %v49 = vld [vmem:[%s47 + $0x8] sm:$0xff]
  %v50 = vld [vmem:[%s47 + $0x10] sm:$0xff]
  %v51 = vld [vmem:[%s47 + $0x18] sm:$0xff]
  %v52 = vld [vmem:[%s47 + $0x20] sm:$0xff]
  %v53 = vld [vmem:[%s47 + $0x28] sm:$0xff]
  %s54 = scalar_lea.vmem %s1, 64
  %v55 = vld [vmem:[%s54] sm:$0xff]
  %v56 = vld [vmem:[%s54 + $0x8] sm:$0xff]
  %v57 = vld [vmem:[%s54 + $0x10] sm:$0xff]
  %v58 = vld [vmem:[%s54 + $0x18] sm:$0xf]
  %vm59 = vcmask 228352
  %v61 = vsel %vm59, %v48, 0
  %v64 = vsel %vm59, %v49, 0
  %v67 = vsel %vm59, %v50, 0
  %v70 = vsel %vm59, %v51, 0
  %v73 = vsel %vm59, %v52, 0
  %v76 = vsel %vm59, %v53, 0
  %vm78 = vcmask 1043456
  %v80 = vsel %vm78, %v58, 0
  %82 = vmatprep.subr.mxu0 0.0
  %83 = vmatpush1.msra.mxu0 %v55
  %84 = vmatprep.subr.mxu0 0.0
  %85 = vmatpush1.msra.mxu0 %v56
  %86 = vmatprep.subr.mxu0 0.0
  %87 = vmatpush1.msra.mxu0 %v57
  %88 = vmatprep.subr.mxu0 0.0
  %89 = vmatpush1.msra.mxu0 %v80
  %90 = vmatprep.subr.mxu0 0.0
  %91 = vmatpush1.msra.mxu0 0.0
  %92 = vmatprep.subr.mxu0 0.0
  %93 = vmatpush1.msra.mxu0 0.0
  %94 = vmatprep.subr.mxu0 0.0
  %95 = vmatpush1.msra.mxu0 0.0
  %96 = vmatprep.subr.mxu0 0.0
  %97 = vmatpush1.msra.mxu0 0.0
  %98 = vmatprep.subr.mxu0 0.0
  %99 = vmatpush1.msra.mxu0 0.0
  %100 = vmatprep.subr.mxu0 0.0
  %101 = vmatpush1.msra.mxu0 0.0
  %102 = vmatprep.subr.mxu0 0.0
  %103 = vmatpush1.msra.mxu0 0.0
  %104 = vmatprep.subr.mxu0 0.0
  %105 = vmatpush1.msra.mxu0 0.0
  %106 = vmatprep.subr.mxu0 0.0
  %107 = vmatpush1.msra.mxu0 0.0
  %108 = vmatprep.subr.mxu0 0.0
  %109 = vmatpush1.msra.mxu0 0.0
  %110 = vmatprep.subr.mxu0 0.0
  %111 = vmatpush1.msra.mxu0 0.0
  %112 = vmatprep.subr.mxu0 0.0
  %113 = vmatpush1.msra.mxu0 0.0
  %114 = vmatprep.subr.mxu0 0.0
  %115 = vmatpush1.msra.mxu0 0.0
  %116 = vmatprep.subr.mxu0 0.0
  %117 = vmatpush1.msra.mxu0 0.0
  %118 = vmatprep.subr.mxu0 0.0
  %119 = vmatpush1.msra.mxu0 0.0
  %120 = vmatprep.subr.mxu0 0.0
  %121 = vmatpush1.msra.mxu0 0.0
  %122 = vmatprep.subr.mxu0 0.0
  %123 = vmatpush1.msra.mxu0 0.0
  %124 = vmatprep.subr.mxu0 0.0
  %125 = vmatpush1.msra.mxu0 0.0
  %126 = vmatprep.subr.mxu0 0.0
  %127 = vmatpush1.msra.mxu0 0.0
  %128 = vmatprep.subr.mxu0 0.0
  %129 = vmatpush1.msra.mxu0 0.0
  %130 = vmatprep.subr.mxu0 0.0
  %131 = vmatpush1.msra.mxu0 0.0
  %132 = vmatprep.subr.mxu0 0.0
  %133 = vmatpush1.msra.mxu0 0.0
  %134 = vmatprep.subr.mxu0 0.0
  %135 = vmatpush1.msra.mxu0 0.0
  %136 = vmatprep.subr.mxu0 0.0
  %137 = vmatpush1.msra.mxu0 0.0
  %138 = vmatprep.subr.mxu0 0.0
  %139 = vmatpush1.msra.mxu0 0.0
  %140 = vmatprep.subr.mxu0 0.0
  %141 = vmatpush1.msra.mxu0 0.0
  %142 = vmatprep.subr.mxu0 0.0
  %143 = vmatpush1.msra.mxu0 0.0
  %144 = vmatprep.subr.mxu0 0.0
  %145 = vmatpush1.msra.mxu0 0.0
  %146 = vmatprep.mubr.f32.mxu0 0.0
  %147 = vmatmul.mubr.f32.gmra.mrb[0].mxu0 %v61
  %v148 = vpop.f32.mrb[0].mxu0
  %v149 = vadd.f32 0.0, %v148
  %v150 = vpop.f32.mrb[0].mxu0
  %151 = vmatprep.mubr.f32.mxu0 0.0
  %152 = vmatmul.mubr.f32.gmra.mrb[0].mxu0 %v64
  %v153 = vpop.f32.mrb[0].mxu0
  %v154 = vadd.f32 0.0, %v153
  %v155 = vpop.f32.mrb[0].mxu0
  %156 = vmatprep.mubr.f32.mxu0 0.0
  %157 = vmatmul.mubr.f32.gmra.mrb[0].mxu0 %v67
  %v158 = vpop.f32.mrb[0].mxu0
  %v159 = vadd.f32 0.0, %v158
  %v160 = vpop.f32.mrb[0].mxu0
  %161 = vmatprep.mubr.f32.mxu0 0.0
  %162 = vmatmul.mubr.f32.gmra.mrb[0].mxu0 %v70
  %v163 = vpop.f32.mrb[0].mxu0
  %v164 = vadd.f32 0.0, %v163
  %v165 = vpop.f32.mrb[0].mxu0
  %166 = vmatprep.mubr.f32.mxu0 0.0
  %167 = vmatmul.mubr.f32.gmra.mrb[0].mxu0 %v73
  %v168 = vpop.f32.mrb[0].mxu0
  %v169 = vadd.f32 0.0, %v168
  %v170 = vpop.f32.mrb[0].mxu0
  %171 = vmatprep.mubr.f32.mxu0 0.0
  %172 = vmatmul.mubr.f32.gmra.mrb[0].mxu0 %v76
  %v173 = vpop.f32.mrb[0].mxu0
  %v174 = vadd.f32 0.0, %v173
  %v175 = vpop.f32.mrb[0].mxu0
  %176 = vdwg.mxu0
  %v178 = vsel %vm59, %v32, 0
  %v181 = vsel %vm59, %v33, 0
  %v184 = vsel %vm59, %v34, 0
  %v187 = vsel %vm59, %v35, 0
  %v190 = vsel %vm59, %v36, 0
  %v193 = vsel %vm59, %v37, 0
  %v196 = vsel %vm78, %v41, 0
  %198 = vmatprep.subr.mxu0 0.0
  %199 = vmatpush1.msra.mxu0 %v38
  %200 = vmatprep.subr.mxu0 0.0
  %201 = vmatpush1.msra.mxu0 %v39
  %202 = vmatprep.subr.mxu0 0.0
  %203 = vmatpush1.msra.mxu0 %v40
  %204 = vmatprep.subr.mxu0 0.0
  %205 = vmatpush1.msra.mxu0 %v196
  %206 = vmatprep.subr.mxu0 0.0
  %207 = vmatpush1.msra.mxu0 0.0
  %208 = vmatprep.subr.mxu0 0.0
  %209 = vmatpush1.msra.mxu0 0.0
  %210 = vmatprep.subr.mxu0 0.0
  %211 = vmatpush1.msra.mxu0 0.0
  %212 = vmatprep.subr.mxu0 0.0
  %213 = vmatpush1.msra.mxu0 0.0
  %214 = vmatprep.subr.mxu0 0.0
  %215 = vmatpush1.msra.mxu0 0.0
  %216 = vmatprep.subr.mxu0 0.0
  %217 = vmatpush1.msra.mxu0 0.0
  %218 = vmatprep.subr.mxu0 0.0
  %219 = vmatpush1.msra.mxu0 0.0
  %220 = vmatprep.subr.mxu0 0.0
  %221 = vmatpush1.msra.mxu0 0.0
  %222 = vmatprep.subr.mxu0 0.0
  %223 = vmatpush1.msra.mxu0 0.0
  %224 = vmatprep.subr.mxu0 0.0
  %225 = vmatpush1.msra.mxu0 0.0
  %226 = vmatprep.subr.mxu0 0.0
  %227 = vmatpush1.msra.mxu0 0.0
  %228 = vmatprep.subr.mxu0 0.0
  %229 = vmatpush1.msra.mxu0 0.0
  %230 = vmatprep.subr.mxu0 0.0
  %231 = vmatpush1.msra.mxu0 0.0
  %232 = vmatprep.subr.mxu0 0.0
  %233 = vmatpush1.msra.mxu0 0.0
  %234 = vmatprep.subr.mxu0 0.0
  %235 = vmatpush1.msra.mxu0 0.0
  %236 = vmatprep.subr.mxu0 0.0
  %237 = vmatpush1.msra.mxu0 0.0
  %238 = vmatprep.subr.mxu0 0.0
  %239 = vmatpush1.msra.mxu0 0.0
  %240 = vmatprep.subr.mxu0 0.0
  %241 = vmatpush1.msra.mxu0 0.0
  %242 = vmatprep.subr.mxu0 0.0
  %243 = vmatpush1.msra.mxu0 0.0
  %244 = vmatprep.subr.mxu0 0.0
  %245 = vmatpush1.msra.mxu0 0.0
  %246 = vmatprep.subr.mxu0 0.0
  %247 = vmatpush1.msra.mxu0 0.0
  %248 = vmatprep.subr.mxu0 0.0
  %249 = vmatpush1.msra.mxu0 0.0
  %250 = vmatprep.subr.mxu0 0.0
  %251 = vmatpush1.msra.mxu0 0.0
  %252 = vmatprep.subr.mxu0 0.0
  %253 = vmatpush1.msra.mxu0 0.0
  %254 = vmatprep.subr.mxu0 0.0
  %255 = vmatpush1.msra.mxu0 0.0
  %256 = vmatprep.subr.mxu0 0.0
  %257 = vmatpush1.msra.mxu0 0.0
  %258 = vmatprep.subr.mxu0 0.0
  %259 = vmatpush1.msra.mxu0 0.0
  %260 = vmatprep.subr.mxu0 0.0
  %261 = vmatpush1.msra.mxu0 0.0
  %262 = vmatprep.mubr.f32.mxu0 0.0
  %263 = vmatmul.mubr.f32.gmra.mrb[0].mxu0 %v178
  %v264 = vpop.f32.mrb[0].mxu0
  %v265 = vadd.f32 %v149, %v264
  %v266 = vpop.f32.mrb[0].mxu0
  %267 = vmatprep.mubr.f32.mxu0 0.0
  %268 = vmatmul.mubr.f32.gmra.mrb[0].mxu0 %v181
  %v269 = vpop.f32.mrb[0].mxu0
  %v270 = vadd.f32 %v154, %v269
  %v271 = vpop.f32.mrb[0].mxu0
  %272 = vmatprep.mubr.f32.mxu0 0.0
  %273 = vmatmul.mubr.f32.gmra.mrb[0].mxu0 %v184
  %v274 = vpop.f32.mrb[0].mxu0
  %v275 = vadd.f32 %v159, %v274
  %v276 = vpop.f32.mrb[0].mxu0
  %277 = vmatprep.mubr.f32.mxu0 0.0
  %278 = vmatmul.mubr.f32.gmra.mrb[0].mxu0 %v187
  %v279 = vpop.f32.mrb[0].mxu0
  %v280 = vadd.f32 %v164, %v279
  %v281 = vpop.f32.mrb[0].mxu0
  %282 = vmatprep.mubr.f32.mxu0 0.0
  %283 = vmatmul.mubr.f32.gmra.mrb[0].mxu0 %v190
  %v284 = vpop.f32.mrb[0].mxu0
  %v285 = vadd.f32 %v169, %v284
  %v286 = vpop.f32.mrb[0].mxu0
  %287 = vmatprep.mubr.f32.mxu0 0.0
  %288 = vmatmul.mubr.f32.gmra.mrb[0].mxu0 %v193
  %v289 = vpop.f32.mrb[0].mxu0
  %v290 = vadd.f32 %v174, %v289
  %v291 = vpop.f32.mrb[0].mxu0
  %292 = vdwg.mxu0
  %s293 = scalar_lea.vmem %s1, 96
  %v294 = vld [vmem:[%s293] sm:$0xff]
  %v295 = vld [vmem:[%s293 + $0x8] sm:$0xff]
  %v296 = vld [vmem:[%s293 + $0x10] sm:$0xff]
  %v297 = vld [vmem:[%s293 + $0x18] sm:$0xf]
  %v299 = vsel %vm78, %v297, 0
  %301 = vmatprep.subr.mxu0 0.0
  %302 = vmatpush1.msra.mxu0 %v294
  %303 = vmatprep.subr.mxu0 0.0
  %304 = vmatpush1.msra.mxu0 %v295
  %305 = vmatprep.subr.mxu0 0.0
  %306 = vmatpush1.msra.mxu0 %v296
  %307 = vmatprep.subr.mxu0 0.0
  %308 = vmatpush1.msra.mxu0 %v299
  %309 = vmatprep.subr.mxu0 0.0
  %310 = vmatpush1.msra.mxu0 0.0
  %311 = vmatprep.subr.mxu0 0.0
  %312 = vmatpush1.msra.mxu0 0.0
  %313 = vmatprep.subr.mxu0 0.0
  %314 = vmatpush1.msra.mxu0 0.0
  %315 = vmatprep.subr.mxu0 0.0
  %316 = vmatpush1.msra.mxu0 0.0
  %317 = vmatprep.subr.mxu0 0.0
  %318 = vmatpush1.msra.mxu0 0.0
  %319 = vmatprep.subr.mxu0 0.0
  %320 = vmatpush1.msra.mxu0 0.0
  %321 = vmatprep.subr.mxu0 0.0
  %322 = vmatpush1.msra.mxu0 0.0
  %323 = vmatprep.subr.mxu0 0.0
  %324 = vmatpush1.msra.mxu0 0.0
  %325 = vmatprep.subr.mxu0 0.0
  %326 = vmatpush1.msra.mxu0 0.0
  %327 = vmatprep.subr.mxu0 0.0
  %328 = vmatpush1.msra.mxu0 0.0
  %329 = vmatprep.subr.mxu0 0.0
  %330 = vmatpush1.msra.mxu0 0.0
  %331 = vmatprep.subr.mxu0 0.0
  %332 = vmatpush1.msra.mxu0 0.0
  %333 = vmatprep.subr.mxu0 0.0
  %334 = vmatpush1.msra.mxu0 0.0
  %335 = vmatprep.subr.mxu0 0.0
  %336 = vmatpush1.msra.mxu0 0.0
  %337 = vmatprep.subr.mxu0 0.0
  %338 = vmatpush1.msra.mxu0 0.0
  %339 = vmatprep.subr.mxu0 0.0
  %340 = vmatpush1.msra.mxu0 0.0
  %341 = vmatprep.subr.mxu0 0.0
  %342 = vmatpush1.msra.mxu0 0.0
  %343 = vmatprep.subr.mxu0 0.0
  %344 = vmatpush1.msra.mxu0 0.0
  %345 = vmatprep.subr.mxu0 0.0
  %346 = vmatpush1.msra.mxu0 0.0
  %347 = vmatprep.subr.mxu0 0.0
  %348 = vmatpush1.msra.mxu0 0.0
  %349 = vmatprep.subr.mxu0 0.0
  %350 = vmatpush1.msra.mxu0 0.0
  %351 = vmatprep.subr.mxu0 0.0
  %352 = vmatpush1.msra.mxu0 0.0
  %353 = vmatprep.subr.mxu0 0.0
  %354 = vmatpush1.msra.mxu0 0.0
  %355 = vmatprep.subr.mxu0 0.0
  %356 = vmatpush1.msra.mxu0 0.0
  %357 = vmatprep.subr.mxu0 0.0
  %358 = vmatpush1.msra.mxu0 0.0
  %359 = vmatprep.subr.mxu0 0.0
  %360 = vmatpush1.msra.mxu0 0.0
  %361 = vmatprep.subr.mxu0 0.0
  %362 = vmatpush1.msra.mxu0 0.0
  %363 = vmatprep.subr.mxu0 0.0
  %364 = vmatpush1.msra.mxu0 0.0
  %365 = vmatprep.mubr.f32.mxu0 0.0
  %366 = vmatmul.mubr.f32.gmra.mrb[0].mxu0 %v61
  %v367 = vpop.f32.mrb[0].mxu0
  %v368 = vadd.f32 0.0, %v367
  %v369 = vpop.f32.mrb[0].mxu0
  %370 = vmatprep.mubr.f32.mxu0 0.0
  %371 = vmatmul.mubr.f32.gmra.mrb[0].mxu0 %v64
  %v372 = vpop.f32.mrb[0].mxu0
  %v373 = vadd.f32 0.0, %v372
  %v374 = vpop.f32.mrb[0].mxu0
  %375 = vmatprep.mubr.f32.mxu0 0.0
  %376 = vmatmul.mubr.f32.gmra.mrb[0].mxu0 %v67
  %v377 = vpop.f32.mrb[0].mxu0
  %v378 = vadd.f32 0.0, %v377
  %v379 = vpop.f32.mrb[0].mxu0
  %380 = vmatprep.mubr.f32.mxu0 0.0
  %381 = vmatmul.mubr.f32.gmra.mrb[0].mxu0 %v70
  %v382 = vpop.f32.mrb[0].mxu0
  %v383 = vadd.f32 0.0, %v382
  %v384 = vpop.f32.mrb[0].mxu0
  %385 = vmatprep.mubr.f32.mxu0 0.0
  %386 = vmatmul.mubr.f32.gmra.mrb[0].mxu0 %v73
  %v387 = vpop.f32.mrb[0].mxu0
  %v388 = vadd.f32 0.0, %v387
  %v389 = vpop.f32.mrb[0].mxu0
  %390 = vmatprep.mubr.f32.mxu0 0.0
  %391 = vmatmul.mubr.f32.gmra.mrb[0].mxu0 %v76
  %v392 = vpop.f32.mrb[0].mxu0
  %v393 = vadd.f32 0.0, %v392
  %v394 = vpop.f32.mrb[0].mxu0
  %395 = vdwg.mxu0
  %v397 = vsel %vm78, %v46, 0
  %399 = vmatprep.subr.mxu0 0.0
  %400 = vmatpush1.msra.mxu0 %v43
  %401 = vmatprep.subr.mxu0 0.0
  %402 = vmatpush1.msra.mxu0 %v44
  %403 = vmatprep.subr.mxu0 0.0
  %404 = vmatpush1.msra.mxu0 %v45
  %405 = vmatprep.subr.mxu0 0.0
  %406 = vmatpush1.msra.mxu0 %v397
  %407 = vmatprep.subr.mxu0 0.0
  %408 = vmatpush1.msra.mxu0 0.0
  %409 = vmatprep.subr.mxu0 0.0
  %410 = vmatpush1.msra.mxu0 0.0
  %411 = vmatprep.subr.mxu0 0.0
  %412 = vmatpush1.msra.mxu0 0.0
  %413 = vmatprep.subr.mxu0 0.0
  %414 = vmatpush1.msra.mxu0 0.0
  %415 = vmatprep.subr.mxu0 0.0
  %416 = vmatpush1.msra.mxu0 0.0
  %417 = vmatprep.subr.mxu0 0.0
  %418 = vmatpush1.msra.mxu0 0.0
  %419 = vmatprep.subr.mxu0 0.0
  %420 = vmatpush1.msra.mxu0 0.0
  %421 = vmatprep.subr.mxu0 0.0
  %422 = vmatpush1.msra.mxu0 0.0
  %423 = vmatprep.subr.mxu0 0.0
  %424 = vmatpush1.msra.mxu0 0.0
  %425 = vmatprep.subr.mxu0 0.0
  %426 = vmatpush1.msra.mxu0 0.0
  %427 = vmatprep.subr.mxu0 0.0
  %428 = vmatpush1.msra.mxu0 0.0
  %429 = vmatprep.subr.mxu0 0.0
  %430 = vmatpush1.msra.mxu0 0.0
  %431 = vmatprep.subr.mxu0 0.0
  %432 = vmatpush1.msra.mxu0 0.0
  %433 = vmatprep.subr.mxu0 0.0
  %434 = vmatpush1.msra.mxu0 0.0
  %435 = vmatprep.subr.mxu0 0.0
  %436 = vmatpush1.msra.mxu0 0.0
  %437 = vmatprep.subr.mxu0 0.0
  %438 = vmatpush1.msra.mxu0 0.0
  %439 = vmatprep.subr.mxu0 0.0
  %440 = vmatpush1.msra.mxu0 0.0
  %441 = vmatprep.subr.mxu0 0.0
  %442 = vmatpush1.msra.mxu0 0.0
  %443 = vmatprep.subr.mxu0 0.0
  %444 = vmatpush1.msra.mxu0 0.0
  %445 = vmatprep.subr.mxu0 0.0
  %446 = vmatpush1.msra.mxu0 0.0
  %447 = vmatprep.subr.mxu0 0.0
  %448 = vmatpush1.msra.mxu0 0.0
  %449 = vmatprep.subr.mxu0 0.0
  %450 = vmatpush1.msra.mxu0 0.0
  %451 = vmatprep.subr.mxu0 0.0
  %452 = vmatpush1.msra.mxu0 0.0
  %453 = vmatprep.subr.mxu0 0.0
  %454 = vmatpush1.msra.mxu0 0.0
  %455 = vmatprep.subr.mxu0 0.0
  %456 = vmatpush1.msra.mxu0 0.0
  %457 = vmatprep.subr.mxu0 0.0
  %458 = vmatpush1.msra.mxu0 0.0
  %459 = vmatprep.subr.mxu0 0.0
  %460 = vmatpush1.msra.mxu0 0.0
  %461 = vmatprep.subr.mxu0 0.0
  %462 = vmatpush1.msra.mxu0 0.0
  %463 = vmatprep.mubr.f32.mxu0 0.0
  %464 = vmatmul.mubr.f32.gmra.mrb[0].mxu0 %v178
  %v465 = vpop.f32.mrb[0].mxu0
  %v466 = vadd.f32 %v368, %v465
  %v467 = vpop.f32.mrb[0].mxu0
  %468 = vmatprep.mubr.f32.mxu0 0.0
  %469 = vmatmul.mubr.f32.gmra.mrb[0].mxu0 %v181
  %v470 = vpop.f32.mrb[0].mxu0
  %v471 = vadd.f32 %v373, %v470
  %v472 = vpop.f32.mrb[0].mxu0
  %473 = vmatprep.mubr.f32.mxu0 0.0
  %474 = vmatmul.mubr.f32.gmra.mrb[0].mxu0 %v184
  %v475 = vpop.f32.mrb[0].mxu0
  %v476 = vadd.f32 %v378, %v475
  %v477 = vpop.f32.mrb[0].mxu0
  %478 = vmatprep.mubr.f32.mxu0 0.0
  %479 = vmatmul.mubr.f32.gmra.mrb[0].mxu0 %v187
  %v480 = vpop.f32.mrb[0].mxu0
  %v481 = vadd.f32 %v383, %v480
  %v482 = vpop.f32.mrb[0].mxu0
  %483 = vmatprep.mubr.f32.mxu0 0.0
  %484 = vmatmul.mubr.f32.gmra.mrb[0].mxu0 %v190
  %v485 = vpop.f32.mrb[0].mxu0
  %v486 = vadd.f32 %v388, %v485
  %v487 = vpop.f32.mrb[0].mxu0
  %488 = vmatprep.mubr.f32.mxu0 0.0
  %489 = vmatmul.mubr.f32.gmra.mrb[0].mxu0 %v193
  %v490 = vpop.f32.mrb[0].mxu0
  %v491 = vadd.f32 %v393, %v490
  %v492 = vpop.f32.mrb[0].mxu0
  %493 = vdwg.mxu0
  %s494 = scalar_lea.vmem %s0, 112
  %v495 = vld [vmem:[%s494] sm:$0xff]
  %v496 = vld [vmem:[%s494 + $0x8] sm:$0xff]
  %v497 = vld [vmem:[%s494 + $0x10] sm:$0xff]
  %v498 = vld [vmem:[%s494 + $0x18] sm:$0xff]
  %v499 = vld [vmem:[%s494 + $0x20] sm:$0xff]
  %v500 = vld [vmem:[%s494 + $0x28] sm:$0xff]
  %s501 = scalar_lea.vmem %s1, 128
  %v502 = vld [vmem:[%s501] sm:$0xff]
  %v503 = vld [vmem:[%s501 + $0x8] sm:$0xff]
  %v504 = vld [vmem:[%s501 + $0x10] sm:$0xff]
  %v505 = vld [vmem:[%s501 + $0x18] sm:$0xf]
  %v507 = vsel %vm59, %v495, 0
  %v510 = vsel %vm59, %v496, 0
  %v513 = vsel %vm59, %v497, 0
  %v516 = vsel %vm59, %v498, 0
  %v519 = vsel %vm59, %v499, 0
  %v522 = vsel %vm59, %v500, 0
  %v525 = vsel %vm78, %v505, 0
  %527 = vmatprep.subr.mxu0 0.0
  %528 = vmatpush1.msra.mxu0 %v502
  %529 = vmatprep.subr.mxu0 0.0
  %530 = vmatpush1.msra.mxu0 %v503
  %531 = vmatprep.subr.mxu0 0.0
  %532 = vmatpush1.msra.mxu0 %v504
  %533 = vmatprep.subr.mxu0 0.0
  %534 = vmatpush1.msra.mxu0 %v525
  %535 = vmatprep.subr.mxu0 0.0
  %536 = vmatpush1.msra.mxu0 0.0
  %537 = vmatprep.subr.mxu0 0.0
  %538 = vmatpush1.msra.mxu0 0.0
  %539 = vmatprep.subr.mxu0 0.0
  %540 = vmatpush1.msra.mxu0 0.0
  %541 = vmatprep.subr.mxu0 0.0
  %542 = vmatpush1.msra.mxu0 0.0
  %543 = vmatprep.subr.mxu0 0.0
  %544 = vmatpush1.msra.mxu0 0.0
  %545 = vmatprep.subr.mxu0 0.0
  %546 = vmatpush1.msra.mxu0 0.0
  %547 = vmatprep.subr.mxu0 0.0
  %548 = vmatpush1.msra.mxu0 0.0
  %549 = vmatprep.subr.mxu0 0.0
  %550 = vmatpush1.msra.mxu0 0.0
  %551 = vmatprep.subr.mxu0 0.0
  %552 = vmatpush1.msra.mxu0 0.0
  %553 = vmatprep.subr.mxu0 0.0
  %554 = vmatpush1.msra.mxu0 0.0
  %555 = vmatprep.subr.mxu0 0.0
  %556 = vmatpush1.msra.mxu0 0.0
  %557 = vmatprep.subr.mxu0 0.0
  %558 = vmatpush1.msra.mxu0 0.0
  %559 = vmatprep.subr.mxu0 0.0
  %560 = vmatpush1.msra.mxu0 0.0
  %561 = vmatprep.subr.mxu0 0.0
  %562 = vmatpush1.msra.mxu0 0.0
  %563 = vmatprep.subr.mxu0 0.0
  %564 = vmatpush1.msra.mxu0 0.0
  %565 = vmatprep.subr.mxu0 0.0
  %566 = vmatpush1.msra.mxu0 0.0
  %567 = vmatprep.subr.mxu0 0.0
  %568 = vmatpush1.msra.mxu0 0.0
  %569 = vmatprep.subr.mxu0 0.0
  %570 = vmatpush1.msra.mxu0 0.0
  %571 = vmatprep.subr.mxu0 0.0
  %572 = vmatpush1.msra.mxu0 0.0
  %573 = vmatprep.subr.mxu0 0.0
  %574 = vmatpush1.msra.mxu0 0.0
  %575 = vmatprep.subr.mxu0 0.0
  %576 = vmatpush1.msra.mxu0 0.0
  %577 = vmatprep.subr.mxu0 0.0
  %578 = vmatpush1.msra.mxu0 0.0
  %579 = vmatprep.subr.mxu0 0.0
  %580 = vmatpush1.msra.mxu0 0.0
  %581 = vmatprep.subr.mxu0 0.0
  %582 = vmatpush1.msra.mxu0 0.0
  %583 = vmatprep.subr.mxu0 0.0
  %584 = vmatpush1.msra.mxu0 0.0
  %585 = vmatprep.subr.mxu0 0.0
  %586 = vmatpush1.msra.mxu0 0.0
  %587 = vmatprep.subr.mxu0 0.0
  %588 = vmatpush1.msra.mxu0 0.0
  %589 = vmatprep.subr.mxu0 0.0
  %590 = vmatpush1.msra.mxu0 0.0
  %591 = vmatprep.mubr.f32.mxu0 0.0
  %592 = vmatmul.mubr.f32.gmra.mrb[0].mxu0 %v507
  %v593 = vpop.f32.mrb[0].mxu0
  %v594 = vadd.f32 0.0, %v593
  %v595 = vpop.f32.mrb[0].mxu0
  %596 = vmatprep.mubr.f32.mxu0 0.0
  %597 = vmatmul.mubr.f32.gmra.mrb[0].mxu0 %v510
  %v598 = vpop.f32.mrb[0].mxu0
  %v599 = vadd.f32 0.0, %v598
  %v600 = vpop.f32.mrb[0].mxu0
  %601 = vmatprep.mubr.f32.mxu0 0.0
  %602 = vmatmul.mubr.f32.gmra.mrb[0].mxu0 %v513
  %v603 = vpop.f32.mrb[0].mxu0
  %v604 = vadd.f32 0.0, %v603
  %v605 = vpop.f32.mrb[0].mxu0
  %606 = vmatprep.mubr.f32.mxu0 0.0
  %607 = vmatmul.mubr.f32.gmra.mrb[0].mxu0 %v516
  %v608 = vpop.f32.mrb[0].mxu0
  %v609 = vadd.f32 0.0, %v608
  %v610 = vpop.f32.mrb[0].mxu0
  %611 = vmatprep.mubr.f32.mxu0 0.0
  %612 = vmatmul.mubr.f32.gmra.mrb[0].mxu0 %v519
  %v613 = vpop.f32.mrb[0].mxu0
  %v614 = vadd.f32 0.0, %v613
  %v615 = vpop.f32.mrb[0].mxu0
  %616 = vmatprep.mubr.f32.mxu0 0.0
  %617 = vmatmul.mubr.f32.gmra.mrb[0].mxu0 %v522
  %v618 = vpop.f32.mrb[0].mxu0
  %v619 = vadd.f32 0.0, %v618
  %v620 = vpop.f32.mrb[0].mxu0
  %621 = vdwg.mxu0
  %v622 = vadd.f32 %v265, %v594
  %v623 = vadd.f32 %v270, %v599
  %v624 = vadd.f32 %v275, %v604
  %v625 = vadd.f32 %v280, %v609
  %v626 = vadd.f32 %v285, %v614
  %v627 = vadd.f32 %v290, %v619
  %s628 = scalar_lea.vmem %s1, 160
  %v629 = vld [vmem:[%s628] sm:$0xff]
  %v630 = vld [vmem:[%s628 + $0x8] sm:$0xff]
  %v631 = vld [vmem:[%s628 + $0x10] sm:$0xff]
  %v632 = vld [vmem:[%s628 + $0x18] sm:$0xf]
  %v634 = vsel %vm78, %v632, 0
  %636 = vmatprep.subr.mxu0 0.0
  %637 = vmatpush1.msra.mxu0 %v629
  %638 = vmatprep.subr.mxu0 0.0
  %639 = vmatpush1.msra.mxu0 %v630
  %640 = vmatprep.subr.mxu0 0.0
  %641 = vmatpush1.msra.mxu0 %v631
  %642 = vmatprep.subr.mxu0 0.0
  %643 = vmatpush1.msra.mxu0 %v634
  %644 = vmatprep.subr.mxu0 0.0
  %645 = vmatpush1.msra.mxu0 0.0
  %646 = vmatprep.subr.mxu0 0.0
  %647 = vmatpush1.msra.mxu0 0.0
  %648 = vmatprep.subr.mxu0 0.0
  %649 = vmatpush1.msra.mxu0 0.0
  %650 = vmatprep.subr.mxu0 0.0
  %651 = vmatpush1.msra.mxu0 0.0
  %652 = vmatprep.subr.mxu0 0.0
  %653 = vmatpush1.msra.mxu0 0.0
  %654 = vmatprep.subr.mxu0 0.0
  %655 = vmatpush1.msra.mxu0 0.0
  %656 = vmatprep.subr.mxu0 0.0
  %657 = vmatpush1.msra.mxu0 0.0
  %658 = vmatprep.subr.mxu0 0.0
  %659 = vmatpush1.msra.mxu0 0.0
  %660 = vmatprep.subr.mxu0 0.0
  %661 = vmatpush1.msra.mxu0 0.0
  %662 = vmatprep.subr.mxu0 0.0
  %663 = vmatpush1.msra.mxu0 0.0
  %664 = vmatprep.subr.mxu0 0.0
  %665 = vmatpush1.msra.mxu0 0.0
  %666 = vmatprep.subr.mxu0 0.0
  %667 = vmatpush1.msra.mxu0 0.0
  %668 = vmatprep.subr.mxu0 0.0
  %669 = vmatpush1.msra.mxu0 0.0
  %670 = vmatprep.subr.mxu0 0.0
  %671 = vmatpush1.msra.mxu0 0.0
  %672 = vmatprep.subr.mxu0 0.0
  %673 = vmatpush1.msra.mxu0 0.0
  %674 = vmatprep.subr.mxu0 0.0
  %675 = vmatpush1.msra.mxu0 0.0
  %676 = vmatprep.subr.mxu0 0.0
  %677 = vmatpush1.msra.mxu0 0.0
  %678 = vmatprep.subr.mxu0 0.0
  %679 = vmatpush1.msra.mxu0 0.0
  %680 = vmatprep.subr.mxu0 0.0
  %681 = vmatpush1.msra.mxu0 0.0
  %682 = vmatprep.subr.mxu0 0.0
  %683 = vmatpush1.msra.mxu0 0.0
  %684 = vmatprep.subr.mxu0 0.0
  %685 = vmatpush1.msra.mxu0 0.0
  %686 = vmatprep.subr.mxu0 0.0
  %687 = vmatpush1.msra.mxu0 0.0
  %688 = vmatprep.subr.mxu0 0.0
  %689 = vmatpush1.msra.mxu0 0.0
  %690 = vmatprep.subr.mxu0 0.0
  %691 = vmatpush1.msra.mxu0 0.0
  %692 = vmatprep.subr.mxu0 0.0
  %693 = vmatpush1.msra.mxu0 0.0
  %694 = vmatprep.subr.mxu0 0.0
  %695 = vmatpush1.msra.mxu0 0.0
  %696 = vmatprep.subr.mxu0 0.0
  %697 = vmatpush1.msra.mxu0 0.0
  %698 = vmatprep.subr.mxu0 0.0
  %699 = vmatpush1.msra.mxu0 0.0
  %700 = vmatprep.mubr.f32.mxu0 0.0
  %701 = vmatmul.mubr.f32.gmra.mrb[0].mxu0 %v507
  %v702 = vpop.f32.mrb[0].mxu0
  %v703 = vadd.f32 0.0, %v702
  %v704 = vpop.f32.mrb[0].mxu0
  %705 = vmatprep.mubr.f32.mxu0 0.0
  %706 = vmatmul.mubr.f32.gmra.mrb[0].mxu0 %v510
  %v707 = vpop.f32.mrb[0].mxu0
  %v708 = vadd.f32 0.0, %v707
  %v709 = vpop.f32.mrb[0].mxu0
  %710 = vmatprep.mubr.f32.mxu0 0.0
  %711 = vmatmul.mubr.f32.gmra.mrb[0].mxu0 %v513
  %v712 = vpop.f32.mrb[0].mxu0
  %v713 = vadd.f32 0.0, %v712
  %v714 = vpop.f32.mrb[0].mxu0
  %715 = vmatprep.mubr.f32.mxu0 0.0
  %716 = vmatmul.mubr.f32.gmra.mrb[0].mxu0 %v516
  %v717 = vpop.f32.mrb[0].mxu0
  %v718 = vadd.f32 0.0, %v717
  %v719 = vpop.f32.mrb[0].mxu0
  %720 = vmatprep.mubr.f32.mxu0 0.0
  %721 = vmatmul.mubr.f32.gmra.mrb[0].mxu0 %v519
  %v722 = vpop.f32.mrb[0].mxu0
  %v723 = vadd.f32 0.0, %v722
  %v724 = vpop.f32.mrb[0].mxu0
  %725 = vmatprep.mubr.f32.mxu0 0.0
  %726 = vmatmul.mubr.f32.gmra.mrb[0].mxu0 %v522
  %v727 = vpop.f32.mrb[0].mxu0
  %v728 = vadd.f32 0.0, %v727
  %v729 = vpop.f32.mrb[0].mxu0
  %730 = vdwg.mxu0
  %v731 = vadd.f32 %v466, %v703
  %v732 = vadd.f32 %v471, %v708
  %v733 = vadd.f32 %v476, %v713
  %v734 = vadd.f32 %v481, %v718
  %v735 = vadd.f32 %v486, %v723
  %v736 = vadd.f32 %v491, %v728
  %s737 = scalar_lea.vmem %s0, 168
  %v738 = vld [vmem:[%s737] sm:$0xff]
  %v739 = vld [vmem:[%s737 + $0x8] sm:$0xff]
  %v740 = vld [vmem:[%s737 + $0x10] sm:$0xff]
  %v741 = vld [vmem:[%s737 + $0x18] sm:$0xff]
  %v742 = vld [vmem:[%s737 + $0x20] sm:$0xff]
  %v743 = vld [vmem:[%s737 + $0x28] sm:$0xff]
  %s744 = scalar_lea.vmem %s1, 192
  %v745 = vld [vmem:[%s744] sm:$0xff]
  %v746 = vld [vmem:[%s744 + $0x8] sm:$0xff]
  %v747 = vld [vmem:[%s744 + $0x10] sm:$0xff]
  %v748 = vld [vmem:[%s744 + $0x18] sm:$0xf]
  %v750 = vsel %vm59, %v738, 0
  %v753 = vsel %vm59, %v739, 0
  %v756 = vsel %vm59, %v740, 0
  %v759 = vsel %vm59, %v741, 0
  %v762 = vsel %vm59, %v742, 0
  %v765 = vsel %vm59, %v743, 0
  %v768 = vsel %vm78, %v748, 0
  %770 = vmatprep.subr.mxu0 0.0
  %771 = vmatpush1.msra.mxu0 %v745
  %772 = vmatprep.subr.mxu0 0.0
  %773 = vmatpush1.msra.mxu0 %v746
  %774 = vmatprep.subr.mxu0 0.0
  %775 = vmatpush1.msra.mxu0 %v747
  %776 = vmatprep.subr.mxu0 0.0
  %777 = vmatpush1.msra.mxu0 %v768
  %778 = vmatprep.subr.mxu0 0.0
  %779 = vmatpush1.msra.mxu0 0.0
  %780 = vmatprep.subr.mxu0 0.0
  %781 = vmatpush1.msra.mxu0 0.0
  %782 = vmatprep.subr.mxu0 0.0
  %783 = vmatpush1.msra.mxu0 0.0
  %784 = vmatprep.subr.mxu0 0.0
  %785 = vmatpush1.msra.mxu0 0.0
  %786 = vmatprep.subr.mxu0 0.0
  %787 = vmatpush1.msra.mxu0 0.0
  %788 = vmatprep.subr.mxu0 0.0
  %789 = vmatpush1.msra.mxu0 0.0
  %790 = vmatprep.subr.mxu0 0.0
  %791 = vmatpush1.msra.mxu0 0.0
  %792 = vmatprep.subr.mxu0 0.0
  %793 = vmatpush1.msra.mxu0 0.0
  %794 = vmatprep.subr.mxu0 0.0
  %795 = vmatpush1.msra.mxu0 0.0
  %796 = vmatprep.subr.mxu0 0.0
  %797 = vmatpush1.msra.mxu0 0.0
  %798 = vmatprep.subr.mxu0 0.0
  %799 = vmatpush1.msra.mxu0 0.0
  %800 = vmatprep.subr.mxu0 0.0
  %801 = vmatpush1.msra.mxu0 0.0
  %802 = vmatprep.subr.mxu0 0.0
  %803 = vmatpush1.msra.mxu0 0.0
  %804 = vmatprep.subr.mxu0 0.0
  %805 = vmatpush1.msra.mxu0 0.0
  %806 = vmatprep.subr.mxu0 0.0
  %807 = vmatpush1.msra.mxu0 0.0
  %808 = vmatprep.subr.mxu0 0.0
  %809 = vmatpush1.msra.mxu0 0.0
  %810 = vmatprep.subr.mxu0 0.0
  %811 = vmatpush1.msra.mxu0 0.0
  %812 = vmatprep.subr.mxu0 0.0
  %813 = vmatpush1.msra.mxu0 0.0
  %814 = vmatprep.subr.mxu0 0.0
  %815 = vmatpush1.msra.mxu0 0.0
  %816 = vmatprep.subr.mxu0 0.0
  %817 = vmatpush1.msra.mxu0 0.0
  %818 = vmatprep.subr.mxu0 0.0
  %819 = vmatpush1.msra.mxu0 0.0
  %820 = vmatprep.subr.mxu0 0.0
  %821 = vmatpush1.msra.mxu0 0.0
  %822 = vmatprep.subr.mxu0 0.0
  %823 = vmatpush1.msra.mxu0 0.0
  %824 = vmatprep.subr.mxu0 0.0
  %825 = vmatpush1.msra.mxu0 0.0
  %826 = vmatprep.subr.mxu0 0.0
  %827 = vmatpush1.msra.mxu0 0.0
  %828 = vmatprep.subr.mxu0 0.0
  %829 = vmatpush1.msra.mxu0 0.0
  %830 = vmatprep.subr.mxu0 0.0
  %831 = vmatpush1.msra.mxu0 0.0
  %832 = vmatprep.subr.mxu0 0.0
  %833 = vmatpush1.msra.mxu0 0.0
  %834 = vmatprep.mubr.f32.mxu0 0.0
  %835 = vmatmul.mubr.f32.gmra.mrb[0].mxu0 %v750
  %v836 = vpop.f32.mrb[0].mxu0
  %v837 = vadd.f32 0.0, %v836
  %v838 = vpop.f32.mrb[0].mxu0
  %839 = vmatprep.mubr.f32.mxu0 0.0
  %840 = vmatmul.mubr.f32.gmra.mrb[0].mxu0 %v753
  %v841 = vpop.f32.mrb[0].mxu0
  %v842 = vadd.f32 0.0, %v841
  %v843 = vpop.f32.mrb[0].mxu0
  %844 = vmatprep.mubr.f32.mxu0 0.0
  %845 = vmatmul.mubr.f32.gmra.mrb[0].mxu0 %v756
  %v846 = vpop.f32.mrb[0].mxu0
  %v847 = vadd.f32 0.0, %v846
  %v848 = vpop.f32.mrb[0].mxu0
  %849 = vmatprep.mubr.f32.mxu0 0.0
  %850 = vmatmul.mubr.f32.gmra.mrb[0].mxu0 %v759
  %v851 = vpop.f32.mrb[0].mxu0
  %v852 = vadd.f32 0.0, %v851
  %v853 = vpop.f32.mrb[0].mxu0
  %854 = vmatprep.mubr.f32.mxu0 0.0
  %855 = vmatmul.mubr.f32.gmra.mrb[0].mxu0 %v762
  %v856 = vpop.f32.mrb[0].mxu0
  %v857 = vadd.f32 0.0, %v856
  %v858 = vpop.f32.mrb[0].mxu0
  %859 = vmatprep.mubr.f32.mxu0 0.0
  %860 = vmatmul.mubr.f32.gmra.mrb[0].mxu0 %v765
  %v861 = vpop.f32.mrb[0].mxu0
  %v862 = vadd.f32 0.0, %v861
  %v863 = vpop.f32.mrb[0].mxu0
  %864 = vdwg.mxu0
  %v865 = vadd.f32 %v622, %v837
  %v866 = vadd.f32 %v623, %v842
  %v867 = vadd.f32 %v624, %v847
  %v868 = vadd.f32 %v625, %v852
  %v869 = vadd.f32 %v626, %v857
  %v870 = vadd.f32 %v627, %v862
  %s871 = scalar_lea.vmem %s1, 224
  %v872 = vld [vmem:[%s871] sm:$0xff]
  %v873 = vld [vmem:[%s871 + $0x8] sm:$0xff]
  %v874 = vld [vmem:[%s871 + $0x10] sm:$0xff]
  %v875 = vld [vmem:[%s871 + $0x18] sm:$0xf]
  %v877 = vsel %vm78, %v875, 0
  %879 = vmatprep.subr.mxu0 0.0
  %880 = vmatpush1.msra.mxu0 %v872
  %881 = vmatprep.subr.mxu0 0.0
  %882 = vmatpush1.msra.mxu0 %v873
  %883 = vmatprep.subr.mxu0 0.0
  %884 = vmatpush1.msra.mxu0 %v874
  %885 = vmatprep.subr.mxu0 0.0
  %886 = vmatpush1.msra.mxu0 %v877
  %887 = vmatprep.subr.mxu0 0.0
  %888 = vmatpush1.msra.mxu0 0.0
  %889 = vmatprep.subr.mxu0 0.0
  %890 = vmatpush1.msra.mxu0 0.0
  %891 = vmatprep.subr.mxu0 0.0
  %892 = vmatpush1.msra.mxu0 0.0
  %893 = vmatprep.subr.mxu0 0.0
  %894 = vmatpush1.msra.mxu0 0.0
  %895 = vmatprep.subr.mxu0 0.0
  %896 = vmatpush1.msra.mxu0 0.0
  %897 = vmatprep.subr.mxu0 0.0
  %898 = vmatpush1.msra.mxu0 0.0
  %899 = vmatprep.subr.mxu0 0.0
  %900 = vmatpush1.msra.mxu0 0.0
  %901 = vmatprep.subr.mxu0 0.0
  %902 = vmatpush1.msra.mxu0 0.0
  %903 = vmatprep.subr.mxu0 0.0
  %904 = vmatpush1.msra.mxu0 0.0
  %905 = vmatprep.subr.mxu0 0.0
  %906 = vmatpush1.msra.mxu0 0.0
  %907 = vmatprep.subr.mxu0 0.0
  %908 = vmatpush1.msra.mxu0 0.0
  %909 = vmatprep.subr.mxu0 0.0
  %910 = vmatpush1.msra.mxu0 0.0
  %911 = vmatprep.subr.mxu0 0.0
  %912 = vmatpush1.msra.mxu0 0.0
  %913 = vmatprep.subr.mxu0 0.0
  %914 = vmatpush1.msra.mxu0 0.0
  %915 = vmatprep.subr.mxu0 0.0
  %916 = vmatpush1.msra.mxu0 0.0
  %917 = vmatprep.subr.mxu0 0.0
  %918 = vmatpush1.msra.mxu0 0.0
  %919 = vmatprep.subr.mxu0 0.0
  %920 = vmatpush1.msra.mxu0 0.0
  %921 = vmatprep.subr.mxu0 0.0
  %922 = vmatpush1.msra.mxu0 0.0
  %923 = vmatprep.subr.mxu0 0.0
  %924 = vmatpush1.msra.mxu0 0.0
  %925 = vmatprep.subr.mxu0 0.0
  %926 = vmatpush1.msra.mxu0 0.0
  %927 = vmatprep.subr.mxu0 0.0
  %928 = vmatpush1.msra.mxu0 0.0
  %929 = vmatprep.subr.mxu0 0.0
  %930 = vmatpush1.msra.mxu0 0.0
  %931 = vmatprep.subr.mxu0 0.0
  %932 = vmatpush1.msra.mxu0 0.0
  %933 = vmatprep.subr.mxu0 0.0
  %934 = vmatpush1.msra.mxu0 0.0
  %935 = vmatprep.subr.mxu0 0.0
  %936 = vmatpush1.msra.mxu0 0.0
  %937 = vmatprep.subr.mxu0 0.0
  %938 = vmatpush1.msra.mxu0 0.0
  %939 = vmatprep.subr.mxu0 0.0
  %940 = vmatpush1.msra.mxu0 0.0
  %941 = vmatprep.subr.mxu0 0.0
  %942 = vmatpush1.msra.mxu0 0.0
  %943 = vmatprep.mubr.f32.mxu0 0.0
  %944 = vmatmul.mubr.f32.gmra.mrb[0].mxu0 %v750
  %v945 = vpop.f32.mrb[0].mxu0
  %v946 = vadd.f32 0.0, %v945
  %v947 = vpop.f32.mrb[0].mxu0
  %948 = vmatprep.mubr.f32.mxu0 0.0
  %949 = vmatmul.mubr.f32.gmra.mrb[0].mxu0 %v753
  %v950 = vpop.f32.mrb[0].mxu0
  %v951 = vadd.f32 0.0, %v950
  %v952 = vpop.f32.mrb[0].mxu0
  %953 = vmatprep.mubr.f32.mxu0 0.0
  %954 = vmatmul.mubr.f32.gmra.mrb[0].mxu0 %v756
  %v955 = vpop.f32.mrb[0].mxu0
  %v956 = vadd.f32 0.0, %v955
  %v957 = vpop.f32.mrb[0].mxu0
  %958 = vmatprep.mubr.f32.mxu0 0.0
  %959 = vmatmul.mubr.f32.gmra.mrb[0].mxu0 %v759
  %v960 = vpop.f32.mrb[0].mxu0
  %v961 = vadd.f32 0.0, %v960
  %v962 = vpop.f32.mrb[0].mxu0
  %963 = vmatprep.mubr.f32.mxu0 0.0
  %964 = vmatmul.mubr.f32.gmra.mrb[0].mxu0 %v762
  %v965 = vpop.f32.mrb[0].mxu0
  %v966 = vadd.f32 0.0, %v965
  %v967 = vpop.f32.mrb[0].mxu0
  %968 = vmatprep.mubr.f32.mxu0 0.0
  %969 = vmatmul.mubr.f32.gmra.mrb[0].mxu0 %v765
  %v970 = vpop.f32.mrb[0].mxu0
  %v971 = vadd.f32 0.0, %v970
  %v972 = vpop.f32.mrb[0].mxu0
  %973 = vdwg.mxu0
  %v974 = vadd.f32 %v731, %v946
  %v975 = vadd.f32 %v732, %v951
  %v976 = vadd.f32 %v733, %v956
  %v977 = vadd.f32 %v734, %v961
  %v978 = vadd.f32 %v735, %v966
  %v979 = vadd.f32 %v736, %v971
  %s980 = scalar_lea.vmem %s0, 8
  %v981 = vld [vmem:[%s980] sm:$0xff]
  %v982 = vld [vmem:[%s980 + $0x8] sm:$0xff]
  %v983 = vld [vmem:[%s980 + $0x10] sm:$0xff]
  %v984 = vld [vmem:[%s980 + $0x18] sm:$0xff]
  %v985 = vld [vmem:[%s980 + $0x20] sm:$0xff]
  %v986 = vld [vmem:[%s980 + $0x28] sm:$0xff]
  %s987 = scalar_lea.vmem %s1, 256
  %v988 = vld [vmem:[%s987] sm:$0xff]
  %v989 = vld [vmem:[%s987 + $0x8] sm:$0xff]
  %v990 = vld [vmem:[%s987 + $0x10] sm:$0xff]
  %v991 = vld [vmem:[%s987 + $0x18] sm:$0xf]
  %v993 = vsel %vm59, %v981, 0
  %v996 = vsel %vm59, %v982, 0
  %v999 = vsel %vm59, %v983, 0
  %v1002 = vsel %vm59, %v984, 0
  %v1005 = vsel %vm59, %v985, 0
  %v1008 = vsel %vm59, %v986, 0
  %v1011 = vsel %vm78, %v991, 0
  %1013 = vmatprep.subr.mxu0 0.0
  %1014 = vmatpush1.msra.mxu0 %v988
  %1015 = vmatprep.subr.mxu0 0.0
  %1016 = vmatpush1.msra.mxu0 %v989
  %1017 = vmatprep.subr.mxu0 0.0
  %1018 = vmatpush1.msra.mxu0 %v990
  %1019 = vmatprep.subr.mxu0 0.0
  %1020 = vmatpush1.msra.mxu0 %v1011
  %1021 = vmatprep.subr.mxu0 0.0
  %1022 = vmatpush1.msra.mxu0 0.0
  %1023 = vmatprep.subr.mxu0 0.0
  %1024 = vmatpush1.msra.mxu0 0.0
  %1025 = vmatprep.subr.mxu0 0.0
  %1026 = vmatpush1.msra.mxu0 0.0
  %1027 = vmatprep.subr.mxu0 0.0
  %1028 = vmatpush1.msra.mxu0 0.0
  %1029 = vmatprep.subr.mxu0 0.0
  %1030 = vmatpush1.msra.mxu0 0.0
  %1031 = vmatprep.subr.mxu0 0.0
  %1032 = vmatpush1.msra.mxu0 0.0
  %1033 = vmatprep.subr.mxu0 0.0
  %1034 = vmatpush1.msra.mxu0 0.0
  %1035 = vmatprep.subr.mxu0 0.0
  %1036 = vmatpush1.msra.mxu0 0.0
  %1037 = vmatprep.subr.mxu0 0.0
  %1038 = vmatpush1.msra.mxu0 0.0
  %1039 = vmatprep.subr.mxu0 0.0
  %1040 = vmatpush1.msra.mxu0 0.0
  %1041 = vmatprep.subr.mxu0 0.0
  %1042 = vmatpush1.msra.mxu0 0.0
  %1043 = vmatprep.subr.mxu0 0.0
  %1044 = vmatpush1.msra.mxu0 0.0
  %1045 = vmatprep.subr.mxu0 0.0
  %1046 = vmatpush1.msra.mxu0 0.0
  %1047 = vmatprep.subr.mxu0 0.0
  %1048 = vmatpush1.msra.mxu0 0.0
  %1049 = vmatprep.subr.mxu0 0.0
  %1050 = vmatpush1.msra.mxu0 0.0
  %1051 = vmatprep.subr.mxu0 0.0
  %1052 = vmatpush1.msra.mxu0 0.0
  %1053 = vmatprep.subr.mxu0 0.0
  %1054 = vmatpush1.msra.mxu0 0.0
  %1055 = vmatprep.subr.mxu0 0.0
  %1056 = vmatpush1.msra.mxu0 0.0
  %1057 = vmatprep.subr.mxu0 0.0
  %1058 = vmatpush1.msra.mxu0 0.0
  %1059 = vmatprep.subr.mxu0 0.0
  %1060 = vmatpush1.msra.mxu0 0.0
  %1061 = vmatprep.subr.mxu0 0.0
  %1062 = vmatpush1.msra.mxu0 0.0
  %1063 = vmatprep.subr.mxu0 0.0
  %1064 = vmatpush1.msra.mxu0 0.0
  %1065 = vmatprep.subr.mxu0 0.0
  %1066 = vmatpush1.msra.mxu0 0.0
  %1067 = vmatprep.subr.mxu0 0.0
  %1068 = vmatpush1.msra.mxu0 0.0
  %1069 = vmatprep.subr.mxu0 0.0
  %1070 = vmatpush1.msra.mxu0 0.0
  %1071 = vmatprep.subr.mxu0 0.0
  %1072 = vmatpush1.msra.mxu0 0.0
  %1073 = vmatprep.subr.mxu0 0.0
  %1074 = vmatpush1.msra.mxu0 0.0
  %1075 = vmatprep.subr.mxu0 0.0
  %1076 = vmatpush1.msra.mxu0 0.0
  %1077 = vmatprep.mubr.f32.mxu0 0.0
  %1078 = vmatmul.mubr.f32.gmra.mrb[0].mxu0 %v993
  %v1079 = vpop.f32.mrb[0].mxu0
  %v1080 = vadd.f32 0.0, %v1079
  %v1081 = vpop.f32.mrb[0].mxu0
  %1082 = vmatprep.mubr.f32.mxu0 0.0
  %1083 = vmatmul.mubr.f32.gmra.mrb[0].mxu0 %v996
  %v1084 = vpop.f32.mrb[0].mxu0
  %v1085 = vadd.f32 0.0, %v1084
  %v1086 = vpop.f32.mrb[0].mxu0
  %1087 = vmatprep.mubr.f32.mxu0 0.0
  %1088 = vmatmul.mubr.f32.gmra.mrb[0].mxu0 %v999
  %v1089 = vpop.f32.mrb[0].mxu0
  %v1090 = vadd.f32 0.0, %v1089
  %v1091 = vpop.f32.mrb[0].mxu0
  %1092 = vmatprep.mubr.f32.mxu0 0.0
  %1093 = vmatmul.mubr.f32.gmra.mrb[0].mxu0 %v1002
  %v1094 = vpop.f32.mrb[0].mxu0
  %v1095 = vadd.f32 0.0, %v1094
  %v1096 = vpop.f32.mrb[0].mxu0
  %1097 = vmatprep.mubr.f32.mxu0 0.0
  %1098 = vmatmul.mubr.f32.gmra.mrb[0].mxu0 %v1005
  %v1099 = vpop.f32.mrb[0].mxu0
  %v1100 = vadd.f32 0.0, %v1099
  %v1101 = vpop.f32.mrb[0].mxu0
  %1102 = vmatprep.mubr.f32.mxu0 0.0
  %1103 = vmatmul.mubr.f32.gmra.mrb[0].mxu0 %v1008
  %v1104 = vpop.f32.mrb[0].mxu0
  %v1105 = vadd.f32 0.0, %v1104
  %v1106 = vpop.f32.mrb[0].mxu0
  %1107 = vdwg.mxu0
  %v1108 = vadd.f32 %v865, %v1080
  %v1109 = vadd.f32 %v866, %v1085
  %v1110 = vadd.f32 %v867, %v1090
  %v1111 = vadd.f32 %v868, %v1095
  %v1112 = vadd.f32 %v869, %v1100
  %v1113 = vadd.f32 %v870, %v1105
  %s1114 = scalar_lea.vmem %s1, 288
  %v1115 = vld [vmem:[%s1114] sm:$0xff]
  %v1116 = vld [vmem:[%s1114 + $0x8] sm:$0xff]
  %v1117 = vld [vmem:[%s1114 + $0x10] sm:$0xff]
  %v1118 = vld [vmem:[%s1114 + $0x18] sm:$0xf]
  %v1120 = vsel %vm78, %v1118, 0
  %1122 = vmatprep.subr.mxu0 0.0
  %1123 = vmatpush1.msra.mxu0 %v1115
  %1124 = vmatprep.subr.mxu0 0.0
  %1125 = vmatpush1.msra.mxu0 %v1116
  %1126 = vmatprep.subr.mxu0 0.0
  %1127 = vmatpush1.msra.mxu0 %v1117
  %1128 = vmatprep.subr.mxu0 0.0
  %1129 = vmatpush1.msra.mxu0 %v1120
  %1130 = vmatprep.subr.mxu0 0.0
  %1131 = vmatpush1.msra.mxu0 0.0
  %1132 = vmatprep.subr.mxu0 0.0
  %1133 = vmatpush1.msra.mxu0 0.0
  %1134 = vmatprep.subr.mxu0 0.0
  %1135 = vmatpush1.msra.mxu0 0.0
  %1136 = vmatprep.subr.mxu0 0.0
  %1137 = vmatpush1.msra.mxu0 0.0
  %1138 = vmatprep.subr.mxu0 0.0
  %1139 = vmatpush1.msra.mxu0 0.0
  %1140 = vmatprep.subr.mxu0 0.0
  %1141 = vmatpush1.msra.mxu0 0.0
  %1142 = vmatprep.subr.mxu0 0.0
  %1143 = vmatpush1.msra.mxu0 0.0
  %1144 = vmatprep.subr.mxu0 0.0
  %1145 = vmatpush1.msra.mxu0 0.0
  %1146 = vmatprep.subr.mxu0 0.0
  %1147 = vmatpush1.msra.mxu0 0.0
  %1148 = vmatprep.subr.mxu0 0.0
  %1149 = vmatpush1.msra.mxu0 0.0
  %1150 = vmatprep.subr.mxu0 0.0
  %1151 = vmatpush1.msra.mxu0 0.0
  %1152 = vmatprep.subr.mxu0 0.0
  %1153 = vmatpush1.msra.mxu0 0.0
  %1154 = vmatprep.subr.mxu0 0.0
  %1155 = vmatpush1.msra.mxu0 0.0
  %1156 = vmatprep.subr.mxu0 0.0
  %1157 = vmatpush1.msra.mxu0 0.0
  %1158 = vmatprep.subr.mxu0 0.0
  %1159 = vmatpush1.msra.mxu0 0.0
  %1160 = vmatprep.subr.mxu0 0.0
  %1161 = vmatpush1.msra.mxu0 0.0
  %1162 = vmatprep.subr.mxu0 0.0
  %1163 = vmatpush1.msra.mxu0 0.0
  %1164 = vmatprep.subr.mxu0 0.0
  %1165 = vmatpush1.msra.mxu0 0.0
  %1166 = vmatprep.subr.mxu0 0.0
  %1167 = vmatpush1.msra.mxu0 0.0
  %1168 = vmatprep.subr.mxu0 0.0
  %1169 = vmatpush1.msra.mxu0 0.0
  %1170 = vmatprep.subr.mxu0 0.0
  %1171 = vmatpush1.msra.mxu0 0.0
  %1172 = vmatprep.subr.mxu0 0.0
  %1173 = vmatpush1.msra.mxu0 0.0
  %1174 = vmatprep.subr.mxu0 0.0
  %1175 = vmatpush1.msra.mxu0 0.0
  %1176 = vmatprep.subr.mxu0 0.0
  %1177 = vmatpush1.msra.mxu0 0.0
  %1178 = vmatprep.subr.mxu0 0.0
  %1179 = vmatpush1.msra.mxu0 0.0
  %1180 = vmatprep.subr.mxu0 0.0
  %1181 = vmatpush1.msra.mxu0 0.0
  %1182 = vmatprep.subr.mxu0 0.0
  %1183 = vmatpush1.msra.mxu0 0.0
  %1184 = vmatprep.subr.mxu0 0.0
  %1185 = vmatpush1.msra.mxu0 0.0
  %1186 = vmatprep.mubr.f32.mxu0 0.0
  %1187 = vmatmul.mubr.f32.gmra.mrb[0].mxu0 %v993
  %v1188 = vpop.f32.mrb[0].mxu0
  %v1189 = vadd.f32 0.0, %v1188
  %v1190 = vpop.f32.mrb[0].mxu0
  %1191 = vmatprep.mubr.f32.mxu0 0.0
  %1192 = vmatmul.mubr.f32.gmra.mrb[0].mxu0 %v996
  %v1193 = vpop.f32.mrb[0].mxu0
  %v1194 = vadd.f32 0.0, %v1193
  %v1195 = vpop.f32.mrb[0].mxu0
  %1196 = vmatprep.mubr.f32.mxu0 0.0
  %1197 = vmatmul.mubr.f32.gmra.mrb[0].mxu0 %v999
  %v1198 = vpop.f32.mrb[0].mxu0
  %v1199 = vadd.f32 0.0, %v1198
  %v1200 = vpop.f32.mrb[0].mxu0
  %1201 = vmatprep.mubr.f32.mxu0 0.0
  %1202 = vmatmul.mubr.f32.gmra.mrb[0].mxu0 %v1002
  %v1203 = vpop.f32.mrb[0].mxu0
  %v1204 = vadd.f32 0.0, %v1203
  %v1205 = vpop.f32.mrb[0].mxu0
  %1206 = vmatprep.mubr.f32.mxu0 0.0
  %1207 = vmatmul.mubr.f32.gmra.mrb[0].mxu0 %v1005
  %v1208 = vpop.f32.mrb[0].mxu0
  %v1209 = vadd.f32 0.0, %v1208
  %v1210 = vpop.f32.mrb[0].mxu0
  %1211 = vmatprep.mubr.f32.mxu0 0.0
  %1212 = vmatmul.mubr.f32.gmra.mrb[0].mxu0 %v1008
  %v1213 = vpop.f32.mrb[0].mxu0
  %v1214 = vadd.f32 0.0, %v1213
  %v1215 = vpop.f32.mrb[0].mxu0
  %1216 = vdwg.mxu0
  %v1217 = vadd.f32 %v974, %v1189
  %v1218 = vadd.f32 %v975, %v1194
  %v1219 = vadd.f32 %v976, %v1199
  %v1220 = vadd.f32 %v977, %v1204
  %v1221 = vadd.f32 %v978, %v1209
  %v1222 = vadd.f32 %v979, %v1214
  %1223 = vmatprep.subr.mxu0 0.0
  %1224 = vmatpush1.msra.mxu0 %v55
  %1225 = vmatprep.subr.mxu0 0.0
  %1226 = vmatpush1.msra.mxu0 %v56
  %1227 = vmatprep.subr.mxu0 0.0
  %1228 = vmatpush1.msra.mxu0 %v57
  %1229 = vmatprep.subr.mxu0 0.0
  %1230 = vmatpush1.msra.mxu0 %v80
  %1231 = vmatprep.subr.mxu0 0.0
  %1232 = vmatpush1.msra.mxu0 0.0
  %1233 = vmatprep.subr.mxu0 0.0
  %1234 = vmatpush1.msra.mxu0 0.0
  %1235 = vmatprep.subr.mxu0 0.0
  %1236 = vmatpush1.msra.mxu0 0.0
  %1237 = vmatprep.subr.mxu0 0.0
  %1238 = vmatpush1.msra.mxu0 0.0
  %1239 = vmatprep.subr.mxu0 0.0
  %1240 = vmatpush1.msra.mxu0 0.0
  %1241 = vmatprep.subr.mxu0 0.0
  %1242 = vmatpush1.msra.mxu0 0.0
  %1243 = vmatprep.subr.mxu0 0.0
  %1244 = vmatpush1.msra.mxu0 0.0
  %1245 = vmatprep.subr.mxu0 0.0
  %1246 = vmatpush1.msra.mxu0 0.0
  %1247 = vmatprep.subr.mxu0 0.0
  %1248 = vmatpush1.msra.mxu0 0.0
  %1249 = vmatprep.subr.mxu0 0.0
  %1250 = vmatpush1.msra.mxu0 0.0
  %1251 = vmatprep.subr.mxu0 0.0
  %1252 = vmatpush1.msra.mxu0 0.0
  %1253 = vmatprep.subr.mxu0 0.0
  %1254 = vmatpush1.msra.mxu0 0.0
  %1255 = vmatprep.subr.mxu0 0.0
  %1256 = vmatpush1.msra.mxu0 0.0
  %1257 = vmatprep.subr.mxu0 0.0
  %1258 = vmatpush1.msra.mxu0 0.0
  %1259 = vmatprep.subr.mxu0 0.0
  %1260 = vmatpush1.msra.mxu0 0.0
  %1261 = vmatprep.subr.mxu0 0.0
  %1262 = vmatpush1.msra.mxu0 0.0
  %1263 = vmatprep.subr.mxu0 0.0
  %1264 = vmatpush1.msra.mxu0 0.0
  %1265 = vmatprep.subr.mxu0 0.0
  %1266 = vmatpush1.msra.mxu0 0.0
  %1267 = vmatprep.subr.mxu0 0.0
  %1268 = vmatpush1.msra.mxu0 0.0
  %1269 = vmatprep.subr.mxu0 0.0
  %1270 = vmatpush1.msra.mxu0 0.0
  %1271 = vmatprep.subr.mxu0 0.0
  %1272 = vmatpush1.msra.mxu0 0.0
  %1273 = vmatprep.subr.mxu0 0.0
  %1274 = vmatpush1.msra.mxu0 0.0
  %1275 = vmatprep.subr.mxu0 0.0
  %1276 = vmatpush1.msra.mxu0 0.0
  %1277 = vmatprep.subr.mxu0 0.0
  %1278 = vmatpush1.msra.mxu0 0.0
  %1279 = vmatprep.subr.mxu0 0.0
  %1280 = vmatpush1.msra.mxu0 0.0
  %1281 = vmatprep.subr.mxu0 0.0
  %1282 = vmatpush1.msra.mxu0 0.0
  %1283 = vmatprep.subr.mxu0 0.0
  %1284 = vmatpush1.msra.mxu0 0.0
  %1285 = vmatprep.subr.mxu0 0.0
  %1286 = vmatpush1.msra.mxu0 0.0
  %1287 = vmatprep.mubr.f32.mxu0 0.0
  %1288 = vmatmul.mubr.f32.gmra.mrb[0].mxu0 %v507
  %v1289 = vpop.f32.mrb[0].mxu0
  %v1290 = vadd.f32 0.0, %v1289
  %v1291 = vpop.f32.mrb[0].mxu0
  %1292 = vmatprep.mubr.f32.mxu0 0.0
  %1293 = vmatmul.mubr.f32.gmra.mrb[0].mxu0 %v510
  %v1294 = vpop.f32.mrb[0].mxu0
  %v1295 = vadd.f32 0.0, %v1294
  %v1296 = vpop.f32.mrb[0].mxu0
  %1297 = vmatprep.mubr.f32.mxu0 0.0
  %1298 = vmatmul.mubr.f32.gmra.mrb[0].mxu0 %v513
  %v1299 = vpop.f32.mrb[0].mxu0
  %v1300 = vadd.f32 0.0, %v1299
  %v1301 = vpop.f32.mrb[0].mxu0
  %1302 = vmatprep.mubr.f32.mxu0 0.0
  %1303 = vmatmul.mubr.f32.gmra.mrb[0].mxu0 %v516
  %v1304 = vpop.f32.mrb[0].mxu0
  %v1305 = vadd.f32 0.0, %v1304
  %v1306 = vpop.f32.mrb[0].mxu0
  %1307 = vmatprep.mubr.f32.mxu0 0.0
  %1308 = vmatmul.mubr.f32.gmra.mrb[0].mxu0 %v519
  %v1309 = vpop.f32.mrb[0].mxu0
  %v1310 = vadd.f32 0.0, %v1309
  %v1311 = vpop.f32.mrb[0].mxu0
  %1312 = vmatprep.mubr.f32.mxu0 0.0
  %1313 = vmatmul.mubr.f32.gmra.mrb[0].mxu0 %v522
  %v1314 = vpop.f32.mrb[0].mxu0
  %v1315 = vadd.f32 0.0, %v1314
  %v1316 = vpop.f32.mrb[0].mxu0
  %1317 = vdwg.mxu0
  %1318 = vmatprep.subr.mxu0 0.0
  %1319 = vmatpush1.msra.mxu0 %v38
  %1320 = vmatprep.subr.mxu0 0.0
  %1321 = vmatpush1.msra.mxu0 %v39
  %1322 = vmatprep.subr.mxu0 0.0
  %1323 = vmatpush1.msra.mxu0 %v40
  %1324 = vmatprep.subr.mxu0 0.0
  %1325 = vmatpush1.msra.mxu0 %v196
  %1326 = vmatprep.subr.mxu0 0.0
  %1327 = vmatpush1.msra.mxu0 0.0
  %1328 = vmatprep.subr.mxu0 0.0
  %1329 = vmatpush1.msra.mxu0 0.0
  %1330 = vmatprep.subr.mxu0 0.0
  %1331 = vmatpush1.msra.mxu0 0.0
  %1332 = vmatprep.subr.mxu0 0.0
  %1333 = vmatpush1.msra.mxu0 0.0
  %1334 = vmatprep.subr.mxu0 0.0
  %1335 = vmatpush1.msra.mxu0 0.0
  %1336 = vmatprep.subr.mxu0 0.0
  %1337 = vmatpush1.msra.mxu0 0.0
  %1338 = vmatprep.subr.mxu0 0.0
  %1339 = vmatpush1.msra.mxu0 0.0
  %1340 = vmatprep.subr.mxu0 0.0
  %1341 = vmatpush1.msra.mxu0 0.0
  %1342 = vmatprep.subr.mxu0 0.0
  %1343 = vmatpush1.msra.mxu0 0.0
  %1344 = vmatprep.subr.mxu0 0.0
  %1345 = vmatpush1.msra.mxu0 0.0
  %1346 = vmatprep.subr.mxu0 0.0
  %1347 = vmatpush1.msra.mxu0 0.0
  %1348 = vmatprep.subr.mxu0 0.0
  %1349 = vmatpush1.msra.mxu0 0.0
  %1350 = vmatprep.subr.mxu0 0.0
  %1351 = vmatpush1.msra.mxu0 0.0
  %1352 = vmatprep.subr.mxu0 0.0
  %1353 = vmatpush1.msra.mxu0 0.0
  %1354 = vmatprep.subr.mxu0 0.0
  %1355 = vmatpush1.msra.mxu0 0.0
  %1356 = vmatprep.subr.mxu0 0.0
  %1357 = vmatpush1.msra.mxu0 0.0
  %1358 = vmatprep.subr.mxu0 0.0
  %1359 = vmatpush1.msra.mxu0 0.0
  %1360 = vmatprep.subr.mxu0 0.0
  %1361 = vmatpush1.msra.mxu0 0.0
  %1362 = vmatprep.subr.mxu0 0.0
  %1363 = vmatpush1.msra.mxu0 0.0
  %1364 = vmatprep.subr.mxu0 0.0
  %1365 = vmatpush1.msra.mxu0 0.0
  %1366 = vmatprep.subr.mxu0 0.0
  %1367 = vmatpush1.msra.mxu0 0.0
  %1368 = vmatprep.subr.mxu0 0.0
  %1369 = vmatpush1.msra.mxu0 0.0
  %1370 = vmatprep.subr.mxu0 0.0
  %1371 = vmatpush1.msra.mxu0 0.0
  %1372 = vmatprep.subr.mxu0 0.0
  %1373 = vmatpush1.msra.mxu0 0.0
  %1374 = vmatprep.subr.mxu0 0.0
  %1375 = vmatpush1.msra.mxu0 0.0
  %1376 = vmatprep.subr.mxu0 0.0
  %1377 = vmatpush1.msra.mxu0 0.0
  %1378 = vmatprep.subr.mxu0 0.0
  %1379 = vmatpush1.msra.mxu0 0.0
  %1380 = vmatprep.subr.mxu0 0.0
  %1381 = vmatpush1.msra.mxu0 0.0
  %1382 = vmatprep.mubr.f32.mxu0 0.0
  %1383 = vmatmul.mubr.f32.gmra.mrb[0].mxu0 %v61
  %v1384 = vpop.f32.mrb[0].mxu0
  %v1385 = vadd.f32 %v1290, %v1384
  %v1386 = vpop.f32.mrb[0].mxu0
  %1387 = vmatprep.mubr.f32.mxu0 0.0
  %1388 = vmatmul.mubr.f32.gmra.mrb[0].mxu0 %v64
  %v1389 = vpop.f32.mrb[0].mxu0
  %v1390 = vadd.f32 %v1295, %v1389
  %v1391 = vpop.f32.mrb[0].mxu0
  %1392 = vmatprep.mubr.f32.mxu0 0.0
  %1393 = vmatmul.mubr.f32.gmra.mrb[0].mxu0 %v67
  %v1394 = vpop.f32.mrb[0].mxu0
  %v1395 = vadd.f32 %v1300, %v1394
  %v1396 = vpop.f32.mrb[0].mxu0
  %1397 = vmatprep.mubr.f32.mxu0 0.0
  %1398 = vmatmul.mubr.f32.gmra.mrb[0].mxu0 %v70
  %v1399 = vpop.f32.mrb[0].mxu0
  %v1400 = vadd.f32 %v1305, %v1399
  %v1401 = vpop.f32.mrb[0].mxu0
  %1402 = vmatprep.mubr.f32.mxu0 0.0
  %1403 = vmatmul.mubr.f32.gmra.mrb[0].mxu0 %v73
  %v1404 = vpop.f32.mrb[0].mxu0
  %v1405 = vadd.f32 %v1310, %v1404
  %v1406 = vpop.f32.mrb[0].mxu0
  %1407 = vmatprep.mubr.f32.mxu0 0.0
  %1408 = vmatmul.mubr.f32.gmra.mrb[0].mxu0 %v76
  %v1409 = vpop.f32.mrb[0].mxu0
  %v1410 = vadd.f32 %v1315, %v1409
  %v1411 = vpop.f32.mrb[0].mxu0
  %1412 = vdwg.mxu0
  %1413 = vmatprep.subr.mxu0 0.0
  %1414 = vmatpush1.msra.mxu0 %v294
  %1415 = vmatprep.subr.mxu0 0.0
  %1416 = vmatpush1.msra.mxu0 %v295
  %1417 = vmatprep.subr.mxu0 0.0
  %1418 = vmatpush1.msra.mxu0 %v296
  %1419 = vmatprep.subr.mxu0 0.0
  %1420 = vmatpush1.msra.mxu0 %v299
  %1421 = vmatprep.subr.mxu0 0.0
  %1422 = vmatpush1.msra.mxu0 0.0
  %1423 = vmatprep.subr.mxu0 0.0
  %1424 = vmatpush1.msra.mxu0 0.0
  %1425 = vmatprep.subr.mxu0 0.0
  %1426 = vmatpush1.msra.mxu0 0.0
  %1427 = vmatprep.subr.mxu0 0.0
  %1428 = vmatpush1.msra.mxu0 0.0
  %1429 = vmatprep.subr.mxu0 0.0
  %1430 = vmatpush1.msra.mxu0 0.0
  %1431 = vmatprep.subr.mxu0 0.0
  %1432 = vmatpush1.msra.mxu0 0.0
  %1433 = vmatprep.subr.mxu0 0.0
  %1434 = vmatpush1.msra.mxu0 0.0
  %1435 = vmatprep.subr.mxu0 0.0
  %1436 = vmatpush1.msra.mxu0 0.0
  %1437 = vmatprep.subr.mxu0 0.0
  %1438 = vmatpush1.msra.mxu0 0.0
  %1439 = vmatprep.subr.mxu0 0.0
  %1440 = vmatpush1.msra.mxu0 0.0
  %1441 = vmatprep.subr.mxu0 0.0
  %1442 = vmatpush1.msra.mxu0 0.0
  %1443 = vmatprep.subr.mxu0 0.0
  %1444 = vmatpush1.msra.mxu0 0.0
  %1445 = vmatprep.subr.mxu0 0.0
  %1446 = vmatpush1.msra.mxu0 0.0
  %1447 = vmatprep.subr.mxu0 0.0
  %1448 = vmatpush1.msra.mxu0 0.0
  %1449 = vmatprep.subr.mxu0 0.0
  %1450 = vmatpush1.msra.mxu0 0.0
  %1451 = vmatprep.subr.mxu0 0.0
  %1452 = vmatpush1.msra.mxu0 0.0
  %1453 = vmatprep.subr.mxu0 0.0
  %1454 = vmatpush1.msra.mxu0 0.0
  %1455 = vmatprep.subr.mxu0 0.0
  %1456 = vmatpush1.msra.mxu0 0.0
  %1457 = vmatprep.subr.mxu0 0.0
  %1458 = vmatpush1.msra.mxu0 0.0
  %1459 = vmatprep.subr.mxu0 0.0
  %1460 = vmatpush1.msra.mxu0 0.0
  %1461 = vmatprep.subr.mxu0 0.0
  %1462 = vmatpush1.msra.mxu0 0.0
  %1463 = vmatprep.subr.mxu0 0.0
  %1464 = vmatpush1.msra.mxu0 0.0
  %1465 = vmatprep.subr.mxu0 0.0
  %1466 = vmatpush1.msra.mxu0 0.0
  %1467 = vmatprep.subr.mxu0 0.0
  %1468 = vmatpush1.msra.mxu0 0.0
  %1469 = vmatprep.subr.mxu0 0.0
  %1470 = vmatpush1.msra.mxu0 0.0
  %1471 = vmatprep.subr.mxu0 0.0
  %1472 = vmatpush1.msra.mxu0 0.0
  %1473 = vmatprep.subr.mxu0 0.0
  %1474 = vmatpush1.msra.mxu0 0.0
  %1475 = vmatprep.subr.mxu0 0.0
  %1476 = vmatpush1.msra.mxu0 0.0
  %1477 = vmatprep.mubr.f32.mxu0 0.0
  %1478 = vmatmul.mubr.f32.gmra.mrb[0].mxu0 %v507
  %v1479 = vpop.f32.mrb[0].mxu0
  %v1480 = vadd.f32 0.0, %v1479
  %v1481 = vpop.f32.mrb[0].mxu0
  %1482 = vmatprep.mubr.f32.mxu0 0.0
  %1483 = vmatmul.mubr.f32.gmra.mrb[0].mxu0 %v510
  %v1484 = vpop.f32.mrb[0].mxu0
  %v1485 = vadd.f32 0.0, %v1484
  %v1486 = vpop.f32.mrb[0].mxu0
  %1487 = vmatprep.mubr.f32.mxu0 0.0
  %1488 = vmatmul.mubr.f32.gmra.mrb[0].mxu0 %v513
  %v1489 = vpop.f32.mrb[0].mxu0
  %v1490 = vadd.f32 0.0, %v1489
  %v1491 = vpop.f32.mrb[0].mxu0
  %1492 = vmatprep.mubr.f32.mxu0 0.0
  %1493 = vmatmul.mubr.f32.gmra.mrb[0].mxu0 %v516
  %v1494 = vpop.f32.mrb[0].mxu0
  %v1495 = vadd.f32 0.0, %v1494
  %v1496 = vpop.f32.mrb[0].mxu0
  %1497 = vmatprep.mubr.f32.mxu0 0.0
  %1498 = vmatmul.mubr.f32.gmra.mrb[0].mxu0 %v519
  %v1499 = vpop.f32.mrb[0].mxu0
  %v1500 = vadd.f32 0.0, %v1499
  %v1501 = vpop.f32.mrb[0].mxu0
  %1502 = vmatprep.mubr.f32.mxu0 0.0
  %1503 = vmatmul.mubr.f32.gmra.mrb[0].mxu0 %v522
  %v1504 = vpop.f32.mrb[0].mxu0
  %v1505 = vadd.f32 0.0, %v1504
  %v1506 = vpop.f32.mrb[0].mxu0
  %1507 = vdwg.mxu0
  %1508 = vmatprep.subr.mxu0 0.0
  %1509 = vmatpush1.msra.mxu0 %v43
  %1510 = vmatprep.subr.mxu0 0.0
  %1511 = vmatpush1.msra.mxu0 %v44
  %1512 = vmatprep.subr.mxu0 0.0
  %1513 = vmatpush1.msra.mxu0 %v45
  %1514 = vmatprep.subr.mxu0 0.0
  %1515 = vmatpush1.msra.mxu0 %v397
  %1516 = vmatprep.subr.mxu0 0.0
  %1517 = vmatpush1.msra.mxu0 0.0
  %1518 = vmatprep.subr.mxu0 0.0
  %1519 = vmatpush1.msra.mxu0 0.0
  %1520 = vmatprep.subr.mxu0 0.0
  %1521 = vmatpush1.msra.mxu0 0.0
  %1522 = vmatprep.subr.mxu0 0.0
  %1523 = vmatpush1.msra.mxu0 0.0
  %1524 = vmatprep.subr.mxu0 0.0
  %1525 = vmatpush1.msra.mxu0 0.0
  %1526 = vmatprep.subr.mxu0 0.0
  %1527 = vmatpush1.msra.mxu0 0.0
  %1528 = vmatprep.subr.mxu0 0.0
  %1529 = vmatpush1.msra.mxu0 0.0
  %1530 = vmatprep.subr.mxu0 0.0
  %1531 = vmatpush1.msra.mxu0 0.0
  %1532 = vmatprep.subr.mxu0 0.0
  %1533 = vmatpush1.msra.mxu0 0.0
  %1534 = vmatprep.subr.mxu0 0.0
  %1535 = vmatpush1.msra.mxu0 0.0
  %1536 = vmatprep.subr.mxu0 0.0
  %1537 = vmatpush1.msra.mxu0 0.0
  %1538 = vmatprep.subr.mxu0 0.0
  %1539 = vmatpush1.msra.mxu0 0.0
  %1540 = vmatprep.subr.mxu0 0.0
  %1541 = vmatpush1.msra.mxu0 0.0
  %1542 = vmatprep.subr.mxu0 0.0
  %1543 = vmatpush1.msra.mxu0 0.0
  %1544 = vmatprep.subr.mxu0 0.0
  %1545 = vmatpush1.msra.mxu0 0.0
  %1546 = vmatprep.subr.mxu0 0.0
  %1547 = vmatpush1.msra.mxu0 0.0
  %1548 = vmatprep.subr.mxu0 0.0
  %1549 = vmatpush1.msra.mxu0 0.0
  %1550 = vmatprep.subr.mxu0 0.0
  %1551 = vmatpush1.msra.mxu0 0.0
  %1552 = vmatprep.subr.mxu0 0.0
  %1553 = vmatpush1.msra.mxu0 0.0
  %1554 = vmatprep.subr.mxu0 0.0
  %1555 = vmatpush1.msra.mxu0 0.0
  %1556 = vmatprep.subr.mxu0 0.0
  %1557 = vmatpush1.msra.mxu0 0.0
  %1558 = vmatprep.subr.mxu0 0.0
  %1559 = vmatpush1.msra.mxu0 0.0
  %1560 = vmatprep.subr.mxu0 0.0
  %1561 = vmatpush1.msra.mxu0 0.0
  %1562 = vmatprep.subr.mxu0 0.0
  %1563 = vmatpush1.msra.mxu0 0.0
  %1564 = vmatprep.subr.mxu0 0.0
  %1565 = vmatpush1.msra.mxu0 0.0
  %1566 = vmatprep.subr.mxu0 0.0
  %1567 = vmatpush1.msra.mxu0 0.0
  %1568 = vmatprep.subr.mxu0 0.0
  %1569 = vmatpush1.msra.mxu0 0.0
  %1570 = vmatprep.subr.mxu0 0.0
  %1571 = vmatpush1.msra.mxu0 0.0
  %1572 = vmatprep.mubr.f32.mxu0 0.0
  %1573 = vmatmul.mubr.f32.gmra.mrb[0].mxu0 %v61
  %v1574 = vpop.f32.mrb[0].mxu0
  %v1575 = vadd.f32 %v1480, %v1574
  %v1576 = vpop.f32.mrb[0].mxu0
  %1577 = vmatprep.mubr.f32.mxu0 0.0
  %1578 = vmatmul.mubr.f32.gmra.mrb[0].mxu0 %v64
  %v1579 = vpop.f32.mrb[0].mxu0
  %v1580 = vadd.f32 %v1485, %v1579
  %v1581 = vpop.f32.mrb[0].mxu0
  %1582 = vmatprep.mubr.f32.mxu0 0.0
  %1583 = vmatmul.mubr.f32.gmra.mrb[0].mxu0 %v67
  %v1584 = vpop.f32.mrb[0].mxu0
  %v1585 = vadd.f32 %v1490, %v1584
  %v1586 = vpop.f32.mrb[0].mxu0
  %1587 = vmatprep.mubr.f32.mxu0 0.0
  %1588 = vmatmul.mubr.f32.gmra.mrb[0].mxu0 %v70
  %v1589 = vpop.f32.mrb[0].mxu0
  %v1590 = vadd.f32 %v1495, %v1589
  %v1591 = vpop.f32.mrb[0].mxu0
  %1592 = vmatprep.mubr.f32.mxu0 0.0
  %1593 = vmatmul.mubr.f32.gmra.mrb[0].mxu0 %v73
  %v1594 = vpop.f32.mrb[0].mxu0
  %v1595 = vadd.f32 %v1500, %v1594
  %v1596 = vpop.f32.mrb[0].mxu0
  %1597 = vmatprep.mubr.f32.mxu0 0.0
  %1598 = vmatmul.mubr.f32.gmra.mrb[0].mxu0 %v76
  %v1599 = vpop.f32.mrb[0].mxu0
  %v1600 = vadd.f32 %v1505, %v1599
  %v1601 = vpop.f32.mrb[0].mxu0
  %1602 = vdwg.mxu0
  %1603 = vmatprep.subr.mxu0 0.0
  %1604 = vmatpush1.msra.mxu0 %v502
  %1605 = vmatprep.subr.mxu0 0.0
  %1606 = vmatpush1.msra.mxu0 %v503
  %1607 = vmatprep.subr.mxu0 0.0
  %1608 = vmatpush1.msra.mxu0 %v504
  %1609 = vmatprep.subr.mxu0 0.0
  %1610 = vmatpush1.msra.mxu0 %v525
  %1611 = vmatprep.subr.mxu0 0.0
  %1612 = vmatpush1.msra.mxu0 0.0
  %1613 = vmatprep.subr.mxu0 0.0
  %1614 = vmatpush1.msra.mxu0 0.0
  %1615 = vmatprep.subr.mxu0 0.0
  %1616 = vmatpush1.msra.mxu0 0.0
  %1617 = vmatprep.subr.mxu0 0.0
  %1618 = vmatpush1.msra.mxu0 0.0
  %1619 = vmatprep.subr.mxu0 0.0
  %1620 = vmatpush1.msra.mxu0 0.0
  %1621 = vmatprep.subr.mxu0 0.0
  %1622 = vmatpush1.msra.mxu0 0.0
  %1623 = vmatprep.subr.mxu0 0.0
  %1624 = vmatpush1.msra.mxu0 0.0
  %1625 = vmatprep.subr.mxu0 0.0
  %1626 = vmatpush1.msra.mxu0 0.0
  %1627 = vmatprep.subr.mxu0 0.0
  %1628 = vmatpush1.msra.mxu0 0.0
  %1629 = vmatprep.subr.mxu0 0.0
  %1630 = vmatpush1.msra.mxu0 0.0
  %1631 = vmatprep.subr.mxu0 0.0
  %1632 = vmatpush1.msra.mxu0 0.0
  %1633 = vmatprep.subr.mxu0 0.0
  %1634 = vmatpush1.msra.mxu0 0.0
  %1635 = vmatprep.subr.mxu0 0.0
  %1636 = vmatpush1.msra.mxu0 0.0
  %1637 = vmatprep.subr.mxu0 0.0
  %1638 = vmatpush1.msra.mxu0 0.0
  %1639 = vmatprep.subr.mxu0 0.0
  %1640 = vmatpush1.msra.mxu0 0.0
  %1641 = vmatprep.subr.mxu0 0.0
  %1642 = vmatpush1.msra.mxu0 0.0
  %1643 = vmatprep.subr.mxu0 0.0
  %1644 = vmatpush1.msra.mxu0 0.0
  %1645 = vmatprep.subr.mxu0 0.0
  %1646 = vmatpush1.msra.mxu0 0.0
  %1647 = vmatprep.subr.mxu0 0.0
  %1648 = vmatpush1.msra.mxu0 0.0
  %1649 = vmatprep.subr.mxu0 0.0
  %1650 = vmatpush1.msra.mxu0 0.0
  %1651 = vmatprep.subr.mxu0 0.0
  %1652 = vmatpush1.msra.mxu0 0.0
  %1653 = vmatprep.subr.mxu0 0.0
  %1654 = vmatpush1.msra.mxu0 0.0
  %1655 = vmatprep.subr.mxu0 0.0
  %1656 = vmatpush1.msra.mxu0 0.0
  %1657 = vmatprep.subr.mxu0 0.0
  %1658 = vmatpush1.msra.mxu0 0.0
  %1659 = vmatprep.subr.mxu0 0.0
  %1660 = vmatpush1.msra.mxu0 0.0
  %1661 = vmatprep.subr.mxu0 0.0
  %1662 = vmatpush1.msra.mxu0 0.0
  %1663 = vmatprep.subr.mxu0 0.0
  %1664 = vmatpush1.msra.mxu0 0.0
  %1665 = vmatprep.subr.mxu0 0.0
  %1666 = vmatpush1.msra.mxu0 0.0
  %1667 = vmatprep.mubr.f32.mxu0 0.0
  %1668 = vmatmul.mubr.f32.gmra.mrb[0].mxu0 %v750
  %v1669 = vpop.f32.mrb[0].mxu0
  %v1670 = vadd.f32 0.0, %v1669
  %v1671 = vpop.f32.mrb[0].mxu0
  %1672 = vmatprep.mubr.f32.mxu0 0.0
  %1673 = vmatmul.mubr.f32.gmra.mrb[0].mxu0 %v753
  %v1674 = vpop.f32.mrb[0].mxu0
  %v1675 = vadd.f32 0.0, %v1674
  %v1676 = vpop.f32.mrb[0].mxu0
  %1677 = vmatprep.mubr.f32.mxu0 0.0
  %1678 = vmatmul.mubr.f32.gmra.mrb[0].mxu0 %v756
  %v1679 = vpop.f32.mrb[0].mxu0
  %v1680 = vadd.f32 0.0, %v1679
  %v1681 = vpop.f32.mrb[0].mxu0
  %1682 = vmatprep.mubr.f32.mxu0 0.0
  %1683 = vmatmul.mubr.f32.gmra.mrb[0].mxu0 %v759
  %v1684 = vpop.f32.mrb[0].mxu0
  %v1685 = vadd.f32 0.0, %v1684
  %v1686 = vpop.f32.mrb[0].mxu0
  %1687 = vmatprep.mubr.f32.mxu0 0.0
  %1688 = vmatmul.mubr.f32.gmra.mrb[0].mxu0 %v762
  %v1689 = vpop.f32.mrb[0].mxu0
  %v1690 = vadd.f32 0.0, %v1689
  %v1691 = vpop.f32.mrb[0].mxu0
  %1692 = vmatprep.mubr.f32.mxu0 0.0
  %1693 = vmatmul.mubr.f32.gmra.mrb[0].mxu0 %v765
  %v1694 = vpop.f32.mrb[0].mxu0
  %v1695 = vadd.f32 0.0, %v1694
  %v1696 = vpop.f32.mrb[0].mxu0
  %1697 = vdwg.mxu0
  %v1698 = vadd.f32 %v1385, %v1670
  %v1699 = vadd.f32 %v1390, %v1675
  %v1700 = vadd.f32 %v1395, %v1680
  %v1701 = vadd.f32 %v1400, %v1685
  %v1702 = vadd.f32 %v1405, %v1690
  %v1703 = vadd.f32 %v1410, %v1695
  %1704 = vmatprep.subr.mxu0 0.0
  %1705 = vmatpush1.msra.mxu0 %v629
  %1706 = vmatprep.subr.mxu0 0.0
  %1707 = vmatpush1.msra.mxu0 %v630
  %1708 = vmatprep.subr.mxu0 0.0
  %1709 = vmatpush1.msra.mxu0 %v631
  %1710 = vmatprep.subr.mxu0 0.0
  %1711 = vmatpush1.msra.mxu0 %v634
  %1712 = vmatprep.subr.mxu0 0.0
  %1713 = vmatpush1.msra.mxu0 0.0
  %1714 = vmatprep.subr.mxu0 0.0
  %1715 = vmatpush1.msra.mxu0 0.0
  %1716 = vmatprep.subr.mxu0 0.0
  %1717 = vmatpush1.msra.mxu0 0.0
  %1718 = vmatprep.subr.mxu0 0.0
  %1719 = vmatpush1.msra.mxu0 0.0
  %1720 = vmatprep.subr.mxu0 0.0
  %1721 = vmatpush1.msra.mxu0 0.0
  %1722 = vmatprep.subr.mxu0 0.0
  %1723 = vmatpush1.msra.mxu0 0.0
  %1724 = vmatprep.subr.mxu0 0.0
  %1725 = vmatpush1.msra.mxu0 0.0
  %1726 = vmatprep.subr.mxu0 0.0
  %1727 = vmatpush1.msra.mxu0 0.0
  %1728 = vmatprep.subr.mxu0 0.0
  %1729 = vmatpush1.msra.mxu0 0.0
  %1730 = vmatprep.subr.mxu0 0.0
  %1731 = vmatpush1.msra.mxu0 0.0
  %1732 = vmatprep.subr.mxu0 0.0
  %1733 = vmatpush1.msra.mxu0 0.0
  %1734 = vmatprep.subr.mxu0 0.0
  %1735 = vmatpush1.msra.mxu0 0.0
  %1736 = vmatprep.subr.mxu0 0.0
  %1737 = vmatpush1.msra.mxu0 0.0
  %1738 = vmatprep.subr.mxu0 0.0
  %1739 = vmatpush1.msra.mxu0 0.0
  %1740 = vmatprep.subr.mxu0 0.0
  %1741 = vmatpush1.msra.mxu0 0.0
  %1742 = vmatprep.subr.mxu0 0.0
  %1743 = vmatpush1.msra.mxu0 0.0
  %1744 = vmatprep.subr.mxu0 0.0
  %1745 = vmatpush1.msra.mxu0 0.0
  %1746 = vmatprep.subr.mxu0 0.0
  %1747 = vmatpush1.msra.mxu0 0.0
  %1748 = vmatprep.subr.mxu0 0.0
  %1749 = vmatpush1.msra.mxu0 0.0
  %1750 = vmatprep.subr.mxu0 0.0
  %1751 = vmatpush1.msra.mxu0 0.0
  %1752 = vmatprep.subr.mxu0 0.0
  %1753 = vmatpush1.msra.mxu0 0.0
  %1754 = vmatprep.subr.mxu0 0.0
  %1755 = vmatpush1.msra.mxu0 0.0
  %1756 = vmatprep.subr.mxu0 0.0
  %1757 = vmatpush1.msra.mxu0 0.0
  %1758 = vmatprep.subr.mxu0 0.0
  %1759 = vmatpush1.msra.mxu0 0.0
  %1760 = vmatprep.subr.mxu0 0.0
  %1761 = vmatpush1.msra.mxu0 0.0
  %1762 = vmatprep.subr.mxu0 0.0
  %1763 = vmatpush1.msra.mxu0 0.0
  %1764 = vmatprep.subr.mxu0 0.0
  %1765 = vmatpush1.msra.mxu0 0.0
  %1766 = vmatprep.subr.mxu0 0.0
  %1767 = vmatpush1.msra.mxu0 0.0
  %1768 = vmatprep.mubr.f32.mxu0 0.0
  %1769 = vmatmul.mubr.f32.gmra.mrb[0].mxu0 %v750
  %v1770 = vpop.f32.mrb[0].mxu0
  %v1771 = vadd.f32 0.0, %v1770
  %v1772 = vpop.f32.mrb[0].mxu0
  %1773 = vmatprep.mubr.f32.mxu0 0.0
  %1774 = vmatmul.mubr.f32.gmra.mrb[0].mxu0 %v753
  %v1775 = vpop.f32.mrb[0].mxu0
  %v1776 = vadd.f32 0.0, %v1775
  %v1777 = vpop.f32.mrb[0].mxu0
  %1778 = vmatprep.mubr.f32.mxu0 0.0
  %1779 = vmatmul.mubr.f32.gmra.mrb[0].mxu0 %v756
  %v1780 = vpop.f32.mrb[0].mxu0
  %v1781 = vadd.f32 0.0, %v1780
  %v1782 = vpop.f32.mrb[0].mxu0
  %1783 = vmatprep.mubr.f32.mxu0 0.0
  %1784 = vmatmul.mubr.f32.gmra.mrb[0].mxu0 %v759
  %v1785 = vpop.f32.mrb[0].mxu0
  %v1786 = vadd.f32 0.0, %v1785
  %v1787 = vpop.f32.mrb[0].mxu0
  %1788 = vmatprep.mubr.f32.mxu0 0.0
  %1789 = vmatmul.mubr.f32.gmra.mrb[0].mxu0 %v762
  %v1790 = vpop.f32.mrb[0].mxu0
  %v1791 = vadd.f32 0.0, %v1790
  %v1792 = vpop.f32.mrb[0].mxu0
  %1793 = vmatprep.mubr.f32.mxu0 0.0
  %1794 = vmatmul.mubr.f32.gmra.mrb[0].mxu0 %v765
  %v1795 = vpop.f32.mrb[0].mxu0
  %v1796 = vadd.f32 0.0, %v1795
  %v1797 = vpop.f32.mrb[0].mxu0
  %1798 = vdwg.mxu0
  %v1799 = vadd.f32 %v1575, %v1771
  %v1800 = vadd.f32 %v1580, %v1776
  %v1801 = vadd.f32 %v1585, %v1781
  %v1802 = vadd.f32 %v1590, %v1786
  %v1803 = vadd.f32 %v1595, %v1791
  %v1804 = vadd.f32 %v1600, %v1796
  %1805 = vmatprep.subr.mxu0 0.0
  %1806 = vmatpush1.msra.mxu0 %v745
  %1807 = vmatprep.subr.mxu0 0.0
  %1808 = vmatpush1.msra.mxu0 %v746
  %1809 = vmatprep.subr.mxu0 0.0
  %1810 = vmatpush1.msra.mxu0 %v747
  %1811 = vmatprep.subr.mxu0 0.0
  %1812 = vmatpush1.msra.mxu0 %v768
  %1813 = vmatprep.subr.mxu0 0.0
  %1814 = vmatpush1.msra.mxu0 0.0
  %1815 = vmatprep.subr.mxu0 0.0
  %1816 = vmatpush1.msra.mxu0 0.0
  %1817 = vmatprep.subr.mxu0 0.0
  %1818 = vmatpush1.msra.mxu0 0.0
  %1819 = vmatprep.subr.mxu0 0.0
  %1820 = vmatpush1.msra.mxu0 0.0
  %1821 = vmatprep.subr.mxu0 0.0
  %1822 = vmatpush1.msra.mxu0 0.0
  %1823 = vmatprep.subr.mxu0 0.0
  %1824 = vmatpush1.msra.mxu0 0.0
  %1825 = vmatprep.subr.mxu0 0.0
  %1826 = vmatpush1.msra.mxu0 0.0
  %1827 = vmatprep.subr.mxu0 0.0
  %1828 = vmatpush1.msra.mxu0 0.0
  %1829 = vmatprep.subr.mxu0 0.0
  %1830 = vmatpush1.msra.mxu0 0.0
  %1831 = vmatprep.subr.mxu0 0.0
  %1832 = vmatpush1.msra.mxu0 0.0
  %1833 = vmatprep.subr.mxu0 0.0
  %1834 = vmatpush1.msra.mxu0 0.0
  %1835 = vmatprep.subr.mxu0 0.0
  %1836 = vmatpush1.msra.mxu0 0.0
  %1837 = vmatprep.subr.mxu0 0.0
  %1838 = vmatpush1.msra.mxu0 0.0
  %1839 = vmatprep.subr.mxu0 0.0
  %1840 = vmatpush1.msra.mxu0 0.0
  %1841 = vmatprep.subr.mxu0 0.0
  %1842 = vmatpush1.msra.mxu0 0.0
  %1843 = vmatprep.subr.mxu0 0.0
  %1844 = vmatpush1.msra.mxu0 0.0
  %1845 = vmatprep.subr.mxu0 0.0
  %1846 = vmatpush1.msra.mxu0 0.0
  %1847 = vmatprep.subr.mxu0 0.0
  %1848 = vmatpush1.msra.mxu0 0.0
  %1849 = vmatprep.subr.mxu0 0.0
  %1850 = vmatpush1.msra.mxu0 0.0
  %1851 = vmatprep.subr.mxu0 0.0
  %1852 = vmatpush1.msra.mxu0 0.0
  %1853 = vmatprep.subr.mxu0 0.0
  %1854 = vmatpush1.msra.mxu0 0.0
  %1855 = vmatprep.subr.mxu0 0.0
  %1856 = vmatpush1.msra.mxu0 0.0
  %1857 = vmatprep.subr.mxu0 0.0
  %1858 = vmatpush1.msra.mxu0 0.0
  %1859 = vmatprep.subr.mxu0 0.0
  %1860 = vmatpush1.msra.mxu0 0.0
  %1861 = vmatprep.subr.mxu0 0.0
  %1862 = vmatpush1.msra.mxu0 0.0
  %1863 = vmatprep.subr.mxu0 0.0
  %1864 = vmatpush1.msra.mxu0 0.0
  %1865 = vmatprep.subr.mxu0 0.0
  %1866 = vmatpush1.msra.mxu0 0.0
  %1867 = vmatprep.subr.mxu0 0.0
  %1868 = vmatpush1.msra.mxu0 0.0
  %1869 = vmatprep.mubr.f32.mxu0 0.0
  %1870 = vmatmul.mubr.f32.gmra.mrb[0].mxu0 %v993
  %v1871 = vpop.f32.mrb[0].mxu0
  %v1872 = vadd.f32 0.0, %v1871
  %v1873 = vpop.f32.mrb[0].mxu0
  %1874 = vmatprep.mubr.f32.mxu0 0.0
  %1875 = vmatmul.mubr.f32.gmra.mrb[0].mxu0 %v996
  %v1876 = vpop.f32.mrb[0].mxu0
  %v1877 = vadd.f32 0.0, %v1876
  %v1878 = vpop.f32.mrb[0].mxu0
  %1879 = vmatprep.mubr.f32.mxu0 0.0
  %1880 = vmatmul.mubr.f32.gmra.mrb[0].mxu0 %v999
  %v1881 = vpop.f32.mrb[0].mxu0
  %v1882 = vadd.f32 0.0, %v1881
  %v1883 = vpop.f32.mrb[0].mxu0
  %1884 = vmatprep.mubr.f32.mxu0 0.0
  %1885 = vmatmul.mubr.f32.gmra.mrb[0].mxu0 %v1002
  %v1886 = vpop.f32.mrb[0].mxu0
  %v1887 = vadd.f32 0.0, %v1886
  %v1888 = vpop.f32.mrb[0].mxu0
  %1889 = vmatprep.mubr.f32.mxu0 0.0
  %1890 = vmatmul.mubr.f32.gmra.mrb[0].mxu0 %v1005
  %v1891 = vpop.f32.mrb[0].mxu0
  %v1892 = vadd.f32 0.0, %v1891
  %v1893 = vpop.f32.mrb[0].mxu0
  %1894 = vmatprep.mubr.f32.mxu0 0.0
  %1895 = vmatmul.mubr.f32.gmra.mrb[0].mxu0 %v1008
  %v1896 = vpop.f32.mrb[0].mxu0
  %v1897 = vadd.f32 0.0, %v1896
  %v1898 = vpop.f32.mrb[0].mxu0
  %1899 = vdwg.mxu0
  %v1900 = vadd.f32 %v1698, %v1872
  %v1901 = vadd.f32 %v1699, %v1877
  %v1902 = vadd.f32 %v1700, %v1882
  %v1903 = vadd.f32 %v1701, %v1887
  %v1904 = vadd.f32 %v1702, %v1892
  %v1905 = vadd.f32 %v1703, %v1897
  %1906 = vmatprep.subr.mxu0 0.0
  %1907 = vmatpush1.msra.mxu0 %v872
  %1908 = vmatprep.subr.mxu0 0.0
  %1909 = vmatpush1.msra.mxu0 %v873
  %1910 = vmatprep.subr.mxu0 0.0
  %1911 = vmatpush1.msra.mxu0 %v874
  %1912 = vmatprep.subr.mxu0 0.0
  %1913 = vmatpush1.msra.mxu0 %v877
  %1914 = vmatprep.subr.mxu0 0.0
  %1915 = vmatpush1.msra.mxu0 0.0
  %1916 = vmatprep.subr.mxu0 0.0
  %1917 = vmatpush1.msra.mxu0 0.0
  %1918 = vmatprep.subr.mxu0 0.0
  %1919 = vmatpush1.msra.mxu0 0.0
  %1920 = vmatprep.subr.mxu0 0.0
  %1921 = vmatpush1.msra.mxu0 0.0
  %1922 = vmatprep.subr.mxu0 0.0
  %1923 = vmatpush1.msra.mxu0 0.0
  %1924 = vmatprep.subr.mxu0 0.0
  %1925 = vmatpush1.msra.mxu0 0.0
  %1926 = vmatprep.subr.mxu0 0.0
  %1927 = vmatpush1.msra.mxu0 0.0
  %1928 = vmatprep.subr.mxu0 0.0
  %1929 = vmatpush1.msra.mxu0 0.0
  %1930 = vmatprep.subr.mxu0 0.0
  %1931 = vmatpush1.msra.mxu0 0.0
  %1932 = vmatprep.subr.mxu0 0.0
  %1933 = vmatpush1.msra.mxu0 0.0
  %1934 = vmatprep.subr.mxu0 0.0
  %1935 = vmatpush1.msra.mxu0 0.0
  %1936 = vmatprep.subr.mxu0 0.0
  %1937 = vmatpush1.msra.mxu0 0.0
  %1938 = vmatprep.subr.mxu0 0.0
  %1939 = vmatpush1.msra.mxu0 0.0
  %1940 = vmatprep.subr.mxu0 0.0
  %1941 = vmatpush1.msra.mxu0 0.0
  %1942 = vmatprep.subr.mxu0 0.0
  %1943 = vmatpush1.msra.mxu0 0.0
  %1944 = vmatprep.subr.mxu0 0.0
  %1945 = vmatpush1.msra.mxu0 0.0
  %1946 = vmatprep.subr.mxu0 0.0
  %1947 = vmatpush1.msra.mxu0 0.0
  %1948 = vmatprep.subr.mxu0 0.0
  %1949 = vmatpush1.msra.mxu0 0.0
  %1950 = vmatprep.subr.mxu0 0.0
  %1951 = vmatpush1.msra.mxu0 0.0
  %1952 = vmatprep.subr.mxu0 0.0
  %1953 = vmatpush1.msra.mxu0 0.0
  %1954 = vmatprep.subr.mxu0 0.0
  %1955 = vmatpush1.msra.mxu0 0.0
  %1956 = vmatprep.subr.mxu0 0.0
  %1957 = vmatpush1.msra.mxu0 0.0
  %1958 = vmatprep.subr.mxu0 0.0
  %1959 = vmatpush1.msra.mxu0 0.0
  %1960 = vmatprep.subr.mxu0 0.0
  %1961 = vmatpush1.msra.mxu0 0.0
  %1962 = vmatprep.subr.mxu0 0.0
  %1963 = vmatpush1.msra.mxu0 0.0
  %1964 = vmatprep.subr.mxu0 0.0
  %1965 = vmatpush1.msra.mxu0 0.0
  %1966 = vmatprep.subr.mxu0 0.0
  %1967 = vmatpush1.msra.mxu0 0.0
  %1968 = vmatprep.subr.mxu0 0.0
  %1969 = vmatpush1.msra.mxu0 0.0
  %1970 = vmatprep.mubr.f32.mxu0 0.0
  %1971 = vmatmul.mubr.f32.gmra.mrb[0].mxu0 %v993
  %v1972 = vpop.f32.mrb[0].mxu0
  %v1973 = vadd.f32 0.0, %v1972
  %v1974 = vpop.f32.mrb[0].mxu0
  %1975 = vmatprep.mubr.f32.mxu0 0.0
  %1976 = vmatmul.mubr.f32.gmra.mrb[0].mxu0 %v996
  %v1977 = vpop.f32.mrb[0].mxu0
  %v1978 = vadd.f32 0.0, %v1977
  %v1979 = vpop.f32.mrb[0].mxu0
  %1980 = vmatprep.mubr.f32.mxu0 0.0
  %1981 = vmatmul.mubr.f32.gmra.mrb[0].mxu0 %v999
  %v1982 = vpop.f32.mrb[0].mxu0
  %v1983 = vadd.f32 0.0, %v1982
  %v1984 = vpop.f32.mrb[0].mxu0
  %1985 = vmatprep.mubr.f32.mxu0 0.0
  %1986 = vmatmul.mubr.f32.gmra.mrb[0].mxu0 %v1002
  %v1987 = vpop.f32.mrb[0].mxu0
  %v1988 = vadd.f32 0.0, %v1987
  %v1989 = vpop.f32.mrb[0].mxu0
  %1990 = vmatprep.mubr.f32.mxu0 0.0
  %1991 = vmatmul.mubr.f32.gmra.mrb[0].mxu0 %v1005
  %v1992 = vpop.f32.mrb[0].mxu0
  %v1993 = vadd.f32 0.0, %v1992
  %v1994 = vpop.f32.mrb[0].mxu0
  %1995 = vmatprep.mubr.f32.mxu0 0.0
  %1996 = vmatmul.mubr.f32.gmra.mrb[0].mxu0 %v1008
  %v1997 = vpop.f32.mrb[0].mxu0
  %v1998 = vadd.f32 0.0, %v1997
  %v1999 = vpop.f32.mrb[0].mxu0
  %2000 = vdwg.mxu0
  %v2001 = vadd.f32 %v1799, %v1973
  %v2002 = vadd.f32 %v1800, %v1978
  %v2003 = vadd.f32 %v1801, %v1983
  %v2004 = vadd.f32 %v1802, %v1988
  %v2005 = vadd.f32 %v1803, %v1993
  %v2006 = vadd.f32 %v1804, %v1998
  %s2007 = scalar_lea.vmem %s0, 64
  %v2008 = vld [vmem:[%s2007] sm:$0xff]
  %v2009 = vld [vmem:[%s2007 + $0x8] sm:$0xff]
  %v2010 = vld [vmem:[%s2007 + $0x10] sm:$0xff]
  %v2011 = vld [vmem:[%s2007 + $0x18] sm:$0xff]
  %v2012 = vld [vmem:[%s2007 + $0x20] sm:$0xff]
  %v2013 = vld [vmem:[%s2007 + $0x28] sm:$0xff]
  %v2015 = vsel %vm59, %v2008, 0
  %v2018 = vsel %vm59, %v2009, 0
  %v2021 = vsel %vm59, %v2010, 0
  %v2024 = vsel %vm59, %v2011, 0
  %v2027 = vsel %vm59, %v2012, 0
  %v2030 = vsel %vm59, %v2013, 0
  %2032 = vmatprep.subr.mxu0 0.0
  %2033 = vmatpush1.msra.mxu0 %v988
  %2034 = vmatprep.subr.mxu0 0.0
  %2035 = vmatpush1.msra.mxu0 %v989
  %2036 = vmatprep.subr.mxu0 0.0
  %2037 = vmatpush1.msra.mxu0 %v990
  %2038 = vmatprep.subr.mxu0 0.0
  %2039 = vmatpush1.msra.mxu0 %v1011
  %2040 = vmatprep.subr.mxu0 0.0
  %2041 = vmatpush1.msra.mxu0 0.0
  %2042 = vmatprep.subr.mxu0 0.0
  %2043 = vmatpush1.msra.mxu0 0.0
  %2044 = vmatprep.subr.mxu0 0.0
  %2045 = vmatpush1.msra.mxu0 0.0
  %2046 = vmatprep.subr.mxu0 0.0
  %2047 = vmatpush1.msra.mxu0 0.0
  %2048 = vmatprep.subr.mxu0 0.0
  %2049 = vmatpush1.msra.mxu0 0.0
  %2050 = vmatprep.subr.mxu0 0.0
  %2051 = vmatpush1.msra.mxu0 0.0
  %2052 = vmatprep.subr.mxu0 0.0
  %2053 = vmatpush1.msra.mxu0 0.0
  %2054 = vmatprep.subr.mxu0 0.0
  %2055 = vmatpush1.msra.mxu0 0.0
  %2056 = vmatprep.subr.mxu0 0.0
  %2057 = vmatpush1.msra.mxu0 0.0
  %2058 = vmatprep.subr.mxu0 0.0
  %2059 = vmatpush1.msra.mxu0 0.0
  %2060 = vmatprep.subr.mxu0 0.0
  %2061 = vmatpush1.msra.mxu0 0.0
  %2062 = vmatprep.subr.mxu0 0.0
  %2063 = vmatpush1.msra.mxu0 0.0
  %2064 = vmatprep.subr.mxu0 0.0
  %2065 = vmatpush1.msra.mxu0 0.0
  %2066 = vmatprep.subr.mxu0 0.0
  %2067 = vmatpush1.msra.mxu0 0.0
  %2068 = vmatprep.subr.mxu0 0.0
  %2069 = vmatpush1.msra.mxu0 0.0
  %2070 = vmatprep.subr.mxu0 0.0
  %2071 = vmatpush1.msra.mxu0 0.0
  %2072 = vmatprep.subr.mxu0 0.0
  %2073 = vmatpush1.msra.mxu0 0.0
  %2074 = vmatprep.subr.mxu0 0.0
  %2075 = vmatpush1.msra.mxu0 0.0
  %2076 = vmatprep.subr.mxu0 0.0
  %2077 = vmatpush1.msra.mxu0 0.0
  %2078 = vmatprep.subr.mxu0 0.0
  %2079 = vmatpush1.msra.mxu0 0.0
  %2080 = vmatprep.subr.mxu0 0.0
  %2081 = vmatpush1.msra.mxu0 0.0
  %2082 = vmatprep.subr.mxu0 0.0
  %2083 = vmatpush1.msra.mxu0 0.0
  %2084 = vmatprep.subr.mxu0 0.0
  %2085 = vmatpush1.msra.mxu0 0.0
  %2086 = vmatprep.subr.mxu0 0.0
  %2087 = vmatpush1.msra.mxu0 0.0
  %2088 = vmatprep.subr.mxu0 0.0
  %2089 = vmatpush1.msra.mxu0 0.0
  %2090 = vmatprep.subr.mxu0 0.0
  %2091 = vmatpush1.msra.mxu0 0.0
  %2092 = vmatprep.subr.mxu0 0.0
  %2093 = vmatpush1.msra.mxu0 0.0
  %2094 = vmatprep.subr.mxu0 0.0
  %2095 = vmatpush1.msra.mxu0 0.0
  %2096 = vmatprep.mubr.f32.mxu0 0.0
  %2097 = vmatmul.mubr.f32.gmra.mrb[0].mxu0 %v2015
  %v2098 = vpop.f32.mrb[0].mxu0
  %v2099 = vadd.f32 0.0, %v2098
  %v2100 = vpop.f32.mrb[0].mxu0
  %2101 = vmatprep.mubr.f32.mxu0 0.0
  %2102 = vmatmul.mubr.f32.gmra.mrb[0].mxu0 %v2018
  %v2103 = vpop.f32.mrb[0].mxu0
  %v2104 = vadd.f32 0.0, %v2103
  %v2105 = vpop.f32.mrb[0].mxu0
  %2106 = vmatprep.mubr.f32.mxu0 0.0
  %2107 = vmatmul.mubr.f32.gmra.mrb[0].mxu0 %v2021
  %v2108 = vpop.f32.mrb[0].mxu0
  %v2109 = vadd.f32 0.0, %v2108
  %v2110 = vpop.f32.mrb[0].mxu0
  %2111 = vmatprep.mubr.f32.mxu0 0.0
  %2112 = vmatmul.mubr.f32.gmra.mrb[0].mxu0 %v2024
  %v2113 = vpop.f32.mrb[0].mxu0
  %v2114 = vadd.f32 0.0, %v2113
  %v2115 = vpop.f32.mrb[0].mxu0
  %2116 = vmatprep.mubr.f32.mxu0 0.0
  %2117 = vmatmul.mubr.f32.gmra.mrb[0].mxu0 %v2027
  %v2118 = vpop.f32.mrb[0].mxu0
  %v2119 = vadd.f32 0.0, %v2118
  %v2120 = vpop.f32.mrb[0].mxu0
  %2121 = vmatprep.mubr.f32.mxu0 0.0
  %2122 = vmatmul.mubr.f32.gmra.mrb[0].mxu0 %v2030
  %v2123 = vpop.f32.mrb[0].mxu0
  %v2124 = vadd.f32 0.0, %v2123
  %v2125 = vpop.f32.mrb[0].mxu0
  %2126 = vdwg.mxu0
  %v2127 = vadd.f32 %v1900, %v2099
  %v2128 = vadd.f32 %v1901, %v2104
  %v2129 = vadd.f32 %v1902, %v2109
  %v2130 = vadd.f32 %v1903, %v2114
  %v2131 = vadd.f32 %v1904, %v2119
  %v2132 = vadd.f32 %v1905, %v2124
  %2133 = vmatprep.subr.mxu0 0.0
  %2134 = vmatpush1.msra.mxu0 %v1115
  %2135 = vmatprep.subr.mxu0 0.0
  %2136 = vmatpush1.msra.mxu0 %v1116
  %2137 = vmatprep.subr.mxu0 0.0
  %2138 = vmatpush1.msra.mxu0 %v1117
  %2139 = vmatprep.subr.mxu0 0.0
  %2140 = vmatpush1.msra.mxu0 %v1120
  %2141 = vmatprep.subr.mxu0 0.0
  %2142 = vmatpush1.msra.mxu0 0.0
  %2143 = vmatprep.subr.mxu0 0.0
  %2144 = vmatpush1.msra.mxu0 0.0
  %2145 = vmatprep.subr.mxu0 0.0
  %2146 = vmatpush1.msra.mxu0 0.0
  %2147 = vmatprep.subr.mxu0 0.0
  %2148 = vmatpush1.msra.mxu0 0.0
  %2149 = vmatprep.subr.mxu0 0.0
  %2150 = vmatpush1.msra.mxu0 0.0
  %2151 = vmatprep.subr.mxu0 0.0
  %2152 = vmatpush1.msra.mxu0 0.0
  %2153 = vmatprep.subr.mxu0 0.0
  %2154 = vmatpush1.msra.mxu0 0.0
  %2155 = vmatprep.subr.mxu0 0.0
  %2156 = vmatpush1.msra.mxu0 0.0
  %2157 = vmatprep.subr.mxu0 0.0
  %2158 = vmatpush1.msra.mxu0 0.0
  %2159 = vmatprep.subr.mxu0 0.0
  %2160 = vmatpush1.msra.mxu0 0.0
  %2161 = vmatprep.subr.mxu0 0.0
  %2162 = vmatpush1.msra.mxu0 0.0
  %2163 = vmatprep.subr.mxu0 0.0
  %2164 = vmatpush1.msra.mxu0 0.0
  %2165 = vmatprep.subr.mxu0 0.0
  %2166 = vmatpush1.msra.mxu0 0.0
  %2167 = vmatprep.subr.mxu0 0.0
  %2168 = vmatpush1.msra.mxu0 0.0
  %2169 = vmatprep.subr.mxu0 0.0
  %2170 = vmatpush1.msra.mxu0 0.0
  %2171 = vmatprep.subr.mxu0 0.0
  %2172 = vmatpush1.msra.mxu0 0.0
  %2173 = vmatprep.subr.mxu0 0.0
  %2174 = vmatpush1.msra.mxu0 0.0
  %2175 = vmatprep.subr.mxu0 0.0
  %2176 = vmatpush1.msra.mxu0 0.0
  %2177 = vmatprep.subr.mxu0 0.0
  %2178 = vmatpush1.msra.mxu0 0.0
  %2179 = vmatprep.subr.mxu0 0.0
  %2180 = vmatpush1.msra.mxu0 0.0
  %2181 = vmatprep.subr.mxu0 0.0
  %2182 = vmatpush1.msra.mxu0 0.0
  %2183 = vmatprep.subr.mxu0 0.0
  %2184 = vmatpush1.msra.mxu0 0.0
  %2185 = vmatprep.subr.mxu0 0.0
  %2186 = vmatpush1.msra.mxu0 0.0
  %2187 = vmatprep.subr.mxu0 0.0
  %2188 = vmatpush1.msra.mxu0 0.0
  %2189 = vmatprep.subr.mxu0 0.0
  %2190 = vmatpush1.msra.mxu0 0.0
  %2191 = vmatprep.subr.mxu0 0.0
  %2192 = vmatpush1.msra.mxu0 0.0
  %2193 = vmatprep.subr.mxu0 0.0
  %2194 = vmatpush1.msra.mxu0 0.0
  %2195 = vmatprep.subr.mxu0 0.0
  %2196 = vmatpush1.msra.mxu0 0.0
  %2197 = vmatprep.mubr.f32.mxu0 0.0
  %2198 = vmatmul.mubr.f32.gmra.mrb[0].mxu0 %v2015
  %v2199 = vpop.f32.mrb[0].mxu0
  %v2200 = vadd.f32 0.0, %v2199
  %v2201 = vpop.f32.mrb[0].mxu0
  %2202 = vmatprep.mubr.f32.mxu0 0.0
  %2203 = vmatmul.mubr.f32.gmra.mrb[0].mxu0 %v2018
  %v2204 = vpop.f32.mrb[0].mxu0
  %v2205 = vadd.f32 0.0, %v2204
  %v2206 = vpop.f32.mrb[0].mxu0
  %2207 = vmatprep.mubr.f32.mxu0 0.0
  %2208 = vmatmul.mubr.f32.gmra.mrb[0].mxu0 %v2021
  %v2209 = vpop.f32.mrb[0].mxu0
  %v2210 = vadd.f32 0.0, %v2209
  %v2211 = vpop.f32.mrb[0].mxu0
  %2212 = vmatprep.mubr.f32.mxu0 0.0
  %2213 = vmatmul.mubr.f32.gmra.mrb[0].mxu0 %v2024
  %v2214 = vpop.f32.mrb[0].mxu0
  %v2215 = vadd.f32 0.0, %v2214
  %v2216 = vpop.f32.mrb[0].mxu0
  %2217 = vmatprep.mubr.f32.mxu0 0.0
  %2218 = vmatmul.mubr.f32.gmra.mrb[0].mxu0 %v2027
  %v2219 = vpop.f32.mrb[0].mxu0
  %v2220 = vadd.f32 0.0, %v2219
  %v2221 = vpop.f32.mrb[0].mxu0
  %2222 = vmatprep.mubr.f32.mxu0 0.0
  %2223 = vmatmul.mubr.f32.gmra.mrb[0].mxu0 %v2030
  %v2224 = vpop.f32.mrb[0].mxu0
  %v2225 = vadd.f32 0.0, %v2224
  %v2226 = vpop.f32.mrb[0].mxu0
  %2227 = vdwg.mxu0
  %v2228 = vadd.f32 %v2001, %v2200
  %v2229 = vadd.f32 %v2002, %v2205
  %v2230 = vadd.f32 %v2003, %v2210
  %v2231 = vadd.f32 %v2004, %v2215
  %v2232 = vadd.f32 %v2005, %v2220
  %v2233 = vadd.f32 %v2006, %v2225
  %v2234 = vmax.f32 %v1108, %v1217
  %v2235 = vmax.f32 %v1109, %v1218
  %v2236 = vmax.f32 %v1110, %v1219
  %v2237 = vmax.f32 %v1111, %v1220
  %v2238 = vmax.f32 %v1112, %v1221
  %v2239 = vmax.f32 %v1113, %v1222
  %v2240 = vmax.f32 %v2127, %v2228
  %v2241 = vmax.f32 %v2128, %v2229
  %v2242 = vmax.f32 %v2129, %v2230
  %v2243 = vmax.f32 %v2130, %v2231
  %v2244 = vmax.f32 %v2131, %v2232
  %v2245 = vmax.f32 %v2132, %v2233
  %v2246 = vmax.f32 %v2234, %v2240
  %v2247 = vmax.f32 %v2235, %v2241
  %v2248 = vmax.f32 %v2236, %v2242
  %v2249 = vmax.f32 %v2237, %v2243
  %v2250 = vmax.f32 %v2238, %v2244
  %v2251 = vmax.f32 %v2239, %v2245
  %v2252 = vld [vmem:[%s2] sm:$0x1]
  %v2254 = vlaneseq
  %v2255 = vshrl.u32 %v2254, 7
  %v2256 = vsub.s32 0, %v2255
  %v2257 = vrot.slane %v2252, %v2256
  %v2259 = vadd.f32 %v2246, %v2257
  %v2260 = vadd.f32 %v2247, %v2257
  %v2261 = vadd.f32 %v2248, %v2257
  %v2262 = vadd.f32 %v2249, %v2257
  %v2263 = vadd.f32 %v2250, %v2257
  %v2264 = vadd.f32 %v2251, %v2257
  %v2265 = vmax.f32 %v2259, 0.0
  %v2266 = vmax.f32 %v2260, 0.0
  %v2267 = vmax.f32 %v2261, 0.0
  %v2268 = vmax.f32 %v2262, 0.0
  %v2269 = vmax.f32 %v2263, 0.0
  %v2270 = vmax.f32 %v2264, 0.0
  %2271 = vmatprep.subr.mxu0 0.0
  %2272 = vmatpush1.msra.mxu0 %v55
  %2273 = vmatprep.subr.mxu0 0.0
  %2274 = vmatpush1.msra.mxu0 %v56
  %2275 = vmatprep.subr.mxu0 0.0
  %2276 = vmatpush1.msra.mxu0 %v57
  %2277 = vmatprep.subr.mxu0 0.0
  %2278 = vmatpush1.msra.mxu0 %v80
  %2279 = vmatprep.subr.mxu0 0.0
  %2280 = vmatpush1.msra.mxu0 0.0
  %2281 = vmatprep.subr.mxu0 0.0
  %2282 = vmatpush1.msra.mxu0 0.0
  %2283 = vmatprep.subr.mxu0 0.0
  %2284 = vmatpush1.msra.mxu0 0.0
  %2285 = vmatprep.subr.mxu0 0.0
  %2286 = vmatpush1.msra.mxu0 0.0
  %2287 = vmatprep.subr.mxu0 0.0
  %2288 = vmatpush1.msra.mxu0 0.0
  %2289 = vmatprep.subr.mxu0 0.0
  %2290 = vmatpush1.msra.mxu0 0.0
  %2291 = vmatprep.subr.mxu0 0.0
  %2292 = vmatpush1.msra.mxu0 0.0
  %2293 = vmatprep.subr.mxu0 0.0
  %2294 = vmatpush1.msra.mxu0 0.0
  %2295 = vmatprep.subr.mxu0 0.0
  %2296 = vmatpush1.msra.mxu0 0.0
  %2297 = vmatprep.subr.mxu0 0.0
  %2298 = vmatpush1.msra.mxu0 0.0
  %2299 = vmatprep.subr.mxu0 0.0
  %2300 = vmatpush1.msra.mxu0 0.0
  %2301 = vmatprep.subr.mxu0 0.0
  %2302 = vmatpush1.msra.mxu0 0.0
  %2303 = vmatprep.subr.mxu0 0.0
  %2304 = vmatpush1.msra.mxu0 0.0
  %2305 = vmatprep.subr.mxu0 0.0
  %2306 = vmatpush1.msra.mxu0 0.0
  %2307 = vmatprep.subr.mxu0 0.0
  %2308 = vmatpush1.msra.mxu0 0.0
  %2309 = vmatprep.subr.mxu0 0.0
  %2310 = vmatpush1.msra.mxu0 0.0
  %2311 = vmatprep.subr.mxu0 0.0
  %2312 = vmatpush1.msra.mxu0 0.0
  %2313 = vmatprep.subr.mxu0 0.0
  %2314 = vmatpush1.msra.mxu0 0.0
  %2315 = vmatprep.subr.mxu0 0.0
  %2316 = vmatpush1.msra.mxu0 0.0
  %2317 = vmatprep.subr.mxu0 0.0
  %2318 = vmatpush1.msra.mxu0 0.0
  %2319 = vmatprep.subr.mxu0 0.0
  %2320 = vmatpush1.msra.mxu0 0.0
  %2321 = vmatprep.subr.mxu0 0.0
  %2322 = vmatpush1.msra.mxu0 0.0
  %2323 = vmatprep.subr.mxu0 0.0
  %2324 = vmatpush1.msra.mxu0 0.0
  %2325 = vmatprep.subr.mxu0 0.0
  %2326 = vmatpush1.msra.mxu0 0.0
  %2327 = vmatprep.subr.mxu0 0.0
  %2328 = vmatpush1.msra.mxu0 0.0
  %2329 = vmatprep.subr.mxu0 0.0
  %2330 = vmatpush1.msra.mxu0 0.0
  %2331 = vmatprep.subr.mxu0 0.0
  %2332 = vmatpush1.msra.mxu0 0.0
  %2333 = vmatprep.subr.mxu0 0.0
  %2334 = vmatpush1.msra.mxu0 0.0
  %2335 = vmatprep.mubr.f32.mxu0 0.0
  %2336 = vmatmul.mubr.f32.gmra.mrb[0].mxu0 %v750
  %v2337 = vpop.f32.mrb[0].mxu0
  %v2338 = vadd.f32 0.0, %v2337
  %v2339 = vpop.f32.mrb[0].mxu0
  %2340 = vmatprep.mubr.f32.mxu0 0.0
  %2341 = vmatmul.mubr.f32.gmra.mrb[0].mxu0 %v753
  %v2342 = vpop.f32.mrb[0].mxu0
  %v2343 = vadd.f32 0.0, %v2342
  %v2344 = vpop.f32.mrb[0].mxu0
  %2345 = vmatprep.mubr.f32.mxu0 0.0
  %2346 = vmatmul.mubr.f32.gmra.mrb[0].mxu0 %v756
  %v2347 = vpop.f32.mrb[0].mxu0
  %v2348 = vadd.f32 0.0, %v2347
  %v2349 = vpop.f32.mrb[0].mxu0
  %2350 = vmatprep.mubr.f32.mxu0 0.0
  %2351 = vmatmul.mubr.f32.gmra.mrb[0].mxu0 %v759
  %v2352 = vpop.f32.mrb[0].mxu0
  %v2353 = vadd.f32 0.0, %v2352
  %v2354 = vpop.f32.mrb[0].mxu0
  %2355 = vmatprep.mubr.f32.mxu0 0.0
  %2356 = vmatmul.mubr.f32.gmra.mrb[0].mxu0 %v762
  %v2357 = vpop.f32.mrb[0].mxu0
  %v2358 = vadd.f32 0.0, %v2357
  %v2359 = vpop.f32.mrb[0].mxu0
  %2360 = vmatprep.mubr.f32.mxu0 0.0
  %2361 = vmatmul.mubr.f32.gmra.mrb[0].mxu0 %v765
  %v2362 = vpop.f32.mrb[0].mxu0
  %v2363 = vadd.f32 0.0, %v2362
  %v2364 = vpop.f32.mrb[0].mxu0
  %2365 = vdwg.mxu0
  %2366 = vmatprep.subr.mxu0 0.0
  %2367 = vmatpush1.msra.mxu0 %v38
  %2368 = vmatprep.subr.mxu0 0.0
  %2369 = vmatpush1.msra.mxu0 %v39
  %2370 = vmatprep.subr.mxu0 0.0
  %2371 = vmatpush1.msra.mxu0 %v40
  %2372 = vmatprep.subr.mxu0 0.0
  %2373 = vmatpush1.msra.mxu0 %v196
  %2374 = vmatprep.subr.mxu0 0.0
  %2375 = vmatpush1.msra.mxu0 0.0
  %2376 = vmatprep.subr.mxu0 0.0
  %2377 = vmatpush1.msra.mxu0 0.0
  %2378 = vmatprep.subr.mxu0 0.0
  %2379 = vmatpush1.msra.mxu0 0.0
  %2380 = vmatprep.subr.mxu0 0.0
  %2381 = vmatpush1.msra.mxu0 0.0
  %2382 = vmatprep.subr.mxu0 0.0
  %2383 = vmatpush1.msra.mxu0 0.0
  %2384 = vmatprep.subr.mxu0 0.0
  %2385 = vmatpush1.msra.mxu0 0.0
  %2386 = vmatprep.subr.mxu0 0.0
  %2387 = vmatpush1.msra.mxu0 0.0
  %2388 = vmatprep.subr.mxu0 0.0
  %2389 = vmatpush1.msra.mxu0 0.0
  %2390 = vmatprep.subr.mxu0 0.0
  %2391 = vmatpush1.msra.mxu0 0.0
  %2392 = vmatprep.subr.mxu0 0.0
  %2393 = vmatpush1.msra.mxu0 0.0
  %2394 = vmatprep.subr.mxu0 0.0
  %2395 = vmatpush1.msra.mxu0 0.0
  %2396 = vmatprep.subr.mxu0 0.0
  %2397 = vmatpush1.msra.mxu0 0.0
  %2398 = vmatprep.subr.mxu0 0.0
  %2399 = vmatpush1.msra.mxu0 0.0
  %2400 = vmatprep.subr.mxu0 0.0
  %2401 = vmatpush1.msra.mxu0 0.0
  %2402 = vmatprep.subr.mxu0 0.0
  %2403 = vmatpush1.msra.mxu0 0.0
  %2404 = vmatprep.subr.mxu0 0.0
  %2405 = vmatpush1.msra.mxu0 0.0
  %2406 = vmatprep.subr.mxu0 0.0
  %2407 = vmatpush1.msra.mxu0 0.0
  %2408 = vmatprep.subr.mxu0 0.0
  %2409 = vmatpush1.msra.mxu0 0.0
  %2410 = vmatprep.subr.mxu0 0.0
  %2411 = vmatpush1.msra.mxu0 0.0
  %2412 = vmatprep.subr.mxu0 0.0
  %2413 = vmatpush1.msra.mxu0 0.0
  %2414 = vmatprep.subr.mxu0 0.0
  %2415 = vmatpush1.msra.mxu0 0.0
  %2416 = vmatprep.subr.mxu0 0.0
  %2417 = vmatpush1.msra.mxu0 0.0
  %2418 = vmatprep.subr.mxu0 0.0
  %2419 = vmatpush1.msra.mxu0 0.0
  %2420 = vmatprep.subr.mxu0 0.0
  %2421 = vmatpush1.msra.mxu0 0.0
  %2422 = vmatprep.subr.mxu0 0.0
  %2423 = vmatpush1.msra.mxu0 0.0
  %2424 = vmatprep.subr.mxu0 0.0
  %2425 = vmatpush1.msra.mxu0 0.0
  %2426 = vmatprep.subr.mxu0 0.0
  %2427 = vmatpush1.msra.mxu0 0.0
  %2428 = vmatprep.subr.mxu0 0.0
  %2429 = vmatpush1.msra.mxu0 0.0
  %2430 = vmatprep.mubr.f32.mxu0 0.0
  %2431 = vmatmul.mubr.f32.gmra.mrb[0].mxu0 %v507
  %v2432 = vpop.f32.mrb[0].mxu0
  %v2433 = vadd.f32 %v2338, %v2432
  %v2434 = vpop.f32.mrb[0].mxu0
  %2435 = vmatprep.mubr.f32.mxu0 0.0
  %2436 = vmatmul.mubr.f32.gmra.mrb[0].mxu0 %v510
  %v2437 = vpop.f32.mrb[0].mxu0
  %v2438 = vadd.f32 %v2343, %v2437
  %v2439 = vpop.f32.mrb[0].mxu0
  %2440 = vmatprep.mubr.f32.mxu0 0.0
  %2441 = vmatmul.mubr.f32.gmra.mrb[0].mxu0 %v513
  %v2442 = vpop.f32.mrb[0].mxu0
  %v2443 = vadd.f32 %v2348, %v2442
  %v2444 = vpop.f32.mrb[0].mxu0
  %2445 = vmatprep.mubr.f32.mxu0 0.0
  %2446 = vmatmul.mubr.f32.gmra.mrb[0].mxu0 %v516
  %v2447 = vpop.f32.mrb[0].mxu0
  %v2448 = vadd.f32 %v2353, %v2447
  %v2449 = vpop.f32.mrb[0].mxu0
  %2450 = vmatprep.mubr.f32.mxu0 0.0
  %2451 = vmatmul.mubr.f32.gmra.mrb[0].mxu0 %v519
  %v2452 = vpop.f32.mrb[0].mxu0
  %v2453 = vadd.f32 %v2358, %v2452
  %v2454 = vpop.f32.mrb[0].mxu0
  %2455 = vmatprep.mubr.f32.mxu0 0.0
  %2456 = vmatmul.mubr.f32.gmra.mrb[0].mxu0 %v522
  %v2457 = vpop.f32.mrb[0].mxu0
  %v2458 = vadd.f32 %v2363, %v2457
  %v2459 = vpop.f32.mrb[0].mxu0
  %2460 = vdwg.mxu0
  %2461 = vmatprep.subr.mxu0 0.0
  %2462 = vmatpush1.msra.mxu0 %v294
  %2463 = vmatprep.subr.mxu0 0.0
  %2464 = vmatpush1.msra.mxu0 %v295
  %2465 = vmatprep.subr.mxu0 0.0
  %2466 = vmatpush1.msra.mxu0 %v296
  %2467 = vmatprep.subr.mxu0 0.0
  %2468 = vmatpush1.msra.mxu0 %v299
  %2469 = vmatprep.subr.mxu0 0.0
  %2470 = vmatpush1.msra.mxu0 0.0
  %2471 = vmatprep.subr.mxu0 0.0
  %2472 = vmatpush1.msra.mxu0 0.0
  %2473 = vmatprep.subr.mxu0 0.0
  %2474 = vmatpush1.msra.mxu0 0.0
  %2475 = vmatprep.subr.mxu0 0.0
  %2476 = vmatpush1.msra.mxu0 0.0
  %2477 = vmatprep.subr.mxu0 0.0
  %2478 = vmatpush1.msra.mxu0 0.0
  %2479 = vmatprep.subr.mxu0 0.0
  %2480 = vmatpush1.msra.mxu0 0.0
  %2481 = vmatprep.subr.mxu0 0.0
  %2482 = vmatpush1.msra.mxu0 0.0
  %2483 = vmatprep.subr.mxu0 0.0
  %2484 = vmatpush1.msra.mxu0 0.0
  %2485 = vmatprep.subr.mxu0 0.0
  %2486 = vmatpush1.msra.mxu0 0.0
  %2487 = vmatprep.subr.mxu0 0.0
  %2488 = vmatpush1.msra.mxu0 0.0
  %2489 = vmatprep.subr.mxu0 0.0
  %2490 = vmatpush1.msra.mxu0 0.0
  %2491 = vmatprep.subr.mxu0 0.0
  %2492 = vmatpush1.msra.mxu0 0.0
  %2493 = vmatprep.subr.mxu0 0.0
  %2494 = vmatpush1.msra.mxu0 0.0
  %2495 = vmatprep.subr.mxu0 0.0
  %2496 = vmatpush1.msra.mxu0 0.0
  %2497 = vmatprep.subr.mxu0 0.0
  %2498 = vmatpush1.msra.mxu0 0.0
  %2499 = vmatprep.subr.mxu0 0.0
  %2500 = vmatpush1.msra.mxu0 0.0
  %2501 = vmatprep.subr.mxu0 0.0
  %2502 = vmatpush1.msra.mxu0 0.0
  %2503 = vmatprep.subr.mxu0 0.0
  %2504 = vmatpush1.msra.mxu0 0.0
  %2505 = vmatprep.subr.mxu0 0.0
  %2506 = vmatpush1.msra.mxu0 0.0
  %2507 = vmatprep.subr.mxu0 0.0
  %2508 = vmatpush1.msra.mxu0 0.0
  %2509 = vmatprep.subr.mxu0 0.0
  %2510 = vmatpush1.msra.mxu0 0.0
  %2511 = vmatprep.subr.mxu0 0.0
  %2512 = vmatpush1.msra.mxu0 0.0
  %2513 = vmatprep.subr.mxu0 0.0
  %2514 = vmatpush1.msra.mxu0 0.0
  %2515 = vmatprep.subr.mxu0 0.0
  %2516 = vmatpush1.msra.mxu0 0.0
  %2517 = vmatprep.subr.mxu0 0.0
  %2518 = vmatpush1.msra.mxu0 0.0
  %2519 = vmatprep.subr.mxu0 0.0
  %2520 = vmatpush1.msra.mxu0 0.0
  %2521 = vmatprep.subr.mxu0 0.0
  %2522 = vmatpush1.msra.mxu0 0.0
  %2523 = vmatprep.subr.mxu0 0.0
  %2524 = vmatpush1.msra.mxu0 0.0
  %2525 = vmatprep.mubr.f32.mxu0 0.0
  %2526 = vmatmul.mubr.f32.gmra.mrb[0].mxu0 %v750
  %v2527 = vpop.f32.mrb[0].mxu0
  %v2528 = vadd.f32 0.0, %v2527
  %v2529 = vpop.f32.mrb[0].mxu0
  %2530 = vmatprep.mubr.f32.mxu0 0.0
  %2531 = vmatmul.mubr.f32.gmra.mrb[0].mxu0 %v753
  %v2532 = vpop.f32.mrb[0].mxu0
  %v2533 = vadd.f32 0.0, %v2532
  %v2534 = vpop.f32.mrb[0].mxu0
  %2535 = vmatprep.mubr.f32.mxu0 0.0
  %2536 = vmatmul.mubr.f32.gmra.mrb[0].mxu0 %v756
  %v2537 = vpop.f32.mrb[0].mxu0
  %v2538 = vadd.f32 0.0, %v2537
  %v2539 = vpop.f32.mrb[0].mxu0
  %2540 = vmatprep.mubr.f32.mxu0 0.0
  %2541 = vmatmul.mubr.f32.gmra.mrb[0].mxu0 %v759
  %v2542 = vpop.f32.mrb[0].mxu0
  %v2543 = vadd.f32 0.0, %v2542
  %v2544 = vpop.f32.mrb[0].mxu0
  %2545 = vmatprep.mubr.f32.mxu0 0.0
  %2546 = vmatmul.mubr.f32.gmra.mrb[0].mxu0 %v762
  %v2547 = vpop.f32.mrb[0].mxu0
  %v2548 = vadd.f32 0.0, %v2547
  %v2549 = vpop.f32.mrb[0].mxu0
  %2550 = vmatprep.mubr.f32.mxu0 0.0
  %2551 = vmatmul.mubr.f32.gmra.mrb[0].mxu0 %v765
  %v2552 = vpop.f32.mrb[0].mxu0
  %v2553 = vadd.f32 0.0, %v2552
  %v2554 = vpop.f32.mrb[0].mxu0
  %2555 = vdwg.mxu0
  %2556 = vmatprep.subr.mxu0 0.0
  %2557 = vmatpush1.msra.mxu0 %v43
  %2558 = vmatprep.subr.mxu0 0.0
  %2559 = vmatpush1.msra.mxu0 %v44
  %2560 = vmatprep.subr.mxu0 0.0
  %2561 = vmatpush1.msra.mxu0 %v45
  %2562 = vmatprep.subr.mxu0 0.0
  %2563 = vmatpush1.msra.mxu0 %v397
  %2564 = vmatprep.subr.mxu0 0.0
  %2565 = vmatpush1.msra.mxu0 0.0
  %2566 = vmatprep.subr.mxu0 0.0
  %2567 = vmatpush1.msra.mxu0 0.0
  %2568 = vmatprep.subr.mxu0 0.0
  %2569 = vmatpush1.msra.mxu0 0.0
  %2570 = vmatprep.subr.mxu0 0.0
  %2571 = vmatpush1.msra.mxu0 0.0
  %2572 = vmatprep.subr.mxu0 0.0
  %2573 = vmatpush1.msra.mxu0 0.0
  %2574 = vmatprep.subr.mxu0 0.0
  %2575 = vmatpush1.msra.mxu0 0.0
  %2576 = vmatprep.subr.mxu0 0.0
  %2577 = vmatpush1.msra.mxu0 0.0
  %2578 = vmatprep.subr.mxu0 0.0
  %2579 = vmatpush1.msra.mxu0 0.0
  %2580 = vmatprep.subr.mxu0 0.0
  %2581 = vmatpush1.msra.mxu0 0.0
  %2582 = vmatprep.subr.mxu0 0.0
  %2583 = vmatpush1.msra.mxu0 0.0
  %2584 = vmatprep.subr.mxu0 0.0
  %2585 = vmatpush1.msra.mxu0 0.0
  %2586 = vmatprep.subr.mxu0 0.0
  %2587 = vmatpush1.msra.mxu0 0.0
  %2588 = vmatprep.subr.mxu0 0.0
  %2589 = vmatpush1.msra.mxu0 0.0
  %2590 = vmatprep.subr.mxu0 0.0
  %2591 = vmatpush1.msra.mxu0 0.0
  %2592 = vmatprep.subr.mxu0 0.0
  %2593 = vmatpush1.msra.mxu0 0.0
  %2594 = vmatprep.subr.mxu0 0.0
  %2595 = vmatpush1.msra.mxu0 0.0
  %2596 = vmatprep.subr.mxu0 0.0
  %2597 = vmatpush1.msra.mxu0 0.0
  %2598 = vmatprep.subr.mxu0 0.0
  %2599 = vmatpush1.msra.mxu0 0.0
  %2600 = vmatprep.subr.mxu0 0.0
  %2601 = vmatpush1.msra.mxu0 0.0
  %2602 = vmatprep.subr.mxu0 0.0
  %2603 = vmatpush1.msra.mxu0 0.0
  %2604 = vmatprep.subr.mxu0 0.0
  %2605 = vmatpush1.msra.mxu0 0.0
  %2606 = vmatprep.subr.mxu0 0.0
  %2607 = vmatpush1.msra.mxu0 0.0
  %2608 = vmatprep.subr.mxu0 0.0
  %2609 = vmatpush1.msra.mxu0 0.0
  %2610 = vmatprep.subr.mxu0 0.0
  %2611 = vmatpush1.msra.mxu0 0.0
  %2612 = vmatprep.subr.mxu0 0.0
  %2613 = vmatpush1.msra.mxu0 0.0
  %2614 = vmatprep.subr.mxu0 0.0
  %2615 = vmatpush1.msra.mxu0 0.0
  %2616 = vmatprep.subr.mxu0 0.0
  %2617 = vmatpush1.msra.mxu0 0.0
  %2618 = vmatprep.subr.mxu0 0.0
  %2619 = vmatpush1.msra.mxu0 0.0
  %2620 = vmatprep.mubr.f32.mxu0 0.0
  %2621 = vmatmul.mubr.f32.gmra.mrb[0].mxu0 %v507
  %v2622 = vpop.f32.mrb[0].mxu0
  %v2623 = vadd.f32 %v2528, %v2622
  %v2624 = vpop.f32.mrb[0].mxu0
  %2625 = vmatprep.mubr.f32.mxu0 0.0
  %2626 = vmatmul.mubr.f32.gmra.mrb[0].mxu0 %v510
  %v2627 = vpop.f32.mrb[0].mxu0
  %v2628 = vadd.f32 %v2533, %v2627
  %v2629 = vpop.f32.mrb[0].mxu0
  %2630 = vmatprep.mubr.f32.mxu0 0.0
  %2631 = vmatmul.mubr.f32.gmra.mrb[0].mxu0 %v513
  %v2632 = vpop.f32.mrb[0].mxu0
  %v2633 = vadd.f32 %v2538, %v2632
  %v2634 = vpop.f32.mrb[0].mxu0
  %2635 = vmatprep.mubr.f32.mxu0 0.0
  %2636 = vmatmul.mubr.f32.gmra.mrb[0].mxu0 %v516
  %v2637 = vpop.f32.mrb[0].mxu0
  %v2638 = vadd.f32 %v2543, %v2637
  %v2639 = vpop.f32.mrb[0].mxu0
  %2640 = vmatprep.mubr.f32.mxu0 0.0
  %2641 = vmatmul.mubr.f32.gmra.mrb[0].mxu0 %v519
  %v2642 = vpop.f32.mrb[0].mxu0
  %v2643 = vadd.f32 %v2548, %v2642
  %v2644 = vpop.f32.mrb[0].mxu0
  %2645 = vmatprep.mubr.f32.mxu0 0.0
  %2646 = vmatmul.mubr.f32.gmra.mrb[0].mxu0 %v522
  %v2647 = vpop.f32.mrb[0].mxu0
  %v2648 = vadd.f32 %v2553, %v2647
  %v2649 = vpop.f32.mrb[0].mxu0
  %2650 = vdwg.mxu0
  %2651 = vmatprep.subr.mxu0 0.0
  %2652 = vmatpush1.msra.mxu0 %v502
  %2653 = vmatprep.subr.mxu0 0.0
  %2654 = vmatpush1.msra.mxu0 %v503
  %2655 = vmatprep.subr.mxu0 0.0
  %2656 = vmatpush1.msra.mxu0 %v504
  %2657 = vmatprep.subr.mxu0 0.0
  %2658 = vmatpush1.msra.mxu0 %v525
  %2659 = vmatprep.subr.mxu0 0.0
  %2660 = vmatpush1.msra.mxu0 0.0
  %2661 = vmatprep.subr.mxu0 0.0
  %2662 = vmatpush1.msra.mxu0 0.0
  %2663 = vmatprep.subr.mxu0 0.0
  %2664 = vmatpush1.msra.mxu0 0.0
  %2665 = vmatprep.subr.mxu0 0.0
  %2666 = vmatpush1.msra.mxu0 0.0
  %2667 = vmatprep.subr.mxu0 0.0
  %2668 = vmatpush1.msra.mxu0 0.0
  %2669 = vmatprep.subr.mxu0 0.0
  %2670 = vmatpush1.msra.mxu0 0.0
  %2671 = vmatprep.subr.mxu0 0.0
  %2672 = vmatpush1.msra.mxu0 0.0
  %2673 = vmatprep.subr.mxu0 0.0
  %2674 = vmatpush1.msra.mxu0 0.0
  %2675 = vmatprep.subr.mxu0 0.0
  %2676 = vmatpush1.msra.mxu0 0.0
  %2677 = vmatprep.subr.mxu0 0.0
  %2678 = vmatpush1.msra.mxu0 0.0
  %2679 = vmatprep.subr.mxu0 0.0
  %2680 = vmatpush1.msra.mxu0 0.0
  %2681 = vmatprep.subr.mxu0 0.0
  %2682 = vmatpush1.msra.mxu0 0.0
  %2683 = vmatprep.subr.mxu0 0.0
  %2684 = vmatpush1.msra.mxu0 0.0
  %2685 = vmatprep.subr.mxu0 0.0
  %2686 = vmatpush1.msra.mxu0 0.0
  %2687 = vmatprep.subr.mxu0 0.0
  %2688 = vmatpush1.msra.mxu0 0.0
  %2689 = vmatprep.subr.mxu0 0.0
  %2690 = vmatpush1.msra.mxu0 0.0
  %2691 = vmatprep.subr.mxu0 0.0
  %2692 = vmatpush1.msra.mxu0 0.0
  %2693 = vmatprep.subr.mxu0 0.0
  %2694 = vmatpush1.msra.mxu0 0.0
  %2695 = vmatprep.subr.mxu0 0.0
  %2696 = vmatpush1.msra.mxu0 0.0
  %2697 = vmatprep.subr.mxu0 0.0
  %2698 = vmatpush1.msra.mxu0 0.0
  %2699 = vmatprep.subr.mxu0 0.0
  %2700 = vmatpush1.msra.mxu0 0.0
  %2701 = vmatprep.subr.mxu0 0.0
  %2702 = vmatpush1.msra.mxu0 0.0
  %2703 = vmatprep.subr.mxu0 0.0
  %2704 = vmatpush1.msra.mxu0 0.0
  %2705 = vmatprep.subr.mxu0 0.0
  %2706 = vmatpush1.msra.mxu0 0.0
  %2707 = vmatprep.subr.mxu0 0.0
  %2708 = vmatpush1.msra.mxu0 0.0
  %2709 = vmatprep.subr.mxu0 0.0
  %2710 = vmatpush1.msra.mxu0 0.0
  %2711 = vmatprep.subr.mxu0 0.0
  %2712 = vmatpush1.msra.mxu0 0.0
  %2713 = vmatprep.subr.mxu0 0.0
  %2714 = vmatpush1.msra.mxu0 0.0
  %2715 = vmatprep.mubr.f32.mxu0 0.0
  %2716 = vmatmul.mubr.f32.gmra.mrb[0].mxu0 %v993
  %v2717 = vpop.f32.mrb[0].mxu0
  %v2718 = vadd.f32 0.0, %v2717
  %v2719 = vpop.f32.mrb[0].mxu0
  %2720 = vmatprep.mubr.f32.mxu0 0.0
  %2721 = vmatmul.mubr.f32.gmra.mrb[0].mxu0 %v996
  %v2722 = vpop.f32.mrb[0].mxu0
  %v2723 = vadd.f32 0.0, %v2722
  %v2724 = vpop.f32.mrb[0].mxu0
  %2725 = vmatprep.mubr.f32.mxu0 0.0
  %2726 = vmatmul.mubr.f32.gmra.mrb[0].mxu0 %v999
  %v2727 = vpop.f32.mrb[0].mxu0
  %v2728 = vadd.f32 0.0, %v2727
  %v2729 = vpop.f32.mrb[0].mxu0
  %2730 = vmatprep.mubr.f32.mxu0 0.0
  %2731 = vmatmul.mubr.f32.gmra.mrb[0].mxu0 %v1002
  %v2732 = vpop.f32.mrb[0].mxu0
  %v2733 = vadd.f32 0.0, %v2732
  %v2734 = vpop.f32.mrb[0].mxu0
  %2735 = vmatprep.mubr.f32.mxu0 0.0
  %2736 = vmatmul.mubr.f32.gmra.mrb[0].mxu0 %v1005
  %v2737 = vpop.f32.mrb[0].mxu0
  %v2738 = vadd.f32 0.0, %v2737
  %v2739 = vpop.f32.mrb[0].mxu0
  %2740 = vmatprep.mubr.f32.mxu0 0.0
  %2741 = vmatmul.mubr.f32.gmra.mrb[0].mxu0 %v1008
  %v2742 = vpop.f32.mrb[0].mxu0
  %v2743 = vadd.f32 0.0, %v2742
  %v2744 = vpop.f32.mrb[0].mxu0
  %2745 = vdwg.mxu0
  %v2746 = vadd.f32 %v2433, %v2718
  %v2747 = vadd.f32 %v2438, %v2723
  %v2748 = vadd.f32 %v2443, %v2728
  %v2749 = vadd.f32 %v2448, %v2733
  %v2750 = vadd.f32 %v2453, %v2738
  %v2751 = vadd.f32 %v2458, %v2743
  %2752 = vmatprep.subr.mxu0 0.0
  %2753 = vmatpush1.msra.mxu0 %v629
  %2754 = vmatprep.subr.mxu0 0.0
  %2755 = vmatpush1.msra.mxu0 %v630
  %2756 = vmatprep.subr.mxu0 0.0
  %2757 = vmatpush1.msra.mxu0 %v631
  %2758 = vmatprep.subr.mxu0 0.0
  %2759 = vmatpush1.msra.mxu0 %v634
  %2760 = vmatprep.subr.mxu0 0.0
  %2761 = vmatpush1.msra.mxu0 0.0
  %2762 = vmatprep.subr.mxu0 0.0
  %2763 = vmatpush1.msra.mxu0 0.0
  %2764 = vmatprep.subr.mxu0 0.0
  %2765 = vmatpush1.msra.mxu0 0.0
  %2766 = vmatprep.subr.mxu0 0.0
  %2767 = vmatpush1.msra.mxu0 0.0
  %2768 = vmatprep.subr.mxu0 0.0
  %2769 = vmatpush1.msra.mxu0 0.0
  %2770 = vmatprep.subr.mxu0 0.0
  %2771 = vmatpush1.msra.mxu0 0.0
  %2772 = vmatprep.subr.mxu0 0.0
  %2773 = vmatpush1.msra.mxu0 0.0
  %2774 = vmatprep.subr.mxu0 0.0
  %2775 = vmatpush1.msra.mxu0 0.0
  %2776 = vmatprep.subr.mxu0 0.0
  %2777 = vmatpush1.msra.mxu0 0.0
  %2778 = vmatprep.subr.mxu0 0.0
  %2779 = vmatpush1.msra.mxu0 0.0
  %2780 = vmatprep.subr.mxu0 0.0
  %2781 = vmatpush1.msra.mxu0 0.0
  %2782 = vmatprep.subr.mxu0 0.0
  %2783 = vmatpush1.msra.mxu0 0.0
  %2784 = vmatprep.subr.mxu0 0.0
  %2785 = vmatpush1.msra.mxu0 0.0
  %2786 = vmatprep.subr.mxu0 0.0
  %2787 = vmatpush1.msra.mxu0 0.0
  %2788 = vmatprep.subr.mxu0 0.0
  %2789 = vmatpush1.msra.mxu0 0.0
  %2790 = vmatprep.subr.mxu0 0.0
  %2791 = vmatpush1.msra.mxu0 0.0
  %2792 = vmatprep.subr.mxu0 0.0
  %2793 = vmatpush1.msra.mxu0 0.0
  %2794 = vmatprep.subr.mxu0 0.0
  %2795 = vmatpush1.msra.mxu0 0.0
  %2796 = vmatprep.subr.mxu0 0.0
  %2797 = vmatpush1.msra.mxu0 0.0
  %2798 = vmatprep.subr.mxu0 0.0
  %2799 = vmatpush1.msra.mxu0 0.0
  %2800 = vmatprep.subr.mxu0 0.0
  %2801 = vmatpush1.msra.mxu0 0.0
  %2802 = vmatprep.subr.mxu0 0.0
  %2803 = vmatpush1.msra.mxu0 0.0
  %2804 = vmatprep.subr.mxu0 0.0
  %2805 = vmatpush1.msra.mxu0 0.0
  %2806 = vmatprep.subr.mxu0 0.0
  %2807 = vmatpush1.msra.mxu0 0.0
  %2808 = vmatprep.subr.mxu0 0.0
  %2809 = vmatpush1.msra.mxu0 0.0
  %2810 = vmatprep.subr.mxu0 0.0
  %2811 = vmatpush1.msra.mxu0 0.0
  %2812 = vmatprep.subr.mxu0 0.0
  %2813 = vmatpush1.msra.mxu0 0.0
  %2814 = vmatprep.subr.mxu0 0.0
  %2815 = vmatpush1.msra.mxu0 0.0
  %2816 = vmatprep.mubr.f32.mxu0 0.0
  %2817 = vmatmul.mubr.f32.gmra.mrb[0].mxu0 %v993
  %v2818 = vpop.f32.mrb[0].mxu0
  %v2819 = vadd.f32 0.0, %v2818
  %v2820 = vpop.f32.mrb[0].mxu0
  %2821 = vmatprep.mubr.f32.mxu0 0.0
  %2822 = vmatmul.mubr.f32.gmra.mrb[0].mxu0 %v996
  %v2823 = vpop.f32.mrb[0].mxu0
  %v2824 = vadd.f32 0.0, %v2823
  %v2825 = vpop.f32.mrb[0].mxu0
  %2826 = vmatprep.mubr.f32.mxu0 0.0
  %2827 = vmatmul.mubr.f32.gmra.mrb[0].mxu0 %v999
  %v2828 = vpop.f32.mrb[0].mxu0
  %v2829 = vadd.f32 0.0, %v2828
  %v2830 = vpop.f32.mrb[0].mxu0
  %2831 = vmatprep.mubr.f32.mxu0 0.0
  %2832 = vmatmul.mubr.f32.gmra.mrb[0].mxu0 %v1002
  %v2833 = vpop.f32.mrb[0].mxu0
  %v2834 = vadd.f32 0.0, %v2833
  %v2835 = vpop.f32.mrb[0].mxu0
  %2836 = vmatprep.mubr.f32.mxu0 0.0
  %2837 = vmatmul.mubr.f32.gmra.mrb[0].mxu0 %v1005
  %v2838 = vpop.f32.mrb[0].mxu0
  %v2839 = vadd.f32 0.0, %v2838
  %v2840 = vpop.f32.mrb[0].mxu0
  %2841 = vmatprep.mubr.f32.mxu0 0.0
  %2842 = vmatmul.mubr.f32.gmra.mrb[0].mxu0 %v1008
  %v2843 = vpop.f32.mrb[0].mxu0
  %v2844 = vadd.f32 0.0, %v2843
  %v2845 = vpop.f32.mrb[0].mxu0
  %2846 = vdwg.mxu0
  %v2847 = vadd.f32 %v2623, %v2819
  %v2848 = vadd.f32 %v2628, %v2824
  %v2849 = vadd.f32 %v2633, %v2829
  %v2850 = vadd.f32 %v2638, %v2834
  %v2851 = vadd.f32 %v2643, %v2839
  %v2852 = vadd.f32 %v2648, %v2844
  %2853 = vmatprep.subr.mxu0 0.0
  %2854 = vmatpush1.msra.mxu0 %v745
  %2855 = vmatprep.subr.mxu0 0.0
  %2856 = vmatpush1.msra.mxu0 %v746
  %2857 = vmatprep.subr.mxu0 0.0
  %2858 = vmatpush1.msra.mxu0 %v747
  %2859 = vmatprep.subr.mxu0 0.0
  %2860 = vmatpush1.msra.mxu0 %v768
  %2861 = vmatprep.subr.mxu0 0.0
  %2862 = vmatpush1.msra.mxu0 0.0
  %2863 = vmatprep.subr.mxu0 0.0
  %2864 = vmatpush1.msra.mxu0 0.0
  %2865 = vmatprep.subr.mxu0 0.0
  %2866 = vmatpush1.msra.mxu0 0.0
  %2867 = vmatprep.subr.mxu0 0.0
  %2868 = vmatpush1.msra.mxu0 0.0
  %2869 = vmatprep.subr.mxu0 0.0
  %2870 = vmatpush1.msra.mxu0 0.0
  %2871 = vmatprep.subr.mxu0 0.0
  %2872 = vmatpush1.msra.mxu0 0.0
  %2873 = vmatprep.subr.mxu0 0.0
  %2874 = vmatpush1.msra.mxu0 0.0
  %2875 = vmatprep.subr.mxu0 0.0
  %2876 = vmatpush1.msra.mxu0 0.0
  %2877 = vmatprep.subr.mxu0 0.0
  %2878 = vmatpush1.msra.mxu0 0.0
  %2879 = vmatprep.subr.mxu0 0.0
  %2880 = vmatpush1.msra.mxu0 0.0
  %2881 = vmatprep.subr.mxu0 0.0
  %2882 = vmatpush1.msra.mxu0 0.0
  %2883 = vmatprep.subr.mxu0 0.0
  %2884 = vmatpush1.msra.mxu0 0.0
  %2885 = vmatprep.subr.mxu0 0.0
  %2886 = vmatpush1.msra.mxu0 0.0
  %2887 = vmatprep.subr.mxu0 0.0
  %2888 = vmatpush1.msra.mxu0 0.0
  %2889 = vmatprep.subr.mxu0 0.0
  %2890 = vmatpush1.msra.mxu0 0.0
  %2891 = vmatprep.subr.mxu0 0.0
  %2892 = vmatpush1.msra.mxu0 0.0
  %2893 = vmatprep.subr.mxu0 0.0
  %2894 = vmatpush1.msra.mxu0 0.0
  %2895 = vmatprep.subr.mxu0 0.0
  %2896 = vmatpush1.msra.mxu0 0.0
  %2897 = vmatprep.subr.mxu0 0.0
  %2898 = vmatpush1.msra.mxu0 0.0
  %2899 = vmatprep.subr.mxu0 0.0
  %2900 = vmatpush1.msra.mxu0 0.0
  %2901 = vmatprep.subr.mxu0 0.0
  %2902 = vmatpush1.msra.mxu0 0.0
  %2903 = vmatprep.subr.mxu0 0.0
  %2904 = vmatpush1.msra.mxu0 0.0
  %2905 = vmatprep.subr.mxu0 0.0
  %2906 = vmatpush1.msra.mxu0 0.0
  %2907 = vmatprep.subr.mxu0 0.0
  %2908 = vmatpush1.msra.mxu0 0.0
  %2909 = vmatprep.subr.mxu0 0.0
  %2910 = vmatpush1.msra.mxu0 0.0
  %2911 = vmatprep.subr.mxu0 0.0
  %2912 = vmatpush1.msra.mxu0 0.0
  %2913 = vmatprep.subr.mxu0 0.0
  %2914 = vmatpush1.msra.mxu0 0.0
  %2915 = vmatprep.subr.mxu0 0.0
  %2916 = vmatpush1.msra.mxu0 0.0
  %2917 = vmatprep.mubr.f32.mxu0 0.0
  %2918 = vmatmul.mubr.f32.gmra.mrb[0].mxu0 %v2015
  %v2919 = vpop.f32.mrb[0].mxu0
  %v2920 = vadd.f32 0.0, %v2919
  %v2921 = vpop.f32.mrb[0].mxu0
  %2922 = vmatprep.mubr.f32.mxu0 0.0
  %2923 = vmatmul.mubr.f32.gmra.mrb[0].mxu0 %v2018
  %v2924 = vpop.f32.mrb[0].mxu0
  %v2925 = vadd.f32 0.0, %v2924
  %v2926 = vpop.f32.mrb[0].mxu0
  %2927 = vmatprep.mubr.f32.mxu0 0.0
  %2928 = vmatmul.mubr.f32.gmra.mrb[0].mxu0 %v2021
  %v2929 = vpop.f32.mrb[0].mxu0
  %v2930 = vadd.f32 0.0, %v2929
  %v2931 = vpop.f32.mrb[0].mxu0
  %2932 = vmatprep.mubr.f32.mxu0 0.0
  %2933 = vmatmul.mubr.f32.gmra.mrb[0].mxu0 %v2024
  %v2934 = vpop.f32.mrb[0].mxu0
  %v2935 = vadd.f32 0.0, %v2934
  %v2936 = vpop.f32.mrb[0].mxu0
  %2937 = vmatprep.mubr.f32.mxu0 0.0
  %2938 = vmatmul.mubr.f32.gmra.mrb[0].mxu0 %v2027
  %v2939 = vpop.f32.mrb[0].mxu0
  %v2940 = vadd.f32 0.0, %v2939
  %v2941 = vpop.f32.mrb[0].mxu0
  %2942 = vmatprep.mubr.f32.mxu0 0.0
  %2943 = vmatmul.mubr.f32.gmra.mrb[0].mxu0 %v2030
  %v2944 = vpop.f32.mrb[0].mxu0
  %v2945 = vadd.f32 0.0, %v2944
  %v2946 = vpop.f32.mrb[0].mxu0
  %2947 = vdwg.mxu0
  %v2948 = vadd.f32 %v2746, %v2920
  %v2949 = vadd.f32 %v2747, %v2925
  %v2950 = vadd.f32 %v2748, %v2930
  %v2951 = vadd.f32 %v2749, %v2935
  %v2952 = vadd.f32 %v2750, %v2940
  %v2953 = vadd.f32 %v2751, %v2945
  %2954 = vmatprep.subr.mxu0 0.0
  %2955 = vmatpush1.msra.mxu0 %v872
  %2956 = vmatprep.subr.mxu0 0.0
  %2957 = vmatpush1.msra.mxu0 %v873
  %2958 = vmatprep.subr.mxu0 0.0
  %2959 = vmatpush1.msra.mxu0 %v874
  %2960 = vmatprep.subr.mxu0 0.0
  %2961 = vmatpush1.msra.mxu0 %v877
  %2962 = vmatprep.subr.mxu0 0.0
  %2963 = vmatpush1.msra.mxu0 0.0
  %2964 = vmatprep.subr.mxu0 0.0
  %2965 = vmatpush1.msra.mxu0 0.0
  %2966 = vmatprep.subr.mxu0 0.0
  %2967 = vmatpush1.msra.mxu0 0.0
  %2968 = vmatprep.subr.mxu0 0.0
  %2969 = vmatpush1.msra.mxu0 0.0
  %2970 = vmatprep.subr.mxu0 0.0
  %2971 = vmatpush1.msra.mxu0 0.0
  %2972 = vmatprep.subr.mxu0 0.0
  %2973 = vmatpush1.msra.mxu0 0.0
  %2974 = vmatprep.subr.mxu0 0.0
  %2975 = vmatpush1.msra.mxu0 0.0
  %2976 = vmatprep.subr.mxu0 0.0
  %2977 = vmatpush1.msra.mxu0 0.0
  %2978 = vmatprep.subr.mxu0 0.0
  %2979 = vmatpush1.msra.mxu0 0.0
  %2980 = vmatprep.subr.mxu0 0.0
  %2981 = vmatpush1.msra.mxu0 0.0
  %2982 = vmatprep.subr.mxu0 0.0
  %2983 = vmatpush1.msra.mxu0 0.0
  %2984 = vmatprep.subr.mxu0 0.0
  %2985 = vmatpush1.msra.mxu0 0.0
  %2986 = vmatprep.subr.mxu0 0.0
  %2987 = vmatpush1.msra.mxu0 0.0
  %2988 = vmatprep.subr.mxu0 0.0
  %2989 = vmatpush1.msra.mxu0 0.0
  %2990 = vmatprep.subr.mxu0 0.0
  %2991 = vmatpush1.msra.mxu0 0.0
  %2992 = vmatprep.subr.mxu0 0.0
  %2993 = vmatpush1.msra.mxu0 0.0
  %2994 = vmatprep.subr.mxu0 0.0
  %2995 = vmatpush1.msra.mxu0 0.0
  %2996 = vmatprep.subr.mxu0 0.0
  %2997 = vmatpush1.msra.mxu0 0.0
  %2998 = vmatprep.subr.mxu0 0.0
  %2999 = vmatpush1.msra.mxu0 0.0
  %3000 = vmatprep.subr.mxu0 0.0
  %3001 = vmatpush1.msra.mxu0 0.0
  %3002 = vmatprep.subr.mxu0 0.0
  %3003 = vmatpush1.msra.mxu0 0.0
  %3004 = vmatprep.subr.mxu0 0.0
  %3005 = vmatpush1.msra.mxu0 0.0
  %3006 = vmatprep.subr.mxu0 0.0
  %3007 = vmatpush1.msra.mxu0 0.0
  %3008 = vmatprep.subr.mxu0 0.0
  %3009 = vmatpush1.msra.mxu0 0.0
  %3010 = vmatprep.subr.mxu0 0.0
  %3011 = vmatpush1.msra.mxu0 0.0
  %3012 = vmatprep.subr.mxu0 0.0
  %3013 = vmatpush1.msra.mxu0 0.0
  %3014 = vmatprep.subr.mxu0 0.0
  %3015 = vmatpush1.msra.mxu0 0.0
  %3016 = vmatprep.subr.mxu0 0.0
  %3017 = vmatpush1.msra.mxu0 0.0
  %3018 = vmatprep.mubr.f32.mxu0 0.0
  %3019 = vmatmul.mubr.f32.gmra.mrb[0].mxu0 %v2015
  %v3020 = vpop.f32.mrb[0].mxu0
  %v3021 = vadd.f32 0.0, %v3020
  %v3022 = vpop.f32.mrb[0].mxu0
  %3023 = vmatprep.mubr.f32.mxu0 0.0
  %3024 = vmatmul.mubr.f32.gmra.mrb[0].mxu0 %v2018
  %v3025 = vpop.f32.mrb[0].mxu0
  %v3026 = vadd.f32 0.0, %v3025
  %v3027 = vpop.f32.mrb[0].mxu0
  %3028 = vmatprep.mubr.f32.mxu0 0.0
  %3029 = vmatmul.mubr.f32.gmra.mrb[0].mxu0 %v2021
  %v3030 = vpop.f32.mrb[0].mxu0
  %v3031 = vadd.f32 0.0, %v3030
  %v3032 = vpop.f32.mrb[0].mxu0
  %3033 = vmatprep.mubr.f32.mxu0 0.0
  %3034 = vmatmul.mubr.f32.gmra.mrb[0].mxu0 %v2024
  %v3035 = vpop.f32.mrb[0].mxu0
  %v3036 = vadd.f32 0.0, %v3035
  %v3037 = vpop.f32.mrb[0].mxu0
  %3038 = vmatprep.mubr.f32.mxu0 0.0
  %3039 = vmatmul.mubr.f32.gmra.mrb[0].mxu0 %v2027
  %v3040 = vpop.f32.mrb[0].mxu0
  %v3041 = vadd.f32 0.0, %v3040
  %v3042 = vpop.f32.mrb[0].mxu0
  %3043 = vmatprep.mubr.f32.mxu0 0.0
  %3044 = vmatmul.mubr.f32.gmra.mrb[0].mxu0 %v2030
  %v3045 = vpop.f32.mrb[0].mxu0
  %v3046 = vadd.f32 0.0, %v3045
  %v3047 = vpop.f32.mrb[0].mxu0
  %3048 = vdwg.mxu0
  %v3049 = vadd.f32 %v2847, %v3021
  %v3050 = vadd.f32 %v2848, %v3026
  %v3051 = vadd.f32 %v2849, %v3031
  %v3052 = vadd.f32 %v2850, %v3036
  %v3053 = vadd.f32 %v2851, %v3041
  %v3054 = vadd.f32 %v2852, %v3046
  %s3055 = scalar_lea.vmem %s0, 120
  %v3056 = vld [vmem:[%s3055] sm:$0xff]
  %v3057 = vld [vmem:[%s3055 + $0x8] sm:$0xff]
  %v3058 = vld [vmem:[%s3055 + $0x10] sm:$0xff]
  %v3059 = vld [vmem:[%s3055 + $0x18] sm:$0xff]
  %v3060 = vld [vmem:[%s3055 + $0x20] sm:$0xff]
  %v3061 = vld [vmem:[%s3055 + $0x28] sm:$0xff]
  %v3063 = vsel %vm59, %v3056, 0
  %v3066 = vsel %vm59, %v3057, 0
  %v3069 = vsel %vm59, %v3058, 0
  %v3072 = vsel %vm59, %v3059, 0
  %v3075 = vsel %vm59, %v3060, 0
  %v3078 = vsel %vm59, %v3061, 0
  %3080 = vmatprep.subr.mxu0 0.0
  %3081 = vmatpush1.msra.mxu0 %v988
  %3082 = vmatprep.subr.mxu0 0.0
  %3083 = vmatpush1.msra.mxu0 %v989
  %3084 = vmatprep.subr.mxu0 0.0
  %3085 = vmatpush1.msra.mxu0 %v990
  %3086 = vmatprep.subr.mxu0 0.0
  %3087 = vmatpush1.msra.mxu0 %v1011
  %3088 = vmatprep.subr.mxu0 0.0
  %3089 = vmatpush1.msra.mxu0 0.0
  %3090 = vmatprep.subr.mxu0 0.0
  %3091 = vmatpush1.msra.mxu0 0.0
  %3092 = vmatprep.subr.mxu0 0.0
  %3093 = vmatpush1.msra.mxu0 0.0
  %3094 = vmatprep.subr.mxu0 0.0
  %3095 = vmatpush1.msra.mxu0 0.0
  %3096 = vmatprep.subr.mxu0 0.0
  %3097 = vmatpush1.msra.mxu0 0.0
  %3098 = vmatprep.subr.mxu0 0.0
  %3099 = vmatpush1.msra.mxu0 0.0
  %3100 = vmatprep.subr.mxu0 0.0
  %3101 = vmatpush1.msra.mxu0 0.0
  %3102 = vmatprep.subr.mxu0 0.0
  %3103 = vmatpush1.msra.mxu0 0.0
  %3104 = vmatprep.subr.mxu0 0.0
  %3105 = vmatpush1.msra.mxu0 0.0
  %3106 = vmatprep.subr.mxu0 0.0
  %3107 = vmatpush1.msra.mxu0 0.0
  %3108 = vmatprep.subr.mxu0 0.0
  %3109 = vmatpush1.msra.mxu0 0.0
  %3110 = vmatprep.subr.mxu0 0.0
  %3111 = vmatpush1.msra.mxu0 0.0
  %3112 = vmatprep.subr.mxu0 0.0
  %3113 = vmatpush1.msra.mxu0 0.0
  %3114 = vmatprep.subr.mxu0 0.0
  %3115 = vmatpush1.msra.mxu0 0.0
  %3116 = vmatprep.subr.mxu0 0.0
  %3117 = vmatpush1.msra.mxu0 0.0
  %3118 = vmatprep.subr.mxu0 0.0
  %3119 = vmatpush1.msra.mxu0 0.0
  %3120 = vmatprep.subr.mxu0 0.0
  %3121 = vmatpush1.msra.mxu0 0.0
  %3122 = vmatprep.subr.mxu0 0.0
  %3123 = vmatpush1.msra.mxu0 0.0
  %3124 = vmatprep.subr.mxu0 0.0
  %3125 = vmatpush1.msra.mxu0 0.0
  %3126 = vmatprep.subr.mxu0 0.0
  %3127 = vmatpush1.msra.mxu0 0.0
  %3128 = vmatprep.subr.mxu0 0.0
  %3129 = vmatpush1.msra.mxu0 0.0
  %3130 = vmatprep.subr.mxu0 0.0
  %3131 = vmatpush1.msra.mxu0 0.0
  %3132 = vmatprep.subr.mxu0 0.0
  %3133 = vmatpush1.msra.mxu0 0.0
  %3134 = vmatprep.subr.mxu0 0.0
  %3135 = vmatpush1.msra.mxu0 0.0
  %3136 = vmatprep.subr.mxu0 0.0
  %3137 = vmatpush1.msra.mxu0 0.0
  %3138 = vmatprep.subr.mxu0 0.0
  %3139 = vmatpush1.msra.mxu0 0.0
  %3140 = vmatprep.subr.mxu0 0.0
  %3141 = vmatpush1.msra.mxu0 0.0
  %3142 = vmatprep.subr.mxu0 0.0
  %3143 = vmatpush1.msra.mxu0 0.0
  %3144 = vmatprep.mubr.f32.mxu0 0.0
  %3145 = vmatmul.mubr.f32.gmra.mrb[0].mxu0 %v3063
  %v3146 = vpop.f32.mrb[0].mxu0
  %v3147 = vadd.f32 0.0, %v3146
  %v3148 = vpop.f32.mrb[0].mxu0
  %3149 = vmatprep.mubr.f32.mxu0 0.0
  %3150 = vmatmul.mubr.f32.gmra.mrb[0].mxu0 %v3066
  %v3151 = vpop.f32.mrb[0].mxu0
  %v3152 = vadd.f32 0.0, %v3151
  %v3153 = vpop.f32.mrb[0].mxu0
  %3154 = vmatprep.mubr.f32.mxu0 0.0
  %3155 = vmatmul.mubr.f32.gmra.mrb[0].mxu0 %v3069
  %v3156 = vpop.f32.mrb[0].mxu0
  %v3157 = vadd.f32 0.0, %v3156
  %v3158 = vpop.f32.mrb[0].mxu0
  %3159 = vmatprep.mubr.f32.mxu0 0.0
  %3160 = vmatmul.mubr.f32.gmra.mrb[0].mxu0 %v3072
  %v3161 = vpop.f32.mrb[0].mxu0
  %v3162 = vadd.f32 0.0, %v3161
  %v3163 = vpop.f32.mrb[0].mxu0
  %3164 = vmatprep.mubr.f32.mxu0 0.0
  %3165 = vmatmul.mubr.f32.gmra.mrb[0].mxu0 %v3075
  %v3166 = vpop.f32.mrb[0].mxu0
  %v3167 = vadd.f32 0.0, %v3166
  %v3168 = vpop.f32.mrb[0].mxu0
  %3169 = vmatprep.mubr.f32.mxu0 0.0
  %3170 = vmatmul.mubr.f32.gmra.mrb[0].mxu0 %v3078
  %v3171 = vpop.f32.mrb[0].mxu0
  %v3172 = vadd.f32 0.0, %v3171
  %v3173 = vpop.f32.mrb[0].mxu0
  %3174 = vdwg.mxu0
  %v3175 = vadd.f32 %v2948, %v3147
  %v3176 = vadd.f32 %v2949, %v3152
  %v3177 = vadd.f32 %v2950, %v3157
  %v3178 = vadd.f32 %v2951, %v3162
  %v3179 = vadd.f32 %v2952, %v3167
  %v3180 = vadd.f32 %v2953, %v3172
  %3181 = vmatprep.subr.mxu0 0.0
  %3182 = vmatpush1.msra.mxu0 %v1115
  %3183 = vmatprep.subr.mxu0 0.0
  %3184 = vmatpush1.msra.mxu0 %v1116
  %3185 = vmatprep.subr.mxu0 0.0
  %3186 = vmatpush1.msra.mxu0 %v1117
  %3187 = vmatprep.subr.mxu0 0.0
  %3188 = vmatpush1.msra.mxu0 %v1120
  %3189 = vmatprep.subr.mxu0 0.0
  %3190 = vmatpush1.msra.mxu0 0.0
  %3191 = vmatprep.subr.mxu0 0.0
  %3192 = vmatpush1.msra.mxu0 0.0
  %3193 = vmatprep.subr.mxu0 0.0
  %3194 = vmatpush1.msra.mxu0 0.0
  %3195 = vmatprep.subr.mxu0 0.0
  %3196 = vmatpush1.msra.mxu0 0.0
  %3197 = vmatprep.subr.mxu0 0.0
  %3198 = vmatpush1.msra.mxu0 0.0
  %3199 = vmatprep.subr.mxu0 0.0
  %3200 = vmatpush1.msra.mxu0 0.0
  %3201 = vmatprep.subr.mxu0 0.0
  %3202 = vmatpush1.msra.mxu0 0.0
  %3203 = vmatprep.subr.mxu0 0.0
  %3204 = vmatpush1.msra.mxu0 0.0
  %3205 = vmatprep.subr.mxu0 0.0
  %3206 = vmatpush1.msra.mxu0 0.0
  %3207 = vmatprep.subr.mxu0 0.0
  %3208 = vmatpush1.msra.mxu0 0.0
  %3209 = vmatprep.subr.mxu0 0.0
  %3210 = vmatpush1.msra.mxu0 0.0
  %3211 = vmatprep.subr.mxu0 0.0
  %3212 = vmatpush1.msra.mxu0 0.0
  %3213 = vmatprep.subr.mxu0 0.0
  %3214 = vmatpush1.msra.mxu0 0.0
  %3215 = vmatprep.subr.mxu0 0.0
  %3216 = vmatpush1.msra.mxu0 0.0
  %3217 = vmatprep.subr.mxu0 0.0
  %3218 = vmatpush1.msra.mxu0 0.0
  %3219 = vmatprep.subr.mxu0 0.0
  %3220 = vmatpush1.msra.mxu0 0.0
  %3221 = vmatprep.subr.mxu0 0.0
  %3222 = vmatpush1.msra.mxu0 0.0
  %3223 = vmatprep.subr.mxu0 0.0
  %3224 = vmatpush1.msra.mxu0 0.0
  %3225 = vmatprep.subr.mxu0 0.0
  %3226 = vmatpush1.msra.mxu0 0.0
  %3227 = vmatprep.subr.mxu0 0.0
  %3228 = vmatpush1.msra.mxu0 0.0
  %3229 = vmatprep.subr.mxu0 0.0
  %3230 = vmatpush1.msra.mxu0 0.0
  %3231 = vmatprep.subr.mxu0 0.0
  %3232 = vmatpush1.msra.mxu0 0.0
  %3233 = vmatprep.subr.mxu0 0.0
  %3234 = vmatpush1.msra.mxu0 0.0
  %3235 = vmatprep.subr.mxu0 0.0
  %3236 = vmatpush1.msra.mxu0 0.0
  %3237 = vmatprep.subr.mxu0 0.0
  %3238 = vmatpush1.msra.mxu0 0.0
  %3239 = vmatprep.subr.mxu0 0.0
  %3240 = vmatpush1.msra.mxu0 0.0
  %3241 = vmatprep.subr.mxu0 0.0
  %3242 = vmatpush1.msra.mxu0 0.0
  %3243 = vmatprep.subr.mxu0 0.0
  %3244 = vmatpush1.msra.mxu0 0.0
  %3245 = vmatprep.mubr.f32.mxu0 0.0
  %3246 = vmatmul.mubr.f32.gmra.mrb[0].mxu0 %v3063
  %v3247 = vpop.f32.mrb[0].mxu0
  %v3248 = vadd.f32 0.0, %v3247
  %v3249 = vpop.f32.mrb[0].mxu0
  %3250 = vmatprep.mubr.f32.mxu0 0.0
  %3251 = vmatmul.mubr.f32.gmra.mrb[0].mxu0 %v3066
  %v3252 = vpop.f32.mrb[0].mxu0
  %v3253 = vadd.f32 0.0, %v3252
  %v3254 = vpop.f32.mrb[0].mxu0
  %3255 = vmatprep.mubr.f32.mxu0 0.0
  %3256 = vmatmul.mubr.f32.gmra.mrb[0].mxu0 %v3069
  %v3257 = vpop.f32.mrb[0].mxu0
  %v3258 = vadd.f32 0.0, %v3257
  %v3259 = vpop.f32.mrb[0].mxu0
  %3260 = vmatprep.mubr.f32.mxu0 0.0
  %3261 = vmatmul.mubr.f32.gmra.mrb[0].mxu0 %v3072
  %v3262 = vpop.f32.mrb[0].mxu0
  %v3263 = vadd.f32 0.0, %v3262
  %v3264 = vpop.f32.mrb[0].mxu0
  %3265 = vmatprep.mubr.f32.mxu0 0.0
  %3266 = vmatmul.mubr.f32.gmra.mrb[0].mxu0 %v3075
  %v3267 = vpop.f32.mrb[0].mxu0
  %v3268 = vadd.f32 0.0, %v3267
  %v3269 = vpop.f32.mrb[0].mxu0
  %3270 = vmatprep.mubr.f32.mxu0 0.0
  %3271 = vmatmul.mubr.f32.gmra.mrb[0].mxu0 %v3078
  %v3272 = vpop.f32.mrb[0].mxu0
  %v3273 = vadd.f32 0.0, %v3272
  %v3274 = vpop.f32.mrb[0].mxu0
  %3275 = vdwg.mxu0
  %v3276 = vadd.f32 %v3049, %v3248
  %v3277 = vadd.f32 %v3050, %v3253
  %v3278 = vadd.f32 %v3051, %v3258
  %v3279 = vadd.f32 %v3052, %v3263
  %v3280 = vadd.f32 %v3053, %v3268
  %v3281 = vadd.f32 %v3054, %v3273
  %3282 = vmatprep.subr.mxu0 0.0
  %3283 = vmatpush1.msra.mxu0 %v55
  %3284 = vmatprep.subr.mxu0 0.0
  %3285 = vmatpush1.msra.mxu0 %v56
  %3286 = vmatprep.subr.mxu0 0.0
  %3287 = vmatpush1.msra.mxu0 %v57
  %3288 = vmatprep.subr.mxu0 0.0
  %3289 = vmatpush1.msra.mxu0 %v80
  %3290 = vmatprep.subr.mxu0 0.0
  %3291 = vmatpush1.msra.mxu0 0.0
  %3292 = vmatprep.subr.mxu0 0.0
  %3293 = vmatpush1.msra.mxu0 0.0
  %3294 = vmatprep.subr.mxu0 0.0
  %3295 = vmatpush1.msra.mxu0 0.0
  %3296 = vmatprep.subr.mxu0 0.0
  %3297 = vmatpush1.msra.mxu0 0.0
  %3298 = vmatprep.subr.mxu0 0.0
  %3299 = vmatpush1.msra.mxu0 0.0
  %3300 = vmatprep.subr.mxu0 0.0
  %3301 = vmatpush1.msra.mxu0 0.0
  %3302 = vmatprep.subr.mxu0 0.0
  %3303 = vmatpush1.msra.mxu0 0.0
  %3304 = vmatprep.subr.mxu0 0.0
  %3305 = vmatpush1.msra.mxu0 0.0
  %3306 = vmatprep.subr.mxu0 0.0
  %3307 = vmatpush1.msra.mxu0 0.0
  %3308 = vmatprep.subr.mxu0 0.0
  %3309 = vmatpush1.msra.mxu0 0.0
  %3310 = vmatprep.subr.mxu0 0.0
  %3311 = vmatpush1.msra.mxu0 0.0
  %3312 = vmatprep.subr.mxu0 0.0
  %3313 = vmatpush1.msra.mxu0 0.0
  %3314 = vmatprep.subr.mxu0 0.0
  %3315 = vmatpush1.msra.mxu0 0.0
  %3316 = vmatprep.subr.mxu0 0.0
  %3317 = vmatpush1.msra.mxu0 0.0
  %3318 = vmatprep.subr.mxu0 0.0
  %3319 = vmatpush1.msra.mxu0 0.0
  %3320 = vmatprep.subr.mxu0 0.0
  %3321 = vmatpush1.msra.mxu0 0.0
  %3322 = vmatprep.subr.mxu0 0.0
  %3323 = vmatpush1.msra.mxu0 0.0
  %3324 = vmatprep.subr.mxu0 0.0
  %3325 = vmatpush1.msra.mxu0 0.0
  %3326 = vmatprep.subr.mxu0 0.0
  %3327 = vmatpush1.msra.mxu0 0.0
  %3328 = vmatprep.subr.mxu0 0.0
  %3329 = vmatpush1.msra.mxu0 0.0
  %3330 = vmatprep.subr.mxu0 0.0
  %3331 = vmatpush1.msra.mxu0 0.0
  %3332 = vmatprep.subr.mxu0 0.0
  %3333 = vmatpush1.msra.mxu0 0.0
  %3334 = vmatprep.subr.mxu0 0.0
  %3335 = vmatpush1.msra.mxu0 0.0
  %3336 = vmatprep.subr.mxu0 0.0
  %3337 = vmatpush1.msra.mxu0 0.0
  %3338 = vmatprep.subr.mxu0 0.0
  %3339 = vmatpush1.msra.mxu0 0.0
  %3340 = vmatprep.subr.mxu0 0.0
  %3341 = vmatpush1.msra.mxu0 0.0
  %3342 = vmatprep.subr.mxu0 0.0
  %3343 = vmatpush1.msra.mxu0 0.0
  %3344 = vmatprep.subr.mxu0 0.0
  %3345 = vmatpush1.msra.mxu0 0.0
  %3346 = vmatprep.mubr.f32.mxu0 0.0
  %3347 = vmatmul.mubr.f32.gmra.mrb[0].mxu0 %v993
  %v3348 = vpop.f32.mrb[0].mxu0
  %v3349 = vadd.f32 0.0, %v3348
  %v3350 = vpop.f32.mrb[0].mxu0
  %3351 = vmatprep.mubr.f32.mxu0 0.0
  %3352 = vmatmul.mubr.f32.gmra.mrb[0].mxu0 %v996
  %v3353 = vpop.f32.mrb[0].mxu0
  %v3354 = vadd.f32 0.0, %v3353
  %v3355 = vpop.f32.mrb[0].mxu0
  %3356 = vmatprep.mubr.f32.mxu0 0.0
  %3357 = vmatmul.mubr.f32.gmra.mrb[0].mxu0 %v999
  %v3358 = vpop.f32.mrb[0].mxu0
  %v3359 = vadd.f32 0.0, %v3358
  %v3360 = vpop.f32.mrb[0].mxu0
  %3361 = vmatprep.mubr.f32.mxu0 0.0
  %3362 = vmatmul.mubr.f32.gmra.mrb[0].mxu0 %v1002
  %v3363 = vpop.f32.mrb[0].mxu0
  %v3364 = vadd.f32 0.0, %v3363
  %v3365 = vpop.f32.mrb[0].mxu0
  %3366 = vmatprep.mubr.f32.mxu0 0.0
  %3367 = vmatmul.mubr.f32.gmra.mrb[0].mxu0 %v1005
  %v3368 = vpop.f32.mrb[0].mxu0
  %v3369 = vadd.f32 0.0, %v3368
  %v3370 = vpop.f32.mrb[0].mxu0
  %3371 = vmatprep.mubr.f32.mxu0 0.0
  %3372 = vmatmul.mubr.f32.gmra.mrb[0].mxu0 %v1008
  %v3373 = vpop.f32.mrb[0].mxu0
  %v3374 = vadd.f32 0.0, %v3373
  %v3375 = vpop.f32.mrb[0].mxu0
  %3376 = vdwg.mxu0
  %3377 = vmatprep.subr.mxu0 0.0
  %3378 = vmatpush1.msra.mxu0 %v38
  %3379 = vmatprep.subr.mxu0 0.0
  %3380 = vmatpush1.msra.mxu0 %v39
  %3381 = vmatprep.subr.mxu0 0.0
  %3382 = vmatpush1.msra.mxu0 %v40
  %3383 = vmatprep.subr.mxu0 0.0
  %3384 = vmatpush1.msra.mxu0 %v196
  %3385 = vmatprep.subr.mxu0 0.0
  %3386 = vmatpush1.msra.mxu0 0.0
  %3387 = vmatprep.subr.mxu0 0.0
  %3388 = vmatpush1.msra.mxu0 0.0
  %3389 = vmatprep.subr.mxu0 0.0
  %3390 = vmatpush1.msra.mxu0 0.0
  %3391 = vmatprep.subr.mxu0 0.0
  %3392 = vmatpush1.msra.mxu0 0.0
  %3393 = vmatprep.subr.mxu0 0.0
  %3394 = vmatpush1.msra.mxu0 0.0
  %3395 = vmatprep.subr.mxu0 0.0
  %3396 = vmatpush1.msra.mxu0 0.0
  %3397 = vmatprep.subr.mxu0 0.0
  %3398 = vmatpush1.msra.mxu0 0.0
  %3399 = vmatprep.subr.mxu0 0.0
  %3400 = vmatpush1.msra.mxu0 0.0
  %3401 = vmatprep.subr.mxu0 0.0
  %3402 = vmatpush1.msra.mxu0 0.0
  %3403 = vmatprep.subr.mxu0 0.0
  %3404 = vmatpush1.msra.mxu0 0.0
  %3405 = vmatprep.subr.mxu0 0.0
  %3406 = vmatpush1.msra.mxu0 0.0
  %3407 = vmatprep.subr.mxu0 0.0
  %3408 = vmatpush1.msra.mxu0 0.0
  %3409 = vmatprep.subr.mxu0 0.0
  %3410 = vmatpush1.msra.mxu0 0.0
  %3411 = vmatprep.subr.mxu0 0.0
  %3412 = vmatpush1.msra.mxu0 0.0
  %3413 = vmatprep.subr.mxu0 0.0
  %3414 = vmatpush1.msra.mxu0 0.0
  %3415 = vmatprep.subr.mxu0 0.0
  %3416 = vmatpush1.msra.mxu0 0.0
  %3417 = vmatprep.subr.mxu0 0.0
  %3418 = vmatpush1.msra.mxu0 0.0
  %3419 = vmatprep.subr.mxu0 0.0
  %3420 = vmatpush1.msra.mxu0 0.0
  %3421 = vmatprep.subr.mxu0 0.0
  %3422 = vmatpush1.msra.mxu0 0.0
  %3423 = vmatprep.subr.mxu0 0.0
  %3424 = vmatpush1.msra.mxu0 0.0
  %3425 = vmatprep.subr.mxu0 0.0
  %3426 = vmatpush1.msra.mxu0 0.0
  %3427 = vmatprep.subr.mxu0 0.0
  %3428 = vmatpush1.msra.mxu0 0.0
  %3429 = vmatprep.subr.mxu0 0.0
  %3430 = vmatpush1.msra.mxu0 0.0
  %3431 = vmatprep.subr.mxu0 0.0
  %3432 = vmatpush1.msra.mxu0 0.0
  %3433 = vmatprep.subr.mxu0 0.0
  %3434 = vmatpush1.msra.mxu0 0.0
  %3435 = vmatprep.subr.mxu0 0.0
  %3436 = vmatpush1.msra.mxu0 0.0
  %3437 = vmatprep.subr.mxu0 0.0
  %3438 = vmatpush1.msra.mxu0 0.0
  %3439 = vmatprep.subr.mxu0 0.0
  %3440 = vmatpush1.msra.mxu0 0.0
  %3441 = vmatprep.mubr.f32.mxu0 0.0
  %3442 = vmatmul.mubr.f32.gmra.mrb[0].mxu0 %v750
  %v3443 = vpop.f32.mrb[0].mxu0
  %v3444 = vadd.f32 %v3349, %v3443
  %v3445 = vpop.f32.mrb[0].mxu0
  %3446 = vmatprep.mubr.f32.mxu0 0.0
  %3447 = vmatmul.mubr.f32.gmra.mrb[0].mxu0 %v753
  %v3448 = vpop.f32.mrb[0].mxu0
  %v3449 = vadd.f32 %v3354, %v3448
  %v3450 = vpop.f32.mrb[0].mxu0
  %3451 = vmatprep.mubr.f32.mxu0 0.0
  %3452 = vmatmul.mubr.f32.gmra.mrb[0].mxu0 %v756
  %v3453 = vpop.f32.mrb[0].mxu0
  %v3454 = vadd.f32 %v3359, %v3453
  %v3455 = vpop.f32.mrb[0].mxu0
  %3456 = vmatprep.mubr.f32.mxu0 0.0
  %3457 = vmatmul.mubr.f32.gmra.mrb[0].mxu0 %v759
  %v3458 = vpop.f32.mrb[0].mxu0
  %v3459 = vadd.f32 %v3364, %v3458
  %v3460 = vpop.f32.mrb[0].mxu0
  %3461 = vmatprep.mubr.f32.mxu0 0.0
  %3462 = vmatmul.mubr.f32.gmra.mrb[0].mxu0 %v762
  %v3463 = vpop.f32.mrb[0].mxu0
  %v3464 = vadd.f32 %v3369, %v3463
  %v3465 = vpop.f32.mrb[0].mxu0
  %3466 = vmatprep.mubr.f32.mxu0 0.0
  %3467 = vmatmul.mubr.f32.gmra.mrb[0].mxu0 %v765
  %v3468 = vpop.f32.mrb[0].mxu0
  %v3469 = vadd.f32 %v3374, %v3468
  %v3470 = vpop.f32.mrb[0].mxu0
  %3471 = vdwg.mxu0
  %3472 = vmatprep.subr.mxu0 0.0
  %3473 = vmatpush1.msra.mxu0 %v294
  %3474 = vmatprep.subr.mxu0 0.0
  %3475 = vmatpush1.msra.mxu0 %v295
  %3476 = vmatprep.subr.mxu0 0.0
  %3477 = vmatpush1.msra.mxu0 %v296
  %3478 = vmatprep.subr.mxu0 0.0
  %3479 = vmatpush1.msra.mxu0 %v299
  %3480 = vmatprep.subr.mxu0 0.0
  %3481 = vmatpush1.msra.mxu0 0.0
  %3482 = vmatprep.subr.mxu0 0.0
  %3483 = vmatpush1.msra.mxu0 0.0
  %3484 = vmatprep.subr.mxu0 0.0
  %3485 = vmatpush1.msra.mxu0 0.0
  %3486 = vmatprep.subr.mxu0 0.0
  %3487 = vmatpush1.msra.mxu0 0.0
  %3488 = vmatprep.subr.mxu0 0.0
  %3489 = vmatpush1.msra.mxu0 0.0
  %3490 = vmatprep.subr.mxu0 0.0
  %3491 = vmatpush1.msra.mxu0 0.0
  %3492 = vmatprep.subr.mxu0 0.0
  %3493 = vmatpush1.msra.mxu0 0.0
  %3494 = vmatprep.subr.mxu0 0.0
  %3495 = vmatpush1.msra.mxu0 0.0
  %3496 = vmatprep.subr.mxu0 0.0
  %3497 = vmatpush1.msra.mxu0 0.0
  %3498 = vmatprep.subr.mxu0 0.0
  %3499 = vmatpush1.msra.mxu0 0.0
  %3500 = vmatprep.subr.mxu0 0.0
  %3501 = vmatpush1.msra.mxu0 0.0
  %3502 = vmatprep.subr.mxu0 0.0
  %3503 = vmatpush1.msra.mxu0 0.0
  %3504 = vmatprep.subr.mxu0 0.0
  %3505 = vmatpush1.msra.mxu0 0.0
  %3506 = vmatprep.subr.mxu0 0.0
  %3507 = vmatpush1.msra.mxu0 0.0
  %3508 = vmatprep.subr.mxu0 0.0
  %3509 = vmatpush1.msra.mxu0 0.0
  %3510 = vmatprep.subr.mxu0 0.0
  %3511 = vmatpush1.msra.mxu0 0.0
  %3512 = vmatprep.subr.mxu0 0.0
  %3513 = vmatpush1.msra.mxu0 0.0
  %3514 = vmatprep.subr.mxu0 0.0
  %3515 = vmatpush1.msra.mxu0 0.0
  %3516 = vmatprep.subr.mxu0 0.0
  %3517 = vmatpush1.msra.mxu0 0.0
  %3518 = vmatprep.subr.mxu0 0.0
  %3519 = vmatpush1.msra.mxu0 0.0
  %3520 = vmatprep.subr.mxu0 0.0
  %3521 = vmatpush1.msra.mxu0 0.0
  %3522 = vmatprep.subr.mxu0 0.0
  %3523 = vmatpush1.msra.mxu0 0.0
  %3524 = vmatprep.subr.mxu0 0.0
  %3525 = vmatpush1.msra.mxu0 0.0
  %3526 = vmatprep.subr.mxu0 0.0
  %3527 = vmatpush1.msra.mxu0 0.0
  %3528 = vmatprep.subr.mxu0 0.0
  %3529 = vmatpush1.msra.mxu0 0.0
  %3530 = vmatprep.subr.mxu0 0.0
  %3531 = vmatpush1.msra.mxu0 0.0
  %3532 = vmatprep.subr.mxu0 0.0
  %3533 = vmatpush1.msra.mxu0 0.0
  %3534 = vmatprep.subr.mxu0 0.0
  %3535 = vmatpush1.msra.mxu0 0.0
  %3536 = vmatprep.mubr.f32.mxu0 0.0
  %3537 = vmatmul.mubr.f32.gmra.mrb[0].mxu0 %v993
  %v3538 = vpop.f32.mrb[0].mxu0
  %v3539 = vadd.f32 0.0, %v3538
  %v3540 = vpop.f32.mrb[0].mxu0
  %3541 = vmatprep.mubr.f32.mxu0 0.0
  %3542 = vmatmul.mubr.f32.gmra.mrb[0].mxu0 %v996
  %v3543 = vpop.f32.mrb[0].mxu0
  %v3544 = vadd.f32 0.0, %v3543
  %v3545 = vpop.f32.mrb[0].mxu0
  %3546 = vmatprep.mubr.f32.mxu0 0.0
  %3547 = vmatmul.mubr.f32.gmra.mrb[0].mxu0 %v999
  %v3548 = vpop.f32.mrb[0].mxu0
  %v3549 = vadd.f32 0.0, %v3548
  %v3550 = vpop.f32.mrb[0].mxu0
  %3551 = vmatprep.mubr.f32.mxu0 0.0
  %3552 = vmatmul.mubr.f32.gmra.mrb[0].mxu0 %v1002
  %v3553 = vpop.f32.mrb[0].mxu0
  %v3554 = vadd.f32 0.0, %v3553
  %v3555 = vpop.f32.mrb[0].mxu0
  %3556 = vmatprep.mubr.f32.mxu0 0.0
  %3557 = vmatmul.mubr.f32.gmra.mrb[0].mxu0 %v1005
  %v3558 = vpop.f32.mrb[0].mxu0
  %v3559 = vadd.f32 0.0, %v3558
  %v3560 = vpop.f32.mrb[0].mxu0
  %3561 = vmatprep.mubr.f32.mxu0 0.0
  %3562 = vmatmul.mubr.f32.gmra.mrb[0].mxu0 %v1008
  %v3563 = vpop.f32.mrb[0].mxu0
  %v3564 = vadd.f32 0.0, %v3563
  %v3565 = vpop.f32.mrb[0].mxu0
  %3566 = vdwg.mxu0
  %3567 = vmatprep.subr.mxu0 0.0
  %3568 = vmatpush1.msra.mxu0 %v43
  %3569 = vmatprep.subr.mxu0 0.0
  %3570 = vmatpush1.msra.mxu0 %v44
  %3571 = vmatprep.subr.mxu0 0.0
  %3572 = vmatpush1.msra.mxu0 %v45
  %3573 = vmatprep.subr.mxu0 0.0
  %3574 = vmatpush1.msra.mxu0 %v397
  %3575 = vmatprep.subr.mxu0 0.0
  %3576 = vmatpush1.msra.mxu0 0.0
  %3577 = vmatprep.subr.mxu0 0.0
  %3578 = vmatpush1.msra.mxu0 0.0
  %3579 = vmatprep.subr.mxu0 0.0
  %3580 = vmatpush1.msra.mxu0 0.0
  %3581 = vmatprep.subr.mxu0 0.0
  %3582 = vmatpush1.msra.mxu0 0.0
  %3583 = vmatprep.subr.mxu0 0.0
  %3584 = vmatpush1.msra.mxu0 0.0
  %3585 = vmatprep.subr.mxu0 0.0
  %3586 = vmatpush1.msra.mxu0 0.0
  %3587 = vmatprep.subr.mxu0 0.0
  %3588 = vmatpush1.msra.mxu0 0.0
  %3589 = vmatprep.subr.mxu0 0.0
  %3590 = vmatpush1.msra.mxu0 0.0
  %3591 = vmatprep.subr.mxu0 0.0
  %3592 = vmatpush1.msra.mxu0 0.0
  %3593 = vmatprep.subr.mxu0 0.0
  %3594 = vmatpush1.msra.mxu0 0.0
  %3595 = vmatprep.subr.mxu0 0.0
  %3596 = vmatpush1.msra.mxu0 0.0
  %3597 = vmatprep.subr.mxu0 0.0
  %3598 = vmatpush1.msra.mxu0 0.0
  %3599 = vmatprep.subr.mxu0 0.0
  %3600 = vmatpush1.msra.mxu0 0.0
  %3601 = vmatprep.subr.mxu0 0.0
  %3602 = vmatpush1.msra.mxu0 0.0
  %3603 = vmatprep.subr.mxu0 0.0
  %3604 = vmatpush1.msra.mxu0 0.0
  %3605 = vmatprep.subr.mxu0 0.0
  %3606 = vmatpush1.msra.mxu0 0.0
  %3607 = vmatprep.subr.mxu0 0.0
  %3608 = vmatpush1.msra.mxu0 0.0
  %3609 = vmatprep.subr.mxu0 0.0
  %3610 = vmatpush1.msra.mxu0 0.0
  %3611 = vmatprep.subr.mxu0 0.0
  %3612 = vmatpush1.msra.mxu0 0.0
  %3613 = vmatprep.subr.mxu0 0.0
  %3614 = vmatpush1.msra.mxu0 0.0
  %3615 = vmatprep.subr.mxu0 0.0
  %3616 = vmatpush1.msra.mxu0 0.0
  %3617 = vmatprep.subr.mxu0 0.0
  %3618 = vmatpush1.msra.mxu0 0.0
  %3619 = vmatprep.subr.mxu0 0.0
  %3620 = vmatpush1.msra.mxu0 0.0
  %3621 = vmatprep.subr.mxu0 0.0
  %3622 = vmatpush1.msra.mxu0 0.0
  %3623 = vmatprep.subr.mxu0 0.0
  %3624 = vmatpush1.msra.mxu0 0.0
  %3625 = vmatprep.subr.mxu0 0.0
  %3626 = vmatpush1.msra.mxu0 0.0
  %3627 = vmatprep.subr.mxu0 0.0
  %3628 = vmatpush1.msra.mxu0 0.0
  %3629 = vmatprep.subr.mxu0 0.0
  %3630 = vmatpush1.msra.mxu0 0.0
  %3631 = vmatprep.mubr.f32.mxu0 0.0
  %3632 = vmatmul.mubr.f32.gmra.mrb[0].mxu0 %v750
  %v3633 = vpop.f32.mrb[0].mxu0
  %v3634 = vadd.f32 %v3539, %v3633
  %v3635 = vpop.f32.mrb[0].mxu0
  %3636 = vmatprep.mubr.f32.mxu0 0.0
  %3637 = vmatmul.mubr.f32.gmra.mrb[0].mxu0 %v753
  %v3638 = vpop.f32.mrb[0].mxu0
  %v3639 = vadd.f32 %v3544, %v3638
  %v3640 = vpop.f32.mrb[0].mxu0
  %3641 = vmatprep.mubr.f32.mxu0 0.0
  %3642 = vmatmul.mubr.f32.gmra.mrb[0].mxu0 %v756
  %v3643 = vpop.f32.mrb[0].mxu0
  %v3644 = vadd.f32 %v3549, %v3643
  %v3645 = vpop.f32.mrb[0].mxu0
  %3646 = vmatprep.mubr.f32.mxu0 0.0
  %3647 = vmatmul.mubr.f32.gmra.mrb[0].mxu0 %v759
  %v3648 = vpop.f32.mrb[0].mxu0
  %v3649 = vadd.f32 %v3554, %v3648
  %v3650 = vpop.f32.mrb[0].mxu0
  %3651 = vmatprep.mubr.f32.mxu0 0.0
  %3652 = vmatmul.mubr.f32.gmra.mrb[0].mxu0 %v762
  %v3653 = vpop.f32.mrb[0].mxu0
  %v3654 = vadd.f32 %v3559, %v3653
  %v3655 = vpop.f32.mrb[0].mxu0
  %3656 = vmatprep.mubr.f32.mxu0 0.0
  %3657 = vmatmul.mubr.f32.gmra.mrb[0].mxu0 %v765
  %v3658 = vpop.f32.mrb[0].mxu0
  %v3659 = vadd.f32 %v3564, %v3658
  %v3660 = vpop.f32.mrb[0].mxu0
  %3661 = vdwg.mxu0
  %3662 = vmatprep.subr.mxu0 0.0
  %3663 = vmatpush1.msra.mxu0 %v502
  %3664 = vmatprep.subr.mxu0 0.0
  %3665 = vmatpush1.msra.mxu0 %v503
  %3666 = vmatprep.subr.mxu0 0.0
  %3667 = vmatpush1.msra.mxu0 %v504
  %3668 = vmatprep.subr.mxu0 0.0
  %3669 = vmatpush1.msra.mxu0 %v525
  %3670 = vmatprep.subr.mxu0 0.0
  %3671 = vmatpush1.msra.mxu0 0.0
  %3672 = vmatprep.subr.mxu0 0.0
  %3673 = vmatpush1.msra.mxu0 0.0
  %3674 = vmatprep.subr.mxu0 0.0
  %3675 = vmatpush1.msra.mxu0 0.0
  %3676 = vmatprep.subr.mxu0 0.0
  %3677 = vmatpush1.msra.mxu0 0.0
  %3678 = vmatprep.subr.mxu0 0.0
  %3679 = vmatpush1.msra.mxu0 0.0
  %3680 = vmatprep.subr.mxu0 0.0
  %3681 = vmatpush1.msra.mxu0 0.0
  %3682 = vmatprep.subr.mxu0 0.0
  %3683 = vmatpush1.msra.mxu0 0.0
  %3684 = vmatprep.subr.mxu0 0.0
  %3685 = vmatpush1.msra.mxu0 0.0
  %3686 = vmatprep.subr.mxu0 0.0
  %3687 = vmatpush1.msra.mxu0 0.0
  %3688 = vmatprep.subr.mxu0 0.0
  %3689 = vmatpush1.msra.mxu0 0.0
  %3690 = vmatprep.subr.mxu0 0.0
  %3691 = vmatpush1.msra.mxu0 0.0
  %3692 = vmatprep.subr.mxu0 0.0
  %3693 = vmatpush1.msra.mxu0 0.0
  %3694 = vmatprep.subr.mxu0 0.0
  %3695 = vmatpush1.msra.mxu0 0.0
  %3696 = vmatprep.subr.mxu0 0.0
  %3697 = vmatpush1.msra.mxu0 0.0
  %3698 = vmatprep.subr.mxu0 0.0
  %3699 = vmatpush1.msra.mxu0 0.0
  %3700 = vmatprep.subr.mxu0 0.0
  %3701 = vmatpush1.msra.mxu0 0.0
  %3702 = vmatprep.subr.mxu0 0.0
  %3703 = vmatpush1.msra.mxu0 0.0
  %3704 = vmatprep.subr.mxu0 0.0
  %3705 = vmatpush1.msra.mxu0 0.0
  %3706 = vmatprep.subr.mxu0 0.0
  %3707 = vmatpush1.msra.mxu0 0.0
  %3708 = vmatprep.subr.mxu0 0.0
  %3709 = vmatpush1.msra.mxu0 0.0
  %3710 = vmatprep.subr.mxu0 0.0
  %3711 = vmatpush1.msra.mxu0 0.0
  %3712 = vmatprep.subr.mxu0 0.0
  %3713 = vmatpush1.msra.mxu0 0.0
  %3714 = vmatprep.subr.mxu0 0.0
  %3715 = vmatpush1.msra.mxu0 0.0
  %3716 = vmatprep.subr.mxu0 0.0
  %3717 = vmatpush1.msra.mxu0 0.0
  %3718 = vmatprep.subr.mxu0 0.0
  %3719 = vmatpush1.msra.mxu0 0.0
  %3720 = vmatprep.subr.mxu0 0.0
  %3721 = vmatpush1.msra.mxu0 0.0
  %3722 = vmatprep.subr.mxu0 0.0
  %3723 = vmatpush1.msra.mxu0 0.0
  %3724 = vmatprep.subr.mxu0 0.0
  %3725 = vmatpush1.msra.mxu0 0.0
  %3726 = vmatprep.mubr.f32.mxu0 0.0
  %3727 = vmatmul.mubr.f32.gmra.mrb[0].mxu0 %v2015
  %v3728 = vpop.f32.mrb[0].mxu0
  %v3729 = vadd.f32 0.0, %v3728
  %v3730 = vpop.f32.mrb[0].mxu0
  %3731 = vmatprep.mubr.f32.mxu0 0.0
  %3732 = vmatmul.mubr.f32.gmra.mrb[0].mxu0 %v2018
  %v3733 = vpop.f32.mrb[0].mxu0
  %v3734 = vadd.f32 0.0, %v3733
  %v3735 = vpop.f32.mrb[0].mxu0
  %3736 = vmatprep.mubr.f32.mxu0 0.0
  %3737 = vmatmul.mubr.f32.gmra.mrb[0].mxu0 %v2021
  %v3738 = vpop.f32.mrb[0].mxu0
  %v3739 = vadd.f32 0.0, %v3738
  %v3740 = vpop.f32.mrb[0].mxu0
  %3741 = vmatprep.mubr.f32.mxu0 0.0
  %3742 = vmatmul.mubr.f32.gmra.mrb[0].mxu0 %v2024
  %v3743 = vpop.f32.mrb[0].mxu0
  %v3744 = vadd.f32 0.0, %v3743
  %v3745 = vpop.f32.mrb[0].mxu0
  %3746 = vmatprep.mubr.f32.mxu0 0.0
  %3747 = vmatmul.mubr.f32.gmra.mrb[0].mxu0 %v2027
  %v3748 = vpop.f32.mrb[0].mxu0
  %v3749 = vadd.f32 0.0, %v3748
  %v3750 = vpop.f32.mrb[0].mxu0
  %3751 = vmatprep.mubr.f32.mxu0 0.0
  %3752 = vmatmul.mubr.f32.gmra.mrb[0].mxu0 %v2030
  %v3753 = vpop.f32.mrb[0].mxu0
  %v3754 = vadd.f32 0.0, %v3753
  %v3755 = vpop.f32.mrb[0].mxu0
  %3756 = vdwg.mxu0
  %v3757 = vadd.f32 %v3444, %v3729
  %v3758 = vadd.f32 %v3449, %v3734
  %v3759 = vadd.f32 %v3454, %v3739
  %v3760 = vadd.f32 %v3459, %v3744
  %v3761 = vadd.f32 %v3464, %v3749
  %v3762 = vadd.f32 %v3469, %v3754
  %3763 = vmatprep.subr.mxu0 0.0
  %3764 = vmatpush1.msra.mxu0 %v629
  %3765 = vmatprep.subr.mxu0 0.0
  %3766 = vmatpush1.msra.mxu0 %v630
  %3767 = vmatprep.subr.mxu0 0.0
  %3768 = vmatpush1.msra.mxu0 %v631
  %3769 = vmatprep.subr.mxu0 0.0
  %3770 = vmatpush1.msra.mxu0 %v634
  %3771 = vmatprep.subr.mxu0 0.0
  %3772 = vmatpush1.msra.mxu0 0.0
  %3773 = vmatprep.subr.mxu0 0.0
  %3774 = vmatpush1.msra.mxu0 0.0
  %3775 = vmatprep.subr.mxu0 0.0
  %3776 = vmatpush1.msra.mxu0 0.0
  %3777 = vmatprep.subr.mxu0 0.0
  %3778 = vmatpush1.msra.mxu0 0.0
  %3779 = vmatprep.subr.mxu0 0.0
  %3780 = vmatpush1.msra.mxu0 0.0
  %3781 = vmatprep.subr.mxu0 0.0
  %3782 = vmatpush1.msra.mxu0 0.0
  %3783 = vmatprep.subr.mxu0 0.0
  %3784 = vmatpush1.msra.mxu0 0.0
  %3785 = vmatprep.subr.mxu0 0.0
  %3786 = vmatpush1.msra.mxu0 0.0
  %3787 = vmatprep.subr.mxu0 0.0
  %3788 = vmatpush1.msra.mxu0 0.0
  %3789 = vmatprep.subr.mxu0 0.0
  %3790 = vmatpush1.msra.mxu0 0.0
  %3791 = vmatprep.subr.mxu0 0.0
  %3792 = vmatpush1.msra.mxu0 0.0
  %3793 = vmatprep.subr.mxu0 0.0
  %3794 = vmatpush1.msra.mxu0 0.0
  %3795 = vmatprep.subr.mxu0 0.0
  %3796 = vmatpush1.msra.mxu0 0.0
  %3797 = vmatprep.subr.mxu0 0.0
  %3798 = vmatpush1.msra.mxu0 0.0
  %3799 = vmatprep.subr.mxu0 0.0
  %3800 = vmatpush1.msra.mxu0 0.0
  %3801 = vmatprep.subr.mxu0 0.0
  %3802 = vmatpush1.msra.mxu0 0.0
  %3803 = vmatprep.subr.mxu0 0.0
  %3804 = vmatpush1.msra.mxu0 0.0
  %3805 = vmatprep.subr.mxu0 0.0
  %3806 = vmatpush1.msra.mxu0 0.0
  %3807 = vmatprep.subr.mxu0 0.0
  %3808 = vmatpush1.msra.mxu0 0.0
  %3809 = vmatprep.subr.mxu0 0.0
  %3810 = vmatpush1.msra.mxu0 0.0
  %3811 = vmatprep.subr.mxu0 0.0
  %3812 = vmatpush1.msra.mxu0 0.0
  %3813 = vmatprep.subr.mxu0 0.0
  %3814 = vmatpush1.msra.mxu0 0.0
  %3815 = vmatprep.subr.mxu0 0.0
  %3816 = vmatpush1.msra.mxu0 0.0
  %3817 = vmatprep.subr.mxu0 0.0
  %3818 = vmatpush1.msra.mxu0 0.0
  %3819 = vmatprep.subr.mxu0 0.0
  %3820 = vmatpush1.msra.mxu0 0.0
  %3821 = vmatprep.subr.mxu0 0.0
  %3822 = vmatpush1.msra.mxu0 0.0
  %3823 = vmatprep.subr.mxu0 0.0
  %3824 = vmatpush1.msra.mxu0 0.0
  %3825 = vmatprep.subr.mxu0 0.0
  %3826 = vmatpush1.msra.mxu0 0.0
  %3827 = vmatprep.mubr.f32.mxu0 0.0
  %3828 = vmatmul.mubr.f32.gmra.mrb[0].mxu0 %v2015
  %v3829 = vpop.f32.mrb[0].mxu0
  %v3830 = vadd.f32 0.0, %v3829
  %v3831 = vpop.f32.mrb[0].mxu0
  %3832 = vmatprep.mubr.f32.mxu0 0.0
  %3833 = vmatmul.mubr.f32.gmra.mrb[0].mxu0 %v2018
  %v3834 = vpop.f32.mrb[0].mxu0
  %v3835 = vadd.f32 0.0, %v3834
  %v3836 = vpop.f32.mrb[0].mxu0
  %3837 = vmatprep.mubr.f32.mxu0 0.0
  %3838 = vmatmul.mubr.f32.gmra.mrb[0].mxu0 %v2021
  %v3839 = vpop.f32.mrb[0].mxu0
  %v3840 = vadd.f32 0.0, %v3839
  %v3841 = vpop.f32.mrb[0].mxu0
  %3842 = vmatprep.mubr.f32.mxu0 0.0
  %3843 = vmatmul.mubr.f32.gmra.mrb[0].mxu0 %v2024
  %v3844 = vpop.f32.mrb[0].mxu0
  %v3845 = vadd.f32 0.0, %v3844
  %v3846 = vpop.f32.mrb[0].mxu0
  %3847 = vmatprep.mubr.f32.mxu0 0.0
  %3848 = vmatmul.mubr.f32.gmra.mrb[0].mxu0 %v2027
  %v3849 = vpop.f32.mrb[0].mxu0
  %v3850 = vadd.f32 0.0, %v3849
  %v3851 = vpop.f32.mrb[0].mxu0
  %3852 = vmatprep.mubr.f32.mxu0 0.0
  %3853 = vmatmul.mubr.f32.gmra.mrb[0].mxu0 %v2030
  %v3854 = vpop.f32.mrb[0].mxu0
  %v3855 = vadd.f32 0.0, %v3854
  %v3856 = vpop.f32.mrb[0].mxu0
  %3857 = vdwg.mxu0
  %v3858 = vadd.f32 %v3634, %v3830
  %v3859 = vadd.f32 %v3639, %v3835
  %v3860 = vadd.f32 %v3644, %v3840
  %v3861 = vadd.f32 %v3649, %v3845
  %v3862 = vadd.f32 %v3654, %v3850
  %v3863 = vadd.f32 %v3659, %v3855
  %3864 = vmatprep.subr.mxu0 0.0
  %3865 = vmatpush1.msra.mxu0 %v745
  %3866 = vmatprep.subr.mxu0 0.0
  %3867 = vmatpush1.msra.mxu0 %v746
  %3868 = vmatprep.subr.mxu0 0.0
  %3869 = vmatpush1.msra.mxu0 %v747
  %3870 = vmatprep.subr.mxu0 0.0
  %3871 = vmatpush1.msra.mxu0 %v768
  %3872 = vmatprep.subr.mxu0 0.0
  %3873 = vmatpush1.msra.mxu0 0.0
  %3874 = vmatprep.subr.mxu0 0.0
  %3875 = vmatpush1.msra.mxu0 0.0
  %3876 = vmatprep.subr.mxu0 0.0
  %3877 = vmatpush1.msra.mxu0 0.0
  %3878 = vmatprep.subr.mxu0 0.0
  %3879 = vmatpush1.msra.mxu0 0.0
  %3880 = vmatprep.subr.mxu0 0.0
  %3881 = vmatpush1.msra.mxu0 0.0
  %3882 = vmatprep.subr.mxu0 0.0
  %3883 = vmatpush1.msra.mxu0 0.0
  %3884 = vmatprep.subr.mxu0 0.0
  %3885 = vmatpush1.msra.mxu0 0.0
  %3886 = vmatprep.subr.mxu0 0.0
  %3887 = vmatpush1.msra.mxu0 0.0
  %3888 = vmatprep.subr.mxu0 0.0
  %3889 = vmatpush1.msra.mxu0 0.0
  %3890 = vmatprep.subr.mxu0 0.0
  %3891 = vmatpush1.msra.mxu0 0.0
  %3892 = vmatprep.subr.mxu0 0.0
  %3893 = vmatpush1.msra.mxu0 0.0
  %3894 = vmatprep.subr.mxu0 0.0
  %3895 = vmatpush1.msra.mxu0 0.0
  %3896 = vmatprep.subr.mxu0 0.0
  %3897 = vmatpush1.msra.mxu0 0.0
  %3898 = vmatprep.subr.mxu0 0.0
  %3899 = vmatpush1.msra.mxu0 0.0
  %3900 = vmatprep.subr.mxu0 0.0
  %3901 = vmatpush1.msra.mxu0 0.0
  %3902 = vmatprep.subr.mxu0 0.0
  %3903 = vmatpush1.msra.mxu0 0.0
  %3904 = vmatprep.subr.mxu0 0.0
  %3905 = vmatpush1.msra.mxu0 0.0
  %3906 = vmatprep.subr.mxu0 0.0
  %3907 = vmatpush1.msra.mxu0 0.0
  %3908 = vmatprep.subr.mxu0 0.0
  %3909 = vmatpush1.msra.mxu0 0.0
  %3910 = vmatprep.subr.mxu0 0.0
  %3911 = vmatpush1.msra.mxu0 0.0
  %3912 = vmatprep.subr.mxu0 0.0
  %3913 = vmatpush1.msra.mxu0 0.0
  %3914 = vmatprep.subr.mxu0 0.0
  %3915 = vmatpush1.msra.mxu0 0.0
  %3916 = vmatprep.subr.mxu0 0.0
  %3917 = vmatpush1.msra.mxu0 0.0
  %3918 = vmatprep.subr.mxu0 0.0
  %3919 = vmatpush1.msra.mxu0 0.0
  %3920 = vmatprep.subr.mxu0 0.0
  %3921 = vmatpush1.msra.mxu0 0.0
  %3922 = vmatprep.subr.mxu0 0.0
  %3923 = vmatpush1.msra.mxu0 0.0
  %3924 = vmatprep.subr.mxu0 0.0
  %3925 = vmatpush1.msra.mxu0 0.0
  %3926 = vmatprep.subr.mxu0 0.0
  %3927 = vmatpush1.msra.mxu0 0.0
  %3928 = vmatprep.mubr.f32.mxu0 0.0
  %3929 = vmatmul.mubr.f32.gmra.mrb[0].mxu0 %v3063
  %v3930 = vpop.f32.mrb[0].mxu0
  %v3931 = vadd.f32 0.0, %v3930
  %v3932 = vpop.f32.mrb[0].mxu0
  %3933 = vmatprep.mubr.f32.mxu0 0.0
  %3934 = vmatmul.mubr.f32.gmra.mrb[0].mxu0 %v3066
  %v3935 = vpop.f32.mrb[0].mxu0
  %v3936 = vadd.f32 0.0, %v3935
  %v3937 = vpop.f32.mrb[0].mxu0
  %3938 = vmatprep.mubr.f32.mxu0 0.0
  %3939 = vmatmul.mubr.f32.gmra.mrb[0].mxu0 %v3069
  %v3940 = vpop.f32.mrb[0].mxu0
  %v3941 = vadd.f32 0.0, %v3940
  %v3942 = vpop.f32.mrb[0].mxu0
  %3943 = vmatprep.mubr.f32.mxu0 0.0
  %3944 = vmatmul.mubr.f32.gmra.mrb[0].mxu0 %v3072
  %v3945 = vpop.f32.mrb[0].mxu0
  %v3946 = vadd.f32 0.0, %v3945
  %v3947 = vpop.f32.mrb[0].mxu0
  %3948 = vmatprep.mubr.f32.mxu0 0.0
  %3949 = vmatmul.mubr.f32.gmra.mrb[0].mxu0 %v3075
  %v3950 = vpop.f32.mrb[0].mxu0
  %v3951 = vadd.f32 0.0, %v3950
  %v3952 = vpop.f32.mrb[0].mxu0
  %3953 = vmatprep.mubr.f32.mxu0 0.0
  %3954 = vmatmul.mubr.f32.gmra.mrb[0].mxu0 %v3078
  %v3955 = vpop.f32.mrb[0].mxu0
  %v3956 = vadd.f32 0.0, %v3955
  %v3957 = vpop.f32.mrb[0].mxu0
  %3958 = vdwg.mxu0
  %v3959 = vadd.f32 %v3757, %v3931
  %v3960 = vadd.f32 %v3758, %v3936
  %v3961 = vadd.f32 %v3759, %v3941
  %v3962 = vadd.f32 %v3760, %v3946
  %v3963 = vadd.f32 %v3761, %v3951
  %v3964 = vadd.f32 %v3762, %v3956
  %3965 = vmatprep.subr.mxu0 0.0
  %3966 = vmatpush1.msra.mxu0 %v872
  %3967 = vmatprep.subr.mxu0 0.0
  %3968 = vmatpush1.msra.mxu0 %v873
  %3969 = vmatprep.subr.mxu0 0.0
  %3970 = vmatpush1.msra.mxu0 %v874
  %3971 = vmatprep.subr.mxu0 0.0
  %3972 = vmatpush1.msra.mxu0 %v877
  %3973 = vmatprep.subr.mxu0 0.0
  %3974 = vmatpush1.msra.mxu0 0.0
  %3975 = vmatprep.subr.mxu0 0.0
  %3976 = vmatpush1.msra.mxu0 0.0
  %3977 = vmatprep.subr.mxu0 0.0
  %3978 = vmatpush1.msra.mxu0 0.0
  %3979 = vmatprep.subr.mxu0 0.0
  %3980 = vmatpush1.msra.mxu0 0.0
  %3981 = vmatprep.subr.mxu0 0.0
  %3982 = vmatpush1.msra.mxu0 0.0
  %3983 = vmatprep.subr.mxu0 0.0
  %3984 = vmatpush1.msra.mxu0 0.0
  %3985 = vmatprep.subr.mxu0 0.0
  %3986 = vmatpush1.msra.mxu0 0.0
  %3987 = vmatprep.subr.mxu0 0.0
  %3988 = vmatpush1.msra.mxu0 0.0
  %3989 = vmatprep.subr.mxu0 0.0
  %3990 = vmatpush1.msra.mxu0 0.0
  %3991 = vmatprep.subr.mxu0 0.0
  %3992 = vmatpush1.msra.mxu0 0.0
  %3993 = vmatprep.subr.mxu0 0.0
  %3994 = vmatpush1.msra.mxu0 0.0
  %3995 = vmatprep.subr.mxu0 0.0
  %3996 = vmatpush1.msra.mxu0 0.0
  %3997 = vmatprep.subr.mxu0 0.0
  %3998 = vmatpush1.msra.mxu0 0.0
  %3999 = vmatprep.subr.mxu0 0.0
  %4000 = vmatpush1.msra.mxu0 0.0
  %4001 = vmatprep.subr.mxu0 0.0
  %4002 = vmatpush1.msra.mxu0 0.0
  %4003 = vmatprep.subr.mxu0 0.0
  %4004 = vmatpush1.msra.mxu0 0.0
  %4005 = vmatprep.subr.mxu0 0.0
  %4006 = vmatpush1.msra.mxu0 0.0
  %4007 = vmatprep.subr.mxu0 0.0
  %4008 = vmatpush1.msra.mxu0 0.0
  %4009 = vmatprep.subr.mxu0 0.0
  %4010 = vmatpush1.msra.mxu0 0.0
  %4011 = vmatprep.subr.mxu0 0.0
  %4012 = vmatpush1.msra.mxu0 0.0
  %4013 = vmatprep.subr.mxu0 0.0
  %4014 = vmatpush1.msra.mxu0 0.0
  %4015 = vmatprep.subr.mxu0 0.0
  %4016 = vmatpush1.msra.mxu0 0.0
  %4017 = vmatprep.subr.mxu0 0.0
  %4018 = vmatpush1.msra.mxu0 0.0
  %4019 = vmatprep.subr.mxu0 0.0
  %4020 = vmatpush1.msra.mxu0 0.0
  %4021 = vmatprep.subr.mxu0 0.0
  %4022 = vmatpush1.msra.mxu0 0.0
  %4023 = vmatprep.subr.mxu0 0.0
  %4024 = vmatpush1.msra.mxu0 0.0
  %4025 = vmatprep.subr.mxu0 0.0
  %4026 = vmatpush1.msra.mxu0 0.0
  %4027 = vmatprep.subr.mxu0 0.0
  %4028 = vmatpush1.msra.mxu0 0.0
  %4029 = vmatprep.mubr.f32.mxu0 0.0
  %4030 = vmatmul.mubr.f32.gmra.mrb[0].mxu0 %v3063
  %v4031 = vpop.f32.mrb[0].mxu0
  %v4032 = vadd.f32 0.0, %v4031
  %v4033 = vpop.f32.mrb[0].mxu0
  %4034 = vmatprep.mubr.f32.mxu0 0.0
  %4035 = vmatmul.mubr.f32.gmra.mrb[0].mxu0 %v3066
  %v4036 = vpop.f32.mrb[0].mxu0
  %v4037 = vadd.f32 0.0, %v4036
  %v4038 = vpop.f32.mrb[0].mxu0
  %4039 = vmatprep.mubr.f32.mxu0 0.0
  %4040 = vmatmul.mubr.f32.gmra.mrb[0].mxu0 %v3069
  %v4041 = vpop.f32.mrb[0].mxu0
  %v4042 = vadd.f32 0.0, %v4041
  %v4043 = vpop.f32.mrb[0].mxu0
  %4044 = vmatprep.mubr.f32.mxu0 0.0
  %4045 = vmatmul.mubr.f32.gmra.mrb[0].mxu0 %v3072
  %v4046 = vpop.f32.mrb[0].mxu0
  %v4047 = vadd.f32 0.0, %v4046
  %v4048 = vpop.f32.mrb[0].mxu0
  %4049 = vmatprep.mubr.f32.mxu0 0.0
  %4050 = vmatmul.mubr.f32.gmra.mrb[0].mxu0 %v3075
  %v4051 = vpop.f32.mrb[0].mxu0
  %v4052 = vadd.f32 0.0, %v4051
  %v4053 = vpop.f32.mrb[0].mxu0
  %4054 = vmatprep.mubr.f32.mxu0 0.0
  %4055 = vmatmul.mubr.f32.gmra.mrb[0].mxu0 %v3078
  %v4056 = vpop.f32.mrb[0].mxu0
  %v4057 = vadd.f32 0.0, %v4056
  %v4058 = vpop.f32.mrb[0].mxu0
  %4059 = vdwg.mxu0
  %v4060 = vadd.f32 %v3858, %v4032
  %v4061 = vadd.f32 %v3859, %v4037
  %v4062 = vadd.f32 %v3860, %v4042
  %v4063 = vadd.f32 %v3861, %v4047
  %v4064 = vadd.f32 %v3862, %v4052
  %v4065 = vadd.f32 %v3863, %v4057
  %s4066 = scalar_lea.vmem %s0, 176
  %v4067 = vld [vmem:[%s4066] sm:$0xff]
  %v4068 = vld [vmem:[%s4066 + $0x8] sm:$0xff]
  %v4069 = vld [vmem:[%s4066 + $0x10] sm:$0xff]
  %v4070 = vld [vmem:[%s4066 + $0x18] sm:$0xff]
  %v4071 = vld [vmem:[%s4066 + $0x20] sm:$0xff]
  %v4072 = vld [vmem:[%s4066 + $0x28] sm:$0xff]
  %v4074 = vsel %vm59, %v4067, 0
  %v4077 = vsel %vm59, %v4068, 0
  %v4080 = vsel %vm59, %v4069, 0
  %v4083 = vsel %vm59, %v4070, 0
  %v4086 = vsel %vm59, %v4071, 0
  %v4089 = vsel %vm59, %v4072, 0
  %4091 = vmatprep.subr.mxu0 0.0
  %4092 = vmatpush1.msra.mxu0 %v988
  %4093 = vmatprep.subr.mxu0 0.0
  %4094 = vmatpush1.msra.mxu0 %v989
  %4095 = vmatprep.subr.mxu0 0.0
  %4096 = vmatpush1.msra.mxu0 %v990
  %4097 = vmatprep.subr.mxu0 0.0
  %4098 = vmatpush1.msra.mxu0 %v1011
  %4099 = vmatprep.subr.mxu0 0.0
  %4100 = vmatpush1.msra.mxu0 0.0
  %4101 = vmatprep.subr.mxu0 0.0
  %4102 = vmatpush1.msra.mxu0 0.0
  %4103 = vmatprep.subr.mxu0 0.0
  %4104 = vmatpush1.msra.mxu0 0.0
  %4105 = vmatprep.subr.mxu0 0.0
  %4106 = vmatpush1.msra.mxu0 0.0
  %4107 = vmatprep.subr.mxu0 0.0
  %4108 = vmatpush1.msra.mxu0 0.0
  %4109 = vmatprep.subr.mxu0 0.0
  %4110 = vmatpush1.msra.mxu0 0.0
  %4111 = vmatprep.subr.mxu0 0.0
  %4112 = vmatpush1.msra.mxu0 0.0
  %4113 = vmatprep.subr.mxu0 0.0
  %4114 = vmatpush1.msra.mxu0 0.0
  %4115 = vmatprep.subr.mxu0 0.0
  %4116 = vmatpush1.msra.mxu0 0.0
  %4117 = vmatprep.subr.mxu0 0.0
  %4118 = vmatpush1.msra.mxu0 0.0
  %4119 = vmatprep.subr.mxu0 0.0
  %4120 = vmatpush1.msra.mxu0 0.0
  %4121 = vmatprep.subr.mxu0 0.0
  %4122 = vmatpush1.msra.mxu0 0.0
  %4123 = vmatprep.subr.mxu0 0.0
  %4124 = vmatpush1.msra.mxu0 0.0
  %4125 = vmatprep.subr.mxu0 0.0
  %4126 = vmatpush1.msra.mxu0 0.0
  %4127 = vmatprep.subr.mxu0 0.0
  %4128 = vmatpush1.msra.mxu0 0.0
  %4129 = vmatprep.subr.mxu0 0.0
  %4130 = vmatpush1.msra.mxu0 0.0
  %4131 = vmatprep.subr.mxu0 0.0
  %4132 = vmatpush1.msra.mxu0 0.0
  %4133 = vmatprep.subr.mxu0 0.0
  %4134 = vmatpush1.msra.mxu0 0.0
  %4135 = vmatprep.subr.mxu0 0.0
  %4136 = vmatpush1.msra.mxu0 0.0
  %4137 = vmatprep.subr.mxu0 0.0
  %4138 = vmatpush1.msra.mxu0 0.0
  %4139 = vmatprep.subr.mxu0 0.0
  %4140 = vmatpush1.msra.mxu0 0.0
  %4141 = vmatprep.subr.mxu0 0.0
  %4142 = vmatpush1.msra.mxu0 0.0
  %4143 = vmatprep.subr.mxu0 0.0
  %4144 = vmatpush1.msra.mxu0 0.0
  %4145 = vmatprep.subr.mxu0 0.0
  %4146 = vmatpush1.msra.mxu0 0.0
  %4147 = vmatprep.subr.mxu0 0.0
  %4148 = vmatpush1.msra.mxu0 0.0
  %4149 = vmatprep.subr.mxu0 0.0
  %4150 = vmatpush1.msra.mxu0 0.0
  %4151 = vmatprep.subr.mxu0 0.0
  %4152 = vmatpush1.msra.mxu0 0.0
  %4153 = vmatprep.subr.mxu0 0.0
  %4154 = vmatpush1.msra.mxu0 0.0
  %4155 = vmatprep.mubr.f32.mxu0 0.0
  %4156 = vmatmul.mubr.f32.gmra.mrb[0].mxu0 %v4074
  %v4157 = vpop.f32.mrb[0].mxu0
  %v4158 = vadd.f32 0.0, %v4157
  %v4159 = vpop.f32.mrb[0].mxu0
  %4160 = vmatprep.mubr.f32.mxu0 0.0
  %4161 = vmatmul.mubr.f32.gmra.mrb[0].mxu0 %v4077
  %v4162 = vpop.f32.mrb[0].mxu0
  %v4163 = vadd.f32 0.0, %v4162
  %v4164 = vpop.f32.mrb[0].mxu0
  %4165 = vmatprep.mubr.f32.mxu0 0.0
  %4166 = vmatmul.mubr.f32.gmra.mrb[0].mxu0 %v4080
  %v4167 = vpop.f32.mrb[0].mxu0
  %v4168 = vadd.f32 0.0, %v4167
  %v4169 = vpop.f32.mrb[0].mxu0
  %4170 = vmatprep.mubr.f32.mxu0 0.0
  %4171 = vmatmul.mubr.f32.gmra.mrb[0].mxu0 %v4083
  %v4172 = vpop.f32.mrb[0].mxu0
  %v4173 = vadd.f32 0.0, %v4172
  %v4174 = vpop.f32.mrb[0].mxu0
  %4175 = vmatprep.mubr.f32.mxu0 0.0
  %4176 = vmatmul.mubr.f32.gmra.mrb[0].mxu0 %v4086
  %v4177 = vpop.f32.mrb[0].mxu0
  %v4178 = vadd.f32 0.0, %v4177
  %v4179 = vpop.f32.mrb[0].mxu0
  %4180 = vmatprep.mubr.f32.mxu0 0.0
  %4181 = vmatmul.mubr.f32.gmra.mrb[0].mxu0 %v4089
  %v4182 = vpop.f32.mrb[0].mxu0
  %v4183 = vadd.f32 0.0, %v4182
  %v4184 = vpop.f32.mrb[0].mxu0
  %4185 = vdwg.mxu0
  %v4186 = vadd.f32 %v3959, %v4158
  %v4187 = vadd.f32 %v3960, %v4163
  %v4188 = vadd.f32 %v3961, %v4168
  %v4189 = vadd.f32 %v3962, %v4173
  %v4190 = vadd.f32 %v3963, %v4178
  %v4191 = vadd.f32 %v3964, %v4183
  %4192 = vmatprep.subr.mxu0 0.0
  %4193 = vmatpush1.msra.mxu0 %v1115
  %4194 = vmatprep.subr.mxu0 0.0
  %4195 = vmatpush1.msra.mxu0 %v1116
  %4196 = vmatprep.subr.mxu0 0.0
  %4197 = vmatpush1.msra.mxu0 %v1117
  %4198 = vmatprep.subr.mxu0 0.0
  %4199 = vmatpush1.msra.mxu0 %v1120
  %4200 = vmatprep.subr.mxu0 0.0
  %4201 = vmatpush1.msra.mxu0 0.0
  %4202 = vmatprep.subr.mxu0 0.0
  %4203 = vmatpush1.msra.mxu0 0.0
  %4204 = vmatprep.subr.mxu0 0.0
  %4205 = vmatpush1.msra.mxu0 0.0
  %4206 = vmatprep.subr.mxu0 0.0
  %4207 = vmatpush1.msra.mxu0 0.0
  %4208 = vmatprep.subr.mxu0 0.0
  %4209 = vmatpush1.msra.mxu0 0.0
  %4210 = vmatprep.subr.mxu0 0.0
  %4211 = vmatpush1.msra.mxu0 0.0
  %4212 = vmatprep.subr.mxu0 0.0
  %4213 = vmatpush1.msra.mxu0 0.0
  %4214 = vmatprep.subr.mxu0 0.0
  %4215 = vmatpush1.msra.mxu0 0.0
  %4216 = vmatprep.subr.mxu0 0.0
  %4217 = vmatpush1.msra.mxu0 0.0
  %4218 = vmatprep.subr.mxu0 0.0
  %4219 = vmatpush1.msra.mxu0 0.0
  %4220 = vmatprep.subr.mxu0 0.0
  %4221 = vmatpush1.msra.mxu0 0.0
  %4222 = vmatprep.subr.mxu0 0.0
  %4223 = vmatpush1.msra.mxu0 0.0
  %4224 = vmatprep.subr.mxu0 0.0
  %4225 = vmatpush1.msra.mxu0 0.0
  %4226 = vmatprep.subr.mxu0 0.0
  %4227 = vmatpush1.msra.mxu0 0.0
  %4228 = vmatprep.subr.mxu0 0.0
  %4229 = vmatpush1.msra.mxu0 0.0
  %4230 = vmatprep.subr.mxu0 0.0
  %4231 = vmatpush1.msra.mxu0 0.0
  %4232 = vmatprep.subr.mxu0 0.0
  %4233 = vmatpush1.msra.mxu0 0.0
  %4234 = vmatprep.subr.mxu0 0.0
  %4235 = vmatpush1.msra.mxu0 0.0
  %4236 = vmatprep.subr.mxu0 0.0
  %4237 = vmatpush1.msra.mxu0 0.0
  %4238 = vmatprep.subr.mxu0 0.0
  %4239 = vmatpush1.msra.mxu0 0.0
  %4240 = vmatprep.subr.mxu0 0.0
  %4241 = vmatpush1.msra.mxu0 0.0
  %4242 = vmatprep.subr.mxu0 0.0
  %4243 = vmatpush1.msra.mxu0 0.0
  %4244 = vmatprep.subr.mxu0 0.0
  %4245 = vmatpush1.msra.mxu0 0.0
  %4246 = vmatprep.subr.mxu0 0.0
  %4247 = vmatpush1.msra.mxu0 0.0
  %4248 = vmatprep.subr.mxu0 0.0
  %4249 = vmatpush1.msra.mxu0 0.0
  %4250 = vmatprep.subr.mxu0 0.0
  %4251 = vmatpush1.msra.mxu0 0.0
  %4252 = vmatprep.subr.mxu0 0.0
  %4253 = vmatpush1.msra.mxu0 0.0
  %4254 = vmatprep.subr.mxu0 0.0
  %4255 = vmatpush1.msra.mxu0 0.0
  %4256 = vmatprep.mubr.f32.mxu0 0.0
  %4257 = vmatmul.mubr.f32.gmra.mrb[0].mxu0 %v4074
  %v4258 = vpop.f32.mrb[0].mxu0
  %v4259 = vadd.f32 0.0, %v4258
  %v4260 = vpop.f32.mrb[0].mxu0
  %4261 = vmatprep.mubr.f32.mxu0 0.0
  %4262 = vmatmul.mubr.f32.gmra.mrb[0].mxu0 %v4077
  %v4263 = vpop.f32.mrb[0].mxu0
  %v4264 = vadd.f32 0.0, %v4263
  %v4265 = vpop.f32.mrb[0].mxu0
  %4266 = vmatprep.mubr.f32.mxu0 0.0
  %4267 = vmatmul.mubr.f32.gmra.mrb[0].mxu0 %v4080
  %v4268 = vpop.f32.mrb[0].mxu0
  %v4269 = vadd.f32 0.0, %v4268
  %v4270 = vpop.f32.mrb[0].mxu0
  %4271 = vmatprep.mubr.f32.mxu0 0.0
  %4272 = vmatmul.mubr.f32.gmra.mrb[0].mxu0 %v4083
  %v4273 = vpop.f32.mrb[0].mxu0
  %v4274 = vadd.f32 0.0, %v4273
  %v4275 = vpop.f32.mrb[0].mxu0
  %4276 = vmatprep.mubr.f32.mxu0 0.0
  %4277 = vmatmul.mubr.f32.gmra.mrb[0].mxu0 %v4086
  %v4278 = vpop.f32.mrb[0].mxu0
  %v4279 = vadd.f32 0.0, %v4278
  %v4280 = vpop.f32.mrb[0].mxu0
  %4281 = vmatprep.mubr.f32.mxu0 0.0
  %4282 = vmatmul.mubr.f32.gmra.mrb[0].mxu0 %v4089
  %v4283 = vpop.f32.mrb[0].mxu0
  %v4284 = vadd.f32 0.0, %v4283
  %v4285 = vpop.f32.mrb[0].mxu0
  %4286 = vdwg.mxu0
  %v4287 = vadd.f32 %v4060, %v4259
  %v4288 = vadd.f32 %v4061, %v4264
  %v4289 = vadd.f32 %v4062, %v4269
  %v4290 = vadd.f32 %v4063, %v4274
  %v4291 = vadd.f32 %v4064, %v4279
  %v4292 = vadd.f32 %v4065, %v4284
  %v4293 = vmax.f32 %v3175, %v3276
  %v4294 = vmax.f32 %v3176, %v3277
  %v4295 = vmax.f32 %v3177, %v3278
  %v4296 = vmax.f32 %v3178, %v3279
  %v4297 = vmax.f32 %v3179, %v3280
  %v4298 = vmax.f32 %v3180, %v3281
  %v4299 = vmax.f32 %v4186, %v4287
  %v4300 = vmax.f32 %v4187, %v4288
  %v4301 = vmax.f32 %v4188, %v4289
  %v4302 = vmax.f32 %v4189, %v4290
  %v4303 = vmax.f32 %v4190, %v4291
  %v4304 = vmax.f32 %v4191, %v4292
  %v4305 = vmax.f32 %v4293, %v4299
  %v4306 = vmax.f32 %v4294, %v4300
  %v4307 = vmax.f32 %v4295, %v4301
  %v4308 = vmax.f32 %v4296, %v4302
  %v4309 = vmax.f32 %v4297, %v4303
  %v4310 = vmax.f32 %v4298, %v4304
  %v4311 = vadd.f32 %v4305, %v2257
  %v4312 = vadd.f32 %v4306, %v2257
  %v4313 = vadd.f32 %v4307, %v2257
  %v4314 = vadd.f32 %v4308, %v2257
  %v4315 = vadd.f32 %v4309, %v2257
  %v4316 = vadd.f32 %v4310, %v2257
  %v4317 = vmax.f32 %v4311, 0.0
  %v4318 = vmax.f32 %v4312, 0.0
  %v4319 = vmax.f32 %v4313, 0.0
  %v4320 = vmax.f32 %v4314, 0.0
  %v4321 = vmax.f32 %v4315, 0.0
  %v4322 = vmax.f32 %v4316, 0.0
  %v4323 = vld [vmem:[%s3] sm:$0xff]
  %v4324 = vld [vmem:[%s3 + $0x8] sm:$0xff]
  %v4325 = vld [vmem:[%s3 + $0x10] sm:$0xff]
  %v4326 = vld [vmem:[%s3 + $0x18] sm:$0xff]
  %v4327 = vld [vmem:[%s3 + $0x20] sm:$0xff]
  %v4328 = vld [vmem:[%s3 + $0x28] sm:$0xff]
  %v4329 = vld [vmem:[%s3 + $0x30] sm:$0xff]
  %v4330 = vld [vmem:[%s3 + $0x38] sm:$0xff]
  %v4331 = vld [vmem:[%s3 + $0x40] sm:$0xff]
  %v4332 = vld [vmem:[%s3 + $0x48] sm:$0xff]
  %v4333 = vld [vmem:[%s3 + $0x50] sm:$0xff]
  %v4334 = vld [vmem:[%s3 + $0x58] sm:$0xff]
  %v4335 = vld [vmem:[%s3 + $0x60] sm:$0xff]
  %v4336 = vld [vmem:[%s3 + $0x68] sm:$0xff]
  %v4337 = vld [vmem:[%s3 + $0x70] sm:$0xff]
  %s4338 = scalar_lea.vmem %s3, 120
  %v4339 = vld [vmem:[%s4338] sm:$0xff]
  %v4340 = vld [vmem:[%s4338 + $0x8] sm:$0xff]
  %v4341 = vld [vmem:[%s4338 + $0x10] sm:$0xff]
  %v4342 = vld [vmem:[%s4338 + $0x18] sm:$0xff]
  %v4343 = vld [vmem:[%s4338 + $0x20] sm:$0xff]
  %v4344 = vld [vmem:[%s4338 + $0x28] sm:$0xff]
  %v4345 = vld [vmem:[%s4338 + $0x30] sm:$0xff]
  %v4346 = vld [vmem:[%s4338 + $0x38] sm:$0xff]
  %v4347 = vld [vmem:[%s4338 + $0x40] sm:$0xff]
  %v4348 = vld [vmem:[%s4338 + $0x48] sm:$0xff]
  %v4349 = vld [vmem:[%s4338 + $0x50] sm:$0xff]
  %v4350 = vld [vmem:[%s4338 + $0x58] sm:$0xff]
  %v4351 = vld [vmem:[%s4338 + $0x60] sm:$0xff]
  %v4352 = vld [vmem:[%s4338 + $0x68] sm:$0xff]
  %v4353 = vld [vmem:[%s4338 + $0x70] sm:$0xff]
  %s4354 = scalar_lea.vmem %s3, 240
  %v4355 = vld [vmem:[%s4354] sm:$0xff]
  %v4356 = vld [vmem:[%s4354 + $0x8] sm:$0xff]
  %v4357 = vld [vmem:[%s4354 + $0x10] sm:$0xff]
  %v4358 = vld [vmem:[%s4354 + $0x18] sm:$0xff]
  %v4359 = vld [vmem:[%s4354 + $0x20] sm:$0xff]
  %v4360 = vld [vmem:[%s4354 + $0x28] sm:$0xff]
  %v4361 = vld [vmem:[%s4354 + $0x30] sm:$0xff]
  %v4362 = vld [vmem:[%s4354 + $0x38] sm:$0xff]
  %v4363 = vld [vmem:[%s4354 + $0x40] sm:$0xff]
  %v4364 = vld [vmem:[%s4354 + $0x48] sm:$0xff]
  %v4365 = vld [vmem:[%s4354 + $0x50] sm:$0xff]
  %v4366 = vld [vmem:[%s4354 + $0x58] sm:$0xff]
  %v4367 = vld [vmem:[%s4354 + $0x60] sm:$0xff]
  %v4368 = vld [vmem:[%s4354 + $0x68] sm:$0xff]
  %v4369 = vld [vmem:[%s4354 + $0x70] sm:$0xff]
  %vm4370 = vcmask 982016
  %v4372 = vsel %vm4370, %v4317, 0
  %v4375 = vsel %vm4370, %v4318, 0
  %v4378 = vsel %vm4370, %v4319, 0
  %v4381 = vsel %vm4370, %v4320, 0
  %4383 = vmatprep.subr.mxu0 0.0
  %4384 = vmatpush1.msra.mxu0 %v4355
  %4385 = vmatprep.subr.mxu0 0.0
  %4386 = vmatpush1.msra.mxu0 %v4356
  %4387 = vmatprep.subr.mxu0 0.0
  %4388 = vmatpush1.msra.mxu0 %v4357
  %4389 = vmatprep.subr.mxu0 0.0
  %4390 = vmatpush1.msra.mxu0 %v4358
  %4391 = vmatprep.subr.mxu0 0.0
  %4392 = vmatpush1.msra.mxu0 %v4359
  %4393 = vmatprep.subr.mxu0 0.0
  %4394 = vmatpush1.msra.mxu0 %v4360
  %4395 = vmatprep.subr.mxu0 0.0
  %4396 = vmatpush1.msra.mxu0 %v4361
  %4397 = vmatprep.subr.mxu0 0.0
  %4398 = vmatpush1.msra.mxu0 %v4362
  %4399 = vmatprep.subr.mxu0 0.0
  %4400 = vmatpush1.msra.mxu0 %v4363
  %4401 = vmatprep.subr.mxu0 0.0
  %4402 = vmatpush1.msra.mxu0 %v4364
  %4403 = vmatprep.subr.mxu0 0.0
  %4404 = vmatpush1.msra.mxu0 %v4365
  %4405 = vmatprep.subr.mxu0 0.0
  %4406 = vmatpush1.msra.mxu0 %v4366
  %4407 = vmatprep.subr.mxu0 0.0
  %4408 = vmatpush1.msra.mxu0 %v4367
  %4409 = vmatprep.subr.mxu0 0.0
  %4410 = vmatpush1.msra.mxu0 %v4368
  %4411 = vmatprep.subr.mxu0 0.0
  %4412 = vmatpush1.msra.mxu0 %v4369
  %4413 = vmatprep.subr.mxu0 0.0
  %4414 = vmatpush1.msra.mxu0 0.0
  %4415 = vmatprep.subr.mxu0 0.0
  %4416 = vmatpush1.msra.mxu0 0.0
  %4417 = vmatprep.subr.mxu0 0.0
  %4418 = vmatpush1.msra.mxu0 0.0
  %4419 = vmatprep.subr.mxu0 0.0
  %4420 = vmatpush1.msra.mxu0 0.0
  %4421 = vmatprep.subr.mxu0 0.0
  %4422 = vmatpush1.msra.mxu0 0.0
  %4423 = vmatprep.subr.mxu0 0.0
  %4424 = vmatpush1.msra.mxu0 0.0
  %4425 = vmatprep.subr.mxu0 0.0
  %4426 = vmatpush1.msra.mxu0 0.0
  %4427 = vmatprep.subr.mxu0 0.0
  %4428 = vmatpush1.msra.mxu0 0.0
  %4429 = vmatprep.subr.mxu0 0.0
  %4430 = vmatpush1.msra.mxu0 0.0
  %4431 = vmatprep.subr.mxu0 0.0
  %4432 = vmatpush1.msra.mxu0 0.0
  %4433 = vmatprep.subr.mxu0 0.0
  %4434 = vmatpush1.msra.mxu0 0.0
  %4435 = vmatprep.subr.mxu0 0.0
  %4436 = vmatpush1.msra.mxu0 0.0
  %4437 = vmatprep.subr.mxu0 0.0
  %4438 = vmatpush1.msra.mxu0 0.0
  %4439 = vmatprep.subr.mxu0 0.0
  %4440 = vmatpush1.msra.mxu0 0.0
  %4441 = vmatprep.subr.mxu0 0.0
  %4442 = vmatpush1.msra.mxu0 0.0
  %4443 = vmatprep.subr.mxu0 0.0
  %4444 = vmatpush1.msra.mxu0 0.0
  %4445 = vmatprep.subr.mxu0 0.0
  %4446 = vmatpush1.msra.mxu0 0.0
  %4447 = vmatprep.mubr.f32.mxu0 0.0
  %4448 = vmatmul.mubr.f32.gmra.mrb[0].mxu0 %v4372
  %v4449 = vpop.f32.mrb[0].mxu0
  %v4450 = vadd.f32 0.0, %v4449
  %v4451 = vpop.f32.mrb[0].mxu0
  %4452 = vmatprep.mubr.f32.mxu0 0.0
  %4453 = vmatmul.mubr.f32.gmra.mrb[0].mxu0 %v4375
  %v4454 = vpop.f32.mrb[0].mxu0
  %v4455 = vadd.f32 0.0, %v4454
  %v4456 = vpop.f32.mrb[0].mxu0
  %4457 = vmatprep.mubr.f32.mxu0 0.0
  %4458 = vmatmul.mubr.f32.gmra.mrb[0].mxu0 %v4378
  %v4459 = vpop.f32.mrb[0].mxu0
  %v4460 = vadd.f32 0.0, %v4459
  %v4461 = vpop.f32.mrb[0].mxu0
  %4462 = vmatprep.mubr.f32.mxu0 0.0
  %4463 = vmatmul.mubr.f32.gmra.mrb[0].mxu0 %v4381
  %v4464 = vpop.f32.mrb[0].mxu0
  %v4465 = vadd.f32 0.0, %v4464
  %v4466 = vpop.f32.mrb[0].mxu0
  %4467 = vdwg.mxu0
  %v4469 = vsel %vm4370, %v2265, 0
  %v4472 = vsel %vm4370, %v2266, 0
  %v4475 = vsel %vm4370, %v2267, 0
  %v4478 = vsel %vm4370, %v2268, 0
  %4480 = vmatprep.subr.mxu0 0.0
  %4481 = vmatpush1.msra.mxu0 %v4323
  %4482 = vmatprep.subr.mxu0 0.0
  %4483 = vmatpush1.msra.mxu0 %v4324
  %4484 = vmatprep.subr.mxu0 0.0
  %4485 = vmatpush1.msra.mxu0 %v4325
  %4486 = vmatprep.subr.mxu0 0.0
  %4487 = vmatpush1.msra.mxu0 %v4326
  %4488 = vmatprep.subr.mxu0 0.0
  %4489 = vmatpush1.msra.mxu0 %v4327
  %4490 = vmatprep.subr.mxu0 0.0
  %4491 = vmatpush1.msra.mxu0 %v4328
  %4492 = vmatprep.subr.mxu0 0.0
  %4493 = vmatpush1.msra.mxu0 %v4329
  %4494 = vmatprep.subr.mxu0 0.0
  %4495 = vmatpush1.msra.mxu0 %v4330
  %4496 = vmatprep.subr.mxu0 0.0
  %4497 = vmatpush1.msra.mxu0 %v4331
  %4498 = vmatprep.subr.mxu0 0.0
  %4499 = vmatpush1.msra.mxu0 %v4332
  %4500 = vmatprep.subr.mxu0 0.0
  %4501 = vmatpush1.msra.mxu0 %v4333
  %4502 = vmatprep.subr.mxu0 0.0
  %4503 = vmatpush1.msra.mxu0 %v4334
  %4504 = vmatprep.subr.mxu0 0.0
  %4505 = vmatpush1.msra.mxu0 %v4335
  %4506 = vmatprep.subr.mxu0 0.0
  %4507 = vmatpush1.msra.mxu0 %v4336
  %4508 = vmatprep.subr.mxu0 0.0
  %4509 = vmatpush1.msra.mxu0 %v4337
  %4510 = vmatprep.subr.mxu0 0.0
  %4511 = vmatpush1.msra.mxu0 0.0
  %4512 = vmatprep.subr.mxu0 0.0
  %4513 = vmatpush1.msra.mxu0 0.0
  %4514 = vmatprep.subr.mxu0 0.0
  %4515 = vmatpush1.msra.mxu0 0.0
  %4516 = vmatprep.subr.mxu0 0.0
  %4517 = vmatpush1.msra.mxu0 0.0
  %4518 = vmatprep.subr.mxu0 0.0
  %4519 = vmatpush1.msra.mxu0 0.0
  %4520 = vmatprep.subr.mxu0 0.0
  %4521 = vmatpush1.msra.mxu0 0.0
  %4522 = vmatprep.subr.mxu0 0.0
  %4523 = vmatpush1.msra.mxu0 0.0
  %4524 = vmatprep.subr.mxu0 0.0
  %4525 = vmatpush1.msra.mxu0 0.0
  %4526 = vmatprep.subr.mxu0 0.0
  %4527 = vmatpush1.msra.mxu0 0.0
  %4528 = vmatprep.subr.mxu0 0.0
  %4529 = vmatpush1.msra.mxu0 0.0
  %4530 = vmatprep.subr.mxu0 0.0
  %4531 = vmatpush1.msra.mxu0 0.0
  %4532 = vmatprep.subr.mxu0 0.0
  %4533 = vmatpush1.msra.mxu0 0.0
  %4534 = vmatprep.subr.mxu0 0.0
  %4535 = vmatpush1.msra.mxu0 0.0
  %4536 = vmatprep.subr.mxu0 0.0
  %4537 = vmatpush1.msra.mxu0 0.0
  %4538 = vmatprep.subr.mxu0 0.0
  %4539 = vmatpush1.msra.mxu0 0.0
  %4540 = vmatprep.subr.mxu0 0.0
  %4541 = vmatpush1.msra.mxu0 0.0
  %4542 = vmatprep.subr.mxu0 0.0
  %4543 = vmatpush1.msra.mxu0 0.0
  %4544 = vmatprep.mubr.f32.mxu0 0.0
  %4545 = vmatmul.mubr.f32.gmra.mrb[0].mxu0 %v4469
  %v4546 = vpop.f32.mrb[0].mxu0
  %v4547 = vadd.f32 %v4450, %v4546
  %v4548 = vpop.f32.mrb[0].mxu0
  %4549 = vmatprep.mubr.f32.mxu0 0.0
  %4550 = vmatmul.mubr.f32.gmra.mrb[0].mxu0 %v4472
  %v4551 = vpop.f32.mrb[0].mxu0
  %v4552 = vadd.f32 %v4455, %v4551
  %v4553 = vpop.f32.mrb[0].mxu0
  %4554 = vmatprep.mubr.f32.mxu0 0.0
  %4555 = vmatmul.mubr.f32.gmra.mrb[0].mxu0 %v4475
  %v4556 = vpop.f32.mrb[0].mxu0
  %v4557 = vadd.f32 %v4460, %v4556
  %v4558 = vpop.f32.mrb[0].mxu0
  %4559 = vmatprep.mubr.f32.mxu0 0.0
  %4560 = vmatmul.mubr.f32.gmra.mrb[0].mxu0 %v4478
  %v4561 = vpop.f32.mrb[0].mxu0
  %v4562 = vadd.f32 %v4465, %v4561
  %v4563 = vpop.f32.mrb[0].mxu0
  %4564 = vdwg.mxu0
  %s4565 = scalar_lea.vmem %s3, 360
  %v4566 = vld [vmem:[%s4565] sm:$0xff]
  %v4567 = vld [vmem:[%s4565 + $0x8] sm:$0xff]
  %v4568 = vld [vmem:[%s4565 + $0x10] sm:$0xff]
  %v4569 = vld [vmem:[%s4565 + $0x18] sm:$0xff]
  %v4570 = vld [vmem:[%s4565 + $0x20] sm:$0xff]
  %v4571 = vld [vmem:[%s4565 + $0x28] sm:$0xff]
  %v4572 = vld [vmem:[%s4565 + $0x30] sm:$0xff]
  %v4573 = vld [vmem:[%s4565 + $0x38] sm:$0xff]
  %v4574 = vld [vmem:[%s4565 + $0x40] sm:$0xff]
  %v4575 = vld [vmem:[%s4565 + $0x48] sm:$0xff]
  %v4576 = vld [vmem:[%s4565 + $0x50] sm:$0xff]
  %v4577 = vld [vmem:[%s4565 + $0x58] sm:$0xff]
  %v4578 = vld [vmem:[%s4565 + $0x60] sm:$0xff]
  %v4579 = vld [vmem:[%s4565 + $0x68] sm:$0xff]
  %v4580 = vld [vmem:[%s4565 + $0x70] sm:$0xff]
  %4581 = vmatprep.subr.mxu0 0.0
  %4582 = vmatpush1.msra.mxu0 %v4566
  %4583 = vmatprep.subr.mxu0 0.0
  %4584 = vmatpush1.msra.mxu0 %v4567
  %4585 = vmatprep.subr.mxu0 0.0
  %4586 = vmatpush1.msra.mxu0 %v4568
  %4587 = vmatprep.subr.mxu0 0.0
  %4588 = vmatpush1.msra.mxu0 %v4569
  %4589 = vmatprep.subr.mxu0 0.0
  %4590 = vmatpush1.msra.mxu0 %v4570
  %4591 = vmatprep.subr.mxu0 0.0
  %4592 = vmatpush1.msra.mxu0 %v4571
  %4593 = vmatprep.subr.mxu0 0.0
  %4594 = vmatpush1.msra.mxu0 %v4572
  %4595 = vmatprep.subr.mxu0 0.0
  %4596 = vmatpush1.msra.mxu0 %v4573
  %4597 = vmatprep.subr.mxu0 0.0
  %4598 = vmatpush1.msra.mxu0 %v4574
  %4599 = vmatprep.subr.mxu0 0.0
  %4600 = vmatpush1.msra.mxu0 %v4575
  %4601 = vmatprep.subr.mxu0 0.0
  %4602 = vmatpush1.msra.mxu0 %v4576
  %4603 = vmatprep.subr.mxu0 0.0
  %4604 = vmatpush1.msra.mxu0 %v4577
  %4605 = vmatprep.subr.mxu0 0.0
  %4606 = vmatpush1.msra.mxu0 %v4578
  %4607 = vmatprep.subr.mxu0 0.0
  %4608 = vmatpush1.msra.mxu0 %v4579
  %4609 = vmatprep.subr.mxu0 0.0
  %4610 = vmatpush1.msra.mxu0 %v4580
  %4611 = vmatprep.subr.mxu0 0.0
  %4612 = vmatpush1.msra.mxu0 0.0
  %4613 = vmatprep.subr.mxu0 0.0
  %4614 = vmatpush1.msra.mxu0 0.0
  %4615 = vmatprep.subr.mxu0 0.0
  %4616 = vmatpush1.msra.mxu0 0.0
  %4617 = vmatprep.subr.mxu0 0.0
  %4618 = vmatpush1.msra.mxu0 0.0
  %4619 = vmatprep.subr.mxu0 0.0
  %4620 = vmatpush1.msra.mxu0 0.0
  %4621 = vmatprep.subr.mxu0 0.0
  %4622 = vmatpush1.msra.mxu0 0.0
  %4623 = vmatprep.subr.mxu0 0.0
  %4624 = vmatpush1.msra.mxu0 0.0
  %4625 = vmatprep.subr.mxu0 0.0
  %4626 = vmatpush1.msra.mxu0 0.0
  %4627 = vmatprep.subr.mxu0 0.0
  %4628 = vmatpush1.msra.mxu0 0.0
  %4629 = vmatprep.subr.mxu0 0.0
  %4630 = vmatpush1.msra.mxu0 0.0
  %4631 = vmatprep.subr.mxu0 0.0
  %4632 = vmatpush1.msra.mxu0 0.0
  %4633 = vmatprep.subr.mxu0 0.0
  %4634 = vmatpush1.msra.mxu0 0.0
  %4635 = vmatprep.subr.mxu0 0.0
  %4636 = vmatpush1.msra.mxu0 0.0
  %4637 = vmatprep.subr.mxu0 0.0
  %4638 = vmatpush1.msra.mxu0 0.0
  %4639 = vmatprep.subr.mxu0 0.0
  %4640 = vmatpush1.msra.mxu0 0.0
  %4641 = vmatprep.subr.mxu0 0.0
  %4642 = vmatpush1.msra.mxu0 0.0
  %4643 = vmatprep.subr.mxu0 0.0
  %4644 = vmatpush1.msra.mxu0 0.0
  %4645 = vmatprep.mubr.f32.mxu0 0.0
  %4646 = vmatmul.mubr.f32.gmra.mrb[0].mxu0 %v4372
  %v4647 = vpop.f32.mrb[0].mxu0
  %v4648 = vadd.f32 0.0, %v4647
  %v4649 = vpop.f32.mrb[0].mxu0
  %4650 = vmatprep.mubr.f32.mxu0 0.0
  %4651 = vmatmul.mubr.f32.gmra.mrb[0].mxu0 %v4375
  %v4652 = vpop.f32.mrb[0].mxu0
  %v4653 = vadd.f32 0.0, %v4652
  %v4654 = vpop.f32.mrb[0].mxu0
  %4655 = vmatprep.mubr.f32.mxu0 0.0
  %4656 = vmatmul.mubr.f32.gmra.mrb[0].mxu0 %v4378
  %v4657 = vpop.f32.mrb[0].mxu0
  %v4658 = vadd.f32 0.0, %v4657
  %v4659 = vpop.f32.mrb[0].mxu0
  %4660 = vmatprep.mubr.f32.mxu0 0.0
  %4661 = vmatmul.mubr.f32.gmra.mrb[0].mxu0 %v4381
  %v4662 = vpop.f32.mrb[0].mxu0
  %v4663 = vadd.f32 0.0, %v4662
  %v4664 = vpop.f32.mrb[0].mxu0
  %4665 = vdwg.mxu0
  %4666 = vmatprep.subr.mxu0 0.0
  %4667 = vmatpush1.msra.mxu0 %v4339
  %4668 = vmatprep.subr.mxu0 0.0
  %4669 = vmatpush1.msra.mxu0 %v4340
  %4670 = vmatprep.subr.mxu0 0.0
  %4671 = vmatpush1.msra.mxu0 %v4341
  %4672 = vmatprep.subr.mxu0 0.0
  %4673 = vmatpush1.msra.mxu0 %v4342
  %4674 = vmatprep.subr.mxu0 0.0
  %4675 = vmatpush1.msra.mxu0 %v4343
  %4676 = vmatprep.subr.mxu0 0.0
  %4677 = vmatpush1.msra.mxu0 %v4344
  %4678 = vmatprep.subr.mxu0 0.0
  %4679 = vmatpush1.msra.mxu0 %v4345
  %4680 = vmatprep.subr.mxu0 0.0
  %4681 = vmatpush1.msra.mxu0 %v4346
  %4682 = vmatprep.subr.mxu0 0.0
  %4683 = vmatpush1.msra.mxu0 %v4347
  %4684 = vmatprep.subr.mxu0 0.0
  %4685 = vmatpush1.msra.mxu0 %v4348
  %4686 = vmatprep.subr.mxu0 0.0
  %4687 = vmatpush1.msra.mxu0 %v4349
  %4688 = vmatprep.subr.mxu0 0.0
  %4689 = vmatpush1.msra.mxu0 %v4350
  %4690 = vmatprep.subr.mxu0 0.0
  %4691 = vmatpush1.msra.mxu0 %v4351
  %4692 = vmatprep.subr.mxu0 0.0
  %4693 = vmatpush1.msra.mxu0 %v4352
  %4694 = vmatprep.subr.mxu0 0.0
  %4695 = vmatpush1.msra.mxu0 %v4353
  %4696 = vmatprep.subr.mxu0 0.0
  %4697 = vmatpush1.msra.mxu0 0.0
  %4698 = vmatprep.subr.mxu0 0.0
  %4699 = vmatpush1.msra.mxu0 0.0
  %4700 = vmatprep.subr.mxu0 0.0
  %4701 = vmatpush1.msra.mxu0 0.0
  %4702 = vmatprep.subr.mxu0 0.0
  %4703 = vmatpush1.msra.mxu0 0.0
  %4704 = vmatprep.subr.mxu0 0.0
  %4705 = vmatpush1.msra.mxu0 0.0
  %4706 = vmatprep.subr.mxu0 0.0
  %4707 = vmatpush1.msra.mxu0 0.0
  %4708 = vmatprep.subr.mxu0 0.0
  %4709 = vmatpush1.msra.mxu0 0.0
  %4710 = vmatprep.subr.mxu0 0.0
  %4711 = vmatpush1.msra.mxu0 0.0
  %4712 = vmatprep.subr.mxu0 0.0
  %4713 = vmatpush1.msra.mxu0 0.0
  %4714 = vmatprep.subr.mxu0 0.0
  %4715 = vmatpush1.msra.mxu0 0.0
  %4716 = vmatprep.subr.mxu0 0.0
  %4717 = vmatpush1.msra.mxu0 0.0
  %4718 = vmatprep.subr.mxu0 0.0
  %4719 = vmatpush1.msra.mxu0 0.0
  %4720 = vmatprep.subr.mxu0 0.0
  %4721 = vmatpush1.msra.mxu0 0.0
  %4722 = vmatprep.subr.mxu0 0.0
  %4723 = vmatpush1.msra.mxu0 0.0
  %4724 = vmatprep.subr.mxu0 0.0
  %4725 = vmatpush1.msra.mxu0 0.0
  %4726 = vmatprep.subr.mxu0 0.0
  %4727 = vmatpush1.msra.mxu0 0.0
  %4728 = vmatprep.subr.mxu0 0.0
  %4729 = vmatpush1.msra.mxu0 0.0
  %4730 = vmatprep.mubr.f32.mxu0 0.0
  %4731 = vmatmul.mubr.f32.gmra.mrb[0].mxu0 %v4469
  %v4732 = vpop.f32.mrb[0].mxu0
  %v4733 = vadd.f32 %v4648, %v4732
  %v4734 = vpop.f32.mrb[0].mxu0
  %4735 = vmatprep.mubr.f32.mxu0 0.0
  %4736 = vmatmul.mubr.f32.gmra.mrb[0].mxu0 %v4472
  %v4737 = vpop.f32.mrb[0].mxu0
  %v4738 = vadd.f32 %v4653, %v4737
  %v4739 = vpop.f32.mrb[0].mxu0
  %4740 = vmatprep.mubr.f32.mxu0 0.0
  %4741 = vmatmul.mubr.f32.gmra.mrb[0].mxu0 %v4475
  %v4742 = vpop.f32.mrb[0].mxu0
  %v4743 = vadd.f32 %v4658, %v4742
  %v4744 = vpop.f32.mrb[0].mxu0
  %4745 = vmatprep.mubr.f32.mxu0 0.0
  %4746 = vmatmul.mubr.f32.gmra.mrb[0].mxu0 %v4478
  %v4747 = vpop.f32.mrb[0].mxu0
  %v4748 = vadd.f32 %v4663, %v4747
  %v4749 = vpop.f32.mrb[0].mxu0
  %4750 = vdwg.mxu0
  %s4751 = scalar_lea.vmem %s3, 480
  %v4752 = vld [vmem:[%s4751] sm:$0xff]
  %v4753 = vld [vmem:[%s4751 + $0x8] sm:$0xff]
  %v4754 = vld [vmem:[%s4751 + $0x10] sm:$0xff]
  %v4755 = vld [vmem:[%s4751 + $0x18] sm:$0xff]
  %v4756 = vld [vmem:[%s4751 + $0x20] sm:$0xff]
  %v4757 = vld [vmem:[%s4751 + $0x28] sm:$0xff]
  %v4758 = vld [vmem:[%s4751 + $0x30] sm:$0xff]
  %v4759 = vld [vmem:[%s4751 + $0x38] sm:$0xff]
  %v4760 = vld [vmem:[%s4751 + $0x40] sm:$0xff]
  %v4761 = vld [vmem:[%s4751 + $0x48] sm:$0xff]
  %v4762 = vld [vmem:[%s4751 + $0x50] sm:$0xff]
  %v4763 = vld [vmem:[%s4751 + $0x58] sm:$0xff]
  %v4764 = vld [vmem:[%s4751 + $0x60] sm:$0xff]
  %v4765 = vld [vmem:[%s4751 + $0x68] sm:$0xff]
  %v4766 = vld [vmem:[%s4751 + $0x70] sm:$0xff]
  %v4768 = vsel %vm4370, %v2269, 0
  %4770 = vmatprep.subr.mxu0 0.0
  %4771 = vmatpush1.msra.mxu0 %v4752
  %4772 = vmatprep.subr.mxu0 0.0
  %4773 = vmatpush1.msra.mxu0 %v4753
  %4774 = vmatprep.subr.mxu0 0.0
  %4775 = vmatpush1.msra.mxu0 %v4754
  %4776 = vmatprep.subr.mxu0 0.0
  %4777 = vmatpush1.msra.mxu0 %v4755
  %4778 = vmatprep.subr.mxu0 0.0
  %4779 = vmatpush1.msra.mxu0 %v4756
  %4780 = vmatprep.subr.mxu0 0.0
  %4781 = vmatpush1.msra.mxu0 %v4757
  %4782 = vmatprep.subr.mxu0 0.0
  %4783 = vmatpush1.msra.mxu0 %v4758
  %4784 = vmatprep.subr.mxu0 0.0
  %4785 = vmatpush1.msra.mxu0 %v4759
  %4786 = vmatprep.subr.mxu0 0.0
  %4787 = vmatpush1.msra.mxu0 %v4760
  %4788 = vmatprep.subr.mxu0 0.0
  %4789 = vmatpush1.msra.mxu0 %v4761
  %4790 = vmatprep.subr.mxu0 0.0
  %4791 = vmatpush1.msra.mxu0 %v4762
  %4792 = vmatprep.subr.mxu0 0.0
  %4793 = vmatpush1.msra.mxu0 %v4763
  %4794 = vmatprep.subr.mxu0 0.0
  %4795 = vmatpush1.msra.mxu0 %v4764
  %4796 = vmatprep.subr.mxu0 0.0
  %4797 = vmatpush1.msra.mxu0 %v4765
  %4798 = vmatprep.subr.mxu0 0.0
  %4799 = vmatpush1.msra.mxu0 %v4766
  %4800 = vmatprep.subr.mxu0 0.0
  %4801 = vmatpush1.msra.mxu0 0.0
  %4802 = vmatprep.subr.mxu0 0.0
  %4803 = vmatpush1.msra.mxu0 0.0
  %4804 = vmatprep.subr.mxu0 0.0
  %4805 = vmatpush1.msra.mxu0 0.0
  %4806 = vmatprep.subr.mxu0 0.0
  %4807 = vmatpush1.msra.mxu0 0.0
  %4808 = vmatprep.subr.mxu0 0.0
  %4809 = vmatpush1.msra.mxu0 0.0
  %4810 = vmatprep.subr.mxu0 0.0
  %4811 = vmatpush1.msra.mxu0 0.0
  %4812 = vmatprep.subr.mxu0 0.0
  %4813 = vmatpush1.msra.mxu0 0.0
  %4814 = vmatprep.subr.mxu0 0.0
  %4815 = vmatpush1.msra.mxu0 0.0
  %4816 = vmatprep.subr.mxu0 0.0
  %4817 = vmatpush1.msra.mxu0 0.0
  %4818 = vmatprep.subr.mxu0 0.0
  %4819 = vmatpush1.msra.mxu0 0.0
  %4820 = vmatprep.subr.mxu0 0.0
  %4821 = vmatpush1.msra.mxu0 0.0
  %4822 = vmatprep.subr.mxu0 0.0
  %4823 = vmatpush1.msra.mxu0 0.0
  %4824 = vmatprep.subr.mxu0 0.0
  %4825 = vmatpush1.msra.mxu0 0.0
  %4826 = vmatprep.subr.mxu0 0.0
  %4827 = vmatpush1.msra.mxu0 0.0
  %4828 = vmatprep.subr.mxu0 0.0
  %4829 = vmatpush1.msra.mxu0 0.0
  %4830 = vmatprep.subr.mxu0 0.0
  %4831 = vmatpush1.msra.mxu0 0.0
  %4832 = vmatprep.subr.mxu0 0.0
  %4833 = vmatpush1.msra.mxu0 0.0
  %4834 = vmatprep.mubr.f32.mxu0 0.0
  %4835 = vmatmul.mubr.f32.gmra.mrb[0].mxu0 %v4472
  %v4836 = vpop.f32.mrb[0].mxu0
  %v4837 = vadd.f32 0.0, %v4836
  %v4838 = vpop.f32.mrb[0].mxu0
  %4839 = vmatprep.mubr.f32.mxu0 0.0
  %4840 = vmatmul.mubr.f32.gmra.mrb[0].mxu0 %v4475
  %v4841 = vpop.f32.mrb[0].mxu0
  %v4842 = vadd.f32 0.0, %v4841
  %v4843 = vpop.f32.mrb[0].mxu0
  %4844 = vmatprep.mubr.f32.mxu0 0.0
  %4845 = vmatmul.mubr.f32.gmra.mrb[0].mxu0 %v4478
  %v4846 = vpop.f32.mrb[0].mxu0
  %v4847 = vadd.f32 0.0, %v4846
  %v4848 = vpop.f32.mrb[0].mxu0
  %4849 = vmatprep.mubr.f32.mxu0 0.0
  %4850 = vmatmul.mubr.f32.gmra.mrb[0].mxu0 %v4768
  %v4851 = vpop.f32.mrb[0].mxu0
  %v4852 = vadd.f32 0.0, %v4851
  %v4853 = vpop.f32.mrb[0].mxu0
  %4854 = vdwg.mxu0
  %v4855 = vadd.f32 %v4547, %v4837
  %v4856 = vadd.f32 %v4552, %v4842
  %v4857 = vadd.f32 %v4557, %v4847
  %v4858 = vadd.f32 %v4562, %v4852
  %s4859 = scalar_lea.vmem %s3, 600
  %v4860 = vld [vmem:[%s4859] sm:$0xff]
  %v4861 = vld [vmem:[%s4859 + $0x8] sm:$0xff]
  %v4862 = vld [vmem:[%s4859 + $0x10] sm:$0xff]
  %v4863 = vld [vmem:[%s4859 + $0x18] sm:$0xff]
  %v4864 = vld [vmem:[%s4859 + $0x20] sm:$0xff]
  %v4865 = vld [vmem:[%s4859 + $0x28] sm:$0xff]
  %v4866 = vld [vmem:[%s4859 + $0x30] sm:$0xff]
  %v4867 = vld [vmem:[%s4859 + $0x38] sm:$0xff]
  %v4868 = vld [vmem:[%s4859 + $0x40] sm:$0xff]
  %v4869 = vld [vmem:[%s4859 + $0x48] sm:$0xff]
  %v4870 = vld [vmem:[%s4859 + $0x50] sm:$0xff]
  %v4871 = vld [vmem:[%s4859 + $0x58] sm:$0xff]
  %v4872 = vld [vmem:[%s4859 + $0x60] sm:$0xff]
  %v4873 = vld [vmem:[%s4859 + $0x68] sm:$0xff]
  %v4874 = vld [vmem:[%s4859 + $0x70] sm:$0xff]
  %4875 = vmatprep.subr.mxu0 0.0
  %4876 = vmatpush1.msra.mxu0 %v4860
  %4877 = vmatprep.subr.mxu0 0.0
  %4878 = vmatpush1.msra.mxu0 %v4861
  %4879 = vmatprep.subr.mxu0 0.0
  %4880 = vmatpush1.msra.mxu0 %v4862
  %4881 = vmatprep.subr.mxu0 0.0
  %4882 = vmatpush1.msra.mxu0 %v4863
  %4883 = vmatprep.subr.mxu0 0.0
  %4884 = vmatpush1.msra.mxu0 %v4864
  %4885 = vmatprep.subr.mxu0 0.0
  %4886 = vmatpush1.msra.mxu0 %v4865
  %4887 = vmatprep.subr.mxu0 0.0
  %4888 = vmatpush1.msra.mxu0 %v4866
  %4889 = vmatprep.subr.mxu0 0.0
  %4890 = vmatpush1.msra.mxu0 %v4867
  %4891 = vmatprep.subr.mxu0 0.0
  %4892 = vmatpush1.msra.mxu0 %v4868
  %4893 = vmatprep.subr.mxu0 0.0
  %4894 = vmatpush1.msra.mxu0 %v4869
  %4895 = vmatprep.subr.mxu0 0.0
  %4896 = vmatpush1.msra.mxu0 %v4870
  %4897 = vmatprep.subr.mxu0 0.0
  %4898 = vmatpush1.msra.mxu0 %v4871
  %4899 = vmatprep.subr.mxu0 0.0
  %4900 = vmatpush1.msra.mxu0 %v4872
  %4901 = vmatprep.subr.mxu0 0.0
  %4902 = vmatpush1.msra.mxu0 %v4873
  %4903 = vmatprep.subr.mxu0 0.0
  %4904 = vmatpush1.msra.mxu0 %v4874
  %4905 = vmatprep.subr.mxu0 0.0
  %4906 = vmatpush1.msra.mxu0 0.0
  %4907 = vmatprep.subr.mxu0 0.0
  %4908 = vmatpush1.msra.mxu0 0.0
  %4909 = vmatprep.subr.mxu0 0.0
  %4910 = vmatpush1.msra.mxu0 0.0
  %4911 = vmatprep.subr.mxu0 0.0
  %4912 = vmatpush1.msra.mxu0 0.0
  %4913 = vmatprep.subr.mxu0 0.0
  %4914 = vmatpush1.msra.mxu0 0.0
  %4915 = vmatprep.subr.mxu0 0.0
  %4916 = vmatpush1.msra.mxu0 0.0
  %4917 = vmatprep.subr.mxu0 0.0
  %4918 = vmatpush1.msra.mxu0 0.0
  %4919 = vmatprep.subr.mxu0 0.0
  %4920 = vmatpush1.msra.mxu0 0.0
  %4921 = vmatprep.subr.mxu0 0.0
  %4922 = vmatpush1.msra.mxu0 0.0
  %4923 = vmatprep.subr.mxu0 0.0
  %4924 = vmatpush1.msra.mxu0 0.0
  %4925 = vmatprep.subr.mxu0 0.0
  %4926 = vmatpush1.msra.mxu0 0.0
  %4927 = vmatprep.subr.mxu0 0.0
  %4928 = vmatpush1.msra.mxu0 0.0
  %4929 = vmatprep.subr.mxu0 0.0
  %4930 = vmatpush1.msra.mxu0 0.0
  %4931 = vmatprep.subr.mxu0 0.0
  %4932 = vmatpush1.msra.mxu0 0.0
  %4933 = vmatprep.subr.mxu0 0.0
  %4934 = vmatpush1.msra.mxu0 0.0
  %4935 = vmatprep.subr.mxu0 0.0
  %4936 = vmatpush1.msra.mxu0 0.0
  %4937 = vmatprep.subr.mxu0 0.0
  %4938 = vmatpush1.msra.mxu0 0.0
  %4939 = vmatprep.mubr.f32.mxu0 0.0
  %4940 = vmatmul.mubr.f32.gmra.mrb[0].mxu0 %v4472
  %v4941 = vpop.f32.mrb[0].mxu0
  %v4942 = vadd.f32 0.0, %v4941
  %v4943 = vpop.f32.mrb[0].mxu0
  %4944 = vmatprep.mubr.f32.mxu0 0.0
  %4945 = vmatmul.mubr.f32.gmra.mrb[0].mxu0 %v4475
  %v4946 = vpop.f32.mrb[0].mxu0
  %v4947 = vadd.f32 0.0, %v4946
  %v4948 = vpop.f32.mrb[0].mxu0
  %4949 = vmatprep.mubr.f32.mxu0 0.0
  %4950 = vmatmul.mubr.f32.gmra.mrb[0].mxu0 %v4478
  %v4951 = vpop.f32.mrb[0].mxu0
  %v4952 = vadd.f32 0.0, %v4951
  %v4953 = vpop.f32.mrb[0].mxu0
  %4954 = vmatprep.mubr.f32.mxu0 0.0
  %4955 = vmatmul.mubr.f32.gmra.mrb[0].mxu0 %v4768
  %v4956 = vpop.f32.mrb[0].mxu0
  %v4957 = vadd.f32 0.0, %v4956
  %v4958 = vpop.f32.mrb[0].mxu0
  %4959 = vdwg.mxu0
  %v4960 = vadd.f32 %v4733, %v4942
  %v4961 = vadd.f32 %v4738, %v4947
  %v4962 = vadd.f32 %v4743, %v4952
  %v4963 = vadd.f32 %v4748, %v4957
  %s4964 = scalar_lea.vmem %s3, 720
  %v4965 = vld [vmem:[%s4964] sm:$0xff]
  %v4966 = vld [vmem:[%s4964 + $0x8] sm:$0xff]
  %v4967 = vld [vmem:[%s4964 + $0x10] sm:$0xff]
  %v4968 = vld [vmem:[%s4964 + $0x18] sm:$0xff]
  %v4969 = vld [vmem:[%s4964 + $0x20] sm:$0xff]
  %v4970 = vld [vmem:[%s4964 + $0x28] sm:$0xff]
  %v4971 = vld [vmem:[%s4964 + $0x30] sm:$0xff]
  %v4972 = vld [vmem:[%s4964 + $0x38] sm:$0xff]
  %v4973 = vld [vmem:[%s4964 + $0x40] sm:$0xff]
  %v4974 = vld [vmem:[%s4964 + $0x48] sm:$0xff]
  %v4975 = vld [vmem:[%s4964 + $0x50] sm:$0xff]
  %v4976 = vld [vmem:[%s4964 + $0x58] sm:$0xff]
  %v4977 = vld [vmem:[%s4964 + $0x60] sm:$0xff]
  %v4978 = vld [vmem:[%s4964 + $0x68] sm:$0xff]
  %v4979 = vld [vmem:[%s4964 + $0x70] sm:$0xff]
  %v4981 = vsel %vm4370, %v4321, 0
  %4983 = vmatprep.subr.mxu0 0.0
  %4984 = vmatpush1.msra.mxu0 %v4965
  %4985 = vmatprep.subr.mxu0 0.0
  %4986 = vmatpush1.msra.mxu0 %v4966
  %4987 = vmatprep.subr.mxu0 0.0
  %4988 = vmatpush1.msra.mxu0 %v4967
  %4989 = vmatprep.subr.mxu0 0.0
  %4990 = vmatpush1.msra.mxu0 %v4968
  %4991 = vmatprep.subr.mxu0 0.0
  %4992 = vmatpush1.msra.mxu0 %v4969
  %4993 = vmatprep.subr.mxu0 0.0
  %4994 = vmatpush1.msra.mxu0 %v4970
  %4995 = vmatprep.subr.mxu0 0.0
  %4996 = vmatpush1.msra.mxu0 %v4971
  %4997 = vmatprep.subr.mxu0 0.0
  %4998 = vmatpush1.msra.mxu0 %v4972
  %4999 = vmatprep.subr.mxu0 0.0
  %5000 = vmatpush1.msra.mxu0 %v4973
  %5001 = vmatprep.subr.mxu0 0.0
  %5002 = vmatpush1.msra.mxu0 %v4974
  %5003 = vmatprep.subr.mxu0 0.0
  %5004 = vmatpush1.msra.mxu0 %v4975
  %5005 = vmatprep.subr.mxu0 0.0
  %5006 = vmatpush1.msra.mxu0 %v4976
  %5007 = vmatprep.subr.mxu0 0.0
  %5008 = vmatpush1.msra.mxu0 %v4977
  %5009 = vmatprep.subr.mxu0 0.0
  %5010 = vmatpush1.msra.mxu0 %v4978
  %5011 = vmatprep.subr.mxu0 0.0
  %5012 = vmatpush1.msra.mxu0 %v4979
  %5013 = vmatprep.subr.mxu0 0.0
  %5014 = vmatpush1.msra.mxu0 0.0
  %5015 = vmatprep.subr.mxu0 0.0
  %5016 = vmatpush1.msra.mxu0 0.0
  %5017 = vmatprep.subr.mxu0 0.0
  %5018 = vmatpush1.msra.mxu0 0.0
  %5019 = vmatprep.subr.mxu0 0.0
  %5020 = vmatpush1.msra.mxu0 0.0
  %5021 = vmatprep.subr.mxu0 0.0
  %5022 = vmatpush1.msra.mxu0 0.0
  %5023 = vmatprep.subr.mxu0 0.0
  %5024 = vmatpush1.msra.mxu0 0.0
  %5025 = vmatprep.subr.mxu0 0.0
  %5026 = vmatpush1.msra.mxu0 0.0
  %5027 = vmatprep.subr.mxu0 0.0
  %5028 = vmatpush1.msra.mxu0 0.0
  %5029 = vmatprep.subr.mxu0 0.0
  %5030 = vmatpush1.msra.mxu0 0.0
  %5031 = vmatprep.subr.mxu0 0.0
  %5032 = vmatpush1.msra.mxu0 0.0
  %5033 = vmatprep.subr.mxu0 0.0
  %5034 = vmatpush1.msra.mxu0 0.0
  %5035 = vmatprep.subr.mxu0 0.0
  %5036 = vmatpush1.msra.mxu0 0.0
  %5037 = vmatprep.subr.mxu0 0.0
  %5038 = vmatpush1.msra.mxu0 0.0
  %5039 = vmatprep.subr.mxu0 0.0
  %5040 = vmatpush1.msra.mxu0 0.0
  %5041 = vmatprep.subr.mxu0 0.0
  %5042 = vmatpush1.msra.mxu0 0.0
  %5043 = vmatprep.subr.mxu0 0.0
  %5044 = vmatpush1.msra.mxu0 0.0
  %5045 = vmatprep.subr.mxu0 0.0
  %5046 = vmatpush1.msra.mxu0 0.0
  %5047 = vmatprep.mubr.f32.mxu0 0.0
  %5048 = vmatmul.mubr.f32.gmra.mrb[0].mxu0 %v4375
  %v5049 = vpop.f32.mrb[0].mxu0
  %v5050 = vadd.f32 0.0, %v5049
  %v5051 = vpop.f32.mrb[0].mxu0
  %5052 = vmatprep.mubr.f32.mxu0 0.0
  %5053 = vmatmul.mubr.f32.gmra.mrb[0].mxu0 %v4378
  %v5054 = vpop.f32.mrb[0].mxu0
  %v5055 = vadd.f32 0.0, %v5054
  %v5056 = vpop.f32.mrb[0].mxu0
  %5057 = vmatprep.mubr.f32.mxu0 0.0
  %5058 = vmatmul.mubr.f32.gmra.mrb[0].mxu0 %v4381
  %v5059 = vpop.f32.mrb[0].mxu0
  %v5060 = vadd.f32 0.0, %v5059
  %v5061 = vpop.f32.mrb[0].mxu0
  %5062 = vmatprep.mubr.f32.mxu0 0.0
  %5063 = vmatmul.mubr.f32.gmra.mrb[0].mxu0 %v4981
  %v5064 = vpop.f32.mrb[0].mxu0
  %v5065 = vadd.f32 0.0, %v5064
  %v5066 = vpop.f32.mrb[0].mxu0
  %5067 = vdwg.mxu0
  %v5068 = vadd.f32 %v4855, %v5050
  %v5069 = vadd.f32 %v4856, %v5055
  %v5070 = vadd.f32 %v4857, %v5060
  %v5071 = vadd.f32 %v4858, %v5065
  %s5072 = scalar_lea.vmem %s3, 840
  %v5073 = vld [vmem:[%s5072] sm:$0xff]
  %v5074 = vld [vmem:[%s5072 + $0x8] sm:$0xff]
  %v5075 = vld [vmem:[%s5072 + $0x10] sm:$0xff]
  %v5076 = vld [vmem:[%s5072 + $0x18] sm:$0xff]
  %v5077 = vld [vmem:[%s5072 + $0x20] sm:$0xff]
  %v5078 = vld [vmem:[%s5072 + $0x28] sm:$0xff]
  %v5079 = vld [vmem:[%s5072 + $0x30] sm:$0xff]
  %v5080 = vld [vmem:[%s5072 + $0x38] sm:$0xff]
  %v5081 = vld [vmem:[%s5072 + $0x40] sm:$0xff]
  %v5082 = vld [vmem:[%s5072 + $0x48] sm:$0xff]
  %v5083 = vld [vmem:[%s5072 + $0x50] sm:$0xff]
  %v5084 = vld [vmem:[%s5072 + $0x58] sm:$0xff]
  %v5085 = vld [vmem:[%s5072 + $0x60] sm:$0xff]
  %v5086 = vld [vmem:[%s5072 + $0x68] sm:$0xff]
  %v5087 = vld [vmem:[%s5072 + $0x70] sm:$0xff]
  %5088 = vmatprep.subr.mxu0 0.0
  %5089 = vmatpush1.msra.mxu0 %v5073
  %5090 = vmatprep.subr.mxu0 0.0
  %5091 = vmatpush1.msra.mxu0 %v5074
  %5092 = vmatprep.subr.mxu0 0.0
  %5093 = vmatpush1.msra.mxu0 %v5075
  %5094 = vmatprep.subr.mxu0 0.0
  %5095 = vmatpush1.msra.mxu0 %v5076
  %5096 = vmatprep.subr.mxu0 0.0
  %5097 = vmatpush1.msra.mxu0 %v5077
  %5098 = vmatprep.subr.mxu0 0.0
  %5099 = vmatpush1.msra.mxu0 %v5078
  %5100 = vmatprep.subr.mxu0 0.0
  %5101 = vmatpush1.msra.mxu0 %v5079
  %5102 = vmatprep.subr.mxu0 0.0
  %5103 = vmatpush1.msra.mxu0 %v5080
  %5104 = vmatprep.subr.mxu0 0.0
  %5105 = vmatpush1.msra.mxu0 %v5081
  %5106 = vmatprep.subr.mxu0 0.0
  %5107 = vmatpush1.msra.mxu0 %v5082
  %5108 = vmatprep.subr.mxu0 0.0
  %5109 = vmatpush1.msra.mxu0 %v5083
  %5110 = vmatprep.subr.mxu0 0.0
  %5111 = vmatpush1.msra.mxu0 %v5084
  %5112 = vmatprep.subr.mxu0 0.0
  %5113 = vmatpush1.msra.mxu0 %v5085
  %5114 = vmatprep.subr.mxu0 0.0
  %5115 = vmatpush1.msra.mxu0 %v5086
  %5116 = vmatprep.subr.mxu0 0.0
  %5117 = vmatpush1.msra.mxu0 %v5087
  %5118 = vmatprep.subr.mxu0 0.0
  %5119 = vmatpush1.msra.mxu0 0.0
  %5120 = vmatprep.subr.mxu0 0.0
  %5121 = vmatpush1.msra.mxu0 0.0
  %5122 = vmatprep.subr.mxu0 0.0
  %5123 = vmatpush1.msra.mxu0 0.0
  %5124 = vmatprep.subr.mxu0 0.0
  %5125 = vmatpush1.msra.mxu0 0.0
  %5126 = vmatprep.subr.mxu0 0.0
  %5127 = vmatpush1.msra.mxu0 0.0
  %5128 = vmatprep.subr.mxu0 0.0
  %5129 = vmatpush1.msra.mxu0 0.0
  %5130 = vmatprep.subr.mxu0 0.0
  %5131 = vmatpush1.msra.mxu0 0.0
  %5132 = vmatprep.subr.mxu0 0.0
  %5133 = vmatpush1.msra.mxu0 0.0
  %5134 = vmatprep.subr.mxu0 0.0
  %5135 = vmatpush1.msra.mxu0 0.0
  %5136 = vmatprep.subr.mxu0 0.0
  %5137 = vmatpush1.msra.mxu0 0.0
  %5138 = vmatprep.subr.mxu0 0.0
  %5139 = vmatpush1.msra.mxu0 0.0
  %5140 = vmatprep.subr.mxu0 0.0
  %5141 = vmatpush1.msra.mxu0 0.0
  %5142 = vmatprep.subr.mxu0 0.0
  %5143 = vmatpush1.msra.mxu0 0.0
  %5144 = vmatprep.subr.mxu0 0.0
  %5145 = vmatpush1.msra.mxu0 0.0
  %5146 = vmatprep.subr.mxu0 0.0
  %5147 = vmatpush1.msra.mxu0 0.0
  %5148 = vmatprep.subr.mxu0 0.0
  %5149 = vmatpush1.msra.mxu0 0.0
  %5150 = vmatprep.subr.mxu0 0.0
  %5151 = vmatpush1.msra.mxu0 0.0
  %5152 = vmatprep.mubr.f32.mxu0 0.0
  %5153 = vmatmul.mubr.f32.gmra.mrb[0].mxu0 %v4375
  %v5154 = vpop.f32.mrb[0].mxu0
  %v5155 = vadd.f32 0.0, %v5154
  %v5156 = vpop.f32.mrb[0].mxu0
  %5157 = vmatprep.mubr.f32.mxu0 0.0
  %5158 = vmatmul.mubr.f32.gmra.mrb[0].mxu0 %v4378
  %v5159 = vpop.f32.mrb[0].mxu0
  %v5160 = vadd.f32 0.0, %v5159
  %v5161 = vpop.f32.mrb[0].mxu0
  %5162 = vmatprep.mubr.f32.mxu0 0.0
  %5163 = vmatmul.mubr.f32.gmra.mrb[0].mxu0 %v4381
  %v5164 = vpop.f32.mrb[0].mxu0
  %v5165 = vadd.f32 0.0, %v5164
  %v5166 = vpop.f32.mrb[0].mxu0
  %5167 = vmatprep.mubr.f32.mxu0 0.0
  %5168 = vmatmul.mubr.f32.gmra.mrb[0].mxu0 %v4981
  %v5169 = vpop.f32.mrb[0].mxu0
  %v5170 = vadd.f32 0.0, %v5169
  %v5171 = vpop.f32.mrb[0].mxu0
  %5172 = vdwg.mxu0
  %v5173 = vadd.f32 %v4960, %v5155
  %v5174 = vadd.f32 %v4961, %v5160
  %v5175 = vadd.f32 %v4962, %v5165
  %v5176 = vadd.f32 %v4963, %v5170
  %s5177 = scalar_lea.vmem %s3, 960
  %v5178 = vld [vmem:[%s5177] sm:$0xff]
  %v5179 = vld [vmem:[%s5177 + $0x8] sm:$0xff]
  %v5180 = vld [vmem:[%s5177 + $0x10] sm:$0xff]
  %v5181 = vld [vmem:[%s5177 + $0x18] sm:$0xff]
  %v5182 = vld [vmem:[%s5177 + $0x20] sm:$0xff]
  %v5183 = vld [vmem:[%s5177 + $0x28] sm:$0xff]
  %v5184 = vld [vmem:[%s5177 + $0x30] sm:$0xff]
  %v5185 = vld [vmem:[%s5177 + $0x38] sm:$0xff]
  %v5186 = vld [vmem:[%s5177 + $0x40] sm:$0xff]
  %v5187 = vld [vmem:[%s5177 + $0x48] sm:$0xff]
  %v5188 = vld [vmem:[%s5177 + $0x50] sm:$0xff]
  %v5189 = vld [vmem:[%s5177 + $0x58] sm:$0xff]
  %v5190 = vld [vmem:[%s5177 + $0x60] sm:$0xff]
  %v5191 = vld [vmem:[%s5177 + $0x68] sm:$0xff]
  %v5192 = vld [vmem:[%s5177 + $0x70] sm:$0xff]
  %v5194 = vsel %vm4370, %v2270, 0
  %5196 = vmatprep.subr.mxu0 0.0
  %5197 = vmatpush1.msra.mxu0 %v5178
  %5198 = vmatprep.subr.mxu0 0.0
  %5199 = vmatpush1.msra.mxu0 %v5179
  %5200 = vmatprep.subr.mxu0 0.0
  %5201 = vmatpush1.msra.mxu0 %v5180
  %5202 = vmatprep.subr.mxu0 0.0
  %5203 = vmatpush1.msra.mxu0 %v5181
  %5204 = vmatprep.subr.mxu0 0.0
  %5205 = vmatpush1.msra.mxu0 %v5182
  %5206 = vmatprep.subr.mxu0 0.0
  %5207 = vmatpush1.msra.mxu0 %v5183
  %5208 = vmatprep.subr.mxu0 0.0
  %5209 = vmatpush1.msra.mxu0 %v5184
  %5210 = vmatprep.subr.mxu0 0.0
  %5211 = vmatpush1.msra.mxu0 %v5185
  %5212 = vmatprep.subr.mxu0 0.0
  %5213 = vmatpush1.msra.mxu0 %v5186
  %5214 = vmatprep.subr.mxu0 0.0
  %5215 = vmatpush1.msra.mxu0 %v5187
  %5216 = vmatprep.subr.mxu0 0.0
  %5217 = vmatpush1.msra.mxu0 %v5188
  %5218 = vmatprep.subr.mxu0 0.0
  %5219 = vmatpush1.msra.mxu0 %v5189
  %5220 = vmatprep.subr.mxu0 0.0
  %5221 = vmatpush1.msra.mxu0 %v5190
  %5222 = vmatprep.subr.mxu0 0.0
  %5223 = vmatpush1.msra.mxu0 %v5191
  %5224 = vmatprep.subr.mxu0 0.0
  %5225 = vmatpush1.msra.mxu0 %v5192
  %5226 = vmatprep.subr.mxu0 0.0
  %5227 = vmatpush1.msra.mxu0 0.0
  %5228 = vmatprep.subr.mxu0 0.0
  %5229 = vmatpush1.msra.mxu0 0.0
  %5230 = vmatprep.subr.mxu0 0.0
  %5231 = vmatpush1.msra.mxu0 0.0
  %5232 = vmatprep.subr.mxu0 0.0
  %5233 = vmatpush1.msra.mxu0 0.0
  %5234 = vmatprep.subr.mxu0 0.0
  %5235 = vmatpush1.msra.mxu0 0.0
  %5236 = vmatprep.subr.mxu0 0.0
  %5237 = vmatpush1.msra.mxu0 0.0
  %5238 = vmatprep.subr.mxu0 0.0
  %5239 = vmatpush1.msra.mxu0 0.0
  %5240 = vmatprep.subr.mxu0 0.0
  %5241 = vmatpush1.msra.mxu0 0.0
  %5242 = vmatprep.subr.mxu0 0.0
  %5243 = vmatpush1.msra.mxu0 0.0
  %5244 = vmatprep.subr.mxu0 0.0
  %5245 = vmatpush1.msra.mxu0 0.0
  %5246 = vmatprep.subr.mxu0 0.0
  %5247 = vmatpush1.msra.mxu0 0.0
  %5248 = vmatprep.subr.mxu0 0.0
  %5249 = vmatpush1.msra.mxu0 0.0
  %5250 = vmatprep.subr.mxu0 0.0
  %5251 = vmatpush1.msra.mxu0 0.0
  %5252 = vmatprep.subr.mxu0 0.0
  %5253 = vmatpush1.msra.mxu0 0.0
  %5254 = vmatprep.subr.mxu0 0.0
  %5255 = vmatpush1.msra.mxu0 0.0
  %5256 = vmatprep.subr.mxu0 0.0
  %5257 = vmatpush1.msra.mxu0 0.0
  %5258 = vmatprep.subr.mxu0 0.0
  %5259 = vmatpush1.msra.mxu0 0.0
  %5260 = vmatprep.mubr.f32.mxu0 0.0
  %5261 = vmatmul.mubr.f32.gmra.mrb[0].mxu0 %v4475
  %v5262 = vpop.f32.mrb[0].mxu0
  %v5263 = vadd.f32 0.0, %v5262
  %v5264 = vpop.f32.mrb[0].mxu0
  %5265 = vmatprep.mubr.f32.mxu0 0.0
  %5266 = vmatmul.mubr.f32.gmra.mrb[0].mxu0 %v4478
  %v5267 = vpop.f32.mrb[0].mxu0
  %v5268 = vadd.f32 0.0, %v5267
  %v5269 = vpop.f32.mrb[0].mxu0
  %5270 = vmatprep.mubr.f32.mxu0 0.0
  %5271 = vmatmul.mubr.f32.gmra.mrb[0].mxu0 %v4768
  %v5272 = vpop.f32.mrb[0].mxu0
  %v5273 = vadd.f32 0.0, %v5272
  %v5274 = vpop.f32.mrb[0].mxu0
  %5275 = vmatprep.mubr.f32.mxu0 0.0
  %5276 = vmatmul.mubr.f32.gmra.mrb[0].mxu0 %v5194
  %v5277 = vpop.f32.mrb[0].mxu0
  %v5278 = vadd.f32 0.0, %v5277
  %v5279 = vpop.f32.mrb[0].mxu0
  %5280 = vdwg.mxu0
  %v5281 = vadd.f32 %v5068, %v5263
  %v5282 = vadd.f32 %v5069, %v5268
  %v5283 = vadd.f32 %v5070, %v5273
  %v5284 = vadd.f32 %v5071, %v5278
  %s5285 = scalar_lea.vmem %s3, 1080
  %v5286 = vld [vmem:[%s5285] sm:$0xff]
  %v5287 = vld [vmem:[%s5285 + $0x8] sm:$0xff]
  %v5288 = vld [vmem:[%s5285 + $0x10] sm:$0xff]
  %v5289 = vld [vmem:[%s5285 + $0x18] sm:$0xff]
  %v5290 = vld [vmem:[%s5285 + $0x20] sm:$0xff]
  %v5291 = vld [vmem:[%s5285 + $0x28] sm:$0xff]
  %v5292 = vld [vmem:[%s5285 + $0x30] sm:$0xff]
  %v5293 = vld [vmem:[%s5285 + $0x38] sm:$0xff]
  %v5294 = vld [vmem:[%s5285 + $0x40] sm:$0xff]
  %v5295 = vld [vmem:[%s5285 + $0x48] sm:$0xff]
  %v5296 = vld [vmem:[%s5285 + $0x50] sm:$0xff]
  %v5297 = vld [vmem:[%s5285 + $0x58] sm:$0xff]
  %v5298 = vld [vmem:[%s5285 + $0x60] sm:$0xff]
  %v5299 = vld [vmem:[%s5285 + $0x68] sm:$0xff]
  %v5300 = vld [vmem:[%s5285 + $0x70] sm:$0xff]
  %5301 = vmatprep.subr.mxu0 0.0
  %5302 = vmatpush1.msra.mxu0 %v5286
  %5303 = vmatprep.subr.mxu0 0.0
  %5304 = vmatpush1.msra.mxu0 %v5287
  %5305 = vmatprep.subr.mxu0 0.0
  %5306 = vmatpush1.msra.mxu0 %v5288
  %5307 = vmatprep.subr.mxu0 0.0
  %5308 = vmatpush1.msra.mxu0 %v5289
  %5309 = vmatprep.subr.mxu0 0.0
  %5310 = vmatpush1.msra.mxu0 %v5290
  %5311 = vmatprep.subr.mxu0 0.0
  %5312 = vmatpush1.msra.mxu0 %v5291
  %5313 = vmatprep.subr.mxu0 0.0
  %5314 = vmatpush1.msra.mxu0 %v5292
  %5315 = vmatprep.subr.mxu0 0.0
  %5316 = vmatpush1.msra.mxu0 %v5293
  %5317 = vmatprep.subr.mxu0 0.0
  %5318 = vmatpush1.msra.mxu0 %v5294
  %5319 = vmatprep.subr.mxu0 0.0
  %5320 = vmatpush1.msra.mxu0 %v5295
  %5321 = vmatprep.subr.mxu0 0.0
  %5322 = vmatpush1.msra.mxu0 %v5296
  %5323 = vmatprep.subr.mxu0 0.0
  %5324 = vmatpush1.msra.mxu0 %v5297
  %5325 = vmatprep.subr.mxu0 0.0
  %5326 = vmatpush1.msra.mxu0 %v5298
  %5327 = vmatprep.subr.mxu0 0.0
  %5328 = vmatpush1.msra.mxu0 %v5299
  %5329 = vmatprep.subr.mxu0 0.0
  %5330 = vmatpush1.msra.mxu0 %v5300
  %5331 = vmatprep.subr.mxu0 0.0
  %5332 = vmatpush1.msra.mxu0 0.0
  %5333 = vmatprep.subr.mxu0 0.0
  %5334 = vmatpush1.msra.mxu0 0.0
  %5335 = vmatprep.subr.mxu0 0.0
  %5336 = vmatpush1.msra.mxu0 0.0
  %5337 = vmatprep.subr.mxu0 0.0
  %5338 = vmatpush1.msra.mxu0 0.0
  %5339 = vmatprep.subr.mxu0 0.0
  %5340 = vmatpush1.msra.mxu0 0.0
  %5341 = vmatprep.subr.mxu0 0.0
  %5342 = vmatpush1.msra.mxu0 0.0
  %5343 = vmatprep.subr.mxu0 0.0
  %5344 = vmatpush1.msra.mxu0 0.0
  %5345 = vmatprep.subr.mxu0 0.0
  %5346 = vmatpush1.msra.mxu0 0.0
  %5347 = vmatprep.subr.mxu0 0.0
  %5348 = vmatpush1.msra.mxu0 0.0
  %5349 = vmatprep.subr.mxu0 0.0
  %5350 = vmatpush1.msra.mxu0 0.0
  %5351 = vmatprep.subr.mxu0 0.0
  %5352 = vmatpush1.msra.mxu0 0.0
  %5353 = vmatprep.subr.mxu0 0.0
  %5354 = vmatpush1.msra.mxu0 0.0
  %5355 = vmatprep.subr.mxu0 0.0
  %5356 = vmatpush1.msra.mxu0 0.0
  %5357 = vmatprep.subr.mxu0 0.0
  %5358 = vmatpush1.msra.mxu0 0.0
  %5359 = vmatprep.subr.mxu0 0.0
  %5360 = vmatpush1.msra.mxu0 0.0
  %5361 = vmatprep.subr.mxu0 0.0
  %5362 = vmatpush1.msra.mxu0 0.0
  %5363 = vmatprep.subr.mxu0 0.0
  %5364 = vmatpush1.msra.mxu0 0.0
  %5365 = vmatprep.mubr.f32.mxu0 0.0
  %5366 = vmatmul.mubr.f32.gmra.mrb[0].mxu0 %v4475
  %v5367 = vpop.f32.mrb[0].mxu0
  %v5368 = vadd.f32 0.0, %v5367
  %v5369 = vpop.f32.mrb[0].mxu0
  %5370 = vmatprep.mubr.f32.mxu0 0.0
  %5371 = vmatmul.mubr.f32.gmra.mrb[0].mxu0 %v4478
  %v5372 = vpop.f32.mrb[0].mxu0
  %v5373 = vadd.f32 0.0, %v5372
  %v5374 = vpop.f32.mrb[0].mxu0
  %5375 = vmatprep.mubr.f32.mxu0 0.0
  %5376 = vmatmul.mubr.f32.gmra.mrb[0].mxu0 %v4768
  %v5377 = vpop.f32.mrb[0].mxu0
  %v5378 = vadd.f32 0.0, %v5377
  %v5379 = vpop.f32.mrb[0].mxu0
  %5380 = vmatprep.mubr.f32.mxu0 0.0
  %5381 = vmatmul.mubr.f32.gmra.mrb[0].mxu0 %v5194
  %v5382 = vpop.f32.mrb[0].mxu0
  %v5383 = vadd.f32 0.0, %v5382
  %v5384 = vpop.f32.mrb[0].mxu0
  %5385 = vdwg.mxu0
  %v5386 = vadd.f32 %v5173, %v5368
  %v5387 = vadd.f32 %v5174, %v5373
  %v5388 = vadd.f32 %v5175, %v5378
  %v5389 = vadd.f32 %v5176, %v5383
  %5390 = vmatprep.subr.mxu0 0.0
  %5391 = vmatpush1.msra.mxu0 %v4355
  %5392 = vmatprep.subr.mxu0 0.0
  %5393 = vmatpush1.msra.mxu0 %v4356
  %5394 = vmatprep.subr.mxu0 0.0
  %5395 = vmatpush1.msra.mxu0 %v4357
  %5396 = vmatprep.subr.mxu0 0.0
  %5397 = vmatpush1.msra.mxu0 %v4358
  %5398 = vmatprep.subr.mxu0 0.0
  %5399 = vmatpush1.msra.mxu0 %v4359
  %5400 = vmatprep.subr.mxu0 0.0
  %5401 = vmatpush1.msra.mxu0 %v4360
  %5402 = vmatprep.subr.mxu0 0.0
  %5403 = vmatpush1.msra.mxu0 %v4361
  %5404 = vmatprep.subr.mxu0 0.0
  %5405 = vmatpush1.msra.mxu0 %v4362
  %5406 = vmatprep.subr.mxu0 0.0
  %5407 = vmatpush1.msra.mxu0 %v4363
  %5408 = vmatprep.subr.mxu0 0.0
  %5409 = vmatpush1.msra.mxu0 %v4364
  %5410 = vmatprep.subr.mxu0 0.0
  %5411 = vmatpush1.msra.mxu0 %v4365
  %5412 = vmatprep.subr.mxu0 0.0
  %5413 = vmatpush1.msra.mxu0 %v4366
  %5414 = vmatprep.subr.mxu0 0.0
  %5415 = vmatpush1.msra.mxu0 %v4367
  %5416 = vmatprep.subr.mxu0 0.0
  %5417 = vmatpush1.msra.mxu0 %v4368
  %5418 = vmatprep.subr.mxu0 0.0
  %5419 = vmatpush1.msra.mxu0 %v4369
  %5420 = vmatprep.subr.mxu0 0.0
  %5421 = vmatpush1.msra.mxu0 0.0
  %5422 = vmatprep.subr.mxu0 0.0
  %5423 = vmatpush1.msra.mxu0 0.0
  %5424 = vmatprep.subr.mxu0 0.0
  %5425 = vmatpush1.msra.mxu0 0.0
  %5426 = vmatprep.subr.mxu0 0.0
  %5427 = vmatpush1.msra.mxu0 0.0
  %5428 = vmatprep.subr.mxu0 0.0
  %5429 = vmatpush1.msra.mxu0 0.0
  %5430 = vmatprep.subr.mxu0 0.0
  %5431 = vmatpush1.msra.mxu0 0.0
  %5432 = vmatprep.subr.mxu0 0.0
  %5433 = vmatpush1.msra.mxu0 0.0
  %5434 = vmatprep.subr.mxu0 0.0
  %5435 = vmatpush1.msra.mxu0 0.0
  %5436 = vmatprep.subr.mxu0 0.0
  %5437 = vmatpush1.msra.mxu0 0.0
  %5438 = vmatprep.subr.mxu0 0.0
  %5439 = vmatpush1.msra.mxu0 0.0
  %5440 = vmatprep.subr.mxu0 0.0
  %5441 = vmatpush1.msra.mxu0 0.0
  %5442 = vmatprep.subr.mxu0 0.0
  %5443 = vmatpush1.msra.mxu0 0.0
  %5444 = vmatprep.subr.mxu0 0.0
  %5445 = vmatpush1.msra.mxu0 0.0
  %5446 = vmatprep.subr.mxu0 0.0
  %5447 = vmatpush1.msra.mxu0 0.0
  %5448 = vmatprep.subr.mxu0 0.0
  %5449 = vmatpush1.msra.mxu0 0.0
  %5450 = vmatprep.subr.mxu0 0.0
  %5451 = vmatpush1.msra.mxu0 0.0
  %5452 = vmatprep.subr.mxu0 0.0
  %5453 = vmatpush1.msra.mxu0 0.0
  %5454 = vmatprep.mubr.f32.mxu0 0.0
  %5455 = vmatmul.mubr.f32.gmra.mrb[0].mxu0 %v4472
  %v5456 = vpop.f32.mrb[0].mxu0
  %v5457 = vadd.f32 0.0, %v5456
  %v5458 = vpop.f32.mrb[0].mxu0
  %5459 = vmatprep.mubr.f32.mxu0 0.0
  %5460 = vmatmul.mubr.f32.gmra.mrb[0].mxu0 %v4475
  %v5461 = vpop.f32.mrb[0].mxu0
  %v5462 = vadd.f32 0.0, %v5461
  %v5463 = vpop.f32.mrb[0].mxu0
  %5464 = vmatprep.mubr.f32.mxu0 0.0
  %5465 = vmatmul.mubr.f32.gmra.mrb[0].mxu0 %v4478
  %v5466 = vpop.f32.mrb[0].mxu0
  %v5467 = vadd.f32 0.0, %v5466
  %v5468 = vpop.f32.mrb[0].mxu0
  %5469 = vmatprep.mubr.f32.mxu0 0.0
  %5470 = vmatmul.mubr.f32.gmra.mrb[0].mxu0 %v4768
  %v5471 = vpop.f32.mrb[0].mxu0
  %v5472 = vadd.f32 0.0, %v5471
  %v5473 = vpop.f32.mrb[0].mxu0
  %5474 = vdwg.mxu0
  %5475 = vmatprep.subr.mxu0 0.0
  %5476 = vmatpush1.msra.mxu0 %v4323
  %5477 = vmatprep.subr.mxu0 0.0
  %5478 = vmatpush1.msra.mxu0 %v4324
  %5479 = vmatprep.subr.mxu0 0.0
  %5480 = vmatpush1.msra.mxu0 %v4325
  %5481 = vmatprep.subr.mxu0 0.0
  %5482 = vmatpush1.msra.mxu0 %v4326
  %5483 = vmatprep.subr.mxu0 0.0
  %5484 = vmatpush1.msra.mxu0 %v4327
  %5485 = vmatprep.subr.mxu0 0.0
  %5486 = vmatpush1.msra.mxu0 %v4328
  %5487 = vmatprep.subr.mxu0 0.0
  %5488 = vmatpush1.msra.mxu0 %v4329
  %5489 = vmatprep.subr.mxu0 0.0
  %5490 = vmatpush1.msra.mxu0 %v4330
  %5491 = vmatprep.subr.mxu0 0.0
  %5492 = vmatpush1.msra.mxu0 %v4331
  %5493 = vmatprep.subr.mxu0 0.0
  %5494 = vmatpush1.msra.mxu0 %v4332
  %5495 = vmatprep.subr.mxu0 0.0
  %5496 = vmatpush1.msra.mxu0 %v4333
  %5497 = vmatprep.subr.mxu0 0.0
  %5498 = vmatpush1.msra.mxu0 %v4334
  %5499 = vmatprep.subr.mxu0 0.0
  %5500 = vmatpush1.msra.mxu0 %v4335
  %5501 = vmatprep.subr.mxu0 0.0
  %5502 = vmatpush1.msra.mxu0 %v4336
  %5503 = vmatprep.subr.mxu0 0.0
  %5504 = vmatpush1.msra.mxu0 %v4337
  %5505 = vmatprep.subr.mxu0 0.0
  %5506 = vmatpush1.msra.mxu0 0.0
  %5507 = vmatprep.subr.mxu0 0.0
  %5508 = vmatpush1.msra.mxu0 0.0
  %5509 = vmatprep.subr.mxu0 0.0
  %5510 = vmatpush1.msra.mxu0 0.0
  %5511 = vmatprep.subr.mxu0 0.0
  %5512 = vmatpush1.msra.mxu0 0.0
  %5513 = vmatprep.subr.mxu0 0.0
  %5514 = vmatpush1.msra.mxu0 0.0
  %5515 = vmatprep.subr.mxu0 0.0
  %5516 = vmatpush1.msra.mxu0 0.0
  %5517 = vmatprep.subr.mxu0 0.0
  %5518 = vmatpush1.msra.mxu0 0.0
  %5519 = vmatprep.subr.mxu0 0.0
  %5520 = vmatpush1.msra.mxu0 0.0
  %5521 = vmatprep.subr.mxu0 0.0
  %5522 = vmatpush1.msra.mxu0 0.0
  %5523 = vmatprep.subr.mxu0 0.0
  %5524 = vmatpush1.msra.mxu0 0.0
  %5525 = vmatprep.subr.mxu0 0.0
  %5526 = vmatpush1.msra.mxu0 0.0
  %5527 = vmatprep.subr.mxu0 0.0
  %5528 = vmatpush1.msra.mxu0 0.0
  %5529 = vmatprep.subr.mxu0 0.0
  %5530 = vmatpush1.msra.mxu0 0.0
  %5531 = vmatprep.subr.mxu0 0.0
  %5532 = vmatpush1.msra.mxu0 0.0
  %5533 = vmatprep.subr.mxu0 0.0
  %5534 = vmatpush1.msra.mxu0 0.0
  %5535 = vmatprep.subr.mxu0 0.0
  %5536 = vmatpush1.msra.mxu0 0.0
  %5537 = vmatprep.subr.mxu0 0.0
  %5538 = vmatpush1.msra.mxu0 0.0
  %5539 = vmatprep.mubr.f32.mxu0 0.0
  %5540 = vmatmul.mubr.f32.gmra.mrb[0].mxu0 %v4372
  %v5541 = vpop.f32.mrb[0].mxu0
  %v5542 = vadd.f32 %v5457, %v5541
  %v5543 = vpop.f32.mrb[0].mxu0
  %5544 = vmatprep.mubr.f32.mxu0 0.0
  %5545 = vmatmul.mubr.f32.gmra.mrb[0].mxu0 %v4375
  %v5546 = vpop.f32.mrb[0].mxu0
  %v5547 = vadd.f32 %v5462, %v5546
  %v5548 = vpop.f32.mrb[0].mxu0
  %5549 = vmatprep.mubr.f32.mxu0 0.0
  %5550 = vmatmul.mubr.f32.gmra.mrb[0].mxu0 %v4378
  %v5551 = vpop.f32.mrb[0].mxu0
  %v5552 = vadd.f32 %v5467, %v5551
  %v5553 = vpop.f32.mrb[0].mxu0
  %5554 = vmatprep.mubr.f32.mxu0 0.0
  %5555 = vmatmul.mubr.f32.gmra.mrb[0].mxu0 %v4381
  %v5556 = vpop.f32.mrb[0].mxu0
  %v5557 = vadd.f32 %v5472, %v5556
  %v5558 = vpop.f32.mrb[0].mxu0
  %5559 = vdwg.mxu0
  %5560 = vmatprep.subr.mxu0 0.0
  %5561 = vmatpush1.msra.mxu0 %v4566
  %5562 = vmatprep.subr.mxu0 0.0
  %5563 = vmatpush1.msra.mxu0 %v4567
  %5564 = vmatprep.subr.mxu0 0.0
  %5565 = vmatpush1.msra.mxu0 %v4568
  %5566 = vmatprep.subr.mxu0 0.0
  %5567 = vmatpush1.msra.mxu0 %v4569
  %5568 = vmatprep.subr.mxu0 0.0
  %5569 = vmatpush1.msra.mxu0 %v4570
  %5570 = vmatprep.subr.mxu0 0.0
  %5571 = vmatpush1.msra.mxu0 %v4571
  %5572 = vmatprep.subr.mxu0 0.0
  %5573 = vmatpush1.msra.mxu0 %v4572
  %5574 = vmatprep.subr.mxu0 0.0
  %5575 = vmatpush1.msra.mxu0 %v4573
  %5576 = vmatprep.subr.mxu0 0.0
  %5577 = vmatpush1.msra.mxu0 %v4574
  %5578 = vmatprep.subr.mxu0 0.0
  %5579 = vmatpush1.msra.mxu0 %v4575
  %5580 = vmatprep.subr.mxu0 0.0
  %5581 = vmatpush1.msra.mxu0 %v4576
  %5582 = vmatprep.subr.mxu0 0.0
  %5583 = vmatpush1.msra.mxu0 %v4577
  %5584 = vmatprep.subr.mxu0 0.0
  %5585 = vmatpush1.msra.mxu0 %v4578
  %5586 = vmatprep.subr.mxu0 0.0
  %5587 = vmatpush1.msra.mxu0 %v4579
  %5588 = vmatprep.subr.mxu0 0.0
  %5589 = vmatpush1.msra.mxu0 %v4580
  %5590 = vmatprep.subr.mxu0 0.0
  %5591 = vmatpush1.msra.mxu0 0.0
  %5592 = vmatprep.subr.mxu0 0.0
  %5593 = vmatpush1.msra.mxu0 0.0
  %5594 = vmatprep.subr.mxu0 0.0
  %5595 = vmatpush1.msra.mxu0 0.0
  %5596 = vmatprep.subr.mxu0 0.0
  %5597 = vmatpush1.msra.mxu0 0.0
  %5598 = vmatprep.subr.mxu0 0.0
  %5599 = vmatpush1.msra.mxu0 0.0
  %5600 = vmatprep.subr.mxu0 0.0
  %5601 = vmatpush1.msra.mxu0 0.0
  %5602 = vmatprep.subr.mxu0 0.0
  %5603 = vmatpush1.msra.mxu0 0.0
  %5604 = vmatprep.subr.mxu0 0.0
  %5605 = vmatpush1.msra.mxu0 0.0
  %5606 = vmatprep.subr.mxu0 0.0
  %5607 = vmatpush1.msra.mxu0 0.0
  %5608 = vmatprep.subr.mxu0 0.0
  %5609 = vmatpush1.msra.mxu0 0.0
  %5610 = vmatprep.subr.mxu0 0.0
  %5611 = vmatpush1.msra.mxu0 0.0
  %5612 = vmatprep.subr.mxu0 0.0
  %5613 = vmatpush1.msra.mxu0 0.0
  %5614 = vmatprep.subr.mxu0 0.0
  %5615 = vmatpush1.msra.mxu0 0.0
  %5616 = vmatprep.subr.mxu0 0.0
  %5617 = vmatpush1.msra.mxu0 0.0
  %5618 = vmatprep.subr.mxu0 0.0
  %5619 = vmatpush1.msra.mxu0 0.0
  %5620 = vmatprep.subr.mxu0 0.0
  %5621 = vmatpush1.msra.mxu0 0.0
  %5622 = vmatprep.subr.mxu0 0.0
  %5623 = vmatpush1.msra.mxu0 0.0
  %5624 = vmatprep.mubr.f32.mxu0 0.0
  %5625 = vmatmul.mubr.f32.gmra.mrb[0].mxu0 %v4472
  %v5626 = vpop.f32.mrb[0].mxu0
  %v5627 = vadd.f32 0.0, %v5626
  %v5628 = vpop.f32.mrb[0].mxu0
  %5629 = vmatprep.mubr.f32.mxu0 0.0
  %5630 = vmatmul.mubr.f32.gmra.mrb[0].mxu0 %v4475
  %v5631 = vpop.f32.mrb[0].mxu0
  %v5632 = vadd.f32 0.0, %v5631
  %v5633 = vpop.f32.mrb[0].mxu0
  %5634 = vmatprep.mubr.f32.mxu0 0.0
  %5635 = vmatmul.mubr.f32.gmra.mrb[0].mxu0 %v4478
  %v5636 = vpop.f32.mrb[0].mxu0
  %v5637 = vadd.f32 0.0, %v5636
  %v5638 = vpop.f32.mrb[0].mxu0
  %5639 = vmatprep.mubr.f32.mxu0 0.0
  %5640 = vmatmul.mubr.f32.gmra.mrb[0].mxu0 %v4768
  %v5641 = vpop.f32.mrb[0].mxu0
  %v5642 = vadd.f32 0.0, %v5641
  %v5643 = vpop.f32.mrb[0].mxu0
  %5644 = vdwg.mxu0
  %5645 = vmatprep.subr.mxu0 0.0
  %5646 = vmatpush1.msra.mxu0 %v4339
  %5647 = vmatprep.subr.mxu0 0.0
  %5648 = vmatpush1.msra.mxu0 %v4340
  %5649 = vmatprep.subr.mxu0 0.0
  %5650 = vmatpush1.msra.mxu0 %v4341
  %5651 = vmatprep.subr.mxu0 0.0
  %5652 = vmatpush1.msra.mxu0 %v4342
  %5653 = vmatprep.subr.mxu0 0.0
  %5654 = vmatpush1.msra.mxu0 %v4343
  %5655 = vmatprep.subr.mxu0 0.0
  %5656 = vmatpush1.msra.mxu0 %v4344
  %5657 = vmatprep.subr.mxu0 0.0
  %5658 = vmatpush1.msra.mxu0 %v4345
  %5659 = vmatprep.subr.mxu0 0.0
  %5660 = vmatpush1.msra.mxu0 %v4346
  %5661 = vmatprep.subr.mxu0 0.0
  %5662 = vmatpush1.msra.mxu0 %v4347
  %5663 = vmatprep.subr.mxu0 0.0
  %5664 = vmatpush1.msra.mxu0 %v4348
  %5665 = vmatprep.subr.mxu0 0.0
  %5666 = vmatpush1.msra.mxu0 %v4349
  %5667 = vmatprep.subr.mxu0 0.0
  %5668 = vmatpush1.msra.mxu0 %v4350
  %5669 = vmatprep.subr.mxu0 0.0
  %5670 = vmatpush1.msra.mxu0 %v4351
  %5671 = vmatprep.subr.mxu0 0.0
  %5672 = vmatpush1.msra.mxu0 %v4352
  %5673 = vmatprep.subr.mxu0 0.0
  %5674 = vmatpush1.msra.mxu0 %v4353
  %5675 = vmatprep.subr.mxu0 0.0
  %5676 = vmatpush1.msra.mxu0 0.0
  %5677 = vmatprep.subr.mxu0 0.0
  %5678 = vmatpush1.msra.mxu0 0.0
  %5679 = vmatprep.subr.mxu0 0.0
  %5680 = vmatpush1.msra.mxu0 0.0
  %5681 = vmatprep.subr.mxu0 0.0
  %5682 = vmatpush1.msra.mxu0 0.0
  %5683 = vmatprep.subr.mxu0 0.0
  %5684 = vmatpush1.msra.mxu0 0.0
  %5685 = vmatprep.subr.mxu0 0.0
  %5686 = vmatpush1.msra.mxu0 0.0
  %5687 = vmatprep.subr.mxu0 0.0
  %5688 = vmatpush1.msra.mxu0 0.0
  %5689 = vmatprep.subr.mxu0 0.0
  %5690 = vmatpush1.msra.mxu0 0.0
  %5691 = vmatprep.subr.mxu0 0.0
  %5692 = vmatpush1.msra.mxu0 0.0
  %5693 = vmatprep.subr.mxu0 0.0
  %5694 = vmatpush1.msra.mxu0 0.0
  %5695 = vmatprep.subr.mxu0 0.0
  %5696 = vmatpush1.msra.mxu0 0.0
  %5697 = vmatprep.subr.mxu0 0.0
  %5698 = vmatpush1.msra.mxu0 0.0
  %5699 = vmatprep.subr.mxu0 0.0
  %5700 = vmatpush1.msra.mxu0 0.0
  %5701 = vmatprep.subr.mxu0 0.0
  %5702 = vmatpush1.msra.mxu0 0.0
  %5703 = vmatprep.subr.mxu0 0.0
  %5704 = vmatpush1.msra.mxu0 0.0
  %5705 = vmatprep.subr.mxu0 0.0
  %5706 = vmatpush1.msra.mxu0 0.0
  %5707 = vmatprep.subr.mxu0 0.0
  %5708 = vmatpush1.msra.mxu0 0.0
  %5709 = vmatprep.mubr.f32.mxu0 0.0
  %5710 = vmatmul.mubr.f32.gmra.mrb[0].mxu0 %v4372
  %v5711 = vpop.f32.mrb[0].mxu0
  %v5712 = vadd.f32 %v5627, %v5711
  %v5713 = vpop.f32.mrb[0].mxu0
  %5714 = vmatprep.mubr.f32.mxu0 0.0
  %5715 = vmatmul.mubr.f32.gmra.mrb[0].mxu0 %v4375
  %v5716 = vpop.f32.mrb[0].mxu0
  %v5717 = vadd.f32 %v5632, %v5716
  %v5718 = vpop.f32.mrb[0].mxu0
  %5719 = vmatprep.mubr.f32.mxu0 0.0
  %5720 = vmatmul.mubr.f32.gmra.mrb[0].mxu0 %v4378
  %v5721 = vpop.f32.mrb[0].mxu0
  %v5722 = vadd.f32 %v5637, %v5721
  %v5723 = vpop.f32.mrb[0].mxu0
  %5724 = vmatprep.mubr.f32.mxu0 0.0
  %5725 = vmatmul.mubr.f32.gmra.mrb[0].mxu0 %v4381
  %v5726 = vpop.f32.mrb[0].mxu0
  %v5727 = vadd.f32 %v5642, %v5726
  %v5728 = vpop.f32.mrb[0].mxu0
  %5729 = vdwg.mxu0
  %5730 = vmatprep.subr.mxu0 0.0
  %5731 = vmatpush1.msra.mxu0 %v4752
  %5732 = vmatprep.subr.mxu0 0.0
  %5733 = vmatpush1.msra.mxu0 %v4753
  %5734 = vmatprep.subr.mxu0 0.0
  %5735 = vmatpush1.msra.mxu0 %v4754
  %5736 = vmatprep.subr.mxu0 0.0
  %5737 = vmatpush1.msra.mxu0 %v4755
  %5738 = vmatprep.subr.mxu0 0.0
  %5739 = vmatpush1.msra.mxu0 %v4756
  %5740 = vmatprep.subr.mxu0 0.0
  %5741 = vmatpush1.msra.mxu0 %v4757
  %5742 = vmatprep.subr.mxu0 0.0
  %5743 = vmatpush1.msra.mxu0 %v4758
  %5744 = vmatprep.subr.mxu0 0.0
  %5745 = vmatpush1.msra.mxu0 %v4759
  %5746 = vmatprep.subr.mxu0 0.0
  %5747 = vmatpush1.msra.mxu0 %v4760
  %5748 = vmatprep.subr.mxu0 0.0
  %5749 = vmatpush1.msra.mxu0 %v4761
  %5750 = vmatprep.subr.mxu0 0.0
  %5751 = vmatpush1.msra.mxu0 %v4762
  %5752 = vmatprep.subr.mxu0 0.0
  %5753 = vmatpush1.msra.mxu0 %v4763
  %5754 = vmatprep.subr.mxu0 0.0
  %5755 = vmatpush1.msra.mxu0 %v4764
  %5756 = vmatprep.subr.mxu0 0.0
  %5757 = vmatpush1.msra.mxu0 %v4765
  %5758 = vmatprep.subr.mxu0 0.0
  %5759 = vmatpush1.msra.mxu0 %v4766
  %5760 = vmatprep.subr.mxu0 0.0
  %5761 = vmatpush1.msra.mxu0 0.0
  %5762 = vmatprep.subr.mxu0 0.0
  %5763 = vmatpush1.msra.mxu0 0.0
  %5764 = vmatprep.subr.mxu0 0.0
  %5765 = vmatpush1.msra.mxu0 0.0
  %5766 = vmatprep.subr.mxu0 0.0
  %5767 = vmatpush1.msra.mxu0 0.0
  %5768 = vmatprep.subr.mxu0 0.0
  %5769 = vmatpush1.msra.mxu0 0.0
  %5770 = vmatprep.subr.mxu0 0.0
  %5771 = vmatpush1.msra.mxu0 0.0
  %5772 = vmatprep.subr.mxu0 0.0
  %5773 = vmatpush1.msra.mxu0 0.0
  %5774 = vmatprep.subr.mxu0 0.0
  %5775 = vmatpush1.msra.mxu0 0.0
  %5776 = vmatprep.subr.mxu0 0.0
  %5777 = vmatpush1.msra.mxu0 0.0
  %5778 = vmatprep.subr.mxu0 0.0
  %5779 = vmatpush1.msra.mxu0 0.0
  %5780 = vmatprep.subr.mxu0 0.0
  %5781 = vmatpush1.msra.mxu0 0.0
  %5782 = vmatprep.subr.mxu0 0.0
  %5783 = vmatpush1.msra.mxu0 0.0
  %5784 = vmatprep.subr.mxu0 0.0
  %5785 = vmatpush1.msra.mxu0 0.0
  %5786 = vmatprep.subr.mxu0 0.0
  %5787 = vmatpush1.msra.mxu0 0.0
  %5788 = vmatprep.subr.mxu0 0.0
  %5789 = vmatpush1.msra.mxu0 0.0
  %5790 = vmatprep.subr.mxu0 0.0
  %5791 = vmatpush1.msra.mxu0 0.0
  %5792 = vmatprep.subr.mxu0 0.0
  %5793 = vmatpush1.msra.mxu0 0.0
  %5794 = vmatprep.mubr.f32.mxu0 0.0
  %5795 = vmatmul.mubr.f32.gmra.mrb[0].mxu0 %v4375
  %v5796 = vpop.f32.mrb[0].mxu0
  %v5797 = vadd.f32 0.0, %v5796
  %v5798 = vpop.f32.mrb[0].mxu0
  %5799 = vmatprep.mubr.f32.mxu0 0.0
  %5800 = vmatmul.mubr.f32.gmra.mrb[0].mxu0 %v4378
  %v5801 = vpop.f32.mrb[0].mxu0
  %v5802 = vadd.f32 0.0, %v5801
  %v5803 = vpop.f32.mrb[0].mxu0
  %5804 = vmatprep.mubr.f32.mxu0 0.0
  %5805 = vmatmul.mubr.f32.gmra.mrb[0].mxu0 %v4381
  %v5806 = vpop.f32.mrb[0].mxu0
  %v5807 = vadd.f32 0.0, %v5806
  %v5808 = vpop.f32.mrb[0].mxu0
  %5809 = vmatprep.mubr.f32.mxu0 0.0
  %5810 = vmatmul.mubr.f32.gmra.mrb[0].mxu0 %v4981
  %v5811 = vpop.f32.mrb[0].mxu0
  %v5812 = vadd.f32 0.0, %v5811
  %v5813 = vpop.f32.mrb[0].mxu0
  %5814 = vdwg.mxu0
  %v5815 = vadd.f32 %v5542, %v5797
  %v5816 = vadd.f32 %v5547, %v5802
  %v5817 = vadd.f32 %v5552, %v5807
  %v5818 = vadd.f32 %v5557, %v5812
  %5819 = vmatprep.subr.mxu0 0.0
  %5820 = vmatpush1.msra.mxu0 %v4860
  %5821 = vmatprep.subr.mxu0 0.0
  %5822 = vmatpush1.msra.mxu0 %v4861
  %5823 = vmatprep.subr.mxu0 0.0
  %5824 = vmatpush1.msra.mxu0 %v4862
  %5825 = vmatprep.subr.mxu0 0.0
  %5826 = vmatpush1.msra.mxu0 %v4863
  %5827 = vmatprep.subr.mxu0 0.0
  %5828 = vmatpush1.msra.mxu0 %v4864
  %5829 = vmatprep.subr.mxu0 0.0
  %5830 = vmatpush1.msra.mxu0 %v4865
  %5831 = vmatprep.subr.mxu0 0.0
  %5832 = vmatpush1.msra.mxu0 %v4866
  %5833 = vmatprep.subr.mxu0 0.0
  %5834 = vmatpush1.msra.mxu0 %v4867
  %5835 = vmatprep.subr.mxu0 0.0
  %5836 = vmatpush1.msra.mxu0 %v4868
  %5837 = vmatprep.subr.mxu0 0.0
  %5838 = vmatpush1.msra.mxu0 %v4869
  %5839 = vmatprep.subr.mxu0 0.0
  %5840 = vmatpush1.msra.mxu0 %v4870
  %5841 = vmatprep.subr.mxu0 0.0
  %5842 = vmatpush1.msra.mxu0 %v4871
  %5843 = vmatprep.subr.mxu0 0.0
  %5844 = vmatpush1.msra.mxu0 %v4872
  %5845 = vmatprep.subr.mxu0 0.0
  %5846 = vmatpush1.msra.mxu0 %v4873
  %5847 = vmatprep.subr.mxu0 0.0
  %5848 = vmatpush1.msra.mxu0 %v4874
  %5849 = vmatprep.subr.mxu0 0.0
  %5850 = vmatpush1.msra.mxu0 0.0
  %5851 = vmatprep.subr.mxu0 0.0
  %5852 = vmatpush1.msra.mxu0 0.0
  %5853 = vmatprep.subr.mxu0 0.0
  %5854 = vmatpush1.msra.mxu0 0.0
  %5855 = vmatprep.subr.mxu0 0.0
  %5856 = vmatpush1.msra.mxu0 0.0
  %5857 = vmatprep.subr.mxu0 0.0
  %5858 = vmatpush1.msra.mxu0 0.0
  %5859 = vmatprep.subr.mxu0 0.0
  %5860 = vmatpush1.msra.mxu0 0.0
  %5861 = vmatprep.subr.mxu0 0.0
  %5862 = vmatpush1.msra.mxu0 0.0
  %5863 = vmatprep.subr.mxu0 0.0
  %5864 = vmatpush1.msra.mxu0 0.0
  %5865 = vmatprep.subr.mxu0 0.0
  %5866 = vmatpush1.msra.mxu0 0.0
  %5867 = vmatprep.subr.mxu0 0.0
  %5868 = vmatpush1.msra.mxu0 0.0
  %5869 = vmatprep.subr.mxu0 0.0
  %5870 = vmatpush1.msra.mxu0 0.0
  %5871 = vmatprep.subr.mxu0 0.0
  %5872 = vmatpush1.msra.mxu0 0.0
  %5873 = vmatprep.subr.mxu0 0.0
  %5874 = vmatpush1.msra.mxu0 0.0
  %5875 = vmatprep.subr.mxu0 0.0
  %5876 = vmatpush1.msra.mxu0 0.0
  %5877 = vmatprep.subr.mxu0 0.0
  %5878 = vmatpush1.msra.mxu0 0.0
  %5879 = vmatprep.subr.mxu0 0.0
  %5880 = vmatpush1.msra.mxu0 0.0
  %5881 = vmatprep.subr.mxu0 0.0
  %5882 = vmatpush1.msra.mxu0 0.0
  %5883 = vmatprep.mubr.f32.mxu0 0.0
  %5884 = vmatmul.mubr.f32.gmra.mrb[0].mxu0 %v4375
  %v5885 = vpop.f32.mrb[0].mxu0
  %v5886 = vadd.f32 0.0, %v5885
  %v5887 = vpop.f32.mrb[0].mxu0
  %5888 = vmatprep.mubr.f32.mxu0 0.0
  %5889 = vmatmul.mubr.f32.gmra.mrb[0].mxu0 %v4378
  %v5890 = vpop.f32.mrb[0].mxu0
  %v5891 = vadd.f32 0.0, %v5890
  %v5892 = vpop.f32.mrb[0].mxu0
  %5893 = vmatprep.mubr.f32.mxu0 0.0
  %5894 = vmatmul.mubr.f32.gmra.mrb[0].mxu0 %v4381
  %v5895 = vpop.f32.mrb[0].mxu0
  %v5896 = vadd.f32 0.0, %v5895
  %v5897 = vpop.f32.mrb[0].mxu0
  %5898 = vmatprep.mubr.f32.mxu0 0.0
  %5899 = vmatmul.mubr.f32.gmra.mrb[0].mxu0 %v4981
  %v5900 = vpop.f32.mrb[0].mxu0
  %v5901 = vadd.f32 0.0, %v5900
  %v5902 = vpop.f32.mrb[0].mxu0
  %5903 = vdwg.mxu0
  %v5904 = vadd.f32 %v5712, %v5886
  %v5905 = vadd.f32 %v5717, %v5891
  %v5906 = vadd.f32 %v5722, %v5896
  %v5907 = vadd.f32 %v5727, %v5901
  %5908 = vmatprep.subr.mxu0 0.0
  %5909 = vmatpush1.msra.mxu0 %v4965
  %5910 = vmatprep.subr.mxu0 0.0
  %5911 = vmatpush1.msra.mxu0 %v4966
  %5912 = vmatprep.subr.mxu0 0.0
  %5913 = vmatpush1.msra.mxu0 %v4967
  %5914 = vmatprep.subr.mxu0 0.0
  %5915 = vmatpush1.msra.mxu0 %v4968
  %5916 = vmatprep.subr.mxu0 0.0
  %5917 = vmatpush1.msra.mxu0 %v4969
  %5918 = vmatprep.subr.mxu0 0.0
  %5919 = vmatpush1.msra.mxu0 %v4970
  %5920 = vmatprep.subr.mxu0 0.0
  %5921 = vmatpush1.msra.mxu0 %v4971
  %5922 = vmatprep.subr.mxu0 0.0
  %5923 = vmatpush1.msra.mxu0 %v4972
  %5924 = vmatprep.subr.mxu0 0.0
  %5925 = vmatpush1.msra.mxu0 %v4973
  %5926 = vmatprep.subr.mxu0 0.0
  %5927 = vmatpush1.msra.mxu0 %v4974
  %5928 = vmatprep.subr.mxu0 0.0
  %5929 = vmatpush1.msra.mxu0 %v4975
  %5930 = vmatprep.subr.mxu0 0.0
  %5931 = vmatpush1.msra.mxu0 %v4976
  %5932 = vmatprep.subr.mxu0 0.0
  %5933 = vmatpush1.msra.mxu0 %v4977
  %5934 = vmatprep.subr.mxu0 0.0
  %5935 = vmatpush1.msra.mxu0 %v4978
  %5936 = vmatprep.subr.mxu0 0.0
  %5937 = vmatpush1.msra.mxu0 %v4979
  %5938 = vmatprep.subr.mxu0 0.0
  %5939 = vmatpush1.msra.mxu0 0.0
  %5940 = vmatprep.subr.mxu0 0.0
  %5941 = vmatpush1.msra.mxu0 0.0
  %5942 = vmatprep.subr.mxu0 0.0
  %5943 = vmatpush1.msra.mxu0 0.0
  %5944 = vmatprep.subr.mxu0 0.0
  %5945 = vmatpush1.msra.mxu0 0.0
  %5946 = vmatprep.subr.mxu0 0.0
  %5947 = vmatpush1.msra.mxu0 0.0
  %5948 = vmatprep.subr.mxu0 0.0
  %5949 = vmatpush1.msra.mxu0 0.0
  %5950 = vmatprep.subr.mxu0 0.0
  %5951 = vmatpush1.msra.mxu0 0.0
  %5952 = vmatprep.subr.mxu0 0.0
  %5953 = vmatpush1.msra.mxu0 0.0
  %5954 = vmatprep.subr.mxu0 0.0
  %5955 = vmatpush1.msra.mxu0 0.0
  %5956 = vmatprep.subr.mxu0 0.0
  %5957 = vmatpush1.msra.mxu0 0.0
  %5958 = vmatprep.subr.mxu0 0.0
  %5959 = vmatpush1.msra.mxu0 0.0
  %5960 = vmatprep.subr.mxu0 0.0
  %5961 = vmatpush1.msra.mxu0 0.0
  %5962 = vmatprep.subr.mxu0 0.0
  %5963 = vmatpush1.msra.mxu0 0.0
  %5964 = vmatprep.subr.mxu0 0.0
  %5965 = vmatpush1.msra.mxu0 0.0
  %5966 = vmatprep.subr.mxu0 0.0
  %5967 = vmatpush1.msra.mxu0 0.0
  %5968 = vmatprep.subr.mxu0 0.0
  %5969 = vmatpush1.msra.mxu0 0.0
  %5970 = vmatprep.subr.mxu0 0.0
  %5971 = vmatpush1.msra.mxu0 0.0
  %5972 = vmatprep.mubr.f32.mxu0 0.0
  %5973 = vmatmul.mubr.f32.gmra.mrb[0].mxu0 %v4475
  %v5974 = vpop.f32.mrb[0].mxu0
  %v5975 = vadd.f32 0.0, %v5974
  %v5976 = vpop.f32.mrb[0].mxu0
  %5977 = vmatprep.mubr.f32.mxu0 0.0
  %5978 = vmatmul.mubr.f32.gmra.mrb[0].mxu0 %v4478
  %v5979 = vpop.f32.mrb[0].mxu0
  %v5980 = vadd.f32 0.0, %v5979
  %v5981 = vpop.f32.mrb[0].mxu0
  %5982 = vmatprep.mubr.f32.mxu0 0.0
  %5983 = vmatmul.mubr.f32.gmra.mrb[0].mxu0 %v4768
  %v5984 = vpop.f32.mrb[0].mxu0
  %v5985 = vadd.f32 0.0, %v5984
  %v5986 = vpop.f32.mrb[0].mxu0
  %5987 = vmatprep.mubr.f32.mxu0 0.0
  %5988 = vmatmul.mubr.f32.gmra.mrb[0].mxu0 %v5194
  %v5989 = vpop.f32.mrb[0].mxu0
  %v5990 = vadd.f32 0.0, %v5989
  %v5991 = vpop.f32.mrb[0].mxu0
  %5992 = vdwg.mxu0
  %v5993 = vadd.f32 %v5815, %v5975
  %v5994 = vadd.f32 %v5816, %v5980
  %v5995 = vadd.f32 %v5817, %v5985
  %v5996 = vadd.f32 %v5818, %v5990
  %5997 = vmatprep.subr.mxu0 0.0
  %5998 = vmatpush1.msra.mxu0 %v5073
  %5999 = vmatprep.subr.mxu0 0.0
  %6000 = vmatpush1.msra.mxu0 %v5074
  %6001 = vmatprep.subr.mxu0 0.0
  %6002 = vmatpush1.msra.mxu0 %v5075
  %6003 = vmatprep.subr.mxu0 0.0
  %6004 = vmatpush1.msra.mxu0 %v5076
  %6005 = vmatprep.subr.mxu0 0.0
  %6006 = vmatpush1.msra.mxu0 %v5077
  %6007 = vmatprep.subr.mxu0 0.0
  %6008 = vmatpush1.msra.mxu0 %v5078
  %6009 = vmatprep.subr.mxu0 0.0
  %6010 = vmatpush1.msra.mxu0 %v5079
  %6011 = vmatprep.subr.mxu0 0.0
  %6012 = vmatpush1.msra.mxu0 %v5080
  %6013 = vmatprep.subr.mxu0 0.0
  %6014 = vmatpush1.msra.mxu0 %v5081
  %6015 = vmatprep.subr.mxu0 0.0
  %6016 = vmatpush1.msra.mxu0 %v5082
  %6017 = vmatprep.subr.mxu0 0.0
  %6018 = vmatpush1.msra.mxu0 %v5083
  %6019 = vmatprep.subr.mxu0 0.0
  %6020 = vmatpush1.msra.mxu0 %v5084
  %6021 = vmatprep.subr.mxu0 0.0
  %6022 = vmatpush1.msra.mxu0 %v5085
  %6023 = vmatprep.subr.mxu0 0.0
  %6024 = vmatpush1.msra.mxu0 %v5086
  %6025 = vmatprep.subr.mxu0 0.0
  %6026 = vmatpush1.msra.mxu0 %v5087
  %6027 = vmatprep.subr.mxu0 0.0
  %6028 = vmatpush1.msra.mxu0 0.0
  %6029 = vmatprep.subr.mxu0 0.0
  %6030 = vmatpush1.msra.mxu0 0.0
  %6031 = vmatprep.subr.mxu0 0.0
  %6032 = vmatpush1.msra.mxu0 0.0
  %6033 = vmatprep.subr.mxu0 0.0
  %6034 = vmatpush1.msra.mxu0 0.0
  %6035 = vmatprep.subr.mxu0 0.0
  %6036 = vmatpush1.msra.mxu0 0.0
  %6037 = vmatprep.subr.mxu0 0.0
  %6038 = vmatpush1.msra.mxu0 0.0
  %6039 = vmatprep.subr.mxu0 0.0
  %6040 = vmatpush1.msra.mxu0 0.0
  %6041 = vmatprep.subr.mxu0 0.0
  %6042 = vmatpush1.msra.mxu0 0.0
  %6043 = vmatprep.subr.mxu0 0.0
  %6044 = vmatpush1.msra.mxu0 0.0
  %6045 = vmatprep.subr.mxu0 0.0
  %6046 = vmatpush1.msra.mxu0 0.0
  %6047 = vmatprep.subr.mxu0 0.0
  %6048 = vmatpush1.msra.mxu0 0.0
  %6049 = vmatprep.subr.mxu0 0.0
  %6050 = vmatpush1.msra.mxu0 0.0
  %6051 = vmatprep.subr.mxu0 0.0
  %6052 = vmatpush1.msra.mxu0 0.0
  %6053 = vmatprep.subr.mxu0 0.0
  %6054 = vmatpush1.msra.mxu0 0.0
  %6055 = vmatprep.subr.mxu0 0.0
  %6056 = vmatpush1.msra.mxu0 0.0
  %6057 = vmatprep.subr.mxu0 0.0
  %6058 = vmatpush1.msra.mxu0 0.0
  %6059 = vmatprep.subr.mxu0 0.0
  %6060 = vmatpush1.msra.mxu0 0.0
  %6061 = vmatprep.mubr.f32.mxu0 0.0
  %6062 = vmatmul.mubr.f32.gmra.mrb[0].mxu0 %v4475
  %v6063 = vpop.f32.mrb[0].mxu0
  %v6064 = vadd.f32 0.0, %v6063
  %v6065 = vpop.f32.mrb[0].mxu0
  %6066 = vmatprep.mubr.f32.mxu0 0.0
  %6067 = vmatmul.mubr.f32.gmra.mrb[0].mxu0 %v4478
  %v6068 = vpop.f32.mrb[0].mxu0
  %v6069 = vadd.f32 0.0, %v6068
  %v6070 = vpop.f32.mrb[0].mxu0
  %6071 = vmatprep.mubr.f32.mxu0 0.0
  %6072 = vmatmul.mubr.f32.gmra.mrb[0].mxu0 %v4768
  %v6073 = vpop.f32.mrb[0].mxu0
  %v6074 = vadd.f32 0.0, %v6073
  %v6075 = vpop.f32.mrb[0].mxu0
  %6076 = vmatprep.mubr.f32.mxu0 0.0
  %6077 = vmatmul.mubr.f32.gmra.mrb[0].mxu0 %v5194
  %v6078 = vpop.f32.mrb[0].mxu0
  %v6079 = vadd.f32 0.0, %v6078
  %v6080 = vpop.f32.mrb[0].mxu0
  %6081 = vdwg.mxu0
  %v6082 = vadd.f32 %v5904, %v6064
  %v6083 = vadd.f32 %v5905, %v6069
  %v6084 = vadd.f32 %v5906, %v6074
  %v6085 = vadd.f32 %v5907, %v6079
  %v6087 = vsel %vm4370, %v4322, 0
  %6089 = vmatprep.subr.mxu0 0.0
  %6090 = vmatpush1.msra.mxu0 %v5178
  %6091 = vmatprep.subr.mxu0 0.0
  %6092 = vmatpush1.msra.mxu0 %v5179
  %6093 = vmatprep.subr.mxu0 0.0
  %6094 = vmatpush1.msra.mxu0 %v5180
  %6095 = vmatprep.subr.mxu0 0.0
  %6096 = vmatpush1.msra.mxu0 %v5181
  %6097 = vmatprep.subr.mxu0 0.0
  %6098 = vmatpush1.msra.mxu0 %v5182
  %6099 = vmatprep.subr.mxu0 0.0
  %6100 = vmatpush1.msra.mxu0 %v5183
  %6101 = vmatprep.subr.mxu0 0.0
  %6102 = vmatpush1.msra.mxu0 %v5184
  %6103 = vmatprep.subr.mxu0 0.0
  %6104 = vmatpush1.msra.mxu0 %v5185
  %6105 = vmatprep.subr.mxu0 0.0
  %6106 = vmatpush1.msra.mxu0 %v5186
  %6107 = vmatprep.subr.mxu0 0.0
  %6108 = vmatpush1.msra.mxu0 %v5187
  %6109 = vmatprep.subr.mxu0 0.0
  %6110 = vmatpush1.msra.mxu0 %v5188
  %6111 = vmatprep.subr.mxu0 0.0
  %6112 = vmatpush1.msra.mxu0 %v5189
  %6113 = vmatprep.subr.mxu0 0.0
  %6114 = vmatpush1.msra.mxu0 %v5190
  %6115 = vmatprep.subr.mxu0 0.0
  %6116 = vmatpush1.msra.mxu0 %v5191
  %6117 = vmatprep.subr.mxu0 0.0
  %6118 = vmatpush1.msra.mxu0 %v5192
  %6119 = vmatprep.subr.mxu0 0.0
  %6120 = vmatpush1.msra.mxu0 0.0
  %6121 = vmatprep.subr.mxu0 0.0
  %6122 = vmatpush1.msra.mxu0 0.0
  %6123 = vmatprep.subr.mxu0 0.0
  %6124 = vmatpush1.msra.mxu0 0.0
  %6125 = vmatprep.subr.mxu0 0.0
  %6126 = vmatpush1.msra.mxu0 0.0
  %6127 = vmatprep.subr.mxu0 0.0
  %6128 = vmatpush1.msra.mxu0 0.0
  %6129 = vmatprep.subr.mxu0 0.0
  %6130 = vmatpush1.msra.mxu0 0.0
  %6131 = vmatprep.subr.mxu0 0.0
  %6132 = vmatpush1.msra.mxu0 0.0
  %6133 = vmatprep.subr.mxu0 0.0
  %6134 = vmatpush1.msra.mxu0 0.0
  %6135 = vmatprep.subr.mxu0 0.0
  %6136 = vmatpush1.msra.mxu0 0.0
  %6137 = vmatprep.subr.mxu0 0.0
  %6138 = vmatpush1.msra.mxu0 0.0
  %6139 = vmatprep.subr.mxu0 0.0
  %6140 = vmatpush1.msra.mxu0 0.0
  %6141 = vmatprep.subr.mxu0 0.0
  %6142 = vmatpush1.msra.mxu0 0.0
  %6143 = vmatprep.subr.mxu0 0.0
  %6144 = vmatpush1.msra.mxu0 0.0
  %6145 = vmatprep.subr.mxu0 0.0
  %6146 = vmatpush1.msra.mxu0 0.0
  %6147 = vmatprep.subr.mxu0 0.0
  %6148 = vmatpush1.msra.mxu0 0.0
  %6149 = vmatprep.subr.mxu0 0.0
  %6150 = vmatpush1.msra.mxu0 0.0
  %6151 = vmatprep.subr.mxu0 0.0
  %6152 = vmatpush1.msra.mxu0 0.0
  %6153 = vmatprep.mubr.f32.mxu0 0.0
  %6154 = vmatmul.mubr.f32.gmra.mrb[0].mxu0 %v4378
  %v6155 = vpop.f32.mrb[0].mxu0
  %v6156 = vadd.f32 0.0, %v6155
  %v6157 = vpop.f32.mrb[0].mxu0
  %6158 = vmatprep.mubr.f32.mxu0 0.0
  %6159 = vmatmul.mubr.f32.gmra.mrb[0].mxu0 %v4381
  %v6160 = vpop.f32.mrb[0].mxu0
  %v6161 = vadd.f32 0.0, %v6160
  %v6162 = vpop.f32.mrb[0].mxu0
  %6163 = vmatprep.mubr.f32.mxu0 0.0
  %6164 = vmatmul.mubr.f32.gmra.mrb[0].mxu0 %v4981
  %v6165 = vpop.f32.mrb[0].mxu0
  %v6166 = vadd.f32 0.0, %v6165
  %v6167 = vpop.f32.mrb[0].mxu0
  %6168 = vmatprep.mubr.f32.mxu0 0.0
  %6169 = vmatmul.mubr.f32.gmra.mrb[0].mxu0 %v6087
  %v6170 = vpop.f32.mrb[0].mxu0
  %v6171 = vadd.f32 0.0, %v6170
  %v6172 = vpop.f32.mrb[0].mxu0
  %6173 = vdwg.mxu0
  %v6174 = vadd.f32 %v5993, %v6156
  %v6175 = vadd.f32 %v5994, %v6161
  %v6176 = vadd.f32 %v5995, %v6166
  %v6177 = vadd.f32 %v5996, %v6171
  %6178 = vmatprep.subr.mxu0 0.0
  %6179 = vmatpush1.msra.mxu0 %v5286
  %6180 = vmatprep.subr.mxu0 0.0
  %6181 = vmatpush1.msra.mxu0 %v5287
  %6182 = vmatprep.subr.mxu0 0.0
  %6183 = vmatpush1.msra.mxu0 %v5288
  %6184 = vmatprep.subr.mxu0 0.0
  %6185 = vmatpush1.msra.mxu0 %v5289
  %6186 = vmatprep.subr.mxu0 0.0
  %6187 = vmatpush1.msra.mxu0 %v5290
  %6188 = vmatprep.subr.mxu0 0.0
  %6189 = vmatpush1.msra.mxu0 %v5291
  %6190 = vmatprep.subr.mxu0 0.0
  %6191 = vmatpush1.msra.mxu0 %v5292
  %6192 = vmatprep.subr.mxu0 0.0
  %6193 = vmatpush1.msra.mxu0 %v5293
  %6194 = vmatprep.subr.mxu0 0.0
  %6195 = vmatpush1.msra.mxu0 %v5294
  %6196 = vmatprep.subr.mxu0 0.0
  %6197 = vmatpush1.msra.mxu0 %v5295
  %6198 = vmatprep.subr.mxu0 0.0
  %6199 = vmatpush1.msra.mxu0 %v5296
  %6200 = vmatprep.subr.mxu0 0.0
  %6201 = vmatpush1.msra.mxu0 %v5297
  %6202 = vmatprep.subr.mxu0 0.0
  %6203 = vmatpush1.msra.mxu0 %v5298
  %6204 = vmatprep.subr.mxu0 0.0
  %6205 = vmatpush1.msra.mxu0 %v5299
  %6206 = vmatprep.subr.mxu0 0.0
  %6207 = vmatpush1.msra.mxu0 %v5300
  %6208 = vmatprep.subr.mxu0 0.0
  %6209 = vmatpush1.msra.mxu0 0.0
  %6210 = vmatprep.subr.mxu0 0.0
  %6211 = vmatpush1.msra.mxu0 0.0
  %6212 = vmatprep.subr.mxu0 0.0
  %6213 = vmatpush1.msra.mxu0 0.0
  %6214 = vmatprep.subr.mxu0 0.0
  %6215 = vmatpush1.msra.mxu0 0.0
  %6216 = vmatprep.subr.mxu0 0.0
  %6217 = vmatpush1.msra.mxu0 0.0
  %6218 = vmatprep.subr.mxu0 0.0
  %6219 = vmatpush1.msra.mxu0 0.0
  %6220 = vmatprep.subr.mxu0 0.0
  %6221 = vmatpush1.msra.mxu0 0.0
  %6222 = vmatprep.subr.mxu0 0.0
  %6223 = vmatpush1.msra.mxu0 0.0
  %6224 = vmatprep.subr.mxu0 0.0
  %6225 = vmatpush1.msra.mxu0 0.0
  %6226 = vmatprep.subr.mxu0 0.0
  %6227 = vmatpush1.msra.mxu0 0.0
  %6228 = vmatprep.subr.mxu0 0.0
  %6229 = vmatpush1.msra.mxu0 0.0
  %6230 = vmatprep.subr.mxu0 0.0
  %6231 = vmatpush1.msra.mxu0 0.0
  %6232 = vmatprep.subr.mxu0 0.0
  %6233 = vmatpush1.msra.mxu0 0.0
  %6234 = vmatprep.subr.mxu0 0.0
  %6235 = vmatpush1.msra.mxu0 0.0
  %6236 = vmatprep.subr.mxu0 0.0
  %6237 = vmatpush1.msra.mxu0 0.0
  %6238 = vmatprep.subr.mxu0 0.0
  %6239 = vmatpush1.msra.mxu0 0.0
  %6240 = vmatprep.subr.mxu0 0.0
  %6241 = vmatpush1.msra.mxu0 0.0
  %6242 = vmatprep.mubr.f32.mxu0 0.0
  %6243 = vmatmul.mubr.f32.gmra.mrb[0].mxu0 %v4378
  %v6244 = vpop.f32.mrb[0].mxu0
  %v6245 = vadd.f32 0.0, %v6244
  %v6246 = vpop.f32.mrb[0].mxu0
  %6247 = vmatprep.mubr.f32.mxu0 0.0
  %6248 = vmatmul.mubr.f32.gmra.mrb[0].mxu0 %v4381
  %v6249 = vpop.f32.mrb[0].mxu0
  %v6250 = vadd.f32 0.0, %v6249
  %v6251 = vpop.f32.mrb[0].mxu0
  %6252 = vmatprep.mubr.f32.mxu0 0.0
  %6253 = vmatmul.mubr.f32.gmra.mrb[0].mxu0 %v4981
  %v6254 = vpop.f32.mrb[0].mxu0
  %v6255 = vadd.f32 0.0, %v6254
  %v6256 = vpop.f32.mrb[0].mxu0
  %6257 = vmatprep.mubr.f32.mxu0 0.0
  %6258 = vmatmul.mubr.f32.gmra.mrb[0].mxu0 %v6087
  %v6259 = vpop.f32.mrb[0].mxu0
  %v6260 = vadd.f32 0.0, %v6259
  %v6261 = vpop.f32.mrb[0].mxu0
  %6262 = vdwg.mxu0
  %v6263 = vadd.f32 %v6082, %v6245
  %v6264 = vadd.f32 %v6083, %v6250
  %v6265 = vadd.f32 %v6084, %v6255
  %v6266 = vadd.f32 %v6085, %v6260
  %v6267 = vmax.f32 %v5281, %v5386
  %v6268 = vmax.f32 %v5282, %v5387
  %v6269 = vmax.f32 %v5283, %v5388
  %v6270 = vmax.f32 %v5284, %v5389
  %v6271 = vmax.f32 %v6174, %v6263
  %v6272 = vmax.f32 %v6175, %v6264
  %v6273 = vmax.f32 %v6176, %v6265
  %v6274 = vmax.f32 %v6177, %v6266
  %v6275 = vmax.f32 %v6267, %v6271
  %v6276 = vmax.f32 %v6268, %v6272
  %v6277 = vmax.f32 %v6269, %v6273
  %v6278 = vmax.f32 %v6270, %v6274
  %v6279 = vld [vmem:[%s4] sm:$0x1]
  %v6281 = vlaneseq
  %v6282 = vshrl.u32 %v6281, 7
  %v6283 = vsub.s32 0, %v6282
  %v6284 = vrot.slane %v6279, %v6283
  %v6286 = vadd.f32 %v6275, %v6284
  %v6287 = vadd.f32 %v6276, %v6284
  %v6288 = vadd.f32 %v6277, %v6284
  %v6289 = vadd.f32 %v6278, %v6284
  %v6290 = vmax.f32 %v6286, 0.0
  %v6291 = vmax.f32 %v6287, 0.0
  %v6292 = vmax.f32 %v6288, 0.0
  %v6293 = vmax.f32 %v6289, 0.0
  %v6294 = vld [vmem:[%s6] sm:$0x1]
  %v6295 = vld [vmem:[%s5] sm:$0xff]
  %v6296 = vld [vmem:[%s5 + $0x8] sm:$0xff]
  %v6297 = vld [vmem:[%s5 + $0x10] sm:$0xff]
  %v6298 = vld [vmem:[%s5 + $0x18] sm:$0xff]
  %v6299 = vld [vmem:[%s5 + $0x20] sm:$0xff]
  %v6300 = vld [vmem:[%s5 + $0x28] sm:$0xff]
  %v6301 = vld [vmem:[%s5 + $0x30] sm:$0xff]
  %v6302 = vld [vmem:[%s5 + $0x38] sm:$0xff]
  %v6303 = vld [vmem:[%s5 + $0x40] sm:$0xff]
  %v6304 = vld [vmem:[%s5 + $0x48] sm:$0xff]
  %vm6305 = vcmask 654336
  %v6307 = vsel %vm6305, %v6290, 0
  %6309 = vmatprep.subr.mxu0 0.0
  %6310 = vmatpush1.msra.mxu0 %v6295
  %6311 = vmatprep.subr.mxu0 0.0
  %6312 = vmatpush1.msra.mxu0 %v6296
  %6313 = vmatprep.subr.mxu0 0.0
  %6314 = vmatpush1.msra.mxu0 %v6297
  %6315 = vmatprep.subr.mxu0 0.0
  %6316 = vmatpush1.msra.mxu0 %v6298
  %6317 = vmatprep.subr.mxu0 0.0
  %6318 = vmatpush1.msra.mxu0 %v6299
  %6319 = vmatprep.subr.mxu0 0.0
  %6320 = vmatpush1.msra.mxu0 %v6300
  %6321 = vmatprep.subr.mxu0 0.0
  %6322 = vmatpush1.msra.mxu0 %v6301
  %6323 = vmatprep.subr.mxu0 0.0
  %6324 = vmatpush1.msra.mxu0 %v6302
  %6325 = vmatprep.subr.mxu0 0.0
  %6326 = vmatpush1.msra.mxu0 %v6303
  %6327 = vmatprep.subr.mxu0 0.0
  %6328 = vmatpush1.msra.mxu0 %v6304
  %6329 = vmatprep.subr.mxu0 0.0
  %6330 = vmatpush1.msra.mxu0 0.0
  %6331 = vmatprep.subr.mxu0 0.0
  %6332 = vmatpush1.msra.mxu0 0.0
  %6333 = vmatprep.subr.mxu0 0.0
  %6334 = vmatpush1.msra.mxu0 0.0
  %6335 = vmatprep.subr.mxu0 0.0
  %6336 = vmatpush1.msra.mxu0 0.0
  %6337 = vmatprep.subr.mxu0 0.0
  %6338 = vmatpush1.msra.mxu0 0.0
  %6339 = vmatprep.subr.mxu0 0.0
  %6340 = vmatpush1.msra.mxu0 0.0
  %6341 = vmatprep.subr.mxu0 0.0
  %6342 = vmatpush1.msra.mxu0 0.0
  %6343 = vmatprep.subr.mxu0 0.0
  %6344 = vmatpush1.msra.mxu0 0.0
  %6345 = vmatprep.subr.mxu0 0.0
  %6346 = vmatpush1.msra.mxu0 0.0
  %6347 = vmatprep.subr.mxu0 0.0
  %6348 = vmatpush1.msra.mxu0 0.0
  %6349 = vmatprep.subr.mxu0 0.0
  %6350 = vmatpush1.msra.mxu0 0.0
  %6351 = vmatprep.subr.mxu0 0.0
  %6352 = vmatpush1.msra.mxu0 0.0
  %6353 = vmatprep.subr.mxu0 0.0
  %6354 = vmatpush1.msra.mxu0 0.0
  %6355 = vmatprep.subr.mxu0 0.0
  %6356 = vmatpush1.msra.mxu0 0.0
  %6357 = vmatprep.subr.mxu0 0.0
  %6358 = vmatpush1.msra.mxu0 0.0
  %6359 = vmatprep.subr.mxu0 0.0
  %6360 = vmatpush1.msra.mxu0 0.0
  %6361 = vmatprep.subr.mxu0 0.0
  %6362 = vmatpush1.msra.mxu0 0.0
  %6363 = vmatprep.subr.mxu0 0.0
  %6364 = vmatpush1.msra.mxu0 0.0
  %6365 = vmatprep.subr.mxu0 0.0
  %6366 = vmatpush1.msra.mxu0 0.0
  %6367 = vmatprep.subr.mxu0 0.0
  %6368 = vmatpush1.msra.mxu0 0.0
  %6369 = vmatprep.subr.mxu0 0.0
  %6370 = vmatpush1.msra.mxu0 0.0
  %6371 = vmatprep.subr.mxu0 0.0
  %6372 = vmatpush1.msra.mxu0 0.0
  %6373 = vmatprep.mubr.f32.mxu0 0.0
  %6374 = vmatmul.mubr.f32.gmra.mrb[0].mxu0 %v6307
  %v6375 = vpop.f32.mrb[0].mxu0
  %v6376 = vadd.f32 0.0, %v6375
  %v6377 = vpop.f32.mrb[0].mxu0
  %6378 = vdwg.mxu0
  %v6380 = vlaneseq
  %v6381 = vshrl.u32 %v6380, 7
  %v6382 = vsub.s32 0, %v6381
  %v6383 = vrot.slane %v6294, %v6382
  %v6385 = vadd.f32 %v6383, %v6376
  %s6386 = scalar_lea.vmem %s5, 80
  %v6387 = vld [vmem:[%s6386] sm:$0xff]
  %v6388 = vld [vmem:[%s6386 + $0x8] sm:$0xff]
  %v6389 = vld [vmem:[%s6386 + $0x10] sm:$0xff]
  %v6390 = vld [vmem:[%s6386 + $0x18] sm:$0xff]
  %v6391 = vld [vmem:[%s6386 + $0x20] sm:$0xff]
  %v6392 = vld [vmem:[%s6386 + $0x28] sm:$0xff]
  %v6393 = vld [vmem:[%s6386 + $0x30] sm:$0xff]
  %v6394 = vld [vmem:[%s6386 + $0x38] sm:$0xff]
  %v6395 = vld [vmem:[%s6386 + $0x40] sm:$0xff]
  %v6396 = vld [vmem:[%s6386 + $0x48] sm:$0xff]
  %v6398 = vsel %vm6305, %v6291, 0
  %6400 = vmatprep.subr.mxu0 0.0
  %6401 = vmatpush1.msra.mxu0 %v6387
  %6402 = vmatprep.subr.mxu0 0.0
  %6403 = vmatpush1.msra.mxu0 %v6388
  %6404 = vmatprep.subr.mxu0 0.0
  %6405 = vmatpush1.msra.mxu0 %v6389
  %6406 = vmatprep.subr.mxu0 0.0
  %6407 = vmatpush1.msra.mxu0 %v6390
  %6408 = vmatprep.subr.mxu0 0.0
  %6409 = vmatpush1.msra.mxu0 %v6391
  %6410 = vmatprep.subr.mxu0 0.0
  %6411 = vmatpush1.msra.mxu0 %v6392
  %6412 = vmatprep.subr.mxu0 0.0
  %6413 = vmatpush1.msra.mxu0 %v6393
  %6414 = vmatprep.subr.mxu0 0.0
  %6415 = vmatpush1.msra.mxu0 %v6394
  %6416 = vmatprep.subr.mxu0 0.0
  %6417 = vmatpush1.msra.mxu0 %v6395
  %6418 = vmatprep.subr.mxu0 0.0
  %6419 = vmatpush1.msra.mxu0 %v6396
  %6420 = vmatprep.subr.mxu0 0.0
  %6421 = vmatpush1.msra.mxu0 0.0
  %6422 = vmatprep.subr.mxu0 0.0
  %6423 = vmatpush1.msra.mxu0 0.0
  %6424 = vmatprep.subr.mxu0 0.0
  %6425 = vmatpush1.msra.mxu0 0.0
  %6426 = vmatprep.subr.mxu0 0.0
  %6427 = vmatpush1.msra.mxu0 0.0
  %6428 = vmatprep.subr.mxu0 0.0
  %6429 = vmatpush1.msra.mxu0 0.0
  %6430 = vmatprep.subr.mxu0 0.0
  %6431 = vmatpush1.msra.mxu0 0.0
  %6432 = vmatprep.subr.mxu0 0.0
  %6433 = vmatpush1.msra.mxu0 0.0
  %6434 = vmatprep.subr.mxu0 0.0
  %6435 = vmatpush1.msra.mxu0 0.0
  %6436 = vmatprep.subr.mxu0 0.0
  %6437 = vmatpush1.msra.mxu0 0.0
  %6438 = vmatprep.subr.mxu0 0.0
  %6439 = vmatpush1.msra.mxu0 0.0
  %6440 = vmatprep.subr.mxu0 0.0
  %6441 = vmatpush1.msra.mxu0 0.0
  %6442 = vmatprep.subr.mxu0 0.0
  %6443 = vmatpush1.msra.mxu0 0.0
  %6444 = vmatprep.subr.mxu0 0.0
  %6445 = vmatpush1.msra.mxu0 0.0
  %6446 = vmatprep.subr.mxu0 0.0
  %6447 = vmatpush1.msra.mxu0 0.0
  %6448 = vmatprep.subr.mxu0 0.0
  %6449 = vmatpush1.msra.mxu0 0.0
  %6450 = vmatprep.subr.mxu0 0.0
  %6451 = vmatpush1.msra.mxu0 0.0
  %6452 = vmatprep.subr.mxu0 0.0
  %6453 = vmatpush1.msra.mxu0 0.0
  %6454 = vmatprep.subr.mxu0 0.0
  %6455 = vmatpush1.msra.mxu0 0.0
  %6456 = vmatprep.subr.mxu0 0.0
  %6457 = vmatpush1.msra.mxu0 0.0
  %6458 = vmatprep.subr.mxu0 0.0
  %6459 = vmatpush1.msra.mxu0 0.0
  %6460 = vmatprep.subr.mxu0 0.0
  %6461 = vmatpush1.msra.mxu0 0.0
  %6462 = vmatprep.subr.mxu0 0.0
  %6463 = vmatpush1.msra.mxu0 0.0
  %6464 = vmatprep.mubr.f32.mxu0 0.0
  %6465 = vmatmul.mubr.f32.gmra.mrb[0].mxu0 %v6398
  %v6466 = vpop.f32.mrb[0].mxu0
  %v6467 = vadd.f32 0.0, %v6466
  %v6468 = vpop.f32.mrb[0].mxu0
  %6469 = vdwg.mxu0
  %v6470 = vadd.f32 %v6385, %v6467
  %s6471 = scalar_lea.vmem %s5, 160
  %v6472 = vld [vmem:[%s6471] sm:$0xff]
  %v6473 = vld [vmem:[%s6471 + $0x8] sm:$0xff]
  %v6474 = vld [vmem:[%s6471 + $0x10] sm:$0xff]
  %v6475 = vld [vmem:[%s6471 + $0x18] sm:$0xff]
  %v6476 = vld [vmem:[%s6471 + $0x20] sm:$0xff]
  %v6477 = vld [vmem:[%s6471 + $0x28] sm:$0xff]
  %v6478 = vld [vmem:[%s6471 + $0x30] sm:$0xff]
  %v6479 = vld [vmem:[%s6471 + $0x38] sm:$0xff]
  %v6480 = vld [vmem:[%s6471 + $0x40] sm:$0xff]
  %v6481 = vld [vmem:[%s6471 + $0x48] sm:$0xff]
  %v6483 = vsel %vm6305, %v6292, 0
  %6485 = vmatprep.subr.mxu0 0.0
  %6486 = vmatpush1.msra.mxu0 %v6472
  %6487 = vmatprep.subr.mxu0 0.0
  %6488 = vmatpush1.msra.mxu0 %v6473
  %6489 = vmatprep.subr.mxu0 0.0
  %6490 = vmatpush1.msra.mxu0 %v6474
  %6491 = vmatprep.subr.mxu0 0.0
  %6492 = vmatpush1.msra.mxu0 %v6475
  %6493 = vmatprep.subr.mxu0 0.0
  %6494 = vmatpush1.msra.mxu0 %v6476
  %6495 = vmatprep.subr.mxu0 0.0
  %6496 = vmatpush1.msra.mxu0 %v6477
  %6497 = vmatprep.subr.mxu0 0.0
  %6498 = vmatpush1.msra.mxu0 %v6478
  %6499 = vmatprep.subr.mxu0 0.0
  %6500 = vmatpush1.msra.mxu0 %v6479
  %6501 = vmatprep.subr.mxu0 0.0
  %6502 = vmatpush1.msra.mxu0 %v6480
  %6503 = vmatprep.subr.mxu0 0.0
  %6504 = vmatpush1.msra.mxu0 %v6481
  %6505 = vmatprep.subr.mxu0 0.0
  %6506 = vmatpush1.msra.mxu0 0.0
  %6507 = vmatprep.subr.mxu0 0.0
  %6508 = vmatpush1.msra.mxu0 0.0
  %6509 = vmatprep.subr.mxu0 0.0
  %6510 = vmatpush1.msra.mxu0 0.0
  %6511 = vmatprep.subr.mxu0 0.0
  %6512 = vmatpush1.msra.mxu0 0.0
  %6513 = vmatprep.subr.mxu0 0.0
  %6514 = vmatpush1.msra.mxu0 0.0
  %6515 = vmatprep.subr.mxu0 0.0
  %6516 = vmatpush1.msra.mxu0 0.0
  %6517 = vmatprep.subr.mxu0 0.0
  %6518 = vmatpush1.msra.mxu0 0.0
  %6519 = vmatprep.subr.mxu0 0.0
  %6520 = vmatpush1.msra.mxu0 0.0
  %6521 = vmatprep.subr.mxu0 0.0
  %6522 = vmatpush1.msra.mxu0 0.0
  %6523 = vmatprep.subr.mxu0 0.0
  %6524 = vmatpush1.msra.mxu0 0.0
  %6525 = vmatprep.subr.mxu0 0.0
  %6526 = vmatpush1.msra.mxu0 0.0
  %6527 = vmatprep.subr.mxu0 0.0
  %6528 = vmatpush1.msra.mxu0 0.0
  %6529 = vmatprep.subr.mxu0 0.0
  %6530 = vmatpush1.msra.mxu0 0.0
  %6531 = vmatprep.subr.mxu0 0.0
  %6532 = vmatpush1.msra.mxu0 0.0
  %6533 = vmatprep.subr.mxu0 0.0
  %6534 = vmatpush1.msra.mxu0 0.0
  %6535 = vmatprep.subr.mxu0 0.0
  %6536 = vmatpush1.msra.mxu0 0.0
  %6537 = vmatprep.subr.mxu0 0.0
  %6538 = vmatpush1.msra.mxu0 0.0
  %6539 = vmatprep.subr.mxu0 0.0
  %6540 = vmatpush1.msra.mxu0 0.0
  %6541 = vmatprep.subr.mxu0 0.0
  %6542 = vmatpush1.msra.mxu0 0.0
  %6543 = vmatprep.subr.mxu0 0.0
  %6544 = vmatpush1.msra.mxu0 0.0
  %6545 = vmatprep.subr.mxu0 0.0
  %6546 = vmatpush1.msra.mxu0 0.0
  %6547 = vmatprep.subr.mxu0 0.0
  %6548 = vmatpush1.msra.mxu0 0.0
  %6549 = vmatprep.mubr.f32.mxu0 0.0
  %6550 = vmatmul.mubr.f32.gmra.mrb[0].mxu0 %v6483
  %v6551 = vpop.f32.mrb[0].mxu0
  %v6552 = vadd.f32 0.0, %v6551
  %v6553 = vpop.f32.mrb[0].mxu0
  %6554 = vdwg.mxu0
  %v6555 = vadd.f32 %v6470, %v6552
  %s6556 = scalar_lea.vmem %s5, 240
  %v6557 = vld [vmem:[%s6556] sm:$0xff]
  %v6558 = vld [vmem:[%s6556 + $0x8] sm:$0xff]
  %v6559 = vld [vmem:[%s6556 + $0x10] sm:$0xff]
  %v6560 = vld [vmem:[%s6556 + $0x18] sm:$0xff]
  %v6561 = vld [vmem:[%s6556 + $0x20] sm:$0xff]
  %v6562 = vld [vmem:[%s6556 + $0x28] sm:$0xff]
  %v6563 = vld [vmem:[%s6556 + $0x30] sm:$0xff]
  %v6564 = vld [vmem:[%s6556 + $0x38] sm:$0xff]
  %v6565 = vld [vmem:[%s6556 + $0x40] sm:$0xff]
  %v6566 = vld [vmem:[%s6556 + $0x48] sm:$0xff]
  %v6568 = vsel %vm6305, %v6293, 0
  %6570 = vmatprep.subr.mxu0 0.0
  %6571 = vmatpush1.msra.mxu0 %v6557
  %6572 = vmatprep.subr.mxu0 0.0
  %6573 = vmatpush1.msra.mxu0 %v6558
  %6574 = vmatprep.subr.mxu0 0.0
  %6575 = vmatpush1.msra.mxu0 %v6559
  %6576 = vmatprep.subr.mxu0 0.0
  %6577 = vmatpush1.msra.mxu0 %v6560
  %6578 = vmatprep.subr.mxu0 0.0
  %6579 = vmatpush1.msra.mxu0 %v6561
  %6580 = vmatprep.subr.mxu0 0.0
  %6581 = vmatpush1.msra.mxu0 %v6562
  %6582 = vmatprep.subr.mxu0 0.0
  %6583 = vmatpush1.msra.mxu0 %v6563
  %6584 = vmatprep.subr.mxu0 0.0
  %6585 = vmatpush1.msra.mxu0 %v6564
  %6586 = vmatprep.subr.mxu0 0.0
  %6587 = vmatpush1.msra.mxu0 %v6565
  %6588 = vmatprep.subr.mxu0 0.0
  %6589 = vmatpush1.msra.mxu0 %v6566
  %6590 = vmatprep.subr.mxu0 0.0
  %6591 = vmatpush1.msra.mxu0 0.0
  %6592 = vmatprep.subr.mxu0 0.0
  %6593 = vmatpush1.msra.mxu0 0.0
  %6594 = vmatprep.subr.mxu0 0.0
  %6595 = vmatpush1.msra.mxu0 0.0
  %6596 = vmatprep.subr.mxu0 0.0
  %6597 = vmatpush1.msra.mxu0 0.0
  %6598 = vmatprep.subr.mxu0 0.0
  %6599 = vmatpush1.msra.mxu0 0.0
  %6600 = vmatprep.subr.mxu0 0.0
  %6601 = vmatpush1.msra.mxu0 0.0
  %6602 = vmatprep.subr.mxu0 0.0
  %6603 = vmatpush1.msra.mxu0 0.0
  %6604 = vmatprep.subr.mxu0 0.0
  %6605 = vmatpush1.msra.mxu0 0.0
  %6606 = vmatprep.subr.mxu0 0.0
  %6607 = vmatpush1.msra.mxu0 0.0
  %6608 = vmatprep.subr.mxu0 0.0
  %6609 = vmatpush1.msra.mxu0 0.0
  %6610 = vmatprep.subr.mxu0 0.0
  %6611 = vmatpush1.msra.mxu0 0.0
  %6612 = vmatprep.subr.mxu0 0.0
  %6613 = vmatpush1.msra.mxu0 0.0
  %6614 = vmatprep.subr.mxu0 0.0
  %6615 = vmatpush1.msra.mxu0 0.0
  %6616 = vmatprep.subr.mxu0 0.0
  %6617 = vmatpush1.msra.mxu0 0.0
  %6618 = vmatprep.subr.mxu0 0.0
  %6619 = vmatpush1.msra.mxu0 0.0
  %6620 = vmatprep.subr.mxu0 0.0
  %6621 = vmatpush1.msra.mxu0 0.0
  %6622 = vmatprep.subr.mxu0 0.0
  %6623 = vmatpush1.msra.mxu0 0.0
  %6624 = vmatprep.subr.mxu0 0.0
  %6625 = vmatpush1.msra.mxu0 0.0
  %6626 = vmatprep.subr.mxu0 0.0
  %6627 = vmatpush1.msra.mxu0 0.0
  %6628 = vmatprep.subr.mxu0 0.0
  %6629 = vmatpush1.msra.mxu0 0.0
  %6630 = vmatprep.subr.mxu0 0.0
  %6631 = vmatpush1.msra.mxu0 0.0
  %6632 = vmatprep.subr.mxu0 0.0
  %6633 = vmatpush1.msra.mxu0 0.0
  %6634 = vmatprep.mubr.f32.mxu0 0.0
  %6635 = vmatmul.mubr.f32.gmra.mrb[0].mxu0 %v6568
  %v6636 = vpop.f32.mrb[0].mxu0
  %v6637 = vadd.f32 0.0, %v6636
  %v6638 = vpop.f32.mrb[0].mxu0
  %6639 = vdwg.mxu0
  %v6640 = vadd.f32 %v6555, %v6637
  %v6641 = vmax.f32 %v6640, 0.0
  %v6642 = vld [vmem:[%s7] sm:$0xff]
  %v6643 = vld [vmem:[%s7 + $0x8] sm:$0xff]
  %v6644 = vld [vmem:[%s7 + $0x10] sm:$0xff]
  %v6645 = vld [vmem:[%s7 + $0x18] sm:$0xff]
  %v6646 = vld [vmem:[%s7 + $0x20] sm:$0xff]
  %v6647 = vld [vmem:[%s7 + $0x28] sm:$0xff]
  %v6648 = vld [vmem:[%s7 + $0x30] sm:$0x3]
  %v6649 = vld [vmem:[%s8] sm:$0x1]
  %v6651 = vlaneseq
  %v6652 = vshrl.u32 %v6651, 7
  %v6653 = vsub.s32 0, %v6652
  %v6654 = vrot.slane %v6649, %v6653
  %vm6656 = vcmask 408576
  %v6658 = vsel %vm6656, %v6641, 0
  %vm6660 = vcmask 1041408
  %v6662 = vsel %vm6660, %v6648, 0
  %6664 = vmatprep.subr.mxu0 0.0
  %6665 = vmatpush1.msra.mxu0 %v6642
  %6666 = vmatprep.subr.mxu0 0.0
  %6667 = vmatpush1.msra.mxu0 %v6643
  %6668 = vmatprep.subr.mxu0 0.0
  %6669 = vmatpush1.msra.mxu0 %v6644
  %6670 = vmatprep.subr.mxu0 0.0
  %6671 = vmatpush1.msra.mxu0 %v6645
  %6672 = vmatprep.subr.mxu0 0.0
  %6673 = vmatpush1.msra.mxu0 %v6646
  %6674 = vmatprep.subr.mxu0 0.0
  %6675 = vmatpush1.msra.mxu0 %v6647
  %6676 = vmatprep.subr.mxu0 0.0
  %6677 = vmatpush1.msra.mxu0 %v6662
  %6678 = vmatprep.subr.mxu0 0.0
  %6679 = vmatpush1.msra.mxu0 0.0
  %6680 = vmatprep.subr.mxu0 0.0
  %6681 = vmatpush1.msra.mxu0 0.0
  %6682 = vmatprep.subr.mxu0 0.0
  %6683 = vmatpush1.msra.mxu0 0.0
  %6684 = vmatprep.subr.mxu0 0.0
  %6685 = vmatpush1.msra.mxu0 0.0
  %6686 = vmatprep.subr.mxu0 0.0
  %6687 = vmatpush1.msra.mxu0 0.0
  %6688 = vmatprep.subr.mxu0 0.0
  %6689 = vmatpush1.msra.mxu0 0.0
  %6690 = vmatprep.subr.mxu0 0.0
  %6691 = vmatpush1.msra.mxu0 0.0
  %6692 = vmatprep.subr.mxu0 0.0
  %6693 = vmatpush1.msra.mxu0 0.0
  %6694 = vmatprep.subr.mxu0 0.0
  %6695 = vmatpush1.msra.mxu0 0.0
  %6696 = vmatprep.subr.mxu0 0.0
  %6697 = vmatpush1.msra.mxu0 0.0
  %6698 = vmatprep.subr.mxu0 0.0
  %6699 = vmatpush1.msra.mxu0 0.0
  %6700 = vmatprep.subr.mxu0 0.0
  %6701 = vmatpush1.msra.mxu0 0.0
  %6702 = vmatprep.subr.mxu0 0.0
  %6703 = vmatpush1.msra.mxu0 0.0
  %6704 = vmatprep.subr.mxu0 0.0
  %6705 = vmatpush1.msra.mxu0 0.0
  %6706 = vmatprep.subr.mxu0 0.0
  %6707 = vmatpush1.msra.mxu0 0.0
  %6708 = vmatprep.subr.mxu0 0.0
  %6709 = vmatpush1.msra.mxu0 0.0
  %6710 = vmatprep.subr.mxu0 0.0
  %6711 = vmatpush1.msra.mxu0 0.0
  %6712 = vmatprep.subr.mxu0 0.0
  %6713 = vmatpush1.msra.mxu0 0.0
  %6714 = vmatprep.subr.mxu0 0.0
  %6715 = vmatpush1.msra.mxu0 0.0
  %6716 = vmatprep.subr.mxu0 0.0
  %6717 = vmatpush1.msra.mxu0 0.0
  %6718 = vmatprep.subr.mxu0 0.0
  %6719 = vmatpush1.msra.mxu0 0.0
  %6720 = vmatprep.subr.mxu0 0.0
  %6721 = vmatpush1.msra.mxu0 0.0
  %6722 = vmatprep.subr.mxu0 0.0
  %6723 = vmatpush1.msra.mxu0 0.0
  %6724 = vmatprep.subr.mxu0 0.0
  %6725 = vmatpush1.msra.mxu0 0.0
  %6726 = vmatprep.subr.mxu0 0.0
  %6727 = vmatpush1.msra.mxu0 0.0
  %6728 = vmatprep.mubr.f32.mxu0 0.0
  %6729 = vmatmul.mubr.f32.gmra.mrb[0].mxu0 %v6658
  %v6730 = vpop.f32.mrb[0].mxu0
  %v6731 = vadd.f32 %v6654, %v6730
  %v6732 = vpop.f32.mrb[0].mxu0
  %6733 = vdwg.mxu0
  %vm6734 = vcmask 80896
  %v6735 = vsel %vm6734, %v6731, -inf
  %6736 = vmax.xlane.f32.xlu0 %v6735
  %v6737 = vpop.xlane.xlu0 %6736
  %v6738 = vsub.f32 %v6731, %v6737
  %v6739 = vmul.f32 %v6738, 1.442695
  %v6740 = vpow.pop %v6739
  %v6741 = vsel %vm6734, %v6740, 0.0
  %6742 = vadd.xlane.f32.xlu0 %v6741
  %v6743 = vpop.xlane.xlu0 %6742
  %v6744 = vlog2.pop %v6743
  %v6745 = vmul.f32 %v6744, 0.6931472
  %v6746 = vsub.f32 %v6738, %v6745
  %6747 = vst.msk [vmem:[%s9] sm:$0xff] %vm6734, %v6746
  // Predicated region
  $region38: #{my_network_forward.1} parent=0 // pred_check
    _
  $region39: #{my_network_forward.1} parent=0 // pred_check_branch
    %6749 = sbr.rel (0) target = $region41
  $region40: #{my_network_forward.1} parent=0 // pred_region
    _
  $region41: #{my_network_forward.1} parent=0 // pred_fallthru
    _
  // Predicated region
  $region42: #{my_network_forward.1} parent=0 // pred_check
    _
  $region43: #{my_network_forward.1} parent=0 // pred_check_branch
    %6751 = sbr.rel (0) target = $region45
  $region44: #{my_network_forward.1} parent=0 // pred_region
    _
  $region45: #{my_network_forward.1} parent=0 // pred_fallthru
    _

</llo_original>
